<compile_context>
chip_gen: v6e
topology: v6e:2x2x1
jax: 0.10.0
libtpu: 0.0.40
codegen_flags: <defaults>
</compile_context>

<pallas_src>
import jax
import jax.numpy as jnp
from jax.experimental import pallas as pl
from jax.experimental.pallas import tpu as pltpu

FEAT_DIM = 256
HIDDEN_DENSE = 128
HIDDEN_SPARSE = 128
SIZE = 64            # hard-coded in Prototype_Prompt_Encoder (size=64, rearrange h=w=64)
HW = SIZE * SIZE     # 4096
NUM_TOKENS = 8
CIN = 4              # input channels of the synthetic image fed to the stub encoder
CIN_PAD = 8          # cin zero-padded to 8 so the encoder matmul is cleanly tiled
TILE = 1024          # hw tile: 4 grid steps per batch elem, ~4 MiB live VMEM
N_TILES = HW // TILE


def endosam_kernel(x_ref, wenc_ref, benc_ref, pcm_ref, onepb_ref,
                   dw1_ref, db1_ref, dw2_ref, db2_ref,
                   sw1_ref, sb1_ref, sw2_ref, sb2_ref, pn_ref,
                   dense_ref, sparse_ref, acc_ref):
    t = pl.program_id(1)

    @pl.when(t == 0)
    def _():
        acc_ref[...] = jnp.zeros_like(acc_ref)

    # x is resident for the whole batch element; slice the current hw tile.
    start = pl.multiple_of(t * TILE, TILE)
    x = x_ref[0, :, pl.ds(start, TILE)]                     # (CIN_PAD, TILE) f32
    x_bf = x.astype(jnp.bfloat16)

    # ---- stub encoder: cin -> 256 projection as one MXU matmul (K padded to 8) ----
    feat = jnp.dot(wenc_ref[...], x_bf,
                   preferred_element_type=jnp.float32) + benc_ref[...]   # (256, TILE)
    feat_bf = feat.astype(jnp.bfloat16)

    # ---- prototype similarity directly from x: sim = pc @ x + <proto, benc> ----
    simk = jnp.dot(pcm_ref[...], x_bf,
                   preferred_element_type=jnp.float32)      # (CIN_PAD, TILE); row 0 = sim
    mod = onepb_ref[...] + simk[0:1, :]                     # (1, TILE) = 1 + sim
    fm_bf = feat_bf * mod.astype(jnp.bfloat16)              # bf16 modulation

    # ---- dense path: 1x1 convs as channel-first MXU matmuls (bf16 in, f32 acc) ----
    h = jnp.maximum(
        jnp.dot(dw1_ref[...], fm_bf, preferred_element_type=jnp.float32)
        + db1_ref[...], 0.0)                                 # (128, TILE)
    dense = (jnp.dot(dw2_ref[...], h.astype(jnp.bfloat16),
                     preferred_element_type=jnp.float32) + db2_ref[...])
    dense_ref[0] = dense                                     # (256, TILE), lane-dense

    # ---- sparse path: accumulate s1^T = fm_cf @ sw1^T over hw tiles ----
    acc_ref[...] += jnp.dot(fm_bf, sw1_ref[...],
                            preferred_element_type=jnp.float32)   # (256, 128)

    # NOTE: relies on t being the inner "arbitrary" grid axis (acc zeroed at t==0,
    # finalized at t==last, sparse out_spec constant over t).
    @pl.when(t == pl.num_programs(1) - 1)
    def _():
        s1 = jnp.maximum(acc_ref[...].T + sb1_ref[...], 0.0)       # (128, 256)
        s2 = jnp.dot(sw2_ref[...], s1,
                     preferred_element_type=jnp.float32) + sb2_ref[...]   # (8, 256)
        # pos/neg class embeddings: one_hot == 1 (cls_ids=1, single class)
        sparse_ref[0] = s2 + pn_ref[...]


def prepare_params(params):
    """One-time weight relayout (hoisted out of the per-call forward)."""
    bf16 = jnp.bfloat16
    wenc_cf = jnp.zeros((FEAT_DIM, CIN_PAD), jnp.float32)
    wenc_cf = wenc_cf.at[:, :CIN].set(params["wenc"].T)                  # (256, 8)
    # pc = wenc @ proto (per input channel), pb = <benc, proto>
    pc = (params["wenc"] @ params["proto"])[:, 0]                        # (4,)
    pcm = jnp.zeros((CIN_PAD, CIN_PAD), jnp.float32).at[0, :CIN].set(pc)  # (8, 8)
    onepb = 1.0 + params["benc"] @ params["proto"]                       # (1, 1)
    return dict(
        wenc=wenc_cf.astype(bf16),
        benc=params["benc"].T,                       # (256, 1) f32
        pcm=pcm.astype(bf16),
        onepb=onepb.astype(jnp.float32),
        dw1=params["dw1"].T.astype(bf16),            # (128, 256)
        db1=params["db1"].T,                         # (128, 1)
        dw2=params["dw2"].T.astype(bf16),            # (256, 128)
        db2=params["db2"].T,                         # (256, 1)
        sw1=params["sw1"].T.astype(bf16),            # (4096, 128)
        sb1=params["sb1"],                           # (128, 1)
        sw2=params["sw2"],                           # (8, 128)
        sb2=params["sb2"],                           # (8, 1)
        pn=params["pn"],                             # (8, 256)
    )


def endosam_forward(x_nchw, prep):
    """x_nchw: (b, cin, 64, 64) f32 -> (dense_nchw (b,256,64,64), sparse (b,8,256))."""
    b, cin, hgt, wid = x_nchw.shape
    assert hgt == SIZE and wid == SIZE and cin == CIN
    x_cf = x_nchw.reshape(b, cin, HW)                                    # free reshape
    x_pad = jnp.pad(x_cf, ((0, 0), (0, CIN_PAD - CIN), (0, 0)))          # (b, 8, 4096)

    const = lambda i, t: (0, 0)
    dense_cf, sparse = pl.pallas_call(
        endosam_kernel,
        out_shape=(jax.ShapeDtypeStruct((b, FEAT_DIM, HW), jnp.float32),
                   jax.ShapeDtypeStruct((b, NUM_TOKENS, FEAT_DIM), jnp.float32)),
        grid_spec=pltpu.PrefetchScalarGridSpec(
            num_scalar_prefetch=0,
            grid=(b, N_TILES),
            in_specs=[
                pl.BlockSpec((1, CIN_PAD, HW), lambda i, t: (i, 0, 0)),    # x, once/batch
                pl.BlockSpec((FEAT_DIM, CIN_PAD), const),                  # wenc^T (padded)
                pl.BlockSpec((FEAT_DIM, 1), const),                        # benc col
                pl.BlockSpec((CIN_PAD, CIN_PAD), const),                   # pc row (padded)
                pl.BlockSpec((1, 1), const),                               # 1 + <proto,benc>
                pl.BlockSpec((HIDDEN_DENSE, FEAT_DIM), const),             # dw1^T
                pl.BlockSpec((HIDDEN_DENSE, 1), const),                    # db1 col
                pl.BlockSpec((FEAT_DIM, HIDDEN_DENSE), const),             # dw2^T
                pl.BlockSpec((FEAT_DIM, 1), const),                        # db2 col
                pl.BlockSpec((TILE, HIDDEN_SPARSE), lambda i, t: (t, 0)),  # sw1^T tile
                pl.BlockSpec((HIDDEN_SPARSE, 1), const),                   # sb1
                pl.BlockSpec((NUM_TOKENS, HIDDEN_SPARSE), const),          # sw2
                pl.BlockSpec((NUM_TOKENS, 1), const),                      # sb2
                pl.BlockSpec((NUM_TOKENS, FEAT_DIM), const),               # pn embed
            ],
            out_specs=[
                pl.BlockSpec((1, FEAT_DIM, TILE), lambda i, t: (i, 0, t)),       # dense (cf)
                pl.BlockSpec((1, NUM_TOKENS, FEAT_DIM), lambda i, t: (i, 0, 0)), # sparse
            ],
            scratch_shapes=[pltpu.VMEM((FEAT_DIM, HIDDEN_SPARSE), jnp.float32)],
        ),
        compiler_params=pltpu.CompilerParams(
            dimension_semantics=("parallel", "arbitrary")),
    )(x_pad, prep["wenc"], prep["benc"], prep["pcm"], prep["onepb"],
      prep["dw1"], prep["db1"], prep["dw2"], prep["db2"],
      prep["sw1"], prep["sb1"], prep["sw2"], prep["sb2"], prep["pn"])

    # dense is already channel-first: only a free reshape back to NCHW
    dense_nchw = dense_cf.reshape(b, FEAT_DIM, SIZE, SIZE)
    return dense_nchw, sparse


def reference(x_nchw, params):
    b, cin, hgt, wid = x_nchw.shape
    xf = x_nchw.reshape(b, cin, HW).transpose(0, 2, 1)                    # (b, hw, cin)
    feat = xf @ params["wenc"] + params["benc"]                           # (b, hw, 256)
    sim = feat @ params["proto"]                                          # (b, hw, 1)
    fm = feat + feat * sim
    h = jnp.maximum(fm @ params["dw1"] + params["db1"], 0.0)
    dense = h @ params["dw2"] + params["db2"]                             # (b, hw, 256)
    s1 = jnp.maximum(jnp.einsum("oh,bhc->boc", params["sw1"], fm) + params["sb1"][None], 0.0)
    s2 = jnp.einsum("ok,bkc->boc", params["sw2"], s1) + params["sb2"][None]
    sparse = s2 + params["pn"][None]
    dense_nchw = dense.transpose(0, 2, 1).reshape(b, FEAT_DIM, SIZE, SIZE)
    return dense_nchw, sparse


def init_params(key):
    ks = jax.random.split(key, 12)
    n = lambda k, shape, s: (jax.random.normal(k, shape, jnp.float32) * s)
    # stub encoder (TODO(synk): replaces the frozen SAM ViT image encoder)
    wenc = n(ks[0], (CIN, FEAT_DIM), 0.1)
    benc = n(ks[1], (1, FEAT_DIM), 0.01)
    # Learnable_Prototypes: nn.Embedding(num_classes=1, 256) -> single prototype
    proto = n(ks[2], (FEAT_DIM, 1), 0.05)
    # dense_fc_1 / dense_fc_2 (1x1 Conv2d) in channel-last matmul layout
    dw1 = n(ks[3], (FEAT_DIM, HIDDEN_DENSE), 0.05)
    db1 = n(ks[4], (1, HIDDEN_DENSE), 0.01)
    dw2 = n(ks[5], (HIDDEN_DENSE, FEAT_DIM), 0.05)
    db2 = n(ks[6], (1, FEAT_DIM), 0.01)
    # sparse_fc_1 / sparse_fc_2 (kernel-size-1 Conv1d over the hw axis)
    sw1 = n(ks[7], (HIDDEN_SPARSE, HW), 0.02)
    sb1 = n(ks[8], (HIDDEN_SPARSE, 1), 0.01)
    sw2 = n(ks[9], (NUM_TOKENS, HIDDEN_SPARSE), 0.05)
    sb2 = n(ks[10], (NUM_TOKENS, 1), 0.01)
    # pn_cls_embeddings[0] (neg) / [1] (pos); cls_ids == 1 with a single class
    # => one_hot == 1 everywhere => contribution = pos*1 + neg*0
    kp, kn = jax.random.split(ks[11])
    pn_pos = n(kp, (NUM_TOKENS, FEAT_DIM), 0.05)
    pn_neg = n(kn, (NUM_TOKENS, FEAT_DIM), 0.05)
    one_hot = 1.0
    pn = pn_pos * one_hot + pn_neg * (1.0 - one_hot)
    return dict(wenc=wenc, benc=benc, proto=proto,
                dw1=dw1, db1=db1, dw2=dw2, db2=db2,
                sw1=sw1, sb1=sb1, sw2=sw2, sb2=sb2, pn=pn)


if __name__ == "__main__":
    key = jax.random.PRNGKey(0)
    kx, kp = jax.random.split(key)
    params = init_params(kp)
    prep = prepare_params(params)   # one-time weight relayout, hoisted out of forward
    # small synthetic image; spatial = 64 because size/h/w=64 is hard-coded in the module
    x = jax.random.normal(kx, (2, CIN, SIZE, SIZE), jnp.float32)

    dense, sparse = jax.jit(endosam_forward)(x, prep)
    jax.block_until_ready((dense, sparse))

    ref_dense, ref_sparse = reference(x, params)
    assert dense.shape == (2, FEAT_DIM, SIZE, SIZE), dense.shape
    assert sparse.shape == (2, NUM_TOKENS, FEAT_DIM), sparse.shape
    assert jnp.allclose(dense, ref_dense, atol=1e-2, rtol=1e-2)
    assert jnp.allclose(sparse, ref_sparse, atol=1e-2, rtol=1e-2)

    print("KERNEL_OK")
</pallas_src>

<mosaic_0001>
module attributes {stable_mosaic.version = 11 : i64} {
  func.func @endosam_kernel(%arg0: i32, %arg1: i32, %arg2: memref<1x8x4096xf32, #tpu.memory_space<vmem>>, %arg3: memref<256x8xbf16, #tpu.memory_space<vmem>>, %arg4: memref<256x1xf32, #tpu.memory_space<vmem>>, %arg5: memref<8x8xbf16, #tpu.memory_space<vmem>>, %arg6: memref<1x1xf32, #tpu.memory_space<vmem>>, %arg7: memref<128x256xbf16, #tpu.memory_space<vmem>>, %arg8: memref<128x1xf32, #tpu.memory_space<vmem>>, %arg9: memref<256x128xbf16, #tpu.memory_space<vmem>>, %arg10: memref<256x1xf32, #tpu.memory_space<vmem>>, %arg11: memref<1024x128xbf16, #tpu.memory_space<vmem>>, %arg12: memref<128x1xf32, #tpu.memory_space<vmem>>, %arg13: memref<8x128xf32, #tpu.memory_space<vmem>>, %arg14: memref<8x1xf32, #tpu.memory_space<vmem>>, %arg15: memref<8x256xf32, #tpu.memory_space<vmem>>, %arg16: memref<1x256x1024xf32, #tpu.memory_space<vmem>>, %arg17: memref<1x8x256xf32, #tpu.memory_space<vmem>>, %arg18: memref<256x128xf32, #tpu.memory_space<vmem>>) attributes {dimension_semantics = [#tpu.dimension_semantics<parallel>, #tpu.dimension_semantics<arbitrary>], iteration_bounds = array<i64: 2, 4>, scalar_prefetch = 0 : i64, scratch_operands = 1 : i64, tpu.core_type = #tpu.core_type<tc>, window_params = [{transform_indices = @transform_0, window_bounds = array<i64: 1, 8, 4096>}, {pipeline_mode = #tpu.pipeline_mode<synchronous>, transform_indices = @transform_1, window_bounds = array<i64: 256, 8>}, {pipeline_mode = #tpu.pipeline_mode<synchronous>, transform_indices = @transform_2, window_bounds = array<i64: 256, 1>}, {pipeline_mode = #tpu.pipeline_mode<synchronous>, transform_indices = @transform_3, window_bounds = array<i64: 8, 8>}, {pipeline_mode = #tpu.pipeline_mode<synchronous>, transform_indices = @transform_4, window_bounds = array<i64: 1, 1>}, {pipeline_mode = #tpu.pipeline_mode<synchronous>, transform_indices = @transform_5, window_bounds = array<i64: 128, 256>}, {pipeline_mode = #tpu.pipeline_mode<synchronous>, transform_indices = @transform_6, window_bounds = array<i64: 128, 1>}, {pipeline_mode = #tpu.pipeline_mode<synchronous>, transform_indices = @transform_7, window_bounds = array<i64: 256, 128>}, {pipeline_mode = #tpu.pipeline_mode<synchronous>, transform_indices = @transform_8, window_bounds = array<i64: 256, 1>}, {transform_indices = @transform_9, window_bounds = array<i64: 1024, 128>}, {pipeline_mode = #tpu.pipeline_mode<synchronous>, transform_indices = @transform_10, window_bounds = array<i64: 128, 1>}, {pipeline_mode = #tpu.pipeline_mode<synchronous>, transform_indices = @transform_11, window_bounds = array<i64: 8, 128>}, {pipeline_mode = #tpu.pipeline_mode<synchronous>, transform_indices = @transform_12, window_bounds = array<i64: 8, 1>}, {pipeline_mode = #tpu.pipeline_mode<synchronous>, transform_indices = @transform_13, window_bounds = array<i64: 8, 256>}, {transform_indices = @transform_14, window_bounds = array<i64: 1, 256, 1024>}, {transform_indices = @transform_15, window_bounds = array<i64: 1, 8, 256>}]} {
    %c0_i32 = arith.constant 0 : i32
    %0 = arith.cmpi eq, %arg1, %c0_i32 : i32
    %1 = arith.extui %0 : i1 to i32
    %c0_i32_0 = arith.constant 0 : i32
    %2 = arith.cmpi ne, %1, %c0_i32_0 : i32
    scf.if %2 {
      %cst_33 = arith.constant 0.000000e+00 : f32
      %48 = vector.broadcast %cst_33 : f32 to vector<256x128xf32>
      %c0_34 = arith.constant 0 : index
      %c0_35 = arith.constant 0 : index
      %49 = vector.load %arg18[%c0_34, %c0_35] : memref<256x128xf32, #tpu.memory_space<vmem>>, vector<256x128xf32>
      tpu.vector_store %arg18[%c0_34, %c0_35], %48 {strides = array<i32>} : memref<256x128xf32, #tpu.memory_space<vmem>>, vector<256x128xf32>,
    } else {
    }
    %c1024_i32 = arith.constant 1024 : i32
    %3 = arith.muli %arg1, %c1024_i32 : i32
    %4 = tpu.assume_multiple %3, 1024 : i32
    %c0 = arith.constant 0 : index
    %c0_1 = arith.constant 0 : index
    %5 = arith.index_cast %4 : i32 to index
    %6 = vector.load %arg2[%c0, %c0_1, %5] : memref<1x8x4096xf32, #tpu.memory_space<vmem>>, vector<1x8x1024xf32>
    %7 = vector.shape_cast %6 : vector<1x8x1024xf32> to vector<8x1024xf32>
    %8 = arith.truncf %7 : vector<8x1024xf32> to vector<8x1024xbf16>
    %c0_2 = arith.constant 0 : index
    %c0_3 = arith.constant 0 : index
    %9 = vector.load %arg3[%c0_2, %c0_3] : memref<256x8xbf16, #tpu.memory_space<vmem>>, vector<256x8xbf16>
    %cst = arith.constant dense<0.000000e+00> : vector<256x1024xf32>
    %10 = tpu.matmul %9, %8, %cst {dimension_numbers = #tpu.dot_dimension_numbers<[1], [0], [0], [1], [0, 0, 1, 1], [], []>} : vector<256x8xbf16>, vector<8x1024xbf16>, vector<256x1024xf32> -> vector<256x1024xf32>
    %c0_4 = arith.constant 0 : index
    %c0_5 = arith.constant 0 : index
    %11 = vector.load %arg4[%c0_4, %c0_5] : memref<256x1xf32, #tpu.memory_space<vmem>>, vector<256x1xf32>
    %12 = vector.broadcast %11 : vector<256x1xf32> to vector<256x1024xf32>
    %13 = arith.addf %10, %12 : vector<256x1024xf32>
    %14 = arith.truncf %13 : vector<256x1024xf32> to vector<256x1024xbf16>
    %c0_6 = arith.constant 0 : index
    %c0_7 = arith.constant 0 : index
    %15 = vector.load %arg5[%c0_6, %c0_7] : memref<8x8xbf16, #tpu.memory_space<vmem>>, vector<8x8xbf16>
    %cst_8 = arith.constant dense<0.000000e+00> : vector<8x1024xf32>
    %16 = tpu.matmul %15, %8, %cst_8 {dimension_numbers = #tpu.dot_dimension_numbers<[1], [0], [0], [1], [0, 0, 1, 1], [], []>} : vector<8x8xbf16>, vector<8x1024xbf16>, vector<8x1024xf32> -> vector<8x1024xf32>
    %c0_9 = arith.constant 0 : index
    %c0_10 = arith.constant 0 : index
    %17 = vector.load %arg6[%c0_9, %c0_10] : memref<1x1xf32, #tpu.memory_space<vmem>>, vector<1x1xf32>
    %18 = vector.extract_strided_slice %16 {offsets = [0, 0], sizes = [1, 1024], strides = [1, 1]} : vector<8x1024xf32> to vector<1x1024xf32>
    %19 = vector.broadcast %17 : vector<1x1xf32> to vector<1x1024xf32>
    %20 = arith.addf %19, %18 : vector<1x1024xf32>
    %21 = arith.truncf %20 : vector<1x1024xf32> to vector<1x1024xbf16>
    %22 = vector.broadcast %21 : vector<1x1024xbf16> to vector<256x1024xbf16>
    %23 = arith.mulf %14, %22 : vector<256x1024xbf16>
    %c0_11 = arith.constant 0 : index
    %c0_12 = arith.constant 0 : index
    %24 = vector.load %arg7[%c0_11, %c0_12] : memref<128x256xbf16, #tpu.memory_space<vmem>>, vector<128x256xbf16>
    %cst_13 = arith.constant dense<0.000000e+00> : vector<128x1024xf32>
    %25 = tpu.matmul %24, %23, %cst_13 {dimension_numbers = #tpu.dot_dimension_numbers<[1], [0], [0], [1], [0, 0, 1, 1], [], []>} : vector<128x256xbf16>, vector<256x1024xbf16>, vector<128x1024xf32> -> vector<128x1024xf32>
    %c0_14 = arith.constant 0 : index
    %c0_15 = arith.constant 0 : index
    %26 = vector.load %arg8[%c0_14, %c0_15] : memref<128x1xf32, #tpu.memory_space<vmem>>, vector<128x1xf32>
    %27 = vector.broadcast %26 : vector<128x1xf32> to vector<128x1024xf32>
    %28 = arith.addf %25, %27 : vector<128x1024xf32>
    %cst_16 = arith.constant 0.000000e+00 : f32
    %29 = vector.broadcast %cst_16 : f32 to vector<128x1024xf32>
    %30 = arith.maximumf %28, %29 : vector<128x1024xf32>
    %c0_17 = arith.constant 0 : index
    %c0_18 = arith.constant 0 : index
    %31 = vector.load %arg9[%c0_17, %c0_18] : memref<256x128xbf16, #tpu.memory_space<vmem>>, vector<256x128xbf16>
    %32 = arith.truncf %30 : vector<128x1024xf32> to vector<128x1024xbf16>
    %cst_19 = arith.constant dense<0.000000e+00> : vector<256x1024xf32>
    %33 = tpu.matmul %31, %32, %cst_19 {dimension_numbers = #tpu.dot_dimension_numbers<[1], [0], [0], [1], [0, 0, 1, 1], [], []>} : vector<256x128xbf16>, vector<128x1024xbf16>, vector<256x1024xf32> -> vector<256x1024xf32>
    %c0_20 = arith.constant 0 : index
    %c0_21 = arith.constant 0 : index
    %34 = vector.load %arg10[%c0_20, %c0_21] : memref<256x1xf32, #tpu.memory_space<vmem>>, vector<256x1xf32>
    %35 = vector.broadcast %34 : vector<256x1xf32> to vector<256x1024xf32>
    %36 = arith.addf %33, %35 : vector<256x1024xf32>
    %c0_22 = arith.constant 0 : index
    %c0_23 = arith.constant 0 : index
    %c0_24 = arith.constant 0 : index
    %37 = vector.load %arg16[%c0_22, %c0_23, %c0_24] : memref<1x256x1024xf32, #tpu.memory_space<vmem>>, vector<1x256x1024xf32>
    %38 = vector.shape_cast %37 : vector<1x256x1024xf32> to vector<256x1024xf32>
    %39 = vector.shape_cast %36 : vector<256x1024xf32> to vector<1x256x1024xf32>
    tpu.vector_store %arg16[%c0_22, %c0_23, %c0_24], %39 {strides = array<i32>} : memref<1x256x1024xf32, #tpu.memory_space<vmem>>, vector<1x256x1024xf32>,
    %c0_25 = arith.constant 0 : index
    %c0_26 = arith.constant 0 : index
    %40 = vector.load %arg18[%c0_25, %c0_26] : memref<256x128xf32, #tpu.memory_space<vmem>>, vector<256x128xf32>
    %c0_27 = arith.constant 0 : index
    %c0_28 = arith.constant 0 : index
    %41 = vector.load %arg11[%c0_27, %c0_28] : memref<1024x128xbf16, #tpu.memory_space<vmem>>, vector<1024x128xbf16>
    %cst_29 = arith.constant dense<0.000000e+00> : vector<256x128xf32>
    %42 = tpu.matmul %23, %41, %cst_29 {dimension_numbers = #tpu.dot_dimension_numbers<[1], [0], [0], [1], [0, 0, 1, 1], [], []>} : vector<256x1024xbf16>, vector<1024x128xbf16>, vector<256x128xf32> -> vector<256x128xf32>
    %43 = arith.addf %40, %42 : vector<256x128xf32>
    %c0_30 = arith.constant 0 : index
    %c0_31 = arith.constant 0 : index
    %44 = vector.load %arg18[%c0_30, %c0_31] : memref<256x128xf32, #tpu.memory_space<vmem>>, vector<256x128xf32>
    tpu.vector_store %arg18[%c0_30, %c0_31], %43 {strides = array<i32>} : memref<256x128xf32, #tpu.memory_space<vmem>>, vector<256x128xf32>,
    %c3_i32 = arith.constant 3 : i32
    %45 = arith.cmpi eq, %arg1, %c3_i32 : i32
    %46 = arith.extui %45 : i1 to i32
    %c0_i32_32 = arith.constant 0 : i32
    %47 = arith.cmpi ne, %46, %c0_i32_32 : i32
    scf.if %47 {
      %c0_33 = arith.constant 0 : index
      %c0_34 = arith.constant 0 : index
      %48 = vector.load %arg18[%c0_33, %c0_34] : memref<256x128xf32, #tpu.memory_space<vmem>>, vector<256x128xf32>
      %49 = tpu.transpose %48, [1, 0] : vector<256x128xf32> -> vector<128x256xf32>
      %c0_35 = arith.constant 0 : index
      %c0_36 = arith.constant 0 : index
      %50 = vector.load %arg12[%c0_35, %c0_36] : memref<128x1xf32, #tpu.memory_space<vmem>>, vector<128x1xf32>
      %51 = vector.broadcast %50 : vector<128x1xf32> to vector<128x256xf32>
      %52 = arith.addf %49, %51 : vector<128x256xf32>
      %cst_37 = arith.constant 0.000000e+00 : f32
      %53 = vector.broadcast %cst_37 : f32 to vector<128x256xf32>
      %54 = arith.maximumf %52, %53 : vector<128x256xf32>
      %c0_38 = arith.constant 0 : index
      %c0_39 = arith.constant 0 : index
      %55 = vector.load %arg13[%c0_38, %c0_39] : memref<8x128xf32, #tpu.memory_space<vmem>>, vector<8x128xf32>
      %cst_40 = arith.constant dense<0.000000e+00> : vector<8x256xf32>
      %56 = tpu.matmul %55, %54, %cst_40 {dimension_numbers = #tpu.dot_dimension_numbers<[1], [0], [0], [1], [0, 0, 1, 1], [], []>} : vector<8x128xf32>, vector<128x256xf32>, vector<8x256xf32> -> vector<8x256xf32>
      %c0_41 = arith.constant 0 : index
      %c0_42 = arith.constant 0 : index
      %57 = vector.load %arg14[%c0_41, %c0_42] : memref<8x1xf32, #tpu.memory_space<vmem>>, vector<8x1xf32>
      %58 = vector.broadcast %57 : vector<8x1xf32> to vector<8x256xf32>
      %59 = arith.addf %56, %58 : vector<8x256xf32>
      %c0_43 = arith.constant 0 : index
      %c0_44 = arith.constant 0 : index
      %60 = vector.load %arg15[%c0_43, %c0_44] : memref<8x256xf32, #tpu.memory_space<vmem>>, vector<8x256xf32>
      %61 = arith.addf %59, %60 : vector<8x256xf32>
      %c0_45 = arith.constant 0 : index
      %c0_46 = arith.constant 0 : index
      %c0_47 = arith.constant 0 : index
      %62 = vector.load %arg17[%c0_45, %c0_46, %c0_47] : memref<1x8x256xf32, #tpu.memory_space<vmem>>, vector<1x8x256xf32>
      %63 = vector.shape_cast %62 : vector<1x8x256xf32> to vector<8x256xf32>
      %64 = vector.shape_cast %61 : vector<8x256xf32> to vector<1x8x256xf32>
      tpu.vector_store %arg17[%c0_45, %c0_46, %c0_47], %64 {strides = array<i32>} : memref<1x8x256xf32, #tpu.memory_space<vmem>>, vector<1x8x256xf32>,
    } else {
    }
    return
  }
  func.func @transform_0(%arg0: i32, %arg1: i32) -> (i32, i32, i32) {
    %c0_i32 = arith.constant 0 : i32
    %c0_i32_0 = arith.constant 0 : i32
    %c0_i32_1 = arith.constant 0 : i32
    return %arg0, %c0_i32, %c0_i32_0 : i32, i32, i32
  }
  func.func @transform_1(%arg0: i32, %arg1: i32) -> (i32, i32) {
    %c0_i32 = arith.constant 0 : i32
    %c0_i32_0 = arith.constant 0 : i32
    %c0_i32_1 = arith.constant 0 : i32
    return %c0_i32, %c0_i32_0 : i32, i32
  }
  func.func @transform_2(%arg0: i32, %arg1: i32) -> (i32, i32) {
    %c0_i32 = arith.constant 0 : i32
    %c0_i32_0 = arith.constant 0 : i32
    %c0_i32_1 = arith.constant 0 : i32
    return %c0_i32, %c0_i32_0 : i32, i32
  }
  func.func @transform_3(%arg0: i32, %arg1: i32) -> (i32, i32) {
    %c0_i32 = arith.constant 0 : i32
    %c0_i32_0 = arith.constant 0 : i32
    %c0_i32_1 = arith.constant 0 : i32
    return %c0_i32, %c0_i32_0 : i32, i32
  }
  func.func @transform_4(%arg0: i32, %arg1: i32) -> (i32, i32) {
    %c0_i32 = arith.constant 0 : i32
    %c0_i32_0 = arith.constant 0 : i32
    %c0_i32_1 = arith.constant 0 : i32
    return %c0_i32, %c0_i32_0 : i32, i32
  }
  func.func @transform_5(%arg0: i32, %arg1: i32) -> (i32, i32) {
    %c0_i32 = arith.constant 0 : i32
    %c0_i32_0 = arith.constant 0 : i32
    %c0_i32_1 = arith.constant 0 : i32
    return %c0_i32, %c0_i32_0 : i32, i32
  }
  func.func @transform_6(%arg0: i32, %arg1: i32) -> (i32, i32) {
    %c0_i32 = arith.constant 0 : i32
    %c0_i32_0 = arith.constant 0 : i32
    %c0_i32_1 = arith.constant 0 : i32
    return %c0_i32, %c0_i32_0 : i32, i32
  }
  func.func @transform_7(%arg0: i32, %arg1: i32) -> (i32, i32) {
    %c0_i32 = arith.constant 0 : i32
    %c0_i32_0 = arith.constant 0 : i32
    %c0_i32_1 = arith.constant 0 : i32
    return %c0_i32, %c0_i32_0 : i32, i32
  }
  func.func @transform_8(%arg0: i32, %arg1: i32) -> (i32, i32) {
    %c0_i32 = arith.constant 0 : i32
    %c0_i32_0 = arith.constant 0 : i32
    %c0_i32_1 = arith.constant 0 : i32
    return %c0_i32, %c0_i32_0 : i32, i32
  }
  func.func @transform_9(%arg0: i32, %arg1: i32) -> (i32, i32) {
    %c0_i32 = arith.constant 0 : i32
    %c0_i32_0 = arith.constant 0 : i32
    return %arg1, %c0_i32 : i32, i32
  }
  func.func @transform_10(%arg0: i32, %arg1: i32) -> (i32, i32) {
    %c0_i32 = arith.constant 0 : i32
    %c0_i32_0 = arith.constant 0 : i32
    %c0_i32_1 = arith.constant 0 : i32
    return %c0_i32, %c0_i32_0 : i32, i32
  }
  func.func @transform_11(%arg0: i32, %arg1: i32) -> (i32, i32) {
    %c0_i32 = arith.constant 0 : i32
    %c0_i32_0 = arith.constant 0 : i32
    %c0_i32_1 = arith.constant 0 : i32
    return %c0_i32, %c0_i32_0 : i32, i32
  }
  func.func @transform_12(%arg0: i32, %arg1: i32) -> (i32, i32) {
    %c0_i32 = arith.constant 0 : i32
    %c0_i32_0 = arith.constant 0 : i32
    %c0_i32_1 = arith.constant 0 : i32
    return %c0_i32, %c0_i32_0 : i32, i32
  }
  func.func @transform_13(%arg0: i32, %arg1: i32) -> (i32, i32) {
    %c0_i32 = arith.constant 0 : i32
    %c0_i32_0 = arith.constant 0 : i32
    %c0_i32_1 = arith.constant 0 : i32
    return %c0_i32, %c0_i32_0 : i32, i32
  }
  func.func @transform_14(%arg0: i32, %arg1: i32) -> (i32, i32, i32) {
    %c0_i32 = arith.constant 0 : i32
    %c0_i32_0 = arith.constant 0 : i32
    return %arg0, %c0_i32, %arg1 : i32, i32, i32
  }
  func.func @transform_15(%arg0: i32, %arg1: i32) -> (i32, i32, i32) {
    %c0_i32 = arith.constant 0 : i32
    %c0_i32_0 = arith.constant 0 : i32
    %c0_i32_1 = arith.constant 0 : i32
    return %arg0, %c0_i32, %c0_i32_0 : i32, i32, i32
  }
}

</mosaic_0001>

<llo_original>
// kernel: endosam_forward.1
$region0: #{endosam_forward.1}
  #allocation0 [shape = 'u32[]', space=smem, size = 0x4, offset = 0x4, fixed_abs, tag = 'smem constant byte address 0x4 - core index']
  #allocation1 [shape = 'u32[144,128]{1,0:T(1,128)}', space=vmem, size = 0x12000, scoped, tag = 'internal scratch']
  #allocation2 [shape = 'f32[256,128]{1,0:T(8,128)}', space=vmem, size = 0x20000, scoped, tag = 'scratch operand']
  #allocation3 [shape = 'f32[1,1]{1,0:T(1,128)S(1)}', space=vmem, size = 0x200, scoped, tag = 'scoped memory for endosam_forward.1']
  %s0 = inlined_call_operand.vmem [shape: f32[2,8,4096], index: 0, kind: input, shape index: {}]
  %s1 = inlined_call_operand.vmem [shape: bf16[256,8], index: 1, kind: input, shape index: {}]
  %s2 = inlined_call_operand.vmem [shape: f32[256,1], index: 2, kind: input, shape index: {}]
  %s3 = inlined_call_operand.hbm [shape: bf16[8,8], index: 3, kind: input, shape index: {}]
  %s4 = inlined_call_operand.<no memory space> [shape: f32[1,1], index: 4, kind: input, shape index: {}]
  %s5 = inlined_call_operand.hbm [shape: bf16[128,256], index: 5, kind: input, shape index: {}]
  %s6 = inlined_call_operand.vmem [shape: f32[128,1], index: 6, kind: input, shape index: {}]
  %s7 = inlined_call_operand.hbm [shape: bf16[256,128], index: 7, kind: input, shape index: {}]
  %s8 = inlined_call_operand.vmem [shape: f32[256,1], index: 8, kind: input, shape index: {}]
  %s9 = inlined_call_operand.hbm [shape: bf16[4096,128], index: 9, kind: input, shape index: {}]
  %s10 = inlined_call_operand.vmem [shape: f32[128,1], index: 10, kind: input, shape index: {}]
  %s11 = inlined_call_operand.hbm [shape: f32[8,128], index: 11, kind: input, shape index: {}]
  %s12 = inlined_call_operand.vmem [shape: f32[8,1], index: 12, kind: input, shape index: {}]
  %s13 = inlined_call_operand.hbm [shape: f32[8,256], index: 13, kind: input, shape index: {}]
  %s14 = inlined_call_operand.vmem [shape: f32[2,256,4096], index: 14, kind: output, shape index: {0}]
  %s15 = inlined_call_operand.hbm [shape: f32[2,8,256], index: 15, kind: output, shape index: {1}]
  %16 = xla_tuple %s14, %s15
  %s17 = sld [smem:[#allocation0]]
  $region148: #{endosam_forward.1} parent=0
    _
  %s19 = ssub.s32 1, %s17
  %s20 = scalar_select 0, %s19, %s17
  %v21 = vstv %s4
  %22 = vst [vmem:[#allocation3] sm:$0x1] %v21
  $region1: #{endosam_forward.1} parent=0
    #allocation4 [shape = 'u8[2048]{0}', space=vmem, size = 0x800, scoped, tag = 'input window, operand 3, single buffered']
    #allocation5 [shape = 's32[2]{0}', space=sflag, size = 0x8, scoped, tag = 'scoped memory for endosam_forward.1']
    #allocation6 [shape = 's32[2]{0}', space=sflag, size = 0x8, scoped, tag = 'scoped memory for endosam_forward.1']
    #allocation7 [shape = 'u8[65536]{0}', space=vmem, size = 0x10000, scoped, tag = 'input window, operand 5, single buffered']
    #allocation8 [shape = 's32[1]{0}', space=sflag, size = 0x4, scoped, tag = 'scoped memory for endosam_forward.1']
    #allocation9 [shape = 'u8[65536]{0}', space=vmem, size = 0x10000, scoped, tag = 'input window, operand 7, single buffered']
    #allocation10 [shape = 'u8[524288]{0}', space=vmem, size = 0x80000, scoped, tag = 'input window, operand 9']
    #allocation11 [shape = 's32[2]{0}', space=sflag, size = 0x8, scoped, tag = 'scoped memory for endosam_forward.1']
    #allocation12 [shape = 'u8[4096]{0}', space=vmem, size = 0x1000, scoped, tag = 'input window, operand 11, single buffered']
    #allocation13 [shape = 'u8[8192]{0}', space=vmem, size = 0x2000, scoped, tag = 'input window, operand 13, single buffered']
    #allocation14 [shape = 's32[1]{0}', space=sflag, size = 0x4, scoped, tag = 'scoped memory for endosam_forward.1']
    #allocation15 [shape = 'u8[2097152]{0}', space=vmem, size = 0x200000, scoped, tag = 'output window, operand 0']
    #allocation16 [shape = 'u8[16384]{0}', space=vmem, size = 0x4000, scoped, tag = 'output window, operand 1']
    %23 = vsyncpa [#allocation5], 0
    %24 = vsyncpa [#allocation8], 0
    %25 = vsyncpa [#allocation11], 0
    %s26 = scalar_lea.sflag [#allocation11], 1
    %27 = vsyncpa %s26, 0
    %28 = vsyncpa [#allocation14], 0
    %29 = vsyncpa [#allocation6], 0
    %s30 = scalar_lea.sflag [#allocation6], 1
    %31 = vsyncpa %s30, 0
    loop: start=0, step=1, limit=10
    $region2: #{endosam_forward.1} parent=1 // loop_pre_header
      _
    $region3: #{endosam_forward.1} parent=1 // loop_header
      %s33 = sphi 0, %s37
      %p34 = scmp.ge.s32.totalorder %s33, 10
      %s40 = sphi 0, %s52
      %s41 = sphi 0, %s48
      %s42 = sphi 0, %s40
      %s43 = sphi 0, %s41
      %s44 = sphi 0, %s42
      %s45 = sphi 0, %s43
      %s55 = sphi 0, %s57
      %s58 = sphi 0, %s55
      %s59 = sphi 0, %s58
      %s75 = sphi 0, %s59
      %s79 = sphi 0, %s79
      %s81 = sphi 0, %s79
      %s82 = sphi 0, %s81
      %s96 = sphi 0, %s82
      %s100 = sphi 0, %s100
      %s102 = sphi 0, %s100
      %s103 = sphi 0, %s102
      %s117 = sphi 0, %s103
      %s121 = sphi 0, %s121
      %s123 = sphi 0, %s121
      %s124 = sphi 0, %s123
      %s138 = sphi 0, %s124
      %s142 = sphi 0, %s142
      %s144 = sphi 0, %s142
      %s145 = sphi 0, %s144
      %s159 = sphi 0, %s145
      %s163 = sphi 0, %s163
      %s165 = sphi 0, %s163
      %s166 = sphi 0, %s165
      %s180 = sphi 0, %s166
      %s184 = sphi 0, %s184
      %s186 = sphi 0, %s184
      %s187 = sphi 0, %s186
      %s201 = sphi 0, %s187
      %s205 = sphi 0, %s205
      %s207 = sphi 0, %s205
      %s208 = sphi 0, %s207
      %s222 = sphi 0, %s208
      %s226 = sphi 0, %s226
      %s228 = sphi 0, %s226
      %s229 = sphi 0, %s228
      %s243 = sphi 0, %s229
      %s249 = sphi 0, %s251
      %s252 = sphi 0, %s249
      %s253 = sphi 0, %s252
      %s269 = sphi 0, %s253
      %s273 = sphi 0, %s273
      %s275 = sphi 0, %s273
      %s276 = sphi 0, %s275
      %s290 = sphi 0, %s276
      %s294 = sphi 0, %s294
      %s296 = sphi 0, %s294
      %s297 = sphi 0, %s296
      %s311 = sphi 0, %s297
      %s315 = sphi 0, %s315
      %s317 = sphi 0, %s315
      %s318 = sphi 0, %s317
      %s332 = sphi 0, %s318
      %s336 = sphi 0, %s336
      %s338 = sphi 0, %s336
      %s339 = sphi 0, %s338
      %s353 = sphi 0, %s339
      %s361 = sphi 0, %s363
      %s364 = sphi 0, %s361
      %s365 = sphi 0, %s364
      %s381 = sphi 0, %s365
      %s387 = sphi 0, %s389
      %s390 = sphi 0, %s387
      %s391 = sphi 0, %s390
      %s407 = sphi 0, %s391
    $region4: #{endosam_forward.1} parent=1 // loop_header_branch
      %36 = sbr.rel (%p34) target = $region8
    $region5: #{endosam_forward.1} parent=1 // loop_body
      %s38 = ssub.s32 %s33, 1
      %s39 = ssub.s32 %s33, 2
      %s46 = sadd.s32 1, %s41
      %p47 = scmp.ge.s32.totalorder %s46, 4
      %s48 = scalar_select %p47, 0, %s46
      %s49 = sadd.s32 1, %s40
      %s50 = scalar_select %p47, %s49, %s40
      %p51 = scmp.ge.s32.totalorder %s50, 2
      %s52 = scalar_select %p51, 0, %s50
      %s53 = ssub.s32 %s40, %s52
      %p54 = scmp.eq.s32.totalorder %s53, 0
      %s56 = sadd.s32 %s55, 1
      %s57 = scalar_select %p54, %s55, %s56
      %p60 = pneg %p54
      %p61 = scmp.eq.s32.totalorder %s33, 7
      %p62 = por %p60, %p61
      %p63 = scmp.ne.s32.totalorder %s55, %s58
      %p64 = scmp.eq.s32.totalorder %s33, 0
      %p65 = por %p63, %p64
      %p66 = scmp.ne.s32.totalorder %s55, %s58
      %p67 = scmp.eq.s32.totalorder %s38, 7
      %p68 = por %p66, %p67
      %p69 = scmp.ne.s32.totalorder %s58, %s59
      %p70 = scmp.eq.s32.totalorder %s38, 0
      %p71 = por %p69, %p70
      %p72 = scmp.ne.s32.totalorder %s58, %s59
      %p73 = scmp.eq.s32.totalorder %s39, 7
      %p74 = por %p72, %p73
      %p76 = scmp.ne.s32.totalorder %s59, %s75
      %p77 = scmp.eq.s32.totalorder %s39, 0
      %p78 = por %p76, %p77
      %s80 = sadd.s32 %s79, 1
      %p83 = scmp.eq.s32.totalorder %s33, 7
      %p84 = scmp.ne.s32.totalorder %s79, %s81
      %p85 = scmp.eq.s32.totalorder %s33, 0
      %p86 = por %p84, %p85
      %p87 = scmp.ne.s32.totalorder %s79, %s81
      %p88 = scmp.eq.s32.totalorder %s38, 7
      %p89 = por %p87, %p88
      %p90 = scmp.ne.s32.totalorder %s81, %s82
      %p91 = scmp.eq.s32.totalorder %s38, 0
      %p92 = por %p90, %p91
      %p93 = scmp.ne.s32.totalorder %s81, %s82
      %p94 = scmp.eq.s32.totalorder %s39, 7
      %p95 = por %p93, %p94
      %p97 = scmp.ne.s32.totalorder %s82, %s96
      %p98 = scmp.eq.s32.totalorder %s39, 0
      %p99 = por %p97, %p98
      %s101 = sadd.s32 %s100, 1
      %p104 = scmp.eq.s32.totalorder %s33, 7
      %p105 = scmp.ne.s32.totalorder %s100, %s102
      %p106 = scmp.eq.s32.totalorder %s33, 0
      %p107 = por %p105, %p106
      %p108 = scmp.ne.s32.totalorder %s100, %s102
      %p109 = scmp.eq.s32.totalorder %s38, 7
      %p110 = por %p108, %p109
      %p111 = scmp.ne.s32.totalorder %s102, %s103
      %p112 = scmp.eq.s32.totalorder %s38, 0
      %p113 = por %p111, %p112
      %p114 = scmp.ne.s32.totalorder %s102, %s103
      %p115 = scmp.eq.s32.totalorder %s39, 7
      %p116 = por %p114, %p115
      %p118 = scmp.ne.s32.totalorder %s103, %s117
      %p119 = scmp.eq.s32.totalorder %s39, 0
      %p120 = por %p118, %p119
      %s122 = sadd.s32 %s121, 1
      %p125 = scmp.eq.s32.totalorder %s33, 7
      %p126 = scmp.ne.s32.totalorder %s121, %s123
      %p127 = scmp.eq.s32.totalorder %s33, 0
      %p128 = por %p126, %p127
      %p129 = scmp.ne.s32.totalorder %s121, %s123
      %p130 = scmp.eq.s32.totalorder %s38, 7
      %p131 = por %p129, %p130
      %p132 = scmp.ne.s32.totalorder %s123, %s124
      %p133 = scmp.eq.s32.totalorder %s38, 0
      %p134 = por %p132, %p133
      %p135 = scmp.ne.s32.totalorder %s123, %s124
      %p136 = scmp.eq.s32.totalorder %s39, 7
      %p137 = por %p135, %p136
      %p139 = scmp.ne.s32.totalorder %s124, %s138
      %p140 = scmp.eq.s32.totalorder %s39, 0
      %p141 = por %p139, %p140
      %s143 = sadd.s32 %s142, 1
      %p146 = scmp.eq.s32.totalorder %s33, 7
      %p147 = scmp.ne.s32.totalorder %s142, %s144
      %p148 = scmp.eq.s32.totalorder %s33, 0
      %p149 = por %p147, %p148
      %p150 = scmp.ne.s32.totalorder %s142, %s144
      %p151 = scmp.eq.s32.totalorder %s38, 7
      %p152 = por %p150, %p151
      %p153 = scmp.ne.s32.totalorder %s144, %s145
      %p154 = scmp.eq.s32.totalorder %s38, 0
      %p155 = por %p153, %p154
      %p156 = scmp.ne.s32.totalorder %s144, %s145
      %p157 = scmp.eq.s32.totalorder %s39, 7
      %p158 = por %p156, %p157
      %p160 = scmp.ne.s32.totalorder %s145, %s159
      %p161 = scmp.eq.s32.totalorder %s39, 0
      %p162 = por %p160, %p161
      %s164 = sadd.s32 %s163, 1
      %p167 = scmp.eq.s32.totalorder %s33, 7
      %p168 = scmp.ne.s32.totalorder %s163, %s165
      %p169 = scmp.eq.s32.totalorder %s33, 0
      %p170 = por %p168, %p169
      %p171 = scmp.ne.s32.totalorder %s163, %s165
      %p172 = scmp.eq.s32.totalorder %s38, 7
      %p173 = por %p171, %p172
      %p174 = scmp.ne.s32.totalorder %s165, %s166
      %p175 = scmp.eq.s32.totalorder %s38, 0
      %p176 = por %p174, %p175
      %p177 = scmp.ne.s32.totalorder %s165, %s166
      %p178 = scmp.eq.s32.totalorder %s39, 7
      %p179 = por %p177, %p178
      %p181 = scmp.ne.s32.totalorder %s166, %s180
      %p182 = scmp.eq.s32.totalorder %s39, 0
      %p183 = por %p181, %p182
      %s185 = sadd.s32 %s184, 1
      %p188 = scmp.eq.s32.totalorder %s33, 7
      %p189 = scmp.ne.s32.totalorder %s184, %s186
      %p190 = scmp.eq.s32.totalorder %s33, 0
      %p191 = por %p189, %p190
      %p192 = scmp.ne.s32.totalorder %s184, %s186
      %p193 = scmp.eq.s32.totalorder %s38, 7
      %p194 = por %p192, %p193
      %p195 = scmp.ne.s32.totalorder %s186, %s187
      %p196 = scmp.eq.s32.totalorder %s38, 0
      %p197 = por %p195, %p196
      %p198 = scmp.ne.s32.totalorder %s186, %s187
      %p199 = scmp.eq.s32.totalorder %s39, 7
      %p200 = por %p198, %p199
      %p202 = scmp.ne.s32.totalorder %s187, %s201
      %p203 = scmp.eq.s32.totalorder %s39, 0
      %p204 = por %p202, %p203
      %s206 = sadd.s32 %s205, 1
      %p209 = scmp.eq.s32.totalorder %s33, 7
      %p210 = scmp.ne.s32.totalorder %s205, %s207
      %p211 = scmp.eq.s32.totalorder %s33, 0
      %p212 = por %p210, %p211
      %p213 = scmp.ne.s32.totalorder %s205, %s207
      %p214 = scmp.eq.s32.totalorder %s38, 7
      %p215 = por %p213, %p214
      %p216 = scmp.ne.s32.totalorder %s207, %s208
      %p217 = scmp.eq.s32.totalorder %s38, 0
      %p218 = por %p216, %p217
      %p219 = scmp.ne.s32.totalorder %s207, %s208
      %p220 = scmp.eq.s32.totalorder %s39, 7
      %p221 = por %p219, %p220
      %p223 = scmp.ne.s32.totalorder %s208, %s222
      %p224 = scmp.eq.s32.totalorder %s39, 0
      %p225 = por %p223, %p224
      %s227 = sadd.s32 %s226, 1
      %p230 = scmp.eq.s32.totalorder %s33, 7
      %p231 = scmp.ne.s32.totalorder %s226, %s228
      %p232 = scmp.eq.s32.totalorder %s33, 0
      %p233 = por %p231, %p232
      %p234 = scmp.ne.s32.totalorder %s226, %s228
      %p235 = scmp.eq.s32.totalorder %s38, 7
      %p236 = por %p234, %p235
      %p237 = scmp.ne.s32.totalorder %s228, %s229
      %p238 = scmp.eq.s32.totalorder %s38, 0
      %p239 = por %p237, %p238
      %p240 = scmp.ne.s32.totalorder %s228, %s229
      %p241 = scmp.eq.s32.totalorder %s39, 7
      %p242 = por %p240, %p241
      %p244 = scmp.ne.s32.totalorder %s229, %s243
      %p245 = scmp.eq.s32.totalorder %s39, 0
      %p246 = por %p244, %p245
      %s247 = ssub.s32 %s41, %s48
      %p248 = scmp.eq.s32.totalorder %s247, 0
      %s250 = sadd.s32 %s249, 1
      %s251 = scalar_select %p248, %s249, %s250
      %p254 = pneg %p248
      %p255 = scmp.eq.s32.totalorder %s33, 7
      %p256 = por %p254, %p255
      %p257 = scmp.ne.s32.totalorder %s249, %s252
      %p258 = scmp.eq.s32.totalorder %s33, 0
      %p259 = por %p257, %p258
      %p260 = scmp.ne.s32.totalorder %s249, %s252
      %p261 = scmp.eq.s32.totalorder %s38, 7
      %p262 = por %p260, %p261
      %p263 = scmp.ne.s32.totalorder %s252, %s253
      %p264 = scmp.eq.s32.totalorder %s38, 0
      %p265 = por %p263, %p264
      %p266 = scmp.ne.s32.totalorder %s252, %s253
      %p267 = scmp.eq.s32.totalorder %s39, 7
      %p268 = por %p266, %p267
      %p270 = scmp.ne.s32.totalorder %s253, %s269
      %p271 = scmp.eq.s32.totalorder %s39, 0
      %p272 = por %p270, %p271
      %s274 = sadd.s32 %s273, 1
      %p277 = scmp.eq.s32.totalorder %s33, 7
      %p278 = scmp.ne.s32.totalorder %s273, %s275
      %p279 = scmp.eq.s32.totalorder %s33, 0
      %p280 = por %p278, %p279
      %p281 = scmp.ne.s32.totalorder %s273, %s275
      %p282 = scmp.eq.s32.totalorder %s38, 7
      %p283 = por %p281, %p282
      %p284 = scmp.ne.s32.totalorder %s275, %s276
      %p285 = scmp.eq.s32.totalorder %s38, 0
      %p286 = por %p284, %p285
      %p287 = scmp.ne.s32.totalorder %s275, %s276
      %p288 = scmp.eq.s32.totalorder %s39, 7
      %p289 = por %p287, %p288
      %p291 = scmp.ne.s32.totalorder %s276, %s290
      %p292 = scmp.eq.s32.totalorder %s39, 0
      %p293 = por %p291, %p292
      %s295 = sadd.s32 %s294, 1
      %p298 = scmp.eq.s32.totalorder %s33, 7
      %p299 = scmp.ne.s32.totalorder %s294, %s296
      %p300 = scmp.eq.s32.totalorder %s33, 0
      %p301 = por %p299, %p300
      %p302 = scmp.ne.s32.totalorder %s294, %s296
      %p303 = scmp.eq.s32.totalorder %s38, 7
      %p304 = por %p302, %p303
      %p305 = scmp.ne.s32.totalorder %s296, %s297
      %p306 = scmp.eq.s32.totalorder %s38, 0
      %p307 = por %p305, %p306
      %p308 = scmp.ne.s32.totalorder %s296, %s297
      %p309 = scmp.eq.s32.totalorder %s39, 7
      %p310 = por %p308, %p309
      %p312 = scmp.ne.s32.totalorder %s297, %s311
      %p313 = scmp.eq.s32.totalorder %s39, 0
      %p314 = por %p312, %p313
      %s316 = sadd.s32 %s315, 1
      %p319 = scmp.eq.s32.totalorder %s33, 7
      %p320 = scmp.ne.s32.totalorder %s315, %s317
      %p321 = scmp.eq.s32.totalorder %s33, 0
      %p322 = por %p320, %p321
      %p323 = scmp.ne.s32.totalorder %s315, %s317
      %p324 = scmp.eq.s32.totalorder %s38, 7
      %p325 = por %p323, %p324
      %p326 = scmp.ne.s32.totalorder %s317, %s318
      %p327 = scmp.eq.s32.totalorder %s38, 0
      %p328 = por %p326, %p327
      %p329 = scmp.ne.s32.totalorder %s317, %s318
      %p330 = scmp.eq.s32.totalorder %s39, 7
      %p331 = por %p329, %p330
      %p333 = scmp.ne.s32.totalorder %s318, %s332
      %p334 = scmp.eq.s32.totalorder %s39, 0
      %p335 = por %p333, %p334
      %s337 = sadd.s32 %s336, 1
      %p340 = scmp.eq.s32.totalorder %s33, 7
      %p341 = scmp.ne.s32.totalorder %s336, %s338
      %p342 = scmp.eq.s32.totalorder %s33, 0
      %p343 = por %p341, %p342
      %p344 = scmp.ne.s32.totalorder %s336, %s338
      %p345 = scmp.eq.s32.totalorder %s38, 7
      %p346 = por %p344, %p345
      %p347 = scmp.ne.s32.totalorder %s338, %s339
      %p348 = scmp.eq.s32.totalorder %s38, 0
      %p349 = por %p347, %p348
      %p350 = scmp.ne.s32.totalorder %s338, %s339
      %p351 = scmp.eq.s32.totalorder %s39, 7
      %p352 = por %p350, %p351
      %p354 = scmp.ne.s32.totalorder %s339, %s353
      %p355 = scmp.eq.s32.totalorder %s39, 0
      %p356 = por %p354, %p355
      %s357 = ssub.s32 %s40, %s52
      %s358 = ssub.s32 %s41, %s48
      %s359 = sor.u32 %s357, %s358
      %p360 = scmp.eq.s32.totalorder %s359, 0
      %s362 = sadd.s32 %s361, 1
      %s363 = scalar_select %p360, %s361, %s362
      %p366 = pneg %p360
      %p367 = scmp.eq.s32.totalorder %s33, 7
      %p368 = por %p366, %p367
      %p369 = scmp.ne.s32.totalorder %s361, %s364
      %p370 = scmp.eq.s32.totalorder %s33, 0
      %p371 = por %p369, %p370
      %p372 = scmp.ne.s32.totalorder %s361, %s364
      %p373 = scmp.eq.s32.totalorder %s38, 7
      %p374 = por %p372, %p373
      %p375 = scmp.ne.s32.totalorder %s364, %s365
      %p376 = scmp.eq.s32.totalorder %s38, 0
      %p377 = por %p375, %p376
      %p378 = scmp.ne.s32.totalorder %s364, %s365
      %p379 = scmp.eq.s32.totalorder %s39, 7
      %p380 = por %p378, %p379
      %p382 = scmp.ne.s32.totalorder %s365, %s381
      %p383 = scmp.eq.s32.totalorder %s39, 0
      %p384 = por %p382, %p383
      %s385 = ssub.s32 %s40, %s52
      %p386 = scmp.eq.s32.totalorder %s385, 0
      %s388 = sadd.s32 %s387, 1
      %s389 = scalar_select %p386, %s387, %s388
      %p392 = pneg %p386
      %p393 = scmp.eq.s32.totalorder %s33, 7
      %p394 = por %p392, %p393
      %p395 = scmp.ne.s32.totalorder %s387, %s390
      %p396 = scmp.eq.s32.totalorder %s33, 0
      %p397 = por %p395, %p396
      %p398 = scmp.ne.s32.totalorder %s387, %s390
      %p399 = scmp.eq.s32.totalorder %s38, 7
      %p400 = por %p398, %p399
      %p401 = scmp.ne.s32.totalorder %s390, %s391
      %p402 = scmp.eq.s32.totalorder %s38, 0
      %p403 = por %p401, %p402
      %p404 = scmp.ne.s32.totalorder %s390, %s391
      %p405 = scmp.eq.s32.totalorder %s39, 7
      %p406 = por %p404, %p405
      %p408 = scmp.ne.s32.totalorder %s391, %s407
      %p409 = scmp.eq.s32.totalorder %s39, 0
      %p410 = por %p408, %p409
      %p411 = scmp.le.s32.totalorder 1, %s33
      %p412 = scmp.lt.s32.totalorder %s33, 9
      %p413 = pnand %p411, %p412
      %p414 = pneg %p413
      // Predicated region
      $region9: #{endosam_forward.1} parent=5 // pred_check
        _
      $region10: #{endosam_forward.1} parent=5 // pred_check_branch
        %416 = sbr.rel (%p413) target = $region12
      $region11: #{endosam_forward.1} parent=5 // pred_region
        %s417 = ssub.s32 %s33, 1
        // Predicated region
        $region13: #{endosam_forward.1} parent=11 // pred_check
          %p418 = pneg %p92
        $region14: #{endosam_forward.1} parent=11 // pred_check_branch
          %420 = sbr.rel (%p418) target = $region16
        $region15: #{endosam_forward.1} parent=11 // pred_region
          _
        $region16: #{endosam_forward.1} parent=11 // pred_fallthru
          _
        // Predicated region
        $region17: #{endosam_forward.1} parent=11 // pred_check
          %p421 = pneg %p113
        $region18: #{endosam_forward.1} parent=11 // pred_check_branch
          %423 = sbr.rel (%p421) target = $region20
        $region19: #{endosam_forward.1} parent=11 // pred_region
          _
        $region20: #{endosam_forward.1} parent=11 // pred_fallthru
          _
        // Predicated region
        $region21: #{endosam_forward.1} parent=11 // pred_check
          %p424 = pneg %p134
        $region22: #{endosam_forward.1} parent=11 // pred_check_branch
          %426 = sbr.rel (%p424) target = $region24
        $region23: #{endosam_forward.1} parent=11 // pred_region
          %s428 = ssub.s32 64, 64
          %429 = vsyncadd [#allocation5], %s428
          %s431 = sshll.u32 [#allocation4], 4
          %s432 = int_to_ptr.vmem [resolvable:$true] %s431
          %434 = dma.hbm_to_vmem [thread:$0]  %s3, 64, %s432, [#allocation5]
        $region24: #{endosam_forward.1} parent=11 // pred_fallthru
          _
        // Predicated region
        $region25: #{endosam_forward.1} parent=11 // pred_check
          %p435 = pneg %p155
        $region26: #{endosam_forward.1} parent=11 // pred_check_branch
          %437 = sbr.rel (%p435) target = $region28
        $region27: #{endosam_forward.1} parent=11 // pred_region
          _
        $region28: #{endosam_forward.1} parent=11 // pred_fallthru
          _
        // Predicated region
        $region29: #{endosam_forward.1} parent=11 // pred_check
          %p438 = pneg %p176
        $region30: #{endosam_forward.1} parent=11 // pred_check_branch
          %440 = sbr.rel (%p438) target = $region32
        $region31: #{endosam_forward.1} parent=11 // pred_region
          %s442 = ssub.s32 2048, 2048
          %443 = vsyncadd [#allocation8], %s442
          %s444 = sshll.u32 [#allocation7], 4
          %s445 = int_to_ptr.vmem [resolvable:$true] %s444
          %450 = dma.hbm_to_vmem [thread:$0]  %s5, 2048, %s445, [#allocation8], 128, 128, 8
        $region32: #{endosam_forward.1} parent=11 // pred_fallthru
          _
        // Predicated region
        $region33: #{endosam_forward.1} parent=11 // pred_check
          %p451 = pneg %p197
        $region34: #{endosam_forward.1} parent=11 // pred_check_branch
          %453 = sbr.rel (%p451) target = $region36
        $region35: #{endosam_forward.1} parent=11 // pred_region
          _
        $region36: #{endosam_forward.1} parent=11 // pred_fallthru
          _
        // Predicated region
        $region37: #{endosam_forward.1} parent=11 // pred_check
          %p454 = pneg %p218
        $region38: #{endosam_forward.1} parent=11 // pred_check_branch
          %456 = sbr.rel (%p454) target = $region40
        $region39: #{endosam_forward.1} parent=11 // pred_region
          %s458 = ssub.s32 2048, 2048
          %459 = vsyncadd [#allocation8], %s458
          %s460 = sshll.u32 [#allocation9], 4
          %s461 = int_to_ptr.vmem [resolvable:$true] %s460
          %466 = dma.hbm_to_vmem [thread:$0]  %s7, 2048, %s461, [#allocation8], 64, 64, 4
        $region40: #{endosam_forward.1} parent=11 // pred_fallthru
          _
        // Predicated region
        $region41: #{endosam_forward.1} parent=11 // pred_check
          %p467 = pneg %p239
        $region42: #{endosam_forward.1} parent=11 // pred_check_branch
          %469 = sbr.rel (%p467) target = $region44
        $region43: #{endosam_forward.1} parent=11 // pred_region
          _
        $region44: #{endosam_forward.1} parent=11 // pred_fallthru
          _
        // Predicated region
        $region45: #{endosam_forward.1} parent=11 // pred_check
          %p470 = pneg %p286
        $region46: #{endosam_forward.1} parent=11 // pred_check_branch
          %472 = sbr.rel (%p470) target = $region48
        $region47: #{endosam_forward.1} parent=11 // pred_region
          _
        $region48: #{endosam_forward.1} parent=11 // pred_fallthru
          _
        // Predicated region
        $region49: #{endosam_forward.1} parent=11 // pred_check
          %p473 = pneg %p307
        $region50: #{endosam_forward.1} parent=11 // pred_check_branch
          %475 = sbr.rel (%p473) target = $region52
        $region51: #{endosam_forward.1} parent=11 // pred_region
          %s477 = ssub.s32 128, 128
          %478 = vsyncadd [#allocation11], %s477
          %s480 = sshll.u32 [#allocation12], 4
          %s481 = int_to_ptr.vmem [resolvable:$true] %s480
          %483 = dma.hbm_to_vmem [thread:$0]  %s11, 128, %s481, [#allocation11]
        $region52: #{endosam_forward.1} parent=11 // pred_fallthru
          _
        // Predicated region
        $region53: #{endosam_forward.1} parent=11 // pred_check
          %p484 = pneg %p328
        $region54: #{endosam_forward.1} parent=11 // pred_check_branch
          %486 = sbr.rel (%p484) target = $region56
        $region55: #{endosam_forward.1} parent=11 // pred_region
          _
        $region56: #{endosam_forward.1} parent=11 // pred_fallthru
          _
        // Predicated region
        $region57: #{endosam_forward.1} parent=11 // pred_check
          %p487 = pneg %p349
        $region58: #{endosam_forward.1} parent=11 // pred_check_branch
          %489 = sbr.rel (%p487) target = $region60
        $region59: #{endosam_forward.1} parent=11 // pred_region
          %s491 = ssub.s32 256, 256
          %492 = vsyncadd [#allocation14], %s491
          %s494 = sshll.u32 [#allocation13], 4
          %s495 = int_to_ptr.vmem [resolvable:$true] %s494
          %497 = dma.hbm_to_vmem [thread:$0]  %s13, 256, %s495, [#allocation14]
        $region60: #{endosam_forward.1} parent=11 // pred_fallthru
          _
      $region12: #{endosam_forward.1} parent=5 // pred_fallthru
        _
      %p498 = scmp.lt.s32.totalorder %s33, 8
      // Predicated region
      $region61: #{endosam_forward.1} parent=5 // pred_check
        %p499 = pneg %p498
      $region62: #{endosam_forward.1} parent=5 // pred_check_branch
        %501 = sbr.rel (%p499) target = $region64
      $region63: #{endosam_forward.1} parent=5 // pred_region
        // Predicated region
        $region65: #{endosam_forward.1} parent=63 // pred_check
          %p502 = pneg %p65
        $region66: #{endosam_forward.1} parent=63 // pred_check_branch
          %504 = sbr.rel (%p502) target = $region68
        $region67: #{endosam_forward.1} parent=63 // pred_region
          %p505 = scmp.lt.s32.totalorder %s40, 1
          %s506 = scalar_select %p505, %s40, 1
          %s507 = smul.addr %s506, 32
          %s508 = smul.addr %s507, 8
          %s509 = scalar_lea.vmem %s0, %s508
        $region68: #{endosam_forward.1} parent=63 // pred_fallthru
          _
        // Predicated region
        $region69: #{endosam_forward.1} parent=63 // pred_check
          %p510 = pneg %p259
        $region70: #{endosam_forward.1} parent=63 // pred_check_branch
          %512 = sbr.rel (%p510) target = $region72
        $region71: #{endosam_forward.1} parent=63 // pred_region
          %s513 = sand.u32 %s33, 1
          %s514 = scalar_lea.sflag [#allocation11], %s513
          %s515 = sand.u32 %s249, 1
          %s516 = smul.addr %s515, 512
          %s517 = scalar_lea.vmem [#allocation10], %s516
          %s518 = smul.u32 128, %s41
          %s520 = ssub.s32 8192, 8192
          %521 = vsyncadd %s514, %s520
          %s522 = smul.addr %s518, 64
          %s523 = scalar_lea.hbm %s9, %s522
          %s524 = sshll.u32 %s517, 4
          %s525 = int_to_ptr.vmem [resolvable:$true] %s524
          %530 = dma.hbm_to_vmem [thread:$0]  %s523, 8192, %s525, %s514, 64, 64, 4
        $region72: #{endosam_forward.1} parent=63 // pred_fallthru
          _
      $region64: #{endosam_forward.1} parent=5 // pred_fallthru
        _
      %p531 = scmp.le.s32.totalorder 1, %s33
      %p532 = scmp.lt.s32.totalorder %s33, 9
      %p533 = pnand %p531, %p532
      %p534 = pneg %p533
      // Predicated region
      $region73: #{endosam_forward.1} parent=5 // pred_check
        _
      $region74: #{endosam_forward.1} parent=5 // pred_check_branch
        %536 = sbr.rel (%p533) target = $region76
      $region75: #{endosam_forward.1} parent=5 // pred_region
        %s537 = ssub.s32 %s33, 1
        // Predicated region
        $region77: #{endosam_forward.1} parent=75 // pred_check
          %p538 = pneg %p134
        $region78: #{endosam_forward.1} parent=75 // pred_check_branch
          %540 = sbr.rel (%p538) target = $region80
        $region79: #{endosam_forward.1} parent=75 // pred_region
          %541 = dma.done [#allocation5], 64
        $region80: #{endosam_forward.1} parent=75 // pred_fallthru
          _
        // Predicated region
        $region81: #{endosam_forward.1} parent=75 // pred_check
          %p542 = pneg %p176
        $region82: #{endosam_forward.1} parent=75 // pred_check_branch
          %544 = sbr.rel (%p542) target = $region84
        $region83: #{endosam_forward.1} parent=75 // pred_region
          %545 = dma.done [#allocation8], 2048
        $region84: #{endosam_forward.1} parent=75 // pred_fallthru
          _
        // Predicated region
        $region85: #{endosam_forward.1} parent=75 // pred_check
          %p546 = pneg %p218
        $region86: #{endosam_forward.1} parent=75 // pred_check_branch
          %548 = sbr.rel (%p546) target = $region88
        $region87: #{endosam_forward.1} parent=75 // pred_region
          %549 = dma.done [#allocation8], 2048
        $region88: #{endosam_forward.1} parent=75 // pred_fallthru
          _
        %s550 = sand.u32 %s38, 1
        %s551 = scalar_lea.sflag [#allocation11], %s550
        %s552 = sand.u32 %s252, 1
        %s553 = smul.addr %s552, 512
        %s554 = scalar_lea.vmem [#allocation10], %s553
        // Predicated region
        $region89: #{endosam_forward.1} parent=75 // pred_check
          %p555 = pneg %p265
        $region90: #{endosam_forward.1} parent=75 // pred_check_branch
          %557 = sbr.rel (%p555) target = $region92
        $region91: #{endosam_forward.1} parent=75 // pred_region
          %558 = dma.done %s551, 8192
        $region92: #{endosam_forward.1} parent=75 // pred_fallthru
          _
        // Predicated region
        $region93: #{endosam_forward.1} parent=75 // pred_check
          %p559 = pneg %p307
        $region94: #{endosam_forward.1} parent=75 // pred_check_branch
          %561 = sbr.rel (%p559) target = $region96
        $region95: #{endosam_forward.1} parent=75 // pred_region
          %562 = dma.done [#allocation11], 128
        $region96: #{endosam_forward.1} parent=75 // pred_fallthru
          _
        // Predicated region
        $region97: #{endosam_forward.1} parent=75 // pred_check
          %p563 = pneg %p349
        $region98: #{endosam_forward.1} parent=75 // pred_check_branch
          %565 = sbr.rel (%p563) target = $region100
        $region99: #{endosam_forward.1} parent=75 // pred_region
          %566 = dma.done [#allocation14], 256
        $region100: #{endosam_forward.1} parent=75 // pred_fallthru
          _
        %p567 = scmp.lt.s32.totalorder %s42, 1
        %s568 = scalar_select %p567, %s42, 1
        %s569 = smul.addr %s568, 32
        %s570 = smul.addr %s569, 8
        %s571 = scalar_lea.vmem %s0, %s570
        %p572 = pneg %p71
        %p573 = pneg %p68
        %p574 = pneg %p92
        %p575 = pneg %p89
        %p576 = pneg %p113
        %p577 = pneg %p110
        %p578 = pneg %p134
        %p579 = pneg %p131
        %p580 = pneg %p155
        %p581 = pneg %p152
        %p582 = pneg %p176
        %p583 = pneg %p173
        %p584 = pneg %p197
        %p585 = pneg %p194
        %p586 = pneg %p218
        %p587 = pneg %p215
        %p588 = pneg %p239
        %p589 = pneg %p236
        %s590 = sand.u32 %s38, 1
        %s591 = scalar_lea.sflag [#allocation11], %s590
        %s592 = sand.u32 %s252, 1
        %s593 = smul.addr %s592, 512
        %s594 = scalar_lea.vmem [#allocation10], %s593
        %p595 = pneg %p265
        %p596 = pneg %p262
        %p597 = pneg %p286
        %p598 = pneg %p283
        %p599 = pneg %p307
        %p600 = pneg %p304
        %p601 = pneg %p328
        %p602 = pneg %p325
        %p603 = pneg %p349
        %p604 = pneg %p346
        %p605 = pneg %p377
        %p606 = pneg %p374
        %s607 = sand.u32 %s364, 1
        %s608 = sand.u32 %s364, 1
        %s609 = smul.addr %s608, 2048
        %s610 = scalar_lea.vmem [#allocation15], %s609
        %p611 = pneg %p403
        %p612 = pneg %p400
        %s613 = sand.u32 %s390, 1
        %s614 = scalar_lea.sflag [#allocation6], %s613
        %s615 = sand.u32 %s390, 1
        %s616 = smul.addr %s615, 16
        %s617 = scalar_lea.vmem [#allocation16], %s616
        %p618 = scmp.lt.s32.totalorder %s42, 1
        %s619 = scalar_select %p618, %s42, 1
        %s620 = smul.addr %s619, 32
        %s621 = smul.addr %s620, 8
        %s622 = scalar_lea.vmem %s0, %s621
        %s623 = smul.u32 128, %s43
        %s624 = smul.u32 8, %s43
        %p626 = scmp.eq.s32.totalorder %s43, 0
        // Predicated region
        $region101: #{endosam_forward.1} parent=75 // pred_check
          %p627 = pneg %p626
        $region102: #{endosam_forward.1} parent=75 // pred_check_branch
          %629 = sbr.rel (%p627) target = $region104
        $region103: #{endosam_forward.1} parent=75 // pred_region
          %630 = vst [vmem:[#allocation2] sm:$0xff] 0.0
          %631 = vst [vmem:[#allocation2 + $0x8] sm:$0xff] 0.0
          %632 = vst [vmem:[#allocation2 + $0x10] sm:$0xff] 0.0
          %633 = vst [vmem:[#allocation2 + $0x18] sm:$0xff] 0.0
          %634 = vst [vmem:[#allocation2 + $0x20] sm:$0xff] 0.0
          %635 = vst [vmem:[#allocation2 + $0x28] sm:$0xff] 0.0
          %636 = vst [vmem:[#allocation2 + $0x30] sm:$0xff] 0.0
          %637 = vst [vmem:[#allocation2 + $0x38] sm:$0xff] 0.0
          %638 = vst [vmem:[#allocation2 + $0x40] sm:$0xff] 0.0
          %639 = vst [vmem:[#allocation2 + $0x48] sm:$0xff] 0.0
          %640 = vst [vmem:[#allocation2 + $0x50] sm:$0xff] 0.0
          %641 = vst [vmem:[#allocation2 + $0x58] sm:$0xff] 0.0
          %642 = vst [vmem:[#allocation2 + $0x60] sm:$0xff] 0.0
          %643 = vst [vmem:[#allocation2 + $0x68] sm:$0xff] 0.0
          %644 = vst [vmem:[#allocation2 + $0x70] sm:$0xff] 0.0
          %645 = vst [vmem:[#allocation2 + $0x78] sm:$0xff] 0.0
          %646 = vst [vmem:[#allocation2 + $0x80] sm:$0xff] 0.0
          %647 = vst [vmem:[#allocation2 + $0x88] sm:$0xff] 0.0
          %648 = vst [vmem:[#allocation2 + $0x90] sm:$0xff] 0.0
          %649 = vst [vmem:[#allocation2 + $0x98] sm:$0xff] 0.0
          %650 = vst [vmem:[#allocation2 + $0xa0] sm:$0xff] 0.0
          %651 = vst [vmem:[#allocation2 + $0xa8] sm:$0xff] 0.0
          %652 = vst [vmem:[#allocation2 + $0xb0] sm:$0xff] 0.0
          %653 = vst [vmem:[#allocation2 + $0xb8] sm:$0xff] 0.0
          %654 = vst [vmem:[#allocation2 + $0xc0] sm:$0xff] 0.0
          %655 = vst [vmem:[#allocation2 + $0xc8] sm:$0xff] 0.0
          %656 = vst [vmem:[#allocation2 + $0xd0] sm:$0xff] 0.0
          %657 = vst [vmem:[#allocation2 + $0xd8] sm:$0xff] 0.0
          %658 = vst [vmem:[#allocation2 + $0xe0] sm:$0xff] 0.0
          %659 = vst [vmem:[#allocation2 + $0xe8] sm:$0xff] 0.0
          %660 = vst [vmem:[#allocation2 + $0xf0] sm:$0xff] 0.0
          %661 = vst [vmem:[#allocation2 + $0xf8] sm:$0xff] 0.0
        $region104: #{endosam_forward.1} parent=75 // pred_fallthru
          _
        %s662 = smul.u32 %s43, 1024
        %s663 = sshra.s32 %s662, 7
        %s664 = sand.u32 %s662, 127
        %s665 = smul.addr %s663, 8
        %s666 = scalar_lea.vmem %s622, %s665
        %v667 = vld [vmem:[%s666] sm:$0xff]
        %v668 = vld [vmem:[%s666 + $0x8] sm:$0xff]
        %v669 = vld [vmem:[%s666 + $0x10] sm:$0xff]
        %v670 = vld [vmem:[%s666 + $0x18] sm:$0xff]
        %v671 = vld [vmem:[%s666 + $0x20] sm:$0xff]
        %v672 = vld [vmem:[%s666 + $0x28] sm:$0xff]
        %v673 = vld [vmem:[%s666 + $0x30] sm:$0xff]
        %v674 = vld [vmem:[%s666 + $0x38] sm:$0xff]
        %v675 = vpack.c.bf16 %v667, %v667
        %v676 = vpack.c.bf16 %v668, %v668
        %v677 = vpack.c.bf16 %v669, %v669
        %v678 = vpack.c.bf16 %v670, %v670
        %v679 = vpack.c.bf16 %v671, %v671
        %v680 = vpack.c.bf16 %v672, %v672
        %v681 = vpack.c.bf16 %v673, %v673
        %v682 = vpack.c.bf16 %v674, %v674
        %v683 = vld [vmem:[%s1] sm:$0xf]
        %v684 = vld [vmem:[%s1 + $0x4] sm:$0xf]
        %v685 = vld [vmem:[%s1 + $0x8] sm:$0xf]
        %v686 = vld [vmem:[%s1 + $0xc] sm:$0xf]
        %v687 = vld [vmem:[%s1 + $0x10] sm:$0xf]
        %v688 = vld [vmem:[%s1 + $0x14] sm:$0xf]
        %v689 = vld [vmem:[%s1 + $0x18] sm:$0xf]
        %v690 = vld [vmem:[%s1 + $0x1c] sm:$0xf]
        %v691 = vld [vmem:[%s1 + $0x20] sm:$0xf]
        %v692 = vld [vmem:[%s1 + $0x24] sm:$0xf]
        %v693 = vld [vmem:[%s1 + $0x28] sm:$0xf]
        %v694 = vld [vmem:[%s1 + $0x2c] sm:$0xf]
        %v695 = vld [vmem:[%s1 + $0x30] sm:$0xf]
        %v696 = vld [vmem:[%s1 + $0x34] sm:$0xf]
        %v697 = vld [vmem:[%s1 + $0x38] sm:$0xf]
        %v698 = vld [vmem:[%s1 + $0x3c] sm:$0xf]
        %v699 = vld [vmem:[%s1 + $0x40] sm:$0xf]
        %v700 = vld [vmem:[%s1 + $0x44] sm:$0xf]
        %v701 = vld [vmem:[%s1 + $0x48] sm:$0xf]
        %v702 = vld [vmem:[%s1 + $0x4c] sm:$0xf]
        %v703 = vld [vmem:[%s1 + $0x50] sm:$0xf]
        %v704 = vld [vmem:[%s1 + $0x54] sm:$0xf]
        %v705 = vld [vmem:[%s1 + $0x58] sm:$0xf]
        %v706 = vld [vmem:[%s1 + $0x5c] sm:$0xf]
        %v707 = vld [vmem:[%s1 + $0x60] sm:$0xf]
        %v708 = vld [vmem:[%s1 + $0x64] sm:$0xf]
        %v709 = vld [vmem:[%s1 + $0x68] sm:$0xf]
        %v710 = vld [vmem:[%s1 + $0x6c] sm:$0xf]
        %v711 = vld [vmem:[%s1 + $0x70] sm:$0xf]
        %v712 = vld [vmem:[%s1 + $0x74] sm:$0xf]
        %v713 = vld [vmem:[%s1 + $0x78] sm:$0xf]
        %v714 = vld [vmem:[%s1 + $0x7c] sm:$0xf]
        %v715 = vld [vmem:[%s2] sm:$0xff]
        %v716 = vld [vmem:[%s2 + $0x8] sm:$0xff]
        %v717 = vld [vmem:[%s2 + $0x10] sm:$0xff]
        %v718 = vld [vmem:[%s2 + $0x18] sm:$0xff]
        %v719 = vld [vmem:[%s2 + $0x20] sm:$0xff]
        %v720 = vld [vmem:[%s2 + $0x28] sm:$0xff]
        %v721 = vld [vmem:[%s2 + $0x30] sm:$0xff]
        %v722 = vld [vmem:[%s2 + $0x38] sm:$0xff]
        %v723 = vld [vmem:[%s2 + $0x40] sm:$0xff]
        %v724 = vld [vmem:[%s2 + $0x48] sm:$0xff]
        %v725 = vld [vmem:[%s2 + $0x50] sm:$0xff]
        %v726 = vld [vmem:[%s2 + $0x58] sm:$0xff]
        %v727 = vld [vmem:[%s2 + $0x60] sm:$0xff]
        %v728 = vld [vmem:[%s2 + $0x68] sm:$0xff]
        %v729 = vld [vmem:[%s2 + $0x70] sm:$0xff]
        %v730 = vld [vmem:[%s2 + $0x78] sm:$0xff]
        %v731 = vld [vmem:[%s2 + $0x80] sm:$0xff]
        %v732 = vld [vmem:[%s2 + $0x88] sm:$0xff]
        %v733 = vld [vmem:[%s2 + $0x90] sm:$0xff]
        %v734 = vld [vmem:[%s2 + $0x98] sm:$0xff]
        %v735 = vld [vmem:[%s2 + $0xa0] sm:$0xff]
        %v736 = vld [vmem:[%s2 + $0xa8] sm:$0xff]
        %v737 = vld [vmem:[%s2 + $0xb0] sm:$0xff]
        %v738 = vld [vmem:[%s2 + $0xb8] sm:$0xff]
        %v739 = vld [vmem:[%s2 + $0xc0] sm:$0xff]
        %v740 = vld [vmem:[%s2 + $0xc8] sm:$0xff]
        %v741 = vld [vmem:[%s2 + $0xd0] sm:$0xff]
        %v742 = vld [vmem:[%s2 + $0xd8] sm:$0xff]
        %v743 = vld [vmem:[%s2 + $0xe0] sm:$0xff]
        %v744 = vld [vmem:[%s2 + $0xe8] sm:$0xff]
        %v745 = vld [vmem:[%s2 + $0xf0] sm:$0xff]
        %v746 = vld [vmem:[%s2 + $0xf8] sm:$0xff]
        %748 = vset.pattern.permute.xlu0 0
        %749 = vperm.xlu0 %748, %v715
        %v750 = vpop.permute.xlu0 %749
        %753 = vset.pattern.permute.xlu0 0
        %754 = vperm.xlu0 %753, %v716
        %v755 = vpop.permute.xlu0 %754
        %758 = vset.pattern.permute.xlu0 0
        %759 = vperm.xlu0 %758, %v717
        %v760 = vpop.permute.xlu0 %759
        %763 = vset.pattern.permute.xlu0 0
        %764 = vperm.xlu0 %763, %v718
        %v765 = vpop.permute.xlu0 %764
        %768 = vset.pattern.permute.xlu0 0
        %769 = vperm.xlu0 %768, %v719
        %v770 = vpop.permute.xlu0 %769
        %773 = vset.pattern.permute.xlu0 0
        %774 = vperm.xlu0 %773, %v720
        %v775 = vpop.permute.xlu0 %774
        %778 = vset.pattern.permute.xlu0 0
        %779 = vperm.xlu0 %778, %v721
        %v780 = vpop.permute.xlu0 %779
        %783 = vset.pattern.permute.xlu0 0
        %784 = vperm.xlu0 %783, %v722
        %v785 = vpop.permute.xlu0 %784
        %788 = vset.pattern.permute.xlu0 0
        %789 = vperm.xlu0 %788, %v723
        %v790 = vpop.permute.xlu0 %789
        %793 = vset.pattern.permute.xlu0 0
        %794 = vperm.xlu0 %793, %v724
        %v795 = vpop.permute.xlu0 %794
        %798 = vset.pattern.permute.xlu0 0
        %799 = vperm.xlu0 %798, %v725
        %v800 = vpop.permute.xlu0 %799
        %803 = vset.pattern.permute.xlu0 0
        %804 = vperm.xlu0 %803, %v726
        %v805 = vpop.permute.xlu0 %804
        %808 = vset.pattern.permute.xlu0 0
        %809 = vperm.xlu0 %808, %v727
        %v810 = vpop.permute.xlu0 %809
        %813 = vset.pattern.permute.xlu0 0
        %814 = vperm.xlu0 %813, %v728
        %v815 = vpop.permute.xlu0 %814
        %818 = vset.pattern.permute.xlu0 0
        %819 = vperm.xlu0 %818, %v729
        %v820 = vpop.permute.xlu0 %819
        %823 = vset.pattern.permute.xlu0 0
        %824 = vperm.xlu0 %823, %v730
        %v825 = vpop.permute.xlu0 %824
        %828 = vset.pattern.permute.xlu0 0
        %829 = vperm.xlu0 %828, %v731
        %v830 = vpop.permute.xlu0 %829
        %833 = vset.pattern.permute.xlu0 0
        %834 = vperm.xlu0 %833, %v732
        %v835 = vpop.permute.xlu0 %834
        %838 = vset.pattern.permute.xlu0 0
        %839 = vperm.xlu0 %838, %v733
        %v840 = vpop.permute.xlu0 %839
        %843 = vset.pattern.permute.xlu0 0
        %844 = vperm.xlu0 %843, %v734
        %v845 = vpop.permute.xlu0 %844
        %848 = vset.pattern.permute.xlu0 0
        %849 = vperm.xlu0 %848, %v735
        %v850 = vpop.permute.xlu0 %849
        %853 = vset.pattern.permute.xlu0 0
        %854 = vperm.xlu0 %853, %v736
        %v855 = vpop.permute.xlu0 %854
        %858 = vset.pattern.permute.xlu0 0
        %859 = vperm.xlu0 %858, %v737
        %v860 = vpop.permute.xlu0 %859
        %863 = vset.pattern.permute.xlu0 0
        %864 = vperm.xlu0 %863, %v738
        %v865 = vpop.permute.xlu0 %864
        %868 = vset.pattern.permute.xlu0 0
        %869 = vperm.xlu0 %868, %v739
        %v870 = vpop.permute.xlu0 %869
        %873 = vset.pattern.permute.xlu0 0
        %874 = vperm.xlu0 %873, %v740
        %v875 = vpop.permute.xlu0 %874
        %878 = vset.pattern.permute.xlu0 0
        %879 = vperm.xlu0 %878, %v741
        %v880 = vpop.permute.xlu0 %879
        %883 = vset.pattern.permute.xlu0 0
        %884 = vperm.xlu0 %883, %v742
        %v885 = vpop.permute.xlu0 %884
        %888 = vset.pattern.permute.xlu0 0
        %889 = vperm.xlu0 %888, %v743
        %v890 = vpop.permute.xlu0 %889
        %893 = vset.pattern.permute.xlu0 0
        %894 = vperm.xlu0 %893, %v744
        %v895 = vpop.permute.xlu0 %894
        %898 = vset.pattern.permute.xlu0 0
        %899 = vperm.xlu0 %898, %v745
        %v900 = vpop.permute.xlu0 %899
        %903 = vset.pattern.permute.xlu0 0
        %904 = vperm.xlu0 %903, %v746
        %v905 = vpop.permute.xlu0 %904
        %v939 = vunpack.c.l.b16 %v683
        %v940 = vunpack.c.l.b16 %v684
        %v941 = vunpack.c.l.b16 %v685
        %v942 = vunpack.c.l.b16 %v686
        %v943 = vunpack.c.l.b16 %v687
        %v944 = vunpack.c.l.b16 %v688
        %v945 = vunpack.c.l.b16 %v689
        %v946 = vunpack.c.l.b16 %v690
        %v947 = vunpack.c.l.b16 %v691
        %v948 = vunpack.c.l.b16 %v692
        %v949 = vunpack.c.l.b16 %v693
        %v950 = vunpack.c.l.b16 %v694
        %v951 = vunpack.c.l.b16 %v695
        %v952 = vunpack.c.l.b16 %v696
        %v953 = vunpack.c.l.b16 %v697
        %v954 = vunpack.c.l.b16 %v698
        %v955 = vunpack.c.l.b16 %v699
        %v956 = vunpack.c.l.b16 %v700
        %v957 = vunpack.c.l.b16 %v701
        %v958 = vunpack.c.l.b16 %v702
        %v959 = vunpack.c.l.b16 %v703
        %v960 = vunpack.c.l.b16 %v704
        %v961 = vunpack.c.l.b16 %v705
        %v962 = vunpack.c.l.b16 %v706
        %v963 = vunpack.c.l.b16 %v707
        %v964 = vunpack.c.l.b16 %v708
        %v965 = vunpack.c.l.b16 %v709
        %v966 = vunpack.c.l.b16 %v710
        %v967 = vunpack.c.l.b16 %v711
        %v968 = vunpack.c.l.b16 %v712
        %v969 = vunpack.c.l.b16 %v713
        %v970 = vunpack.c.l.b16 %v714
        %v971 = vpack.c.b16 %v940, %v939
        %v972 = vpack.c.b16 %v942, %v941
        %v973 = vpack.c.b16 %v944, %v943
        %v974 = vpack.c.b16 %v946, %v945
        %v975 = vpack.c.b16 %v948, %v947
        %v976 = vpack.c.b16 %v950, %v949
        %v977 = vpack.c.b16 %v952, %v951
        %v978 = vpack.c.b16 %v954, %v953
        %v979 = vpack.c.b16 %v956, %v955
        %v980 = vpack.c.b16 %v958, %v957
        %v981 = vpack.c.b16 %v960, %v959
        %v982 = vpack.c.b16 %v962, %v961
        %v983 = vpack.c.b16 %v964, %v963
        %v984 = vpack.c.b16 %v966, %v965
        %v985 = vpack.c.b16 %v968, %v967
        %v986 = vpack.c.b16 %v970, %v969
        %vm987 = vcmask 64512
        %v989 = vsel %vm987, %v971, 0
        %v992 = vsel %vm987, %v972, 0
        %v995 = vsel %vm987, %v973, 0
        %v998 = vsel %vm987, %v974, 0
        %v1001 = vsel %vm987, %v975, 0
        %v1004 = vsel %vm987, %v976, 0
        %v1007 = vsel %vm987, %v977, 0
        %v1010 = vsel %vm987, %v978, 0
        %v1013 = vsel %vm987, %v979, 0
        %v1016 = vsel %vm987, %v980, 0
        %v1019 = vsel %vm987, %v981, 0
        %v1022 = vsel %vm987, %v982, 0
        %v1025 = vsel %vm987, %v983, 0
        %v1028 = vsel %vm987, %v984, 0
        %v1031 = vsel %vm987, %v985, 0
        %v1034 = vsel %vm987, %v986, 0
        %vm1036 = vcmask 1043456
        %v1038 = vsel %vm1036, %v675, 0
        %v1041 = vsel %vm1036, %v676, 0
        %v1044 = vsel %vm1036, %v677, 0
        %v1047 = vsel %vm1036, %v678, 0
        %v1050 = vsel %vm1036, %v679, 0
        %v1053 = vsel %vm1036, %v680, 0
        %v1056 = vsel %vm1036, %v681, 0
        %v1059 = vsel %vm1036, %v682, 0
        %1061 = vmatprep.subr.bf16.mxu0 0
        %1062 = vmatpush1.bf16.msra.mxu0 0
        %1063 = vmatprep.subr.bf16.mxu0 0
        %1064 = vmatpush1.bf16.msra.mxu0 0
        %1065 = vmatprep.subr.bf16.mxu0 0
        %1066 = vmatpush1.bf16.msra.mxu0 0
        %1067 = vmatprep.subr.bf16.mxu0 0
        %1068 = vmatpush1.bf16.msra.mxu0 0
        %1069 = vmatprep.subr.bf16.mxu0 0
        %1070 = vmatpush1.bf16.msra.mxu0 0
        %1071 = vmatprep.subr.bf16.mxu0 0
        %1072 = vmatpush1.bf16.msra.mxu0 0
        %1073 = vmatprep.subr.bf16.mxu0 0
        %1074 = vmatpush1.bf16.msra.mxu0 0
        %1075 = vmatprep.subr.bf16.mxu0 %v1041
        %1076 = vmatpush1.bf16.msra.mxu0 %v1038
        %1077 = vmatprep.subr.bf16.mxu0 0
        %1078 = vmatpush2.bf16.msra.mxu0 0
        %1079 = vmatprep.subr.bf16.mxu0 0
        %1080 = vmatpush2.bf16.msra.mxu0 0
        %1081 = vmatprep.subr.bf16.mxu0 0
        %1082 = vmatpush2.bf16.msra.mxu0 0
        %1083 = vmatprep.subr.bf16.mxu0 0
        %1084 = vmatpush2.bf16.msra.mxu0 0
        %1085 = vmatprep.subr.bf16.mxu0 0
        %1086 = vmatpush2.bf16.msra.mxu0 0
        %1087 = vmatprep.subr.bf16.mxu0 0
        %1088 = vmatpush2.bf16.msra.mxu0 0
        %1089 = vmatprep.subr.bf16.mxu0 0
        %1090 = vmatpush2.bf16.msra.mxu0 0
        %1091 = vmatprep.subr.bf16.mxu0 0
        %1092 = vmatpush2.bf16.msra.mxu0 0
        %1093 = vmatprep.mubr.bf16.mxu0 0
        %1094 = vmatmul.mubr.bf16.gmra.mxu0 %v989
        %v1095 = vpop.f32.mrf.mxu0
        %v1096 = vadd.f32 %v750, %v1095
        %v1097 = vpop.f32.mrf.mxu0
        %v1098 = vadd.f32 %v750, %v1097
        %v1099 = vpop.f32.mrf.mxu0
        %v1100 = vadd.f32 %v755, %v1099
        %v1101 = vpop.f32.mrf.mxu0
        %v1102 = vadd.f32 %v755, %v1101
        %1103 = vmatprep.mubr.bf16.mxu0 0
        %1104 = vmatmul.mubr.bf16.gmra.mxu0 %v992
        %v1105 = vpop.f32.mrf.mxu0
        %v1106 = vadd.f32 %v760, %v1105
        %v1107 = vpop.f32.mrf.mxu0
        %v1108 = vadd.f32 %v760, %v1107
        %v1109 = vpop.f32.mrf.mxu0
        %v1110 = vadd.f32 %v765, %v1109
        %v1111 = vpop.f32.mrf.mxu0
        %v1112 = vadd.f32 %v765, %v1111
        %1113 = vmatprep.mubr.bf16.mxu0 0
        %1114 = vmatmul.mubr.bf16.gmra.mxu0 %v995
        %v1115 = vpop.f32.mrf.mxu0
        %v1116 = vadd.f32 %v770, %v1115
        %v1117 = vpop.f32.mrf.mxu0
        %v1118 = vadd.f32 %v770, %v1117
        %v1119 = vpop.f32.mrf.mxu0
        %v1120 = vadd.f32 %v775, %v1119
        %v1121 = vpop.f32.mrf.mxu0
        %v1122 = vadd.f32 %v775, %v1121
        %1123 = vmatprep.mubr.bf16.mxu0 0
        %1124 = vmatmul.mubr.bf16.gmra.mxu0 %v998
        %v1125 = vpop.f32.mrf.mxu0
        %v1126 = vadd.f32 %v780, %v1125
        %v1127 = vpop.f32.mrf.mxu0
        %v1128 = vadd.f32 %v780, %v1127
        %v1129 = vpop.f32.mrf.mxu0
        %v1130 = vadd.f32 %v785, %v1129
        %v1131 = vpop.f32.mrf.mxu0
        %v1132 = vadd.f32 %v785, %v1131
        %1133 = vmatprep.mubr.bf16.mxu0 0
        %1134 = vmatmul.mubr.bf16.gmra.mxu0 %v1001
        %v1135 = vpop.f32.mrf.mxu0
        %v1136 = vadd.f32 %v790, %v1135
        %v1137 = vpop.f32.mrf.mxu0
        %v1138 = vadd.f32 %v790, %v1137
        %v1139 = vpop.f32.mrf.mxu0
        %v1140 = vadd.f32 %v795, %v1139
        %v1141 = vpop.f32.mrf.mxu0
        %v1142 = vadd.f32 %v795, %v1141
        %1143 = vmatprep.mubr.bf16.mxu0 0
        %1144 = vmatmul.mubr.bf16.gmra.mxu0 %v1004
        %v1145 = vpop.f32.mrf.mxu0
        %v1146 = vadd.f32 %v800, %v1145
        %v1147 = vpop.f32.mrf.mxu0
        %v1148 = vadd.f32 %v800, %v1147
        %v1149 = vpop.f32.mrf.mxu0
        %v1150 = vadd.f32 %v805, %v1149
        %v1151 = vpop.f32.mrf.mxu0
        %v1152 = vadd.f32 %v805, %v1151
        %1153 = vmatprep.mubr.bf16.mxu0 0
        %1154 = vmatmul.mubr.bf16.gmra.mxu0 %v1007
        %v1155 = vpop.f32.mrf.mxu0
        %v1156 = vadd.f32 %v810, %v1155
        %v1157 = vpop.f32.mrf.mxu0
        %v1158 = vadd.f32 %v810, %v1157
        %v1159 = vpop.f32.mrf.mxu0
        %v1160 = vadd.f32 %v815, %v1159
        %v1161 = vpop.f32.mrf.mxu0
        %v1162 = vadd.f32 %v815, %v1161
        %1163 = vmatprep.mubr.bf16.mxu0 0
        %1164 = vmatmul.mubr.bf16.gmra.mxu0 %v1010
        %v1165 = vpop.f32.mrf.mxu0
        %v1166 = vadd.f32 %v820, %v1165
        %v1167 = vpop.f32.mrf.mxu0
        %v1168 = vadd.f32 %v820, %v1167
        %v1169 = vpop.f32.mrf.mxu0
        %v1170 = vadd.f32 %v825, %v1169
        %v1171 = vpop.f32.mrf.mxu0
        %v1172 = vadd.f32 %v825, %v1171
        %1173 = vmatprep.mubr.bf16.mxu0 0
        %1174 = vmatmul.mubr.bf16.gmra.mxu0 %v1013
        %v1175 = vpop.f32.mrf.mxu0
        %v1176 = vadd.f32 %v830, %v1175
        %v1177 = vpop.f32.mrf.mxu0
        %v1178 = vadd.f32 %v830, %v1177
        %v1179 = vpop.f32.mrf.mxu0
        %v1180 = vadd.f32 %v835, %v1179
        %v1181 = vpop.f32.mrf.mxu0
        %v1182 = vadd.f32 %v835, %v1181
        %1183 = vmatprep.mubr.bf16.mxu0 0
        %1184 = vmatmul.mubr.bf16.gmra.mxu0 %v1016
        %v1185 = vpop.f32.mrf.mxu0
        %v1186 = vadd.f32 %v840, %v1185
        %v1187 = vpop.f32.mrf.mxu0
        %v1188 = vadd.f32 %v840, %v1187
        %v1189 = vpop.f32.mrf.mxu0
        %v1190 = vadd.f32 %v845, %v1189
        %v1191 = vpop.f32.mrf.mxu0
        %v1192 = vadd.f32 %v845, %v1191
        %1193 = vmatprep.mubr.bf16.mxu0 0
        %1194 = vmatmul.mubr.bf16.gmra.mxu0 %v1019
        %v1195 = vpop.f32.mrf.mxu0
        %v1196 = vadd.f32 %v850, %v1195
        %v1197 = vpop.f32.mrf.mxu0
        %v1198 = vadd.f32 %v850, %v1197
        %v1199 = vpop.f32.mrf.mxu0
        %v1200 = vadd.f32 %v855, %v1199
        %v1201 = vpop.f32.mrf.mxu0
        %v1202 = vadd.f32 %v855, %v1201
        %1203 = vmatprep.mubr.bf16.mxu0 0
        %1204 = vmatmul.mubr.bf16.gmra.mxu0 %v1022
        %v1205 = vpop.f32.mrf.mxu0
        %v1206 = vadd.f32 %v860, %v1205
        %v1207 = vpop.f32.mrf.mxu0
        %v1208 = vadd.f32 %v860, %v1207
        %v1209 = vpop.f32.mrf.mxu0
        %v1210 = vadd.f32 %v865, %v1209
        %v1211 = vpop.f32.mrf.mxu0
        %v1212 = vadd.f32 %v865, %v1211
        %1213 = vmatprep.mubr.bf16.mxu0 0
        %1214 = vmatmul.mubr.bf16.gmra.mxu0 %v1025
        %v1215 = vpop.f32.mrf.mxu0
        %v1216 = vadd.f32 %v870, %v1215
        %v1217 = vpop.f32.mrf.mxu0
        %v1218 = vadd.f32 %v870, %v1217
        %v1219 = vpop.f32.mrf.mxu0
        %v1220 = vadd.f32 %v875, %v1219
        %v1221 = vpop.f32.mrf.mxu0
        %v1222 = vadd.f32 %v875, %v1221
        %1223 = vmatprep.mubr.bf16.mxu0 0
        %1224 = vmatmul.mubr.bf16.gmra.mxu0 %v1028
        %v1225 = vpop.f32.mrf.mxu0
        %v1226 = vadd.f32 %v880, %v1225
        %v1227 = vpop.f32.mrf.mxu0
        %v1228 = vadd.f32 %v880, %v1227
        %v1229 = vpop.f32.mrf.mxu0
        %v1230 = vadd.f32 %v885, %v1229
        %v1231 = vpop.f32.mrf.mxu0
        %v1232 = vadd.f32 %v885, %v1231
        %1233 = vmatprep.mubr.bf16.mxu0 0
        %1234 = vmatmul.mubr.bf16.gmra.mxu0 %v1031
        %v1235 = vpop.f32.mrf.mxu0
        %v1236 = vadd.f32 %v890, %v1235
        %v1237 = vpop.f32.mrf.mxu0
        %v1238 = vadd.f32 %v890, %v1237
        %v1239 = vpop.f32.mrf.mxu0
        %v1240 = vadd.f32 %v895, %v1239
        %v1241 = vpop.f32.mrf.mxu0
        %v1242 = vadd.f32 %v895, %v1241
        %1243 = vmatprep.mubr.bf16.mxu0 0
        %1244 = vmatmul.mubr.bf16.gmra.mxu0 %v1034
        %v1245 = vpop.f32.mrf.mxu0
        %v1246 = vadd.f32 %v900, %v1245
        %v1247 = vpop.f32.mrf.mxu0
        %v1248 = vadd.f32 %v900, %v1247
        %v1249 = vpop.f32.mrf.mxu0
        %v1250 = vadd.f32 %v905, %v1249
        %v1251 = vpop.f32.mrf.mxu0
        %v1252 = vadd.f32 %v905, %v1251
        %1253 = vdwg.mxu0
        %1254 = vmatprep.subr.bf16.mxu0 0
        %1255 = vmatpush1.bf16.msra.mxu0 0
        %1256 = vmatprep.subr.bf16.mxu0 0
        %1257 = vmatpush1.bf16.msra.mxu0 0
        %1258 = vmatprep.subr.bf16.mxu0 0
        %1259 = vmatpush1.bf16.msra.mxu0 0
        %1260 = vmatprep.subr.bf16.mxu0 0
        %1261 = vmatpush1.bf16.msra.mxu0 0
        %1262 = vmatprep.subr.bf16.mxu0 0
        %1263 = vmatpush1.bf16.msra.mxu0 0
        %1264 = vmatprep.subr.bf16.mxu0 0
        %1265 = vmatpush1.bf16.msra.mxu0 0
        %1266 = vmatprep.subr.bf16.mxu0 0
        %1267 = vmatpush1.bf16.msra.mxu0 0
        %1268 = vmatprep.subr.bf16.mxu0 %v1047
        %1269 = vmatpush1.bf16.msra.mxu0 %v1044
        %1270 = vmatprep.subr.bf16.mxu0 0
        %1271 = vmatpush2.bf16.msra.mxu0 0
        %1272 = vmatprep.subr.bf16.mxu0 0
        %1273 = vmatpush2.bf16.msra.mxu0 0
        %1274 = vmatprep.subr.bf16.mxu0 0
        %1275 = vmatpush2.bf16.msra.mxu0 0
        %1276 = vmatprep.subr.bf16.mxu0 0
        %1277 = vmatpush2.bf16.msra.mxu0 0
        %1278 = vmatprep.subr.bf16.mxu0 0
        %1279 = vmatpush2.bf16.msra.mxu0 0
        %1280 = vmatprep.subr.bf16.mxu0 0
        %1281 = vmatpush2.bf16.msra.mxu0 0
        %1282 = vmatprep.subr.bf16.mxu0 0
        %1283 = vmatpush2.bf16.msra.mxu0 0
        %1284 = vmatprep.subr.bf16.mxu0 0
        %1285 = vmatpush2.bf16.msra.mxu0 0
        %1286 = vmatprep.mubr.bf16.mxu0 0
        %1287 = vmatmul.mubr.bf16.gmra.mxu0 %v989
        %v1288 = vpop.f32.mrf.mxu0
        %v1289 = vadd.f32 %v750, %v1288
        %v1290 = vpop.f32.mrf.mxu0
        %v1291 = vadd.f32 %v750, %v1290
        %v1292 = vpop.f32.mrf.mxu0
        %v1293 = vadd.f32 %v755, %v1292
        %v1294 = vpop.f32.mrf.mxu0
        %v1295 = vadd.f32 %v755, %v1294
        %1296 = vmatprep.mubr.bf16.mxu0 0
        %1297 = vmatmul.mubr.bf16.gmra.mxu0 %v992
        %v1298 = vpop.f32.mrf.mxu0
        %v1299 = vadd.f32 %v760, %v1298
        %v1300 = vpop.f32.mrf.mxu0
        %v1301 = vadd.f32 %v760, %v1300
        %v1302 = vpop.f32.mrf.mxu0
        %v1303 = vadd.f32 %v765, %v1302
        %v1304 = vpop.f32.mrf.mxu0
        %v1305 = vadd.f32 %v765, %v1304
        %1306 = vmatprep.mubr.bf16.mxu0 0
        %1307 = vmatmul.mubr.bf16.gmra.mxu0 %v995
        %v1308 = vpop.f32.mrf.mxu0
        %v1309 = vadd.f32 %v770, %v1308
        %v1310 = vpop.f32.mrf.mxu0
        %v1311 = vadd.f32 %v770, %v1310
        %v1312 = vpop.f32.mrf.mxu0
        %v1313 = vadd.f32 %v775, %v1312
        %v1314 = vpop.f32.mrf.mxu0
        %v1315 = vadd.f32 %v775, %v1314
        %1316 = vmatprep.mubr.bf16.mxu0 0
        %1317 = vmatmul.mubr.bf16.gmra.mxu0 %v998
        %v1318 = vpop.f32.mrf.mxu0
        %v1319 = vadd.f32 %v780, %v1318
        %v1320 = vpop.f32.mrf.mxu0
        %v1321 = vadd.f32 %v780, %v1320
        %v1322 = vpop.f32.mrf.mxu0
        %v1323 = vadd.f32 %v785, %v1322
        %v1324 = vpop.f32.mrf.mxu0
        %v1325 = vadd.f32 %v785, %v1324
        %1326 = vmatprep.mubr.bf16.mxu0 0
        %1327 = vmatmul.mubr.bf16.gmra.mxu0 %v1001
        %v1328 = vpop.f32.mrf.mxu0
        %v1329 = vadd.f32 %v790, %v1328
        %v1330 = vpop.f32.mrf.mxu0
        %v1331 = vadd.f32 %v790, %v1330
        %v1332 = vpop.f32.mrf.mxu0
        %v1333 = vadd.f32 %v795, %v1332
        %v1334 = vpop.f32.mrf.mxu0
        %v1335 = vadd.f32 %v795, %v1334
        %1336 = vmatprep.mubr.bf16.mxu0 0
        %1337 = vmatmul.mubr.bf16.gmra.mxu0 %v1004
        %v1338 = vpop.f32.mrf.mxu0
        %v1339 = vadd.f32 %v800, %v1338
        %v1340 = vpop.f32.mrf.mxu0
        %v1341 = vadd.f32 %v800, %v1340
        %v1342 = vpop.f32.mrf.mxu0
        %v1343 = vadd.f32 %v805, %v1342
        %v1344 = vpop.f32.mrf.mxu0
        %v1345 = vadd.f32 %v805, %v1344
        %1346 = vmatprep.mubr.bf16.mxu0 0
        %1347 = vmatmul.mubr.bf16.gmra.mxu0 %v1007
        %v1348 = vpop.f32.mrf.mxu0
        %v1349 = vadd.f32 %v810, %v1348
        %v1350 = vpop.f32.mrf.mxu0
        %v1351 = vadd.f32 %v810, %v1350
        %v1352 = vpop.f32.mrf.mxu0
        %v1353 = vadd.f32 %v815, %v1352
        %v1354 = vpop.f32.mrf.mxu0
        %v1355 = vadd.f32 %v815, %v1354
        %1356 = vmatprep.mubr.bf16.mxu0 0
        %1357 = vmatmul.mubr.bf16.gmra.mxu0 %v1010
        %v1358 = vpop.f32.mrf.mxu0
        %v1359 = vadd.f32 %v820, %v1358
        %v1360 = vpop.f32.mrf.mxu0
        %v1361 = vadd.f32 %v820, %v1360
        %v1362 = vpop.f32.mrf.mxu0
        %v1363 = vadd.f32 %v825, %v1362
        %v1364 = vpop.f32.mrf.mxu0
        %v1365 = vadd.f32 %v825, %v1364
        %1366 = vmatprep.mubr.bf16.mxu0 0
        %1367 = vmatmul.mubr.bf16.gmra.mxu0 %v1013
        %v1368 = vpop.f32.mrf.mxu0
        %v1369 = vadd.f32 %v830, %v1368
        %v1370 = vpop.f32.mrf.mxu0
        %v1371 = vadd.f32 %v830, %v1370
        %v1372 = vpop.f32.mrf.mxu0
        %v1373 = vadd.f32 %v835, %v1372
        %v1374 = vpop.f32.mrf.mxu0
        %v1375 = vadd.f32 %v835, %v1374
        %1376 = vmatprep.mubr.bf16.mxu0 0
        %1377 = vmatmul.mubr.bf16.gmra.mxu0 %v1016
        %v1378 = vpop.f32.mrf.mxu0
        %v1379 = vadd.f32 %v840, %v1378
        %v1380 = vpop.f32.mrf.mxu0
        %v1381 = vadd.f32 %v840, %v1380
        %v1382 = vpop.f32.mrf.mxu0
        %v1383 = vadd.f32 %v845, %v1382
        %v1384 = vpop.f32.mrf.mxu0
        %v1385 = vadd.f32 %v845, %v1384
        %1386 = vmatprep.mubr.bf16.mxu0 0
        %1387 = vmatmul.mubr.bf16.gmra.mxu0 %v1019
        %v1388 = vpop.f32.mrf.mxu0
        %v1389 = vadd.f32 %v850, %v1388
        %v1390 = vpop.f32.mrf.mxu0
        %v1391 = vadd.f32 %v850, %v1390
        %v1392 = vpop.f32.mrf.mxu0
        %v1393 = vadd.f32 %v855, %v1392
        %v1394 = vpop.f32.mrf.mxu0
        %v1395 = vadd.f32 %v855, %v1394
        %1396 = vmatprep.mubr.bf16.mxu0 0
        %1397 = vmatmul.mubr.bf16.gmra.mxu0 %v1022
        %v1398 = vpop.f32.mrf.mxu0
        %v1399 = vadd.f32 %v860, %v1398
        %v1400 = vpop.f32.mrf.mxu0
        %v1401 = vadd.f32 %v860, %v1400
        %v1402 = vpop.f32.mrf.mxu0
        %v1403 = vadd.f32 %v865, %v1402
        %v1404 = vpop.f32.mrf.mxu0
        %v1405 = vadd.f32 %v865, %v1404
        %1406 = vmatprep.mubr.bf16.mxu0 0
        %1407 = vmatmul.mubr.bf16.gmra.mxu0 %v1025
        %v1408 = vpop.f32.mrf.mxu0
        %v1409 = vadd.f32 %v870, %v1408
        %v1410 = vpop.f32.mrf.mxu0
        %v1411 = vadd.f32 %v870, %v1410
        %v1412 = vpop.f32.mrf.mxu0
        %v1413 = vadd.f32 %v875, %v1412
        %v1414 = vpop.f32.mrf.mxu0
        %v1415 = vadd.f32 %v875, %v1414
        %1416 = vmatprep.mubr.bf16.mxu0 0
        %1417 = vmatmul.mubr.bf16.gmra.mxu0 %v1028
        %v1418 = vpop.f32.mrf.mxu0
        %v1419 = vadd.f32 %v880, %v1418
        %v1420 = vpop.f32.mrf.mxu0
        %v1421 = vadd.f32 %v880, %v1420
        %v1422 = vpop.f32.mrf.mxu0
        %v1423 = vadd.f32 %v885, %v1422
        %v1424 = vpop.f32.mrf.mxu0
        %v1425 = vadd.f32 %v885, %v1424
        %1426 = vmatprep.mubr.bf16.mxu0 0
        %1427 = vmatmul.mubr.bf16.gmra.mxu0 %v1031
        %v1428 = vpop.f32.mrf.mxu0
        %v1429 = vadd.f32 %v890, %v1428
        %v1430 = vpop.f32.mrf.mxu0
        %v1431 = vadd.f32 %v890, %v1430
        %v1432 = vpop.f32.mrf.mxu0
        %v1433 = vadd.f32 %v895, %v1432
        %v1434 = vpop.f32.mrf.mxu0
        %v1435 = vadd.f32 %v895, %v1434
        %1436 = vmatprep.mubr.bf16.mxu0 0
        %1437 = vmatmul.mubr.bf16.gmra.mxu0 %v1034
        %v1438 = vpop.f32.mrf.mxu0
        %v1439 = vadd.f32 %v900, %v1438
        %v1440 = vpop.f32.mrf.mxu0
        %v1441 = vadd.f32 %v900, %v1440
        %v1442 = vpop.f32.mrf.mxu0
        %v1443 = vadd.f32 %v905, %v1442
        %v1444 = vpop.f32.mrf.mxu0
        %v1445 = vadd.f32 %v905, %v1444
        %1446 = vdwg.mxu0
        %1447 = vmatprep.subr.bf16.mxu0 0
        %1448 = vmatpush1.bf16.msra.mxu0 0
        %1449 = vmatprep.subr.bf16.mxu0 0
        %1450 = vmatpush1.bf16.msra.mxu0 0
        %1451 = vmatprep.subr.bf16.mxu0 0
        %1452 = vmatpush1.bf16.msra.mxu0 0
        %1453 = vmatprep.subr.bf16.mxu0 0
        %1454 = vmatpush1.bf16.msra.mxu0 0
        %1455 = vmatprep.subr.bf16.mxu0 0
        %1456 = vmatpush1.bf16.msra.mxu0 0
        %1457 = vmatprep.subr.bf16.mxu0 0
        %1458 = vmatpush1.bf16.msra.mxu0 0
        %1459 = vmatprep.subr.bf16.mxu0 0
        %1460 = vmatpush1.bf16.msra.mxu0 0
        %1461 = vmatprep.subr.bf16.mxu0 %v1053
        %1462 = vmatpush1.bf16.msra.mxu0 %v1050
        %1463 = vmatprep.subr.bf16.mxu0 0
        %1464 = vmatpush2.bf16.msra.mxu0 0
        %1465 = vmatprep.subr.bf16.mxu0 0
        %1466 = vmatpush2.bf16.msra.mxu0 0
        %1467 = vmatprep.subr.bf16.mxu0 0
        %1468 = vmatpush2.bf16.msra.mxu0 0
        %1469 = vmatprep.subr.bf16.mxu0 0
        %1470 = vmatpush2.bf16.msra.mxu0 0
        %1471 = vmatprep.subr.bf16.mxu0 0
        %1472 = vmatpush2.bf16.msra.mxu0 0
        %1473 = vmatprep.subr.bf16.mxu0 0
        %1474 = vmatpush2.bf16.msra.mxu0 0
        %1475 = vmatprep.subr.bf16.mxu0 0
        %1476 = vmatpush2.bf16.msra.mxu0 0
        %1477 = vmatprep.subr.bf16.mxu0 0
        %1478 = vmatpush2.bf16.msra.mxu0 0
        %1479 = vmatprep.mubr.bf16.mxu0 0
        %1480 = vmatmul.mubr.bf16.gmra.mxu0 %v989
        %v1481 = vpop.f32.mrf.mxu0
        %v1482 = vadd.f32 %v750, %v1481
        %v1483 = vpop.f32.mrf.mxu0
        %v1484 = vadd.f32 %v750, %v1483
        %v1485 = vpop.f32.mrf.mxu0
        %v1486 = vadd.f32 %v755, %v1485
        %v1487 = vpop.f32.mrf.mxu0
        %v1488 = vadd.f32 %v755, %v1487
        %1489 = vmatprep.mubr.bf16.mxu0 0
        %1490 = vmatmul.mubr.bf16.gmra.mxu0 %v992
        %v1491 = vpop.f32.mrf.mxu0
        %v1492 = vadd.f32 %v760, %v1491
        %v1493 = vpop.f32.mrf.mxu0
        %v1494 = vadd.f32 %v760, %v1493
        %v1495 = vpop.f32.mrf.mxu0
        %v1496 = vadd.f32 %v765, %v1495
        %v1497 = vpop.f32.mrf.mxu0
        %v1498 = vadd.f32 %v765, %v1497
        %1499 = vmatprep.mubr.bf16.mxu0 0
        %1500 = vmatmul.mubr.bf16.gmra.mxu0 %v995
        %v1501 = vpop.f32.mrf.mxu0
        %v1502 = vadd.f32 %v770, %v1501
        %v1503 = vpop.f32.mrf.mxu0
        %v1504 = vadd.f32 %v770, %v1503
        %v1505 = vpop.f32.mrf.mxu0
        %v1506 = vadd.f32 %v775, %v1505
        %v1507 = vpop.f32.mrf.mxu0
        %v1508 = vadd.f32 %v775, %v1507
        %1509 = vmatprep.mubr.bf16.mxu0 0
        %1510 = vmatmul.mubr.bf16.gmra.mxu0 %v998
        %v1511 = vpop.f32.mrf.mxu0
        %v1512 = vadd.f32 %v780, %v1511
        %v1513 = vpop.f32.mrf.mxu0
        %v1514 = vadd.f32 %v780, %v1513
        %v1515 = vpop.f32.mrf.mxu0
        %v1516 = vadd.f32 %v785, %v1515
        %v1517 = vpop.f32.mrf.mxu0
        %v1518 = vadd.f32 %v785, %v1517
        %1519 = vmatprep.mubr.bf16.mxu0 0
        %1520 = vmatmul.mubr.bf16.gmra.mxu0 %v1001
        %v1521 = vpop.f32.mrf.mxu0
        %v1522 = vadd.f32 %v790, %v1521
        %v1523 = vpop.f32.mrf.mxu0
        %v1524 = vadd.f32 %v790, %v1523
        %v1525 = vpop.f32.mrf.mxu0
        %v1526 = vadd.f32 %v795, %v1525
        %v1527 = vpop.f32.mrf.mxu0
        %v1528 = vadd.f32 %v795, %v1527
        %1529 = vmatprep.mubr.bf16.mxu0 0
        %1530 = vmatmul.mubr.bf16.gmra.mxu0 %v1004
        %v1531 = vpop.f32.mrf.mxu0
        %v1532 = vadd.f32 %v800, %v1531
        %v1533 = vpop.f32.mrf.mxu0
        %v1534 = vadd.f32 %v800, %v1533
        %v1535 = vpop.f32.mrf.mxu0
        %v1536 = vadd.f32 %v805, %v1535
        %v1537 = vpop.f32.mrf.mxu0
        %v1538 = vadd.f32 %v805, %v1537
        %1539 = vmatprep.mubr.bf16.mxu0 0
        %1540 = vmatmul.mubr.bf16.gmra.mxu0 %v1007
        %v1541 = vpop.f32.mrf.mxu0
        %v1542 = vadd.f32 %v810, %v1541
        %v1543 = vpop.f32.mrf.mxu0
        %v1544 = vadd.f32 %v810, %v1543
        %v1545 = vpop.f32.mrf.mxu0
        %v1546 = vadd.f32 %v815, %v1545
        %v1547 = vpop.f32.mrf.mxu0
        %v1548 = vadd.f32 %v815, %v1547
        %1549 = vmatprep.mubr.bf16.mxu0 0
        %1550 = vmatmul.mubr.bf16.gmra.mxu0 %v1010
        %v1551 = vpop.f32.mrf.mxu0
        %v1552 = vadd.f32 %v820, %v1551
        %v1553 = vpop.f32.mrf.mxu0
        %v1554 = vadd.f32 %v820, %v1553
        %v1555 = vpop.f32.mrf.mxu0
        %v1556 = vadd.f32 %v825, %v1555
        %v1557 = vpop.f32.mrf.mxu0
        %v1558 = vadd.f32 %v825, %v1557
        %1559 = vmatprep.mubr.bf16.mxu0 0
        %1560 = vmatmul.mubr.bf16.gmra.mxu0 %v1013
        %v1561 = vpop.f32.mrf.mxu0
        %v1562 = vadd.f32 %v830, %v1561
        %v1563 = vpop.f32.mrf.mxu0
        %v1564 = vadd.f32 %v830, %v1563
        %v1565 = vpop.f32.mrf.mxu0
        %v1566 = vadd.f32 %v835, %v1565
        %v1567 = vpop.f32.mrf.mxu0
        %v1568 = vadd.f32 %v835, %v1567
        %1569 = vmatprep.mubr.bf16.mxu0 0
        %1570 = vmatmul.mubr.bf16.gmra.mxu0 %v1016
        %v1571 = vpop.f32.mrf.mxu0
        %v1572 = vadd.f32 %v840, %v1571
        %v1573 = vpop.f32.mrf.mxu0
        %v1574 = vadd.f32 %v840, %v1573
        %v1575 = vpop.f32.mrf.mxu0
        %v1576 = vadd.f32 %v845, %v1575
        %v1577 = vpop.f32.mrf.mxu0
        %v1578 = vadd.f32 %v845, %v1577
        %1579 = vmatprep.mubr.bf16.mxu0 0
        %1580 = vmatmul.mubr.bf16.gmra.mxu0 %v1019
        %v1581 = vpop.f32.mrf.mxu0
        %v1582 = vadd.f32 %v850, %v1581
        %v1583 = vpop.f32.mrf.mxu0
        %v1584 = vadd.f32 %v850, %v1583
        %v1585 = vpop.f32.mrf.mxu0
        %v1586 = vadd.f32 %v855, %v1585
        %v1587 = vpop.f32.mrf.mxu0
        %v1588 = vadd.f32 %v855, %v1587
        %1589 = vmatprep.mubr.bf16.mxu0 0
        %1590 = vmatmul.mubr.bf16.gmra.mxu0 %v1022
        %v1591 = vpop.f32.mrf.mxu0
        %v1592 = vadd.f32 %v860, %v1591
        %v1593 = vpop.f32.mrf.mxu0
        %v1594 = vadd.f32 %v860, %v1593
        %v1595 = vpop.f32.mrf.mxu0
        %v1596 = vadd.f32 %v865, %v1595
        %v1597 = vpop.f32.mrf.mxu0
        %v1598 = vadd.f32 %v865, %v1597
        %1599 = vmatprep.mubr.bf16.mxu0 0
        %1600 = vmatmul.mubr.bf16.gmra.mxu0 %v1025
        %v1601 = vpop.f32.mrf.mxu0
        %v1602 = vadd.f32 %v870, %v1601
        %v1603 = vpop.f32.mrf.mxu0
        %v1604 = vadd.f32 %v870, %v1603
        %v1605 = vpop.f32.mrf.mxu0
        %v1606 = vadd.f32 %v875, %v1605
        %v1607 = vpop.f32.mrf.mxu0
        %v1608 = vadd.f32 %v875, %v1607
        %1609 = vmatprep.mubr.bf16.mxu0 0
        %1610 = vmatmul.mubr.bf16.gmra.mxu0 %v1028
        %v1611 = vpop.f32.mrf.mxu0
        %v1612 = vadd.f32 %v880, %v1611
        %v1613 = vpop.f32.mrf.mxu0
        %v1614 = vadd.f32 %v880, %v1613
        %v1615 = vpop.f32.mrf.mxu0
        %v1616 = vadd.f32 %v885, %v1615
        %v1617 = vpop.f32.mrf.mxu0
        %v1618 = vadd.f32 %v885, %v1617
        %1619 = vmatprep.mubr.bf16.mxu0 0
        %1620 = vmatmul.mubr.bf16.gmra.mxu0 %v1031
        %v1621 = vpop.f32.mrf.mxu0
        %v1622 = vadd.f32 %v890, %v1621
        %v1623 = vpop.f32.mrf.mxu0
        %v1624 = vadd.f32 %v890, %v1623
        %v1625 = vpop.f32.mrf.mxu0
        %v1626 = vadd.f32 %v895, %v1625
        %v1627 = vpop.f32.mrf.mxu0
        %v1628 = vadd.f32 %v895, %v1627
        %1629 = vmatprep.mubr.bf16.mxu0 0
        %1630 = vmatmul.mubr.bf16.gmra.mxu0 %v1034
        %v1631 = vpop.f32.mrf.mxu0
        %v1632 = vadd.f32 %v900, %v1631
        %v1633 = vpop.f32.mrf.mxu0
        %v1634 = vadd.f32 %v900, %v1633
        %v1635 = vpop.f32.mrf.mxu0
        %v1636 = vadd.f32 %v905, %v1635
        %v1637 = vpop.f32.mrf.mxu0
        %v1638 = vadd.f32 %v905, %v1637
        %1639 = vdwg.mxu0
        %1640 = vmatprep.subr.bf16.mxu0 0
        %1641 = vmatpush1.bf16.msra.mxu0 0
        %1642 = vmatprep.subr.bf16.mxu0 0
        %1643 = vmatpush1.bf16.msra.mxu0 0
        %1644 = vmatprep.subr.bf16.mxu0 0
        %1645 = vmatpush1.bf16.msra.mxu0 0
        %1646 = vmatprep.subr.bf16.mxu0 0
        %1647 = vmatpush1.bf16.msra.mxu0 0
        %1648 = vmatprep.subr.bf16.mxu0 0
        %1649 = vmatpush1.bf16.msra.mxu0 0
        %1650 = vmatprep.subr.bf16.mxu0 0
        %1651 = vmatpush1.bf16.msra.mxu0 0
        %1652 = vmatprep.subr.bf16.mxu0 0
        %1653 = vmatpush1.bf16.msra.mxu0 0
        %1654 = vmatprep.subr.bf16.mxu0 %v1059
        %1655 = vmatpush1.bf16.msra.mxu0 %v1056
        %1656 = vmatprep.subr.bf16.mxu0 0
        %1657 = vmatpush2.bf16.msra.mxu0 0
        %1658 = vmatprep.subr.bf16.mxu0 0
        %1659 = vmatpush2.bf16.msra.mxu0 0
        %1660 = vmatprep.subr.bf16.mxu0 0
        %1661 = vmatpush2.bf16.msra.mxu0 0
        %1662 = vmatprep.subr.bf16.mxu0 0
        %1663 = vmatpush2.bf16.msra.mxu0 0
        %1664 = vmatprep.subr.bf16.mxu0 0
        %1665 = vmatpush2.bf16.msra.mxu0 0
        %1666 = vmatprep.subr.bf16.mxu0 0
        %1667 = vmatpush2.bf16.msra.mxu0 0
        %1668 = vmatprep.subr.bf16.mxu0 0
        %1669 = vmatpush2.bf16.msra.mxu0 0
        %1670 = vmatprep.subr.bf16.mxu0 0
        %1671 = vmatpush2.bf16.msra.mxu0 0
        %1672 = vmatprep.mubr.bf16.mxu0 0
        %1673 = vmatmul.mubr.bf16.gmra.mxu0 %v989
        %v1674 = vpop.f32.mrf.mxu0
        %v1675 = vadd.f32 %v750, %v1674
        %v1676 = vpop.f32.mrf.mxu0
        %v1677 = vadd.f32 %v750, %v1676
        %v1678 = vpop.f32.mrf.mxu0
        %v1679 = vadd.f32 %v755, %v1678
        %v1680 = vpop.f32.mrf.mxu0
        %v1681 = vadd.f32 %v755, %v1680
        %1682 = vmatprep.mubr.bf16.mxu0 0
        %1683 = vmatmul.mubr.bf16.gmra.mxu0 %v992
        %v1684 = vpop.f32.mrf.mxu0
        %v1685 = vadd.f32 %v760, %v1684
        %v1686 = vpop.f32.mrf.mxu0
        %v1687 = vadd.f32 %v760, %v1686
        %v1688 = vpop.f32.mrf.mxu0
        %v1689 = vadd.f32 %v765, %v1688
        %v1690 = vpop.f32.mrf.mxu0
        %v1691 = vadd.f32 %v765, %v1690
        %1692 = vmatprep.mubr.bf16.mxu0 0
        %1693 = vmatmul.mubr.bf16.gmra.mxu0 %v995
        %v1694 = vpop.f32.mrf.mxu0
        %v1695 = vadd.f32 %v770, %v1694
        %v1696 = vpop.f32.mrf.mxu0
        %v1697 = vadd.f32 %v770, %v1696
        %v1698 = vpop.f32.mrf.mxu0
        %v1699 = vadd.f32 %v775, %v1698
        %v1700 = vpop.f32.mrf.mxu0
        %v1701 = vadd.f32 %v775, %v1700
        %1702 = vmatprep.mubr.bf16.mxu0 0
        %1703 = vmatmul.mubr.bf16.gmra.mxu0 %v998
        %v1704 = vpop.f32.mrf.mxu0
        %v1705 = vadd.f32 %v780, %v1704
        %v1706 = vpop.f32.mrf.mxu0
        %v1707 = vadd.f32 %v780, %v1706
        %v1708 = vpop.f32.mrf.mxu0
        %v1709 = vadd.f32 %v785, %v1708
        %v1710 = vpop.f32.mrf.mxu0
        %v1711 = vadd.f32 %v785, %v1710
        %1712 = vmatprep.mubr.bf16.mxu0 0
        %1713 = vmatmul.mubr.bf16.gmra.mxu0 %v1001
        %v1714 = vpop.f32.mrf.mxu0
        %v1715 = vadd.f32 %v790, %v1714
        %v1716 = vpop.f32.mrf.mxu0
        %v1717 = vadd.f32 %v790, %v1716
        %v1718 = vpop.f32.mrf.mxu0
        %v1719 = vadd.f32 %v795, %v1718
        %v1720 = vpop.f32.mrf.mxu0
        %v1721 = vadd.f32 %v795, %v1720
        %1722 = vmatprep.mubr.bf16.mxu0 0
        %1723 = vmatmul.mubr.bf16.gmra.mxu0 %v1004
        %v1724 = vpop.f32.mrf.mxu0
        %v1725 = vadd.f32 %v800, %v1724
        %v1726 = vpop.f32.mrf.mxu0
        %v1727 = vadd.f32 %v800, %v1726
        %v1728 = vpop.f32.mrf.mxu0
        %v1729 = vadd.f32 %v805, %v1728
        %v1730 = vpop.f32.mrf.mxu0
        %v1731 = vadd.f32 %v805, %v1730
        %1732 = vmatprep.mubr.bf16.mxu0 0
        %1733 = vmatmul.mubr.bf16.gmra.mxu0 %v1007
        %v1734 = vpop.f32.mrf.mxu0
        %v1735 = vadd.f32 %v810, %v1734
        %v1736 = vpop.f32.mrf.mxu0
        %v1737 = vadd.f32 %v810, %v1736
        %v1738 = vpop.f32.mrf.mxu0
        %v1739 = vadd.f32 %v815, %v1738
        %v1740 = vpop.f32.mrf.mxu0
        %v1741 = vadd.f32 %v815, %v1740
        %1742 = vmatprep.mubr.bf16.mxu0 0
        %1743 = vmatmul.mubr.bf16.gmra.mxu0 %v1010
        %v1744 = vpop.f32.mrf.mxu0
        %v1745 = vadd.f32 %v820, %v1744
        %v1746 = vpop.f32.mrf.mxu0
        %v1747 = vadd.f32 %v820, %v1746
        %v1748 = vpop.f32.mrf.mxu0
        %v1749 = vadd.f32 %v825, %v1748
        %v1750 = vpop.f32.mrf.mxu0
        %v1751 = vadd.f32 %v825, %v1750
        %1752 = vmatprep.mubr.bf16.mxu0 0
        %1753 = vmatmul.mubr.bf16.gmra.mxu0 %v1013
        %v1754 = vpop.f32.mrf.mxu0
        %v1755 = vadd.f32 %v830, %v1754
        %v1756 = vpop.f32.mrf.mxu0
        %v1757 = vadd.f32 %v830, %v1756
        %v1758 = vpop.f32.mrf.mxu0
        %v1759 = vadd.f32 %v835, %v1758
        %v1760 = vpop.f32.mrf.mxu0
        %v1761 = vadd.f32 %v835, %v1760
        %1762 = vmatprep.mubr.bf16.mxu0 0
        %1763 = vmatmul.mubr.bf16.gmra.mxu0 %v1016
        %v1764 = vpop.f32.mrf.mxu0
        %v1765 = vadd.f32 %v840, %v1764
        %v1766 = vpop.f32.mrf.mxu0
        %v1767 = vadd.f32 %v840, %v1766
        %v1768 = vpop.f32.mrf.mxu0
        %v1769 = vadd.f32 %v845, %v1768
        %v1770 = vpop.f32.mrf.mxu0
        %v1771 = vadd.f32 %v845, %v1770
        %1772 = vmatprep.mubr.bf16.mxu0 0
        %1773 = vmatmul.mubr.bf16.gmra.mxu0 %v1019
        %v1774 = vpop.f32.mrf.mxu0
        %v1775 = vadd.f32 %v850, %v1774
        %v1776 = vpop.f32.mrf.mxu0
        %v1777 = vadd.f32 %v850, %v1776
        %v1778 = vpop.f32.mrf.mxu0
        %v1779 = vadd.f32 %v855, %v1778
        %v1780 = vpop.f32.mrf.mxu0
        %v1781 = vadd.f32 %v855, %v1780
        %1782 = vmatprep.mubr.bf16.mxu0 0
        %1783 = vmatmul.mubr.bf16.gmra.mxu0 %v1022
        %v1784 = vpop.f32.mrf.mxu0
        %v1785 = vadd.f32 %v860, %v1784
        %v1786 = vpop.f32.mrf.mxu0
        %v1787 = vadd.f32 %v860, %v1786
        %v1788 = vpop.f32.mrf.mxu0
        %v1789 = vadd.f32 %v865, %v1788
        %v1790 = vpop.f32.mrf.mxu0
        %v1791 = vadd.f32 %v865, %v1790
        %1792 = vmatprep.mubr.bf16.mxu0 0
        %1793 = vmatmul.mubr.bf16.gmra.mxu0 %v1025
        %v1794 = vpop.f32.mrf.mxu0
        %v1795 = vadd.f32 %v870, %v1794
        %v1796 = vpop.f32.mrf.mxu0
        %v1797 = vadd.f32 %v870, %v1796
        %v1798 = vpop.f32.mrf.mxu0
        %v1799 = vadd.f32 %v875, %v1798
        %v1800 = vpop.f32.mrf.mxu0
        %v1801 = vadd.f32 %v875, %v1800
        %1802 = vmatprep.mubr.bf16.mxu0 0
        %1803 = vmatmul.mubr.bf16.gmra.mxu0 %v1028
        %v1804 = vpop.f32.mrf.mxu0
        %v1805 = vadd.f32 %v880, %v1804
        %v1806 = vpop.f32.mrf.mxu0
        %v1807 = vadd.f32 %v880, %v1806
        %v1808 = vpop.f32.mrf.mxu0
        %v1809 = vadd.f32 %v885, %v1808
        %v1810 = vpop.f32.mrf.mxu0
        %v1811 = vadd.f32 %v885, %v1810
        %1812 = vmatprep.mubr.bf16.mxu0 0
        %1813 = vmatmul.mubr.bf16.gmra.mxu0 %v1031
        %v1814 = vpop.f32.mrf.mxu0
        %v1815 = vadd.f32 %v890, %v1814
        %v1816 = vpop.f32.mrf.mxu0
        %v1817 = vadd.f32 %v890, %v1816
        %v1818 = vpop.f32.mrf.mxu0
        %v1819 = vadd.f32 %v895, %v1818
        %v1820 = vpop.f32.mrf.mxu0
        %v1821 = vadd.f32 %v895, %v1820
        %1822 = vmatprep.mubr.bf16.mxu0 0
        %1823 = vmatmul.mubr.bf16.gmra.mxu0 %v1034
        %v1824 = vpop.f32.mrf.mxu0
        %v1825 = vadd.f32 %v900, %v1824
        %v1826 = vpop.f32.mrf.mxu0
        %v1827 = vadd.f32 %v900, %v1826
        %v1828 = vpop.f32.mrf.mxu0
        %v1829 = vadd.f32 %v905, %v1828
        %v1830 = vpop.f32.mrf.mxu0
        %v1831 = vadd.f32 %v905, %v1830
        %1832 = vdwg.mxu0
        %v1833 = vpack.c.bf16 %v1100, %v1096
        %v1834 = vpack.c.bf16 %v1102, %v1098
        %v1835 = vpack.c.bf16 %v1293, %v1289
        %v1836 = vpack.c.bf16 %v1295, %v1291
        %v1837 = vpack.c.bf16 %v1486, %v1482
        %v1838 = vpack.c.bf16 %v1488, %v1484
        %v1839 = vpack.c.bf16 %v1679, %v1675
        %v1840 = vpack.c.bf16 %v1681, %v1677
        %v1841 = vpack.c.bf16 %v1110, %v1106
        %v1842 = vpack.c.bf16 %v1112, %v1108
        %v1843 = vpack.c.bf16 %v1303, %v1299
        %v1844 = vpack.c.bf16 %v1305, %v1301
        %v1845 = vpack.c.bf16 %v1496, %v1492
        %v1846 = vpack.c.bf16 %v1498, %v1494
        %v1847 = vpack.c.bf16 %v1689, %v1685
        %v1848 = vpack.c.bf16 %v1691, %v1687
        %v1849 = vpack.c.bf16 %v1120, %v1116
        %v1850 = vpack.c.bf16 %v1122, %v1118
        %v1851 = vpack.c.bf16 %v1313, %v1309
        %v1852 = vpack.c.bf16 %v1315, %v1311
        %v1853 = vpack.c.bf16 %v1506, %v1502
        %v1854 = vpack.c.bf16 %v1508, %v1504
        %v1855 = vpack.c.bf16 %v1699, %v1695
        %v1856 = vpack.c.bf16 %v1701, %v1697
        %v1857 = vpack.c.bf16 %v1130, %v1126
        %v1858 = vpack.c.bf16 %v1132, %v1128
        %v1859 = vpack.c.bf16 %v1323, %v1319
        %v1860 = vpack.c.bf16 %v1325, %v1321
        %v1861 = vpack.c.bf16 %v1516, %v1512
        %v1862 = vpack.c.bf16 %v1518, %v1514
        %v1863 = vpack.c.bf16 %v1709, %v1705
        %v1864 = vpack.c.bf16 %v1711, %v1707
        %v1865 = vpack.c.bf16 %v1140, %v1136
        %v1866 = vpack.c.bf16 %v1142, %v1138
        %v1867 = vpack.c.bf16 %v1333, %v1329
        %v1868 = vpack.c.bf16 %v1335, %v1331
        %v1869 = vpack.c.bf16 %v1526, %v1522
        %v1870 = vpack.c.bf16 %v1528, %v1524
        %v1871 = vpack.c.bf16 %v1719, %v1715
        %v1872 = vpack.c.bf16 %v1721, %v1717
        %v1873 = vpack.c.bf16 %v1150, %v1146
        %v1874 = vpack.c.bf16 %v1152, %v1148
        %v1875 = vpack.c.bf16 %v1343, %v1339
        %v1876 = vpack.c.bf16 %v1345, %v1341
        %v1877 = vpack.c.bf16 %v1536, %v1532
        %v1878 = vpack.c.bf16 %v1538, %v1534
        %v1879 = vpack.c.bf16 %v1729, %v1725
        %v1880 = vpack.c.bf16 %v1731, %v1727
        %v1881 = vpack.c.bf16 %v1160, %v1156
        %v1882 = vpack.c.bf16 %v1162, %v1158
        %v1883 = vpack.c.bf16 %v1353, %v1349
        %v1884 = vpack.c.bf16 %v1355, %v1351
        %v1885 = vpack.c.bf16 %v1546, %v1542
        %v1886 = vpack.c.bf16 %v1548, %v1544
        %v1887 = vpack.c.bf16 %v1739, %v1735
        %v1888 = vpack.c.bf16 %v1741, %v1737
        %v1889 = vpack.c.bf16 %v1170, %v1166
        %v1890 = vpack.c.bf16 %v1172, %v1168
        %v1891 = vpack.c.bf16 %v1363, %v1359
        %v1892 = vpack.c.bf16 %v1365, %v1361
        %v1893 = vpack.c.bf16 %v1556, %v1552
        %v1894 = vpack.c.bf16 %v1558, %v1554
        %v1895 = vpack.c.bf16 %v1749, %v1745
        %v1896 = vpack.c.bf16 %v1751, %v1747
        %v1897 = vpack.c.bf16 %v1180, %v1176
        %v1898 = vpack.c.bf16 %v1182, %v1178
        %v1899 = vpack.c.bf16 %v1373, %v1369
        %v1900 = vpack.c.bf16 %v1375, %v1371
        %v1901 = vpack.c.bf16 %v1566, %v1562
        %v1902 = vpack.c.bf16 %v1568, %v1564
        %v1903 = vpack.c.bf16 %v1759, %v1755
        %v1904 = vpack.c.bf16 %v1761, %v1757
        %v1905 = vpack.c.bf16 %v1190, %v1186
        %v1906 = vpack.c.bf16 %v1192, %v1188
        %v1907 = vpack.c.bf16 %v1383, %v1379
        %v1908 = vpack.c.bf16 %v1385, %v1381
        %v1909 = vpack.c.bf16 %v1576, %v1572
        %v1910 = vpack.c.bf16 %v1578, %v1574
        %v1911 = vpack.c.bf16 %v1769, %v1765
        %v1912 = vpack.c.bf16 %v1771, %v1767
        %v1913 = vpack.c.bf16 %v1200, %v1196
        %v1914 = vpack.c.bf16 %v1202, %v1198
        %v1915 = vpack.c.bf16 %v1393, %v1389
        %v1916 = vpack.c.bf16 %v1395, %v1391
        %v1917 = vpack.c.bf16 %v1586, %v1582
        %v1918 = vpack.c.bf16 %v1588, %v1584
        %v1919 = vpack.c.bf16 %v1779, %v1775
        %v1920 = vpack.c.bf16 %v1781, %v1777
        %v1921 = vpack.c.bf16 %v1210, %v1206
        %v1922 = vpack.c.bf16 %v1212, %v1208
        %v1923 = vpack.c.bf16 %v1403, %v1399
        %v1924 = vpack.c.bf16 %v1405, %v1401
        %v1925 = vpack.c.bf16 %v1596, %v1592
        %v1926 = vpack.c.bf16 %v1598, %v1594
        %v1927 = vpack.c.bf16 %v1789, %v1785
        %v1928 = vpack.c.bf16 %v1791, %v1787
        %v1929 = vpack.c.bf16 %v1220, %v1216
        %v1930 = vpack.c.bf16 %v1222, %v1218
        %v1931 = vpack.c.bf16 %v1413, %v1409
        %v1932 = vpack.c.bf16 %v1415, %v1411
        %v1933 = vpack.c.bf16 %v1606, %v1602
        %v1934 = vpack.c.bf16 %v1608, %v1604
        %v1935 = vpack.c.bf16 %v1799, %v1795
        %v1936 = vpack.c.bf16 %v1801, %v1797
        %v1937 = vpack.c.bf16 %v1230, %v1226
        %v1938 = vpack.c.bf16 %v1232, %v1228
        %v1939 = vpack.c.bf16 %v1423, %v1419
        %v1940 = vpack.c.bf16 %v1425, %v1421
        %v1941 = vpack.c.bf16 %v1616, %v1612
        %v1942 = vpack.c.bf16 %v1618, %v1614
        %v1943 = vpack.c.bf16 %v1809, %v1805
        %v1944 = vpack.c.bf16 %v1811, %v1807
        %v1945 = vpack.c.bf16 %v1240, %v1236
        %v1946 = vpack.c.bf16 %v1242, %v1238
        %v1947 = vpack.c.bf16 %v1433, %v1429
        %v1948 = vpack.c.bf16 %v1435, %v1431
        %v1949 = vpack.c.bf16 %v1626, %v1622
        %v1950 = vpack.c.bf16 %v1628, %v1624
        %v1951 = vpack.c.bf16 %v1819, %v1815
        %v1952 = vpack.c.bf16 %v1821, %v1817
        %v1953 = vpack.c.bf16 %v1250, %v1246
        %v1954 = vpack.c.bf16 %v1252, %v1248
        %v1955 = vpack.c.bf16 %v1443, %v1439
        %v1956 = vpack.c.bf16 %v1445, %v1441
        %v1957 = vpack.c.bf16 %v1636, %v1632
        %v1958 = vpack.c.bf16 %v1638, %v1634
        %v1959 = vpack.c.bf16 %v1829, %v1825
        %v1960 = vpack.c.bf16 %v1831, %v1827
        %v1961 = vld [vmem:[#allocation4] sm:$0xf]
        %v1963 = vsel %vm987, %v1961, 0
        %1965 = vmatprep.subr.bf16.mxu0 0
        %1966 = vmatpush1.bf16.msra.mxu0 0
        %1967 = vmatprep.subr.bf16.mxu0 0
        %1968 = vmatpush1.bf16.msra.mxu0 0
        %1969 = vmatprep.subr.bf16.mxu0 0
        %1970 = vmatpush1.bf16.msra.mxu0 0
        %1971 = vmatprep.subr.bf16.mxu0 0
        %1972 = vmatpush1.bf16.msra.mxu0 0
        %1973 = vmatprep.subr.bf16.mxu0 0
        %1974 = vmatpush1.bf16.msra.mxu0 0
        %1975 = vmatprep.subr.bf16.mxu0 0
        %1976 = vmatpush1.bf16.msra.mxu0 0
        %1977 = vmatprep.subr.bf16.mxu0 0
        %1978 = vmatpush1.bf16.msra.mxu0 0
        %1979 = vmatprep.subr.bf16.mxu0 %v1041
        %1980 = vmatpush1.bf16.msra.mxu0 %v1038
        %1981 = vmatprep.subr.bf16.mxu0 0
        %1982 = vmatpush2.bf16.msra.mxu0 0
        %1983 = vmatprep.subr.bf16.mxu0 0
        %1984 = vmatpush2.bf16.msra.mxu0 0
        %1985 = vmatprep.subr.bf16.mxu0 0
        %1986 = vmatpush2.bf16.msra.mxu0 0
        %1987 = vmatprep.subr.bf16.mxu0 0
        %1988 = vmatpush2.bf16.msra.mxu0 0
        %1989 = vmatprep.subr.bf16.mxu0 0
        %1990 = vmatpush2.bf16.msra.mxu0 0
        %1991 = vmatprep.subr.bf16.mxu0 0
        %1992 = vmatpush2.bf16.msra.mxu0 0
        %1993 = vmatprep.subr.bf16.mxu0 0
        %1994 = vmatpush2.bf16.msra.mxu0 0
        %1995 = vmatprep.subr.bf16.mxu0 0
        %1996 = vmatpush2.bf16.msra.mxu0 0
        %1997 = vmatprep.mubr.bf16.mxu0 0
        %1998 = vmatmul.mubr.bf16.gmra.mxu0 %v1963
        %v1999 = vpop.f32.mrf.mxu0
        %v2000 = vadd.f32 0.0, %v1999
        %v2001 = vpop.f32.mrf.mxu0
        %v2002 = vadd.f32 0.0, %v2001
        %v2003 = vpop.f32.mrf.mxu0
        %v2004 = vpop.f32.mrf.mxu0
        %2005 = vdwg.mxu0
        %2006 = vmatprep.subr.bf16.mxu0 0
        %2007 = vmatpush1.bf16.msra.mxu0 0
        %2008 = vmatprep.subr.bf16.mxu0 0
        %2009 = vmatpush1.bf16.msra.mxu0 0
        %2010 = vmatprep.subr.bf16.mxu0 0
        %2011 = vmatpush1.bf16.msra.mxu0 0
        %2012 = vmatprep.subr.bf16.mxu0 0
        %2013 = vmatpush1.bf16.msra.mxu0 0
        %2014 = vmatprep.subr.bf16.mxu0 0
        %2015 = vmatpush1.bf16.msra.mxu0 0
        %2016 = vmatprep.subr.bf16.mxu0 0
        %2017 = vmatpush1.bf16.msra.mxu0 0
        %2018 = vmatprep.subr.bf16.mxu0 0
        %2019 = vmatpush1.bf16.msra.mxu0 0
        %2020 = vmatprep.subr.bf16.mxu0 %v1047
        %2021 = vmatpush1.bf16.msra.mxu0 %v1044
        %2022 = vmatprep.subr.bf16.mxu0 0
        %2023 = vmatpush2.bf16.msra.mxu0 0
        %2024 = vmatprep.subr.bf16.mxu0 0
        %2025 = vmatpush2.bf16.msra.mxu0 0
        %2026 = vmatprep.subr.bf16.mxu0 0
        %2027 = vmatpush2.bf16.msra.mxu0 0
        %2028 = vmatprep.subr.bf16.mxu0 0
        %2029 = vmatpush2.bf16.msra.mxu0 0
        %2030 = vmatprep.subr.bf16.mxu0 0
        %2031 = vmatpush2.bf16.msra.mxu0 0
        %2032 = vmatprep.subr.bf16.mxu0 0
        %2033 = vmatpush2.bf16.msra.mxu0 0
        %2034 = vmatprep.subr.bf16.mxu0 0
        %2035 = vmatpush2.bf16.msra.mxu0 0
        %2036 = vmatprep.subr.bf16.mxu0 0
        %2037 = vmatpush2.bf16.msra.mxu0 0
        %2038 = vmatprep.mubr.bf16.mxu0 0
        %2039 = vmatmul.mubr.bf16.gmra.mxu0 %v1963
        %v2040 = vpop.f32.mrf.mxu0
        %v2041 = vadd.f32 0.0, %v2040
        %v2042 = vpop.f32.mrf.mxu0
        %v2043 = vadd.f32 0.0, %v2042
        %v2044 = vpop.f32.mrf.mxu0
        %v2045 = vpop.f32.mrf.mxu0
        %2046 = vdwg.mxu0
        %2047 = vmatprep.subr.bf16.mxu0 0
        %2048 = vmatpush1.bf16.msra.mxu0 0
        %2049 = vmatprep.subr.bf16.mxu0 0
        %2050 = vmatpush1.bf16.msra.mxu0 0
        %2051 = vmatprep.subr.bf16.mxu0 0
        %2052 = vmatpush1.bf16.msra.mxu0 0
        %2053 = vmatprep.subr.bf16.mxu0 0
        %2054 = vmatpush1.bf16.msra.mxu0 0
        %2055 = vmatprep.subr.bf16.mxu0 0
        %2056 = vmatpush1.bf16.msra.mxu0 0
        %2057 = vmatprep.subr.bf16.mxu0 0
        %2058 = vmatpush1.bf16.msra.mxu0 0
        %2059 = vmatprep.subr.bf16.mxu0 0
        %2060 = vmatpush1.bf16.msra.mxu0 0
        %2061 = vmatprep.subr.bf16.mxu0 %v1053
        %2062 = vmatpush1.bf16.msra.mxu0 %v1050
        %2063 = vmatprep.subr.bf16.mxu0 0
        %2064 = vmatpush2.bf16.msra.mxu0 0
        %2065 = vmatprep.subr.bf16.mxu0 0
        %2066 = vmatpush2.bf16.msra.mxu0 0
        %2067 = vmatprep.subr.bf16.mxu0 0
        %2068 = vmatpush2.bf16.msra.mxu0 0
        %2069 = vmatprep.subr.bf16.mxu0 0
        %2070 = vmatpush2.bf16.msra.mxu0 0
        %2071 = vmatprep.subr.bf16.mxu0 0
        %2072 = vmatpush2.bf16.msra.mxu0 0
        %2073 = vmatprep.subr.bf16.mxu0 0
        %2074 = vmatpush2.bf16.msra.mxu0 0
        %2075 = vmatprep.subr.bf16.mxu0 0
        %2076 = vmatpush2.bf16.msra.mxu0 0
        %2077 = vmatprep.subr.bf16.mxu0 0
        %2078 = vmatpush2.bf16.msra.mxu0 0
        %2079 = vmatprep.mubr.bf16.mxu0 0
        %2080 = vmatmul.mubr.bf16.gmra.mxu0 %v1963
        %v2081 = vpop.f32.mrf.mxu0
        %v2082 = vadd.f32 0.0, %v2081
        %v2083 = vpop.f32.mrf.mxu0
        %v2084 = vadd.f32 0.0, %v2083
        %v2085 = vpop.f32.mrf.mxu0
        %v2086 = vpop.f32.mrf.mxu0
        %2087 = vdwg.mxu0
        %2088 = vmatprep.subr.bf16.mxu0 0
        %2089 = vmatpush1.bf16.msra.mxu0 0
        %2090 = vmatprep.subr.bf16.mxu0 0
        %2091 = vmatpush1.bf16.msra.mxu0 0
        %2092 = vmatprep.subr.bf16.mxu0 0
        %2093 = vmatpush1.bf16.msra.mxu0 0
        %2094 = vmatprep.subr.bf16.mxu0 0
        %2095 = vmatpush1.bf16.msra.mxu0 0
        %2096 = vmatprep.subr.bf16.mxu0 0
        %2097 = vmatpush1.bf16.msra.mxu0 0
        %2098 = vmatprep.subr.bf16.mxu0 0
        %2099 = vmatpush1.bf16.msra.mxu0 0
        %2100 = vmatprep.subr.bf16.mxu0 0
        %2101 = vmatpush1.bf16.msra.mxu0 0
        %2102 = vmatprep.subr.bf16.mxu0 %v1059
        %2103 = vmatpush1.bf16.msra.mxu0 %v1056
        %2104 = vmatprep.subr.bf16.mxu0 0
        %2105 = vmatpush2.bf16.msra.mxu0 0
        %2106 = vmatprep.subr.bf16.mxu0 0
        %2107 = vmatpush2.bf16.msra.mxu0 0
        %2108 = vmatprep.subr.bf16.mxu0 0
        %2109 = vmatpush2.bf16.msra.mxu0 0
        %2110 = vmatprep.subr.bf16.mxu0 0
        %2111 = vmatpush2.bf16.msra.mxu0 0
        %2112 = vmatprep.subr.bf16.mxu0 0
        %2113 = vmatpush2.bf16.msra.mxu0 0
        %2114 = vmatprep.subr.bf16.mxu0 0
        %2115 = vmatpush2.bf16.msra.mxu0 0
        %2116 = vmatprep.subr.bf16.mxu0 0
        %2117 = vmatpush2.bf16.msra.mxu0 0
        %2118 = vmatprep.subr.bf16.mxu0 0
        %2119 = vmatpush2.bf16.msra.mxu0 0
        %2120 = vmatprep.mubr.bf16.mxu0 0
        %2121 = vmatmul.mubr.bf16.gmra.mxu0 %v1963
        %v2122 = vpop.f32.mrf.mxu0
        %v2123 = vadd.f32 0.0, %v2122
        %v2124 = vpop.f32.mrf.mxu0
        %v2125 = vadd.f32 0.0, %v2124
        %v2126 = vpop.f32.mrf.mxu0
        %v2127 = vpop.f32.mrf.mxu0
        %2128 = vdwg.mxu0
        %v2129 = vld [vmem:[#allocation3] sm:$0x1]
        %2131 = vset.pattern.permute.xlu0 0
        %2132 = vperm.xlu0 %2131, %v2129
        %v2133 = vpop.permute.xlu0 %2132
        %v2135 = vlaneseq
        %v2136 = vshrl.u32 %v2135, 7
        %v2137 = vsub.s32 0, %v2136
        %v2138 = vrot.slane %v2133, %v2137
        %v2139 = vadd.f32 %v2138, %v2000
        %v2140 = vadd.f32 %v2138, %v2002
        %v2141 = vadd.f32 %v2138, %v2041
        %v2142 = vadd.f32 %v2138, %v2043
        %v2143 = vadd.f32 %v2138, %v2082
        %v2144 = vadd.f32 %v2138, %v2084
        %v2145 = vadd.f32 %v2138, %v2123
        %v2146 = vadd.f32 %v2138, %v2125
        %v2147 = vpack.c.bf16 %v2139, %v2139
        %v2148 = vpack.c.bf16 %v2140, %v2140
        %v2149 = vpack.c.bf16 %v2141, %v2141
        %v2150 = vpack.c.bf16 %v2142, %v2142
        %v2151 = vpack.c.bf16 %v2143, %v2143
        %v2152 = vpack.c.bf16 %v2144, %v2144
        %v2153 = vpack.c.bf16 %v2145, %v2145
        %v2154 = vpack.c.bf16 %v2146, %v2146
        %v2156 = vpack.i.b16 %v2147, %v2147
        %v2158 = vlaneseq
        %v2159 = vshrl.u32 %v2158, 7
        %v2160 = vsub.s32 0, %v2159
        %v2161 = vrot.slane %v2156, %v2160
        %v2163 = vpack.i.b16 %v2148, %v2148
        %v2165 = vlaneseq
        %v2166 = vshrl.u32 %v2165, 7
        %v2167 = vsub.s32 0, %v2166
        %v2168 = vrot.slane %v2163, %v2167
        %v2170 = vpack.i.b16 %v2149, %v2149
        %v2172 = vlaneseq
        %v2173 = vshrl.u32 %v2172, 7
        %v2174 = vsub.s32 0, %v2173
        %v2175 = vrot.slane %v2170, %v2174
        %v2177 = vpack.i.b16 %v2150, %v2150
        %v2179 = vlaneseq
        %v2180 = vshrl.u32 %v2179, 7
        %v2181 = vsub.s32 0, %v2180
        %v2182 = vrot.slane %v2177, %v2181
        %v2184 = vpack.i.b16 %v2151, %v2151
        %v2186 = vlaneseq
        %v2187 = vshrl.u32 %v2186, 7
        %v2188 = vsub.s32 0, %v2187
        %v2189 = vrot.slane %v2184, %v2188
        %v2191 = vpack.i.b16 %v2152, %v2152
        %v2193 = vlaneseq
        %v2194 = vshrl.u32 %v2193, 7
        %v2195 = vsub.s32 0, %v2194
        %v2196 = vrot.slane %v2191, %v2195
        %v2198 = vpack.i.b16 %v2153, %v2153
        %v2200 = vlaneseq
        %v2201 = vshrl.u32 %v2200, 7
        %v2202 = vsub.s32 0, %v2201
        %v2203 = vrot.slane %v2198, %v2202
        %v2205 = vpack.i.b16 %v2154, %v2154
        %v2207 = vlaneseq
        %v2208 = vshrl.u32 %v2207, 7
        %v2209 = vsub.s32 0, %v2208
        %v2210 = vrot.slane %v2205, %v2209
        %v2211 = vmul.bf16 %v1833, %v2161
        %v2212 = vmul.bf16 %v1834, %v2168
        %v2213 = vmul.bf16 %v1835, %v2175
        %v2214 = vmul.bf16 %v1836, %v2182
        %v2215 = vmul.bf16 %v1837, %v2189
        %v2216 = vmul.bf16 %v1838, %v2196
        %v2217 = vmul.bf16 %v1839, %v2203
        %v2218 = vmul.bf16 %v1840, %v2210
        %v2219 = vmul.bf16 %v1841, %v2161
        %v2220 = vmul.bf16 %v1842, %v2168
        %v2221 = vmul.bf16 %v1843, %v2175
        %v2222 = vmul.bf16 %v1844, %v2182
        %v2223 = vmul.bf16 %v1845, %v2189
        %v2224 = vmul.bf16 %v1846, %v2196
        %v2225 = vmul.bf16 %v1847, %v2203
        %v2226 = vmul.bf16 %v1848, %v2210
        %v2227 = vmul.bf16 %v1849, %v2161
        %v2228 = vmul.bf16 %v1850, %v2168
        %v2229 = vmul.bf16 %v1851, %v2175
        %v2230 = vmul.bf16 %v1852, %v2182
        %v2231 = vmul.bf16 %v1853, %v2189
        %v2232 = vmul.bf16 %v1854, %v2196
        %v2233 = vmul.bf16 %v1855, %v2203
        %v2234 = vmul.bf16 %v1856, %v2210
        %v2235 = vmul.bf16 %v1857, %v2161
        %v2236 = vmul.bf16 %v1858, %v2168
        %v2237 = vmul.bf16 %v1859, %v2175
        %v2238 = vmul.bf16 %v1860, %v2182
        %v2239 = vmul.bf16 %v1861, %v2189
        %v2240 = vmul.bf16 %v1862, %v2196
        %v2241 = vmul.bf16 %v1863, %v2203
        %v2242 = vmul.bf16 %v1864, %v2210
        %v2243 = vmul.bf16 %v1865, %v2161
        %v2244 = vmul.bf16 %v1866, %v2168
        %v2245 = vmul.bf16 %v1867, %v2175
        %v2246 = vmul.bf16 %v1868, %v2182
        %v2247 = vmul.bf16 %v1869, %v2189
        %v2248 = vmul.bf16 %v1870, %v2196
        %v2249 = vmul.bf16 %v1871, %v2203
        %v2250 = vmul.bf16 %v1872, %v2210
        %v2251 = vmul.bf16 %v1873, %v2161
        %v2252 = vmul.bf16 %v1874, %v2168
        %v2253 = vmul.bf16 %v1875, %v2175
        %v2254 = vmul.bf16 %v1876, %v2182
        %v2255 = vmul.bf16 %v1877, %v2189
        %v2256 = vmul.bf16 %v1878, %v2196
        %v2257 = vmul.bf16 %v1879, %v2203
        %v2258 = vmul.bf16 %v1880, %v2210
        %v2259 = vmul.bf16 %v1881, %v2161
        %v2260 = vmul.bf16 %v1882, %v2168
        %v2261 = vmul.bf16 %v1883, %v2175
        %v2262 = vmul.bf16 %v1884, %v2182
        %v2263 = vmul.bf16 %v1885, %v2189
        %v2264 = vmul.bf16 %v1886, %v2196
        %v2265 = vmul.bf16 %v1887, %v2203
        %v2266 = vmul.bf16 %v1888, %v2210
        %v2267 = vmul.bf16 %v1889, %v2161
        %v2268 = vmul.bf16 %v1890, %v2168
        %v2269 = vmul.bf16 %v1891, %v2175
        %v2270 = vmul.bf16 %v1892, %v2182
        %v2271 = vmul.bf16 %v1893, %v2189
        %v2272 = vmul.bf16 %v1894, %v2196
        %v2273 = vmul.bf16 %v1895, %v2203
        %v2274 = vmul.bf16 %v1896, %v2210
        %v2275 = vmul.bf16 %v1897, %v2161
        %v2276 = vmul.bf16 %v1898, %v2168
        %v2277 = vmul.bf16 %v1899, %v2175
        %v2278 = vmul.bf16 %v1900, %v2182
        %v2279 = vmul.bf16 %v1901, %v2189
        %v2280 = vmul.bf16 %v1902, %v2196
        %v2281 = vmul.bf16 %v1903, %v2203
        %v2282 = vmul.bf16 %v1904, %v2210
        %v2283 = vmul.bf16 %v1905, %v2161
        %v2284 = vmul.bf16 %v1906, %v2168
        %v2285 = vmul.bf16 %v1907, %v2175
        %v2286 = vmul.bf16 %v1908, %v2182
        %v2287 = vmul.bf16 %v1909, %v2189
        %v2288 = vmul.bf16 %v1910, %v2196
        %v2289 = vmul.bf16 %v1911, %v2203
        %v2290 = vmul.bf16 %v1912, %v2210
        %v2291 = vmul.bf16 %v1913, %v2161
        %v2292 = vmul.bf16 %v1914, %v2168
        %v2293 = vmul.bf16 %v1915, %v2175
        %v2294 = vmul.bf16 %v1916, %v2182
        %v2295 = vmul.bf16 %v1917, %v2189
        %v2296 = vmul.bf16 %v1918, %v2196
        %v2297 = vmul.bf16 %v1919, %v2203
        %v2298 = vmul.bf16 %v1920, %v2210
        %v2299 = vmul.bf16 %v1921, %v2161
        %v2300 = vmul.bf16 %v1922, %v2168
        %v2301 = vmul.bf16 %v1923, %v2175
        %v2302 = vmul.bf16 %v1924, %v2182
        %v2303 = vmul.bf16 %v1925, %v2189
        %v2304 = vmul.bf16 %v1926, %v2196
        %v2305 = vmul.bf16 %v1927, %v2203
        %v2306 = vmul.bf16 %v1928, %v2210
        %v2307 = vmul.bf16 %v1929, %v2161
        %v2308 = vmul.bf16 %v1930, %v2168
        %v2309 = vmul.bf16 %v1931, %v2175
        %v2310 = vmul.bf16 %v1932, %v2182
        %v2311 = vmul.bf16 %v1933, %v2189
        %v2312 = vmul.bf16 %v1934, %v2196
        %v2313 = vmul.bf16 %v1935, %v2203
        %v2314 = vmul.bf16 %v1936, %v2210
        %v2315 = vmul.bf16 %v1937, %v2161
        %v2316 = vmul.bf16 %v1938, %v2168
        %v2317 = vmul.bf16 %v1939, %v2175
        %v2318 = vmul.bf16 %v1940, %v2182
        %v2319 = vmul.bf16 %v1941, %v2189
        %v2320 = vmul.bf16 %v1942, %v2196
        %v2321 = vmul.bf16 %v1943, %v2203
        %v2322 = vmul.bf16 %v1944, %v2210
        %v2323 = vmul.bf16 %v1945, %v2161
        %v2324 = vmul.bf16 %v1946, %v2168
        %v2325 = vmul.bf16 %v1947, %v2175
        %v2326 = vmul.bf16 %v1948, %v2182
        %v2327 = vmul.bf16 %v1949, %v2189
        %v2328 = vmul.bf16 %v1950, %v2196
        %v2329 = vmul.bf16 %v1951, %v2203
        %v2330 = vmul.bf16 %v1952, %v2210
        %v2331 = vmul.bf16 %v1953, %v2161
        %v2332 = vmul.bf16 %v1954, %v2168
        %v2333 = vmul.bf16 %v1955, %v2175
        %v2334 = vmul.bf16 %v1956, %v2182
        %v2335 = vmul.bf16 %v1957, %v2189
        %v2336 = vmul.bf16 %v1958, %v2196
        %v2337 = vmul.bf16 %v1959, %v2203
        %v2338 = vmul.bf16 %v1960, %v2210
        %v2339 = vld [vmem:[#allocation7] sm:$0xff]
        %v2340 = vld [vmem:[#allocation7 + $0x8] sm:$0xff]
        %v2341 = vld [vmem:[#allocation7 + $0x10] sm:$0xff]
        %v2342 = vld [vmem:[#allocation7 + $0x18] sm:$0xff]
        %v2343 = vld [vmem:[#allocation7 + $0x20] sm:$0xff]
        %v2344 = vld [vmem:[#allocation7 + $0x28] sm:$0xff]
        %v2345 = vld [vmem:[#allocation7 + $0x30] sm:$0xff]
        %v2346 = vld [vmem:[#allocation7 + $0x38] sm:$0xff]
        %v2347 = vld [vmem:[#allocation7 + $0x40] sm:$0xff]
        %v2348 = vld [vmem:[#allocation7 + $0x48] sm:$0xff]
        %v2349 = vld [vmem:[#allocation7 + $0x50] sm:$0xff]
        %v2350 = vld [vmem:[#allocation7 + $0x58] sm:$0xff]
        %v2351 = vld [vmem:[#allocation7 + $0x60] sm:$0xff]
        %v2352 = vld [vmem:[#allocation7 + $0x68] sm:$0xff]
        %v2353 = vld [vmem:[#allocation7 + $0x70] sm:$0xff]
        %v2354 = vld [vmem:[#allocation7 + $0x78] sm:$0xff]
        %v2355 = vld [vmem:[%s6] sm:$0xff]
        %v2356 = vld [vmem:[%s6 + $0x8] sm:$0xff]
        %v2357 = vld [vmem:[%s6 + $0x10] sm:$0xff]
        %v2358 = vld [vmem:[%s6 + $0x18] sm:$0xff]
        %v2359 = vld [vmem:[%s6 + $0x20] sm:$0xff]
        %v2360 = vld [vmem:[%s6 + $0x28] sm:$0xff]
        %v2361 = vld [vmem:[%s6 + $0x30] sm:$0xff]
        %v2362 = vld [vmem:[%s6 + $0x38] sm:$0xff]
        %v2363 = vld [vmem:[%s6 + $0x40] sm:$0xff]
        %v2364 = vld [vmem:[%s6 + $0x48] sm:$0xff]
        %v2365 = vld [vmem:[%s6 + $0x50] sm:$0xff]
        %v2366 = vld [vmem:[%s6 + $0x58] sm:$0xff]
        %v2367 = vld [vmem:[%s6 + $0x60] sm:$0xff]
        %v2368 = vld [vmem:[%s6 + $0x68] sm:$0xff]
        %v2369 = vld [vmem:[%s6 + $0x70] sm:$0xff]
        %v2370 = vld [vmem:[%s6 + $0x78] sm:$0xff]
        %2372 = vset.pattern.permute.xlu0 0
        %2373 = vperm.xlu0 %2372, %v2355
        %v2374 = vpop.permute.xlu0 %2373
        %2377 = vset.pattern.permute.xlu0 0
        %2378 = vperm.xlu0 %2377, %v2356
        %v2379 = vpop.permute.xlu0 %2378
        %2382 = vset.pattern.permute.xlu0 0
        %2383 = vperm.xlu0 %2382, %v2357
        %v2384 = vpop.permute.xlu0 %2383
        %2387 = vset.pattern.permute.xlu0 0
        %2388 = vperm.xlu0 %2387, %v2358
        %v2389 = vpop.permute.xlu0 %2388
        %2392 = vset.pattern.permute.xlu0 0
        %2393 = vperm.xlu0 %2392, %v2359
        %v2394 = vpop.permute.xlu0 %2393
        %2397 = vset.pattern.permute.xlu0 0
        %2398 = vperm.xlu0 %2397, %v2360
        %v2399 = vpop.permute.xlu0 %2398
        %2402 = vset.pattern.permute.xlu0 0
        %2403 = vperm.xlu0 %2402, %v2361
        %v2404 = vpop.permute.xlu0 %2403
        %2407 = vset.pattern.permute.xlu0 0
        %2408 = vperm.xlu0 %2407, %v2362
        %v2409 = vpop.permute.xlu0 %2408
        %2412 = vset.pattern.permute.xlu0 0
        %2413 = vperm.xlu0 %2412, %v2363
        %v2414 = vpop.permute.xlu0 %2413
        %2417 = vset.pattern.permute.xlu0 0
        %2418 = vperm.xlu0 %2417, %v2364
        %v2419 = vpop.permute.xlu0 %2418
        %2422 = vset.pattern.permute.xlu0 0
        %2423 = vperm.xlu0 %2422, %v2365
        %v2424 = vpop.permute.xlu0 %2423
        %2427 = vset.pattern.permute.xlu0 0
        %2428 = vperm.xlu0 %2427, %v2366
        %v2429 = vpop.permute.xlu0 %2428
        %2432 = vset.pattern.permute.xlu0 0
        %2433 = vperm.xlu0 %2432, %v2367
        %v2434 = vpop.permute.xlu0 %2433
        %2437 = vset.pattern.permute.xlu0 0
        %2438 = vperm.xlu0 %2437, %v2368
        %v2439 = vpop.permute.xlu0 %2438
        %2442 = vset.pattern.permute.xlu0 0
        %2443 = vperm.xlu0 %2442, %v2369
        %v2444 = vpop.permute.xlu0 %2443
        %2447 = vset.pattern.permute.xlu0 0
        %2448 = vperm.xlu0 %2447, %v2370
        %v2449 = vpop.permute.xlu0 %2448
        %v2467 = vunpack.c.l.b16 %v2339
        %v2468 = vunpack.c.h.b16 %v2339
        %v2469 = vunpack.c.l.b16 %v2340
        %v2470 = vunpack.c.h.b16 %v2340
        %v2471 = vunpack.c.l.b16 %v2341
        %v2472 = vunpack.c.h.b16 %v2341
        %v2473 = vunpack.c.l.b16 %v2342
        %v2474 = vunpack.c.h.b16 %v2342
        %v2475 = vunpack.c.l.b16 %v2343
        %v2476 = vunpack.c.h.b16 %v2343
        %v2477 = vunpack.c.l.b16 %v2344
        %v2478 = vunpack.c.h.b16 %v2344
        %v2479 = vunpack.c.l.b16 %v2345
        %v2480 = vunpack.c.h.b16 %v2345
        %v2481 = vunpack.c.l.b16 %v2346
        %v2482 = vunpack.c.h.b16 %v2346
        %v2483 = vunpack.c.l.b16 %v2347
        %v2484 = vunpack.c.h.b16 %v2347
        %v2485 = vunpack.c.l.b16 %v2348
        %v2486 = vunpack.c.h.b16 %v2348
        %v2487 = vunpack.c.l.b16 %v2349
        %v2488 = vunpack.c.h.b16 %v2349
        %v2489 = vunpack.c.l.b16 %v2350
        %v2490 = vunpack.c.h.b16 %v2350
        %v2491 = vunpack.c.l.b16 %v2351
        %v2492 = vunpack.c.h.b16 %v2351
        %v2493 = vunpack.c.l.b16 %v2352
        %v2494 = vunpack.c.h.b16 %v2352
        %v2495 = vunpack.c.l.b16 %v2353
        %v2496 = vunpack.c.h.b16 %v2353
        %v2497 = vunpack.c.l.b16 %v2354
        %v2498 = vunpack.c.h.b16 %v2354
        %v2499 = vpack.c.b16 %v2469, %v2467
        %v2500 = vpack.c.b16 %v2470, %v2468
        %v2501 = vpack.c.b16 %v2473, %v2471
        %v2502 = vpack.c.b16 %v2474, %v2472
        %v2503 = vpack.c.b16 %v2477, %v2475
        %v2504 = vpack.c.b16 %v2478, %v2476
        %v2505 = vpack.c.b16 %v2481, %v2479
        %v2506 = vpack.c.b16 %v2482, %v2480
        %v2507 = vpack.c.b16 %v2485, %v2483
        %v2508 = vpack.c.b16 %v2486, %v2484
        %v2509 = vpack.c.b16 %v2489, %v2487
        %v2510 = vpack.c.b16 %v2490, %v2488
        %v2511 = vpack.c.b16 %v2493, %v2491
        %v2512 = vpack.c.b16 %v2494, %v2492
        %v2513 = vpack.c.b16 %v2497, %v2495
        %v2514 = vpack.c.b16 %v2498, %v2496
        %2531 = vmatprep.subr.bf16.mxu0 %v2268
        %2532 = vmatpush1.bf16.msra.mxu0 %v2267
        %2533 = vmatprep.subr.bf16.mxu0 %v2260
        %2534 = vmatpush1.bf16.msra.mxu0 %v2259
        %2535 = vmatprep.subr.bf16.mxu0 %v2252
        %2536 = vmatpush1.bf16.msra.mxu0 %v2251
        %2537 = vmatprep.subr.bf16.mxu0 %v2244
        %2538 = vmatpush1.bf16.msra.mxu0 %v2243
        %2539 = vmatprep.subr.bf16.mxu0 %v2236
        %2540 = vmatpush1.bf16.msra.mxu0 %v2235
        %2541 = vmatprep.subr.bf16.mxu0 %v2228
        %2542 = vmatpush1.bf16.msra.mxu0 %v2227
        %2543 = vmatprep.subr.bf16.mxu0 %v2220
        %2544 = vmatpush1.bf16.msra.mxu0 %v2219
        %2545 = vmatprep.subr.bf16.mxu0 %v2212
        %2546 = vmatpush1.bf16.msra.mxu0 %v2211
        %2547 = vmatprep.subr.bf16.mxu0 %v2332
        %2548 = vmatpush2.bf16.msra.mxu0 %v2331
        %2549 = vmatprep.subr.bf16.mxu0 %v2324
        %2550 = vmatpush2.bf16.msra.mxu0 %v2323
        %2551 = vmatprep.subr.bf16.mxu0 %v2316
        %2552 = vmatpush2.bf16.msra.mxu0 %v2315
        %2553 = vmatprep.subr.bf16.mxu0 %v2308
        %2554 = vmatpush2.bf16.msra.mxu0 %v2307
        %2555 = vmatprep.subr.bf16.mxu0 %v2300
        %2556 = vmatpush2.bf16.msra.mxu0 %v2299
        %2557 = vmatprep.subr.bf16.mxu0 %v2292
        %2558 = vmatpush2.bf16.msra.mxu0 %v2291
        %2559 = vmatprep.subr.bf16.mxu0 %v2284
        %2560 = vmatpush2.bf16.msra.mxu0 %v2283
        %2561 = vmatprep.subr.bf16.mxu0 %v2276
        %2562 = vmatpush2.bf16.msra.mxu0 %v2275
        %2563 = vmatprep.mubr.bf16.mxu0 %v2500
        %2564 = vmatmul.mubr.bf16.gmra.mxu0 %v2499
        %v2565 = vpop.f32.mrf.mxu0
        %v2566 = vadd.f32 %v2374, %v2565
        %v2567 = vpop.f32.mrf.mxu0
        %v2568 = vadd.f32 %v2374, %v2567
        %v2569 = vpop.f32.mrf.mxu0
        %v2570 = vadd.f32 %v2379, %v2569
        %v2571 = vpop.f32.mrf.mxu0
        %v2572 = vadd.f32 %v2379, %v2571
        %2573 = vmatprep.mubr.bf16.mxu0 %v2502
        %2574 = vmatmul.mubr.bf16.gmra.mxu0 %v2501
        %v2575 = vpop.f32.mrf.mxu0
        %v2576 = vadd.f32 %v2384, %v2575
        %v2577 = vpop.f32.mrf.mxu0
        %v2578 = vadd.f32 %v2384, %v2577
        %v2579 = vpop.f32.mrf.mxu0
        %v2580 = vadd.f32 %v2389, %v2579
        %v2581 = vpop.f32.mrf.mxu0
        %v2582 = vadd.f32 %v2389, %v2581
        %2583 = vmatprep.mubr.bf16.mxu0 %v2504
        %2584 = vmatmul.mubr.bf16.gmra.mxu0 %v2503
        %v2585 = vpop.f32.mrf.mxu0
        %v2586 = vadd.f32 %v2394, %v2585
        %v2587 = vpop.f32.mrf.mxu0
        %v2588 = vadd.f32 %v2394, %v2587
        %v2589 = vpop.f32.mrf.mxu0
        %v2590 = vadd.f32 %v2399, %v2589
        %v2591 = vpop.f32.mrf.mxu0
        %v2592 = vadd.f32 %v2399, %v2591
        %2593 = vmatprep.mubr.bf16.mxu0 %v2506
        %2594 = vmatmul.mubr.bf16.gmra.mxu0 %v2505
        %v2595 = vpop.f32.mrf.mxu0
        %v2596 = vadd.f32 %v2404, %v2595
        %v2597 = vpop.f32.mrf.mxu0
        %v2598 = vadd.f32 %v2404, %v2597
        %v2599 = vpop.f32.mrf.mxu0
        %v2600 = vadd.f32 %v2409, %v2599
        %v2601 = vpop.f32.mrf.mxu0
        %v2602 = vadd.f32 %v2409, %v2601
        %2603 = vmatprep.mubr.bf16.mxu0 %v2508
        %2604 = vmatmul.mubr.bf16.gmra.mxu0 %v2507
        %v2605 = vpop.f32.mrf.mxu0
        %v2606 = vadd.f32 %v2414, %v2605
        %v2607 = vpop.f32.mrf.mxu0
        %v2608 = vadd.f32 %v2414, %v2607
        %v2609 = vpop.f32.mrf.mxu0
        %v2610 = vadd.f32 %v2419, %v2609
        %v2611 = vpop.f32.mrf.mxu0
        %v2612 = vadd.f32 %v2419, %v2611
        %2613 = vmatprep.mubr.bf16.mxu0 %v2510
        %2614 = vmatmul.mubr.bf16.gmra.mxu0 %v2509
        %v2615 = vpop.f32.mrf.mxu0
        %v2616 = vadd.f32 %v2424, %v2615
        %v2617 = vpop.f32.mrf.mxu0
        %v2618 = vadd.f32 %v2424, %v2617
        %v2619 = vpop.f32.mrf.mxu0
        %v2620 = vadd.f32 %v2429, %v2619
        %v2621 = vpop.f32.mrf.mxu0
        %v2622 = vadd.f32 %v2429, %v2621
        %2623 = vmatprep.mubr.bf16.mxu0 %v2512
        %2624 = vmatmul.mubr.bf16.gmra.mxu0 %v2511
        %v2625 = vpop.f32.mrf.mxu0
        %v2626 = vadd.f32 %v2434, %v2625
        %v2627 = vpop.f32.mrf.mxu0
        %v2628 = vadd.f32 %v2434, %v2627
        %v2629 = vpop.f32.mrf.mxu0
        %v2630 = vadd.f32 %v2439, %v2629
        %v2631 = vpop.f32.mrf.mxu0
        %v2632 = vadd.f32 %v2439, %v2631
        %2633 = vmatprep.mubr.bf16.mxu0 %v2514
        %2634 = vmatmul.mubr.bf16.gmra.mxu0 %v2513
        %v2635 = vpop.f32.mrf.mxu0
        %v2636 = vadd.f32 %v2444, %v2635
        %v2637 = vpop.f32.mrf.mxu0
        %v2638 = vadd.f32 %v2444, %v2637
        %v2639 = vpop.f32.mrf.mxu0
        %v2640 = vadd.f32 %v2449, %v2639
        %v2641 = vpop.f32.mrf.mxu0
        %v2642 = vadd.f32 %v2449, %v2641
        %2643 = vdwg.mxu0
        %2644 = vmatprep.subr.bf16.mxu0 %v2270
        %2645 = vmatpush1.bf16.msra.mxu0 %v2269
        %2646 = vmatprep.subr.bf16.mxu0 %v2262
        %2647 = vmatpush1.bf16.msra.mxu0 %v2261
        %2648 = vmatprep.subr.bf16.mxu0 %v2254
        %2649 = vmatpush1.bf16.msra.mxu0 %v2253
        %2650 = vmatprep.subr.bf16.mxu0 %v2246
        %2651 = vmatpush1.bf16.msra.mxu0 %v2245
        %2652 = vmatprep.subr.bf16.mxu0 %v2238
        %2653 = vmatpush1.bf16.msra.mxu0 %v2237
        %2654 = vmatprep.subr.bf16.mxu0 %v2230
        %2655 = vmatpush1.bf16.msra.mxu0 %v2229
        %2656 = vmatprep.subr.bf16.mxu0 %v2222
        %2657 = vmatpush1.bf16.msra.mxu0 %v2221
        %2658 = vmatprep.subr.bf16.mxu0 %v2214
        %2659 = vmatpush1.bf16.msra.mxu0 %v2213
        %2660 = vmatprep.subr.bf16.mxu0 %v2334
        %2661 = vmatpush2.bf16.msra.mxu0 %v2333
        %2662 = vmatprep.subr.bf16.mxu0 %v2326
        %2663 = vmatpush2.bf16.msra.mxu0 %v2325
        %2664 = vmatprep.subr.bf16.mxu0 %v2318
        %2665 = vmatpush2.bf16.msra.mxu0 %v2317
        %2666 = vmatprep.subr.bf16.mxu0 %v2310
        %2667 = vmatpush2.bf16.msra.mxu0 %v2309
        %2668 = vmatprep.subr.bf16.mxu0 %v2302
        %2669 = vmatpush2.bf16.msra.mxu0 %v2301
        %2670 = vmatprep.subr.bf16.mxu0 %v2294
        %2671 = vmatpush2.bf16.msra.mxu0 %v2293
        %2672 = vmatprep.subr.bf16.mxu0 %v2286
        %2673 = vmatpush2.bf16.msra.mxu0 %v2285
        %2674 = vmatprep.subr.bf16.mxu0 %v2278
        %2675 = vmatpush2.bf16.msra.mxu0 %v2277
        %2676 = vmatprep.mubr.bf16.mxu0 %v2500
        %2677 = vmatmul.mubr.bf16.gmra.mxu0 %v2499
        %v2678 = vpop.f32.mrf.mxu0
        %v2679 = vadd.f32 %v2374, %v2678
        %v2680 = vpop.f32.mrf.mxu0
        %v2681 = vadd.f32 %v2374, %v2680
        %v2682 = vpop.f32.mrf.mxu0
        %v2683 = vadd.f32 %v2379, %v2682
        %v2684 = vpop.f32.mrf.mxu0
        %v2685 = vadd.f32 %v2379, %v2684
        %2686 = vmatprep.mubr.bf16.mxu0 %v2502
        %2687 = vmatmul.mubr.bf16.gmra.mxu0 %v2501
        %v2688 = vpop.f32.mrf.mxu0
        %v2689 = vadd.f32 %v2384, %v2688
        %v2690 = vpop.f32.mrf.mxu0
        %v2691 = vadd.f32 %v2384, %v2690
        %v2692 = vpop.f32.mrf.mxu0
        %v2693 = vadd.f32 %v2389, %v2692
        %v2694 = vpop.f32.mrf.mxu0
        %v2695 = vadd.f32 %v2389, %v2694
        %2696 = vmatprep.mubr.bf16.mxu0 %v2504
        %2697 = vmatmul.mubr.bf16.gmra.mxu0 %v2503
        %v2698 = vpop.f32.mrf.mxu0
        %v2699 = vadd.f32 %v2394, %v2698
        %v2700 = vpop.f32.mrf.mxu0
        %v2701 = vadd.f32 %v2394, %v2700
        %v2702 = vpop.f32.mrf.mxu0
        %v2703 = vadd.f32 %v2399, %v2702
        %v2704 = vpop.f32.mrf.mxu0
        %v2705 = vadd.f32 %v2399, %v2704
        %2706 = vmatprep.mubr.bf16.mxu0 %v2506
        %2707 = vmatmul.mubr.bf16.gmra.mxu0 %v2505
        %v2708 = vpop.f32.mrf.mxu0
        %v2709 = vadd.f32 %v2404, %v2708
        %v2710 = vpop.f32.mrf.mxu0
        %v2711 = vadd.f32 %v2404, %v2710
        %v2712 = vpop.f32.mrf.mxu0
        %v2713 = vadd.f32 %v2409, %v2712
        %v2714 = vpop.f32.mrf.mxu0
        %v2715 = vadd.f32 %v2409, %v2714
        %2716 = vmatprep.mubr.bf16.mxu0 %v2508
        %2717 = vmatmul.mubr.bf16.gmra.mxu0 %v2507
        %v2718 = vpop.f32.mrf.mxu0
        %v2719 = vadd.f32 %v2414, %v2718
        %v2720 = vpop.f32.mrf.mxu0
        %v2721 = vadd.f32 %v2414, %v2720
        %v2722 = vpop.f32.mrf.mxu0
        %v2723 = vadd.f32 %v2419, %v2722
        %v2724 = vpop.f32.mrf.mxu0
        %v2725 = vadd.f32 %v2419, %v2724
        %2726 = vmatprep.mubr.bf16.mxu0 %v2510
        %2727 = vmatmul.mubr.bf16.gmra.mxu0 %v2509
        %v2728 = vpop.f32.mrf.mxu0
        %v2729 = vadd.f32 %v2424, %v2728
        %v2730 = vpop.f32.mrf.mxu0
        %v2731 = vadd.f32 %v2424, %v2730
        %v2732 = vpop.f32.mrf.mxu0
        %v2733 = vadd.f32 %v2429, %v2732
        %v2734 = vpop.f32.mrf.mxu0
        %v2735 = vadd.f32 %v2429, %v2734
        %2736 = vmatprep.mubr.bf16.mxu0 %v2512
        %2737 = vmatmul.mubr.bf16.gmra.mxu0 %v2511
        %v2738 = vpop.f32.mrf.mxu0
        %v2739 = vadd.f32 %v2434, %v2738
        %v2740 = vpop.f32.mrf.mxu0
        %v2741 = vadd.f32 %v2434, %v2740
        %v2742 = vpop.f32.mrf.mxu0
        %v2743 = vadd.f32 %v2439, %v2742
        %v2744 = vpop.f32.mrf.mxu0
        %v2745 = vadd.f32 %v2439, %v2744
        %2746 = vmatprep.mubr.bf16.mxu0 %v2514
        %2747 = vmatmul.mubr.bf16.gmra.mxu0 %v2513
        %v2748 = vpop.f32.mrf.mxu0
        %v2749 = vadd.f32 %v2444, %v2748
        %v2750 = vpop.f32.mrf.mxu0
        %v2751 = vadd.f32 %v2444, %v2750
        %v2752 = vpop.f32.mrf.mxu0
        %v2753 = vadd.f32 %v2449, %v2752
        %v2754 = vpop.f32.mrf.mxu0
        %v2755 = vadd.f32 %v2449, %v2754
        %2756 = vdwg.mxu0
        %2757 = vmatprep.subr.bf16.mxu0 %v2272
        %2758 = vmatpush1.bf16.msra.mxu0 %v2271
        %2759 = vmatprep.subr.bf16.mxu0 %v2264
        %2760 = vmatpush1.bf16.msra.mxu0 %v2263
        %2761 = vmatprep.subr.bf16.mxu0 %v2256
        %2762 = vmatpush1.bf16.msra.mxu0 %v2255
        %2763 = vmatprep.subr.bf16.mxu0 %v2248
        %2764 = vmatpush1.bf16.msra.mxu0 %v2247
        %2765 = vmatprep.subr.bf16.mxu0 %v2240
        %2766 = vmatpush1.bf16.msra.mxu0 %v2239
        %2767 = vmatprep.subr.bf16.mxu0 %v2232
        %2768 = vmatpush1.bf16.msra.mxu0 %v2231
        %2769 = vmatprep.subr.bf16.mxu0 %v2224
        %2770 = vmatpush1.bf16.msra.mxu0 %v2223
        %2771 = vmatprep.subr.bf16.mxu0 %v2216
        %2772 = vmatpush1.bf16.msra.mxu0 %v2215
        %2773 = vmatprep.subr.bf16.mxu0 %v2336
        %2774 = vmatpush2.bf16.msra.mxu0 %v2335
        %2775 = vmatprep.subr.bf16.mxu0 %v2328
        %2776 = vmatpush2.bf16.msra.mxu0 %v2327
        %2777 = vmatprep.subr.bf16.mxu0 %v2320
        %2778 = vmatpush2.bf16.msra.mxu0 %v2319
        %2779 = vmatprep.subr.bf16.mxu0 %v2312
        %2780 = vmatpush2.bf16.msra.mxu0 %v2311
        %2781 = vmatprep.subr.bf16.mxu0 %v2304
        %2782 = vmatpush2.bf16.msra.mxu0 %v2303
        %2783 = vmatprep.subr.bf16.mxu0 %v2296
        %2784 = vmatpush2.bf16.msra.mxu0 %v2295
        %2785 = vmatprep.subr.bf16.mxu0 %v2288
        %2786 = vmatpush2.bf16.msra.mxu0 %v2287
        %2787 = vmatprep.subr.bf16.mxu0 %v2280
        %2788 = vmatpush2.bf16.msra.mxu0 %v2279
        %2789 = vmatprep.mubr.bf16.mxu0 %v2500
        %2790 = vmatmul.mubr.bf16.gmra.mxu0 %v2499
        %v2791 = vpop.f32.mrf.mxu0
        %v2792 = vadd.f32 %v2374, %v2791
        %v2793 = vpop.f32.mrf.mxu0
        %v2794 = vadd.f32 %v2374, %v2793
        %v2795 = vpop.f32.mrf.mxu0
        %v2796 = vadd.f32 %v2379, %v2795
        %v2797 = vpop.f32.mrf.mxu0
        %v2798 = vadd.f32 %v2379, %v2797
        %2799 = vmatprep.mubr.bf16.mxu0 %v2502
        %2800 = vmatmul.mubr.bf16.gmra.mxu0 %v2501
        %v2801 = vpop.f32.mrf.mxu0
        %v2802 = vadd.f32 %v2384, %v2801
        %v2803 = vpop.f32.mrf.mxu0
        %v2804 = vadd.f32 %v2384, %v2803
        %v2805 = vpop.f32.mrf.mxu0
        %v2806 = vadd.f32 %v2389, %v2805
        %v2807 = vpop.f32.mrf.mxu0
        %v2808 = vadd.f32 %v2389, %v2807
        %2809 = vmatprep.mubr.bf16.mxu0 %v2504
        %2810 = vmatmul.mubr.bf16.gmra.mxu0 %v2503
        %v2811 = vpop.f32.mrf.mxu0
        %v2812 = vadd.f32 %v2394, %v2811
        %v2813 = vpop.f32.mrf.mxu0
        %v2814 = vadd.f32 %v2394, %v2813
        %v2815 = vpop.f32.mrf.mxu0
        %v2816 = vadd.f32 %v2399, %v2815
        %v2817 = vpop.f32.mrf.mxu0
        %v2818 = vadd.f32 %v2399, %v2817
        %2819 = vmatprep.mubr.bf16.mxu0 %v2506
        %2820 = vmatmul.mubr.bf16.gmra.mxu0 %v2505
        %v2821 = vpop.f32.mrf.mxu0
        %v2822 = vadd.f32 %v2404, %v2821
        %v2823 = vpop.f32.mrf.mxu0
        %v2824 = vadd.f32 %v2404, %v2823
        %v2825 = vpop.f32.mrf.mxu0
        %v2826 = vadd.f32 %v2409, %v2825
        %v2827 = vpop.f32.mrf.mxu0
        %v2828 = vadd.f32 %v2409, %v2827
        %2829 = vmatprep.mubr.bf16.mxu0 %v2508
        %2830 = vmatmul.mubr.bf16.gmra.mxu0 %v2507
        %v2831 = vpop.f32.mrf.mxu0
        %v2832 = vadd.f32 %v2414, %v2831
        %v2833 = vpop.f32.mrf.mxu0
        %v2834 = vadd.f32 %v2414, %v2833
        %v2835 = vpop.f32.mrf.mxu0
        %v2836 = vadd.f32 %v2419, %v2835
        %v2837 = vpop.f32.mrf.mxu0
        %v2838 = vadd.f32 %v2419, %v2837
        %2839 = vmatprep.mubr.bf16.mxu0 %v2510
        %2840 = vmatmul.mubr.bf16.gmra.mxu0 %v2509
        %v2841 = vpop.f32.mrf.mxu0
        %v2842 = vadd.f32 %v2424, %v2841
        %v2843 = vpop.f32.mrf.mxu0
        %v2844 = vadd.f32 %v2424, %v2843
        %v2845 = vpop.f32.mrf.mxu0
        %v2846 = vadd.f32 %v2429, %v2845
        %v2847 = vpop.f32.mrf.mxu0
        %v2848 = vadd.f32 %v2429, %v2847
        %2849 = vmatprep.mubr.bf16.mxu0 %v2512
        %2850 = vmatmul.mubr.bf16.gmra.mxu0 %v2511
        %v2851 = vpop.f32.mrf.mxu0
        %v2852 = vadd.f32 %v2434, %v2851
        %v2853 = vpop.f32.mrf.mxu0
        %v2854 = vadd.f32 %v2434, %v2853
        %v2855 = vpop.f32.mrf.mxu0
        %v2856 = vadd.f32 %v2439, %v2855
        %v2857 = vpop.f32.mrf.mxu0
        %v2858 = vadd.f32 %v2439, %v2857
        %2859 = vmatprep.mubr.bf16.mxu0 %v2514
        %2860 = vmatmul.mubr.bf16.gmra.mxu0 %v2513
        %v2861 = vpop.f32.mrf.mxu0
        %v2862 = vadd.f32 %v2444, %v2861
        %v2863 = vpop.f32.mrf.mxu0
        %v2864 = vadd.f32 %v2444, %v2863
        %v2865 = vpop.f32.mrf.mxu0
        %v2866 = vadd.f32 %v2449, %v2865
        %v2867 = vpop.f32.mrf.mxu0
        %v2868 = vadd.f32 %v2449, %v2867
        %2869 = vdwg.mxu0
        %2870 = vmatprep.subr.bf16.mxu0 %v2274
        %2871 = vmatpush1.bf16.msra.mxu0 %v2273
        %2872 = vmatprep.subr.bf16.mxu0 %v2266
        %2873 = vmatpush1.bf16.msra.mxu0 %v2265
        %2874 = vmatprep.subr.bf16.mxu0 %v2258
        %2875 = vmatpush1.bf16.msra.mxu0 %v2257
        %2876 = vmatprep.subr.bf16.mxu0 %v2250
        %2877 = vmatpush1.bf16.msra.mxu0 %v2249
        %2878 = vmatprep.subr.bf16.mxu0 %v2242
        %2879 = vmatpush1.bf16.msra.mxu0 %v2241
        %2880 = vmatprep.subr.bf16.mxu0 %v2234
        %2881 = vmatpush1.bf16.msra.mxu0 %v2233
        %2882 = vmatprep.subr.bf16.mxu0 %v2226
        %2883 = vmatpush1.bf16.msra.mxu0 %v2225
        %2884 = vmatprep.subr.bf16.mxu0 %v2218
        %2885 = vmatpush1.bf16.msra.mxu0 %v2217
        %2886 = vmatprep.subr.bf16.mxu0 %v2338
        %2887 = vmatpush2.bf16.msra.mxu0 %v2337
        %2888 = vmatprep.subr.bf16.mxu0 %v2330
        %2889 = vmatpush2.bf16.msra.mxu0 %v2329
        %2890 = vmatprep.subr.bf16.mxu0 %v2322
        %2891 = vmatpush2.bf16.msra.mxu0 %v2321
        %2892 = vmatprep.subr.bf16.mxu0 %v2314
        %2893 = vmatpush2.bf16.msra.mxu0 %v2313
        %2894 = vmatprep.subr.bf16.mxu0 %v2306
        %2895 = vmatpush2.bf16.msra.mxu0 %v2305
        %2896 = vmatprep.subr.bf16.mxu0 %v2298
        %2897 = vmatpush2.bf16.msra.mxu0 %v2297
        %2898 = vmatprep.subr.bf16.mxu0 %v2290
        %2899 = vmatpush2.bf16.msra.mxu0 %v2289
        %2900 = vmatprep.subr.bf16.mxu0 %v2282
        %2901 = vmatpush2.bf16.msra.mxu0 %v2281
        %2902 = vmatprep.mubr.bf16.mxu0 %v2500
        %2903 = vmatmul.mubr.bf16.gmra.mxu0 %v2499
        %v2904 = vpop.f32.mrf.mxu0
        %v2905 = vadd.f32 %v2374, %v2904
        %v2906 = vpop.f32.mrf.mxu0
        %v2907 = vadd.f32 %v2374, %v2906
        %v2908 = vpop.f32.mrf.mxu0
        %v2909 = vadd.f32 %v2379, %v2908
        %v2910 = vpop.f32.mrf.mxu0
        %v2911 = vadd.f32 %v2379, %v2910
        %2912 = vmatprep.mubr.bf16.mxu0 %v2502
        %2913 = vmatmul.mubr.bf16.gmra.mxu0 %v2501
        %v2914 = vpop.f32.mrf.mxu0
        %v2915 = vadd.f32 %v2384, %v2914
        %v2916 = vpop.f32.mrf.mxu0
        %v2917 = vadd.f32 %v2384, %v2916
        %v2918 = vpop.f32.mrf.mxu0
        %v2919 = vadd.f32 %v2389, %v2918
        %v2920 = vpop.f32.mrf.mxu0
        %v2921 = vadd.f32 %v2389, %v2920
        %2922 = vmatprep.mubr.bf16.mxu0 %v2504
        %2923 = vmatmul.mubr.bf16.gmra.mxu0 %v2503
        %v2924 = vpop.f32.mrf.mxu0
        %v2925 = vadd.f32 %v2394, %v2924
        %v2926 = vpop.f32.mrf.mxu0
        %v2927 = vadd.f32 %v2394, %v2926
        %v2928 = vpop.f32.mrf.mxu0
        %v2929 = vadd.f32 %v2399, %v2928
        %v2930 = vpop.f32.mrf.mxu0
        %v2931 = vadd.f32 %v2399, %v2930
        %2932 = vmatprep.mubr.bf16.mxu0 %v2506
        %2933 = vmatmul.mubr.bf16.gmra.mxu0 %v2505
        %v2934 = vpop.f32.mrf.mxu0
        %v2935 = vadd.f32 %v2404, %v2934
        %v2936 = vpop.f32.mrf.mxu0
        %v2937 = vadd.f32 %v2404, %v2936
        %v2938 = vpop.f32.mrf.mxu0
        %v2939 = vadd.f32 %v2409, %v2938
        %v2940 = vpop.f32.mrf.mxu0
        %v2941 = vadd.f32 %v2409, %v2940
        %2942 = vmatprep.mubr.bf16.mxu0 %v2508
        %2943 = vmatmul.mubr.bf16.gmra.mxu0 %v2507
        %v2944 = vpop.f32.mrf.mxu0
        %v2945 = vadd.f32 %v2414, %v2944
        %v2946 = vpop.f32.mrf.mxu0
        %v2947 = vadd.f32 %v2414, %v2946
        %v2948 = vpop.f32.mrf.mxu0
        %v2949 = vadd.f32 %v2419, %v2948
        %v2950 = vpop.f32.mrf.mxu0
        %v2951 = vadd.f32 %v2419, %v2950
        %2952 = vmatprep.mubr.bf16.mxu0 %v2510
        %2953 = vmatmul.mubr.bf16.gmra.mxu0 %v2509
        %v2954 = vpop.f32.mrf.mxu0
        %v2955 = vadd.f32 %v2424, %v2954
        %v2956 = vpop.f32.mrf.mxu0
        %v2957 = vadd.f32 %v2424, %v2956
        %v2958 = vpop.f32.mrf.mxu0
        %v2959 = vadd.f32 %v2429, %v2958
        %v2960 = vpop.f32.mrf.mxu0
        %v2961 = vadd.f32 %v2429, %v2960
        %2962 = vmatprep.mubr.bf16.mxu0 %v2512
        %2963 = vmatmul.mubr.bf16.gmra.mxu0 %v2511
        %v2964 = vpop.f32.mrf.mxu0
        %v2965 = vadd.f32 %v2434, %v2964
        %v2966 = vpop.f32.mrf.mxu0
        %v2967 = vadd.f32 %v2434, %v2966
        %v2968 = vpop.f32.mrf.mxu0
        %v2969 = vadd.f32 %v2439, %v2968
        %v2970 = vpop.f32.mrf.mxu0
        %v2971 = vadd.f32 %v2439, %v2970
        %2972 = vmatprep.mubr.bf16.mxu0 %v2514
        %2973 = vmatmul.mubr.bf16.gmra.mxu0 %v2513
        %v2974 = vpop.f32.mrf.mxu0
        %v2975 = vadd.f32 %v2444, %v2974
        %v2976 = vpop.f32.mrf.mxu0
        %v2977 = vadd.f32 %v2444, %v2976
        %v2978 = vpop.f32.mrf.mxu0
        %v2979 = vadd.f32 %v2449, %v2978
        %v2980 = vpop.f32.mrf.mxu0
        %v2981 = vadd.f32 %v2449, %v2980
        %2982 = vdwg.mxu0
        %v2983 = vmax.f32 %v2566, 0.0
        %v2984 = vmax.f32 %v2568, 0.0
        %v2985 = vmax.f32 %v2679, 0.0
        %v2986 = vmax.f32 %v2681, 0.0
        %v2987 = vmax.f32 %v2792, 0.0
        %v2988 = vmax.f32 %v2794, 0.0
        %v2989 = vmax.f32 %v2905, 0.0
        %v2990 = vmax.f32 %v2907, 0.0
        %v2991 = vmax.f32 %v2570, 0.0
        %v2992 = vmax.f32 %v2572, 0.0
        %v2993 = vmax.f32 %v2683, 0.0
        %v2994 = vmax.f32 %v2685, 0.0
        %v2995 = vmax.f32 %v2796, 0.0
        %v2996 = vmax.f32 %v2798, 0.0
        %v2997 = vmax.f32 %v2909, 0.0
        %v2998 = vmax.f32 %v2911, 0.0
        %v2999 = vmax.f32 %v2576, 0.0
        %v3000 = vmax.f32 %v2578, 0.0
        %v3001 = vmax.f32 %v2689, 0.0
        %v3002 = vmax.f32 %v2691, 0.0
        %v3003 = vmax.f32 %v2802, 0.0
        %v3004 = vmax.f32 %v2804, 0.0
        %v3005 = vmax.f32 %v2915, 0.0
        %v3006 = vmax.f32 %v2917, 0.0
        %v3007 = vmax.f32 %v2580, 0.0
        %v3008 = vmax.f32 %v2582, 0.0
        %v3009 = vmax.f32 %v2693, 0.0
        %v3010 = vmax.f32 %v2695, 0.0
        %v3011 = vmax.f32 %v2806, 0.0
        %v3012 = vmax.f32 %v2808, 0.0
        %v3013 = vmax.f32 %v2919, 0.0
        %v3014 = vmax.f32 %v2921, 0.0
        %v3015 = vmax.f32 %v2586, 0.0
        %v3016 = vmax.f32 %v2588, 0.0
        %v3017 = vmax.f32 %v2699, 0.0
        %v3018 = vmax.f32 %v2701, 0.0
        %v3019 = vmax.f32 %v2812, 0.0
        %v3020 = vmax.f32 %v2814, 0.0
        %v3021 = vmax.f32 %v2925, 0.0
        %v3022 = vmax.f32 %v2927, 0.0
        %v3023 = vmax.f32 %v2590, 0.0
        %v3024 = vmax.f32 %v2592, 0.0
        %v3025 = vmax.f32 %v2703, 0.0
        %v3026 = vmax.f32 %v2705, 0.0
        %v3027 = vmax.f32 %v2816, 0.0
        %v3028 = vmax.f32 %v2818, 0.0
        %v3029 = vmax.f32 %v2929, 0.0
        %v3030 = vmax.f32 %v2931, 0.0
        %v3031 = vmax.f32 %v2596, 0.0
        %v3032 = vmax.f32 %v2598, 0.0
        %v3033 = vmax.f32 %v2709, 0.0
        %v3034 = vmax.f32 %v2711, 0.0
        %v3035 = vmax.f32 %v2822, 0.0
        %v3036 = vmax.f32 %v2824, 0.0
        %v3037 = vmax.f32 %v2935, 0.0
        %v3038 = vmax.f32 %v2937, 0.0
        %v3039 = vmax.f32 %v2600, 0.0
        %v3040 = vmax.f32 %v2602, 0.0
        %v3041 = vmax.f32 %v2713, 0.0
        %v3042 = vmax.f32 %v2715, 0.0
        %v3043 = vmax.f32 %v2826, 0.0
        %v3044 = vmax.f32 %v2828, 0.0
        %v3045 = vmax.f32 %v2939, 0.0
        %v3046 = vmax.f32 %v2941, 0.0
        %v3047 = vmax.f32 %v2606, 0.0
        %v3048 = vmax.f32 %v2608, 0.0
        %v3049 = vmax.f32 %v2719, 0.0
        %v3050 = vmax.f32 %v2721, 0.0
        %v3051 = vmax.f32 %v2832, 0.0
        %v3052 = vmax.f32 %v2834, 0.0
        %v3053 = vmax.f32 %v2945, 0.0
        %v3054 = vmax.f32 %v2947, 0.0
        %v3055 = vmax.f32 %v2610, 0.0
        %v3056 = vmax.f32 %v2612, 0.0
        %v3057 = vmax.f32 %v2723, 0.0
        %v3058 = vmax.f32 %v2725, 0.0
        %v3059 = vmax.f32 %v2836, 0.0
        %v3060 = vmax.f32 %v2838, 0.0
        %v3061 = vmax.f32 %v2949, 0.0
        %v3062 = vmax.f32 %v2951, 0.0
        %v3063 = vmax.f32 %v2616, 0.0
        %v3064 = vmax.f32 %v2618, 0.0
        %v3065 = vmax.f32 %v2729, 0.0
        %v3066 = vmax.f32 %v2731, 0.0
        %v3067 = vmax.f32 %v2842, 0.0
        %v3068 = vmax.f32 %v2844, 0.0
        %v3069 = vmax.f32 %v2955, 0.0
        %v3070 = vmax.f32 %v2957, 0.0
        %v3071 = vmax.f32 %v2620, 0.0
        %v3072 = vmax.f32 %v2622, 0.0
        %v3073 = vmax.f32 %v2733, 0.0
        %v3074 = vmax.f32 %v2735, 0.0
        %v3075 = vmax.f32 %v2846, 0.0
        %v3076 = vmax.f32 %v2848, 0.0
        %v3077 = vmax.f32 %v2959, 0.0
        %v3078 = vmax.f32 %v2961, 0.0
        %v3079 = vmax.f32 %v2626, 0.0
        %v3080 = vmax.f32 %v2628, 0.0
        %v3081 = vmax.f32 %v2739, 0.0
        %v3082 = vmax.f32 %v2741, 0.0
        %v3083 = vmax.f32 %v2852, 0.0
        %v3084 = vmax.f32 %v2854, 0.0
        %v3085 = vmax.f32 %v2965, 0.0
        %v3086 = vmax.f32 %v2967, 0.0
        %v3087 = vmax.f32 %v2630, 0.0
        %v3088 = vmax.f32 %v2632, 0.0
        %v3089 = vmax.f32 %v2743, 0.0
        %v3090 = vmax.f32 %v2745, 0.0
        %v3091 = vmax.f32 %v2856, 0.0
        %v3092 = vmax.f32 %v2858, 0.0
        %v3093 = vmax.f32 %v2969, 0.0
        %v3094 = vmax.f32 %v2971, 0.0
        %v3095 = vmax.f32 %v2636, 0.0
        %v3096 = vmax.f32 %v2638, 0.0
        %v3097 = vmax.f32 %v2749, 0.0
        %v3098 = vmax.f32 %v2751, 0.0
        %v3099 = vmax.f32 %v2862, 0.0
        %v3100 = vmax.f32 %v2864, 0.0
        %v3101 = vmax.f32 %v2975, 0.0
        %v3102 = vmax.f32 %v2977, 0.0
        %v3103 = vmax.f32 %v2640, 0.0
        %v3104 = vmax.f32 %v2642, 0.0
        %v3105 = vmax.f32 %v2753, 0.0
        %v3106 = vmax.f32 %v2755, 0.0
        %v3107 = vmax.f32 %v2866, 0.0
        %v3108 = vmax.f32 %v2868, 0.0
        %v3109 = vmax.f32 %v2979, 0.0
        %v3110 = vmax.f32 %v2981, 0.0
        %v3111 = vld [vmem:[#allocation9] sm:$0xf]
        %v3112 = vld [vmem:[#allocation9 + $0x4] sm:$0xf]
        %v3113 = vld [vmem:[#allocation9 + $0x8] sm:$0xf]
        %v3114 = vld [vmem:[#allocation9 + $0xc] sm:$0xf]
        %v3115 = vld [vmem:[#allocation9 + $0x10] sm:$0xf]
        %v3116 = vld [vmem:[#allocation9 + $0x14] sm:$0xf]
        %v3117 = vld [vmem:[#allocation9 + $0x18] sm:$0xf]
        %v3118 = vld [vmem:[#allocation9 + $0x1c] sm:$0xf]
        %v3119 = vld [vmem:[#allocation9 + $0x20] sm:$0xf]
        %v3120 = vld [vmem:[#allocation9 + $0x24] sm:$0xf]
        %v3121 = vld [vmem:[#allocation9 + $0x28] sm:$0xf]
        %v3122 = vld [vmem:[#allocation9 + $0x2c] sm:$0xf]
        %v3123 = vld [vmem:[#allocation9 + $0x30] sm:$0xf]
        %v3124 = vld [vmem:[#allocation9 + $0x34] sm:$0xf]
        %v3125 = vld [vmem:[#allocation9 + $0x38] sm:$0xf]
        %v3126 = vld [vmem:[#allocation9 + $0x3c] sm:$0xf]
        %v3127 = vld [vmem:[#allocation9 + $0x40] sm:$0xf]
        %v3128 = vld [vmem:[#allocation9 + $0x44] sm:$0xf]
        %v3129 = vld [vmem:[#allocation9 + $0x48] sm:$0xf]
        %v3130 = vld [vmem:[#allocation9 + $0x4c] sm:$0xf]
        %v3131 = vld [vmem:[#allocation9 + $0x50] sm:$0xf]
        %v3132 = vld [vmem:[#allocation9 + $0x54] sm:$0xf]
        %v3133 = vld [vmem:[#allocation9 + $0x58] sm:$0xf]
        %v3134 = vld [vmem:[#allocation9 + $0x5c] sm:$0xf]
        %v3135 = vld [vmem:[#allocation9 + $0x60] sm:$0xf]
        %v3136 = vld [vmem:[#allocation9 + $0x64] sm:$0xf]
        %v3137 = vld [vmem:[#allocation9 + $0x68] sm:$0xf]
        %v3138 = vld [vmem:[#allocation9 + $0x6c] sm:$0xf]
        %v3139 = vld [vmem:[#allocation9 + $0x70] sm:$0xf]
        %v3140 = vld [vmem:[#allocation9 + $0x74] sm:$0xf]
        %v3141 = vld [vmem:[#allocation9 + $0x78] sm:$0xf]
        %v3142 = vld [vmem:[#allocation9 + $0x7c] sm:$0xf]
        %v3143 = vpack.c.bf16 %v2991, %v2983
        %v3144 = vpack.c.bf16 %v2992, %v2984
        %v3145 = vpack.c.bf16 %v2993, %v2985
        %v3146 = vpack.c.bf16 %v2994, %v2986
        %v3147 = vpack.c.bf16 %v2995, %v2987
        %v3148 = vpack.c.bf16 %v2996, %v2988
        %v3149 = vpack.c.bf16 %v2997, %v2989
        %v3150 = vpack.c.bf16 %v2998, %v2990
        %v3151 = vpack.c.bf16 %v3007, %v2999
        %v3152 = vpack.c.bf16 %v3008, %v3000
        %v3153 = vpack.c.bf16 %v3009, %v3001
        %v3154 = vpack.c.bf16 %v3010, %v3002
        %v3155 = vpack.c.bf16 %v3011, %v3003
        %v3156 = vpack.c.bf16 %v3012, %v3004
        %v3157 = vpack.c.bf16 %v3013, %v3005
        %v3158 = vpack.c.bf16 %v3014, %v3006
        %v3159 = vpack.c.bf16 %v3023, %v3015
        %v3160 = vpack.c.bf16 %v3024, %v3016
        %v3161 = vpack.c.bf16 %v3025, %v3017
        %v3162 = vpack.c.bf16 %v3026, %v3018
        %v3163 = vpack.c.bf16 %v3027, %v3019
        %v3164 = vpack.c.bf16 %v3028, %v3020
        %v3165 = vpack.c.bf16 %v3029, %v3021
        %v3166 = vpack.c.bf16 %v3030, %v3022
        %v3167 = vpack.c.bf16 %v3039, %v3031
        %v3168 = vpack.c.bf16 %v3040, %v3032
        %v3169 = vpack.c.bf16 %v3041, %v3033
        %v3170 = vpack.c.bf16 %v3042, %v3034
        %v3171 = vpack.c.bf16 %v3043, %v3035
        %v3172 = vpack.c.bf16 %v3044, %v3036
        %v3173 = vpack.c.bf16 %v3045, %v3037
        %v3174 = vpack.c.bf16 %v3046, %v3038
        %v3175 = vpack.c.bf16 %v3055, %v3047
        %v3176 = vpack.c.bf16 %v3056, %v3048
        %v3177 = vpack.c.bf16 %v3057, %v3049
        %v3178 = vpack.c.bf16 %v3058, %v3050
        %v3179 = vpack.c.bf16 %v3059, %v3051
        %v3180 = vpack.c.bf16 %v3060, %v3052
        %v3181 = vpack.c.bf16 %v3061, %v3053
        %v3182 = vpack.c.bf16 %v3062, %v3054
        %v3183 = vpack.c.bf16 %v3071, %v3063
        %v3184 = vpack.c.bf16 %v3072, %v3064
        %v3185 = vpack.c.bf16 %v3073, %v3065
        %v3186 = vpack.c.bf16 %v3074, %v3066
        %v3187 = vpack.c.bf16 %v3075, %v3067
        %v3188 = vpack.c.bf16 %v3076, %v3068
        %v3189 = vpack.c.bf16 %v3077, %v3069
        %v3190 = vpack.c.bf16 %v3078, %v3070
        %v3191 = vpack.c.bf16 %v3087, %v3079
        %v3192 = vpack.c.bf16 %v3088, %v3080
        %v3193 = vpack.c.bf16 %v3089, %v3081
        %v3194 = vpack.c.bf16 %v3090, %v3082
        %v3195 = vpack.c.bf16 %v3091, %v3083
        %v3196 = vpack.c.bf16 %v3092, %v3084
        %v3197 = vpack.c.bf16 %v3093, %v3085
        %v3198 = vpack.c.bf16 %v3094, %v3086
        %v3199 = vpack.c.bf16 %v3103, %v3095
        %v3200 = vpack.c.bf16 %v3104, %v3096
        %v3201 = vpack.c.bf16 %v3105, %v3097
        %v3202 = vpack.c.bf16 %v3106, %v3098
        %v3203 = vpack.c.bf16 %v3107, %v3099
        %v3204 = vpack.c.bf16 %v3108, %v3100
        %v3205 = vpack.c.bf16 %v3109, %v3101
        %v3206 = vpack.c.bf16 %v3110, %v3102
        %v3207 = vld [vmem:[%s8] sm:$0xff]
        %v3208 = vld [vmem:[%s8 + $0x8] sm:$0xff]
        %v3209 = vld [vmem:[%s8 + $0x10] sm:$0xff]
        %v3210 = vld [vmem:[%s8 + $0x18] sm:$0xff]
        %v3211 = vld [vmem:[%s8 + $0x20] sm:$0xff]
        %v3212 = vld [vmem:[%s8 + $0x28] sm:$0xff]
        %v3213 = vld [vmem:[%s8 + $0x30] sm:$0xff]
        %v3214 = vld [vmem:[%s8 + $0x38] sm:$0xff]
        %v3215 = vld [vmem:[%s8 + $0x40] sm:$0xff]
        %v3216 = vld [vmem:[%s8 + $0x48] sm:$0xff]
        %v3217 = vld [vmem:[%s8 + $0x50] sm:$0xff]
        %v3218 = vld [vmem:[%s8 + $0x58] sm:$0xff]
        %v3219 = vld [vmem:[%s8 + $0x60] sm:$0xff]
        %v3220 = vld [vmem:[%s8 + $0x68] sm:$0xff]
        %v3221 = vld [vmem:[%s8 + $0x70] sm:$0xff]
        %v3222 = vld [vmem:[%s8 + $0x78] sm:$0xff]
        %v3223 = vld [vmem:[%s8 + $0x80] sm:$0xff]
        %v3224 = vld [vmem:[%s8 + $0x88] sm:$0xff]
        %v3225 = vld [vmem:[%s8 + $0x90] sm:$0xff]
        %v3226 = vld [vmem:[%s8 + $0x98] sm:$0xff]
        %v3227 = vld [vmem:[%s8 + $0xa0] sm:$0xff]
        %v3228 = vld [vmem:[%s8 + $0xa8] sm:$0xff]
        %v3229 = vld [vmem:[%s8 + $0xb0] sm:$0xff]
        %v3230 = vld [vmem:[%s8 + $0xb8] sm:$0xff]
        %v3231 = vld [vmem:[%s8 + $0xc0] sm:$0xff]
        %v3232 = vld [vmem:[%s8 + $0xc8] sm:$0xff]
        %v3233 = vld [vmem:[%s8 + $0xd0] sm:$0xff]
        %v3234 = vld [vmem:[%s8 + $0xd8] sm:$0xff]
        %v3235 = vld [vmem:[%s8 + $0xe0] sm:$0xff]
        %v3236 = vld [vmem:[%s8 + $0xe8] sm:$0xff]
        %v3237 = vld [vmem:[%s8 + $0xf0] sm:$0xff]
        %v3238 = vld [vmem:[%s8 + $0xf8] sm:$0xff]
        %3240 = vset.pattern.permute.xlu0 0
        %3241 = vperm.xlu0 %3240, %v3207
        %v3242 = vpop.permute.xlu0 %3241
        %3245 = vset.pattern.permute.xlu0 0
        %3246 = vperm.xlu0 %3245, %v3208
        %v3247 = vpop.permute.xlu0 %3246
        %3250 = vset.pattern.permute.xlu0 0
        %3251 = vperm.xlu0 %3250, %v3209
        %v3252 = vpop.permute.xlu0 %3251
        %3255 = vset.pattern.permute.xlu0 0
        %3256 = vperm.xlu0 %3255, %v3210
        %v3257 = vpop.permute.xlu0 %3256
        %3260 = vset.pattern.permute.xlu0 0
        %3261 = vperm.xlu0 %3260, %v3211
        %v3262 = vpop.permute.xlu0 %3261
        %3265 = vset.pattern.permute.xlu0 0
        %3266 = vperm.xlu0 %3265, %v3212
        %v3267 = vpop.permute.xlu0 %3266
        %3270 = vset.pattern.permute.xlu0 0
        %3271 = vperm.xlu0 %3270, %v3213
        %v3272 = vpop.permute.xlu0 %3271
        %3275 = vset.pattern.permute.xlu0 0
        %3276 = vperm.xlu0 %3275, %v3214
        %v3277 = vpop.permute.xlu0 %3276
        %3280 = vset.pattern.permute.xlu0 0
        %3281 = vperm.xlu0 %3280, %v3215
        %v3282 = vpop.permute.xlu0 %3281
        %3285 = vset.pattern.permute.xlu0 0
        %3286 = vperm.xlu0 %3285, %v3216
        %v3287 = vpop.permute.xlu0 %3286
        %3290 = vset.pattern.permute.xlu0 0
        %3291 = vperm.xlu0 %3290, %v3217
        %v3292 = vpop.permute.xlu0 %3291
        %3295 = vset.pattern.permute.xlu0 0
        %3296 = vperm.xlu0 %3295, %v3218
        %v3297 = vpop.permute.xlu0 %3296
        %3300 = vset.pattern.permute.xlu0 0
        %3301 = vperm.xlu0 %3300, %v3219
        %v3302 = vpop.permute.xlu0 %3301
        %3305 = vset.pattern.permute.xlu0 0
        %3306 = vperm.xlu0 %3305, %v3220
        %v3307 = vpop.permute.xlu0 %3306
        %3310 = vset.pattern.permute.xlu0 0
        %3311 = vperm.xlu0 %3310, %v3221
        %v3312 = vpop.permute.xlu0 %3311
        %3315 = vset.pattern.permute.xlu0 0
        %3316 = vperm.xlu0 %3315, %v3222
        %v3317 = vpop.permute.xlu0 %3316
        %3320 = vset.pattern.permute.xlu0 0
        %3321 = vperm.xlu0 %3320, %v3223
        %v3322 = vpop.permute.xlu0 %3321
        %3325 = vset.pattern.permute.xlu0 0
        %3326 = vperm.xlu0 %3325, %v3224
        %v3327 = vpop.permute.xlu0 %3326
        %3330 = vset.pattern.permute.xlu0 0
        %3331 = vperm.xlu0 %3330, %v3225
        %v3332 = vpop.permute.xlu0 %3331
        %3335 = vset.pattern.permute.xlu0 0
        %3336 = vperm.xlu0 %3335, %v3226
        %v3337 = vpop.permute.xlu0 %3336
        %3340 = vset.pattern.permute.xlu0 0
        %3341 = vperm.xlu0 %3340, %v3227
        %v3342 = vpop.permute.xlu0 %3341
        %3345 = vset.pattern.permute.xlu0 0
        %3346 = vperm.xlu0 %3345, %v3228
        %v3347 = vpop.permute.xlu0 %3346
        %3350 = vset.pattern.permute.xlu0 0
        %3351 = vperm.xlu0 %3350, %v3229
        %v3352 = vpop.permute.xlu0 %3351
        %3355 = vset.pattern.permute.xlu0 0
        %3356 = vperm.xlu0 %3355, %v3230
        %v3357 = vpop.permute.xlu0 %3356
        %3360 = vset.pattern.permute.xlu0 0
        %3361 = vperm.xlu0 %3360, %v3231
        %v3362 = vpop.permute.xlu0 %3361
        %3365 = vset.pattern.permute.xlu0 0
        %3366 = vperm.xlu0 %3365, %v3232
        %v3367 = vpop.permute.xlu0 %3366
        %3370 = vset.pattern.permute.xlu0 0
        %3371 = vperm.xlu0 %3370, %v3233
        %v3372 = vpop.permute.xlu0 %3371
        %3375 = vset.pattern.permute.xlu0 0
        %3376 = vperm.xlu0 %3375, %v3234
        %v3377 = vpop.permute.xlu0 %3376
        %3380 = vset.pattern.permute.xlu0 0
        %3381 = vperm.xlu0 %3380, %v3235
        %v3382 = vpop.permute.xlu0 %3381
        %3385 = vset.pattern.permute.xlu0 0
        %3386 = vperm.xlu0 %3385, %v3236
        %v3387 = vpop.permute.xlu0 %3386
        %3390 = vset.pattern.permute.xlu0 0
        %3391 = vperm.xlu0 %3390, %v3237
        %v3392 = vpop.permute.xlu0 %3391
        %3395 = vset.pattern.permute.xlu0 0
        %3396 = vperm.xlu0 %3395, %v3238
        %v3397 = vpop.permute.xlu0 %3396
        %v3431 = vunpack.c.l.b16 %v3111
        %v3432 = vunpack.c.l.b16 %v3112
        %v3433 = vunpack.c.l.b16 %v3113
        %v3434 = vunpack.c.l.b16 %v3114
        %v3435 = vunpack.c.l.b16 %v3115
        %v3436 = vunpack.c.l.b16 %v3116
        %v3437 = vunpack.c.l.b16 %v3117
        %v3438 = vunpack.c.l.b16 %v3118
        %v3439 = vunpack.c.l.b16 %v3119
        %v3440 = vunpack.c.l.b16 %v3120
        %v3441 = vunpack.c.l.b16 %v3121
        %v3442 = vunpack.c.l.b16 %v3122
        %v3443 = vunpack.c.l.b16 %v3123
        %v3444 = vunpack.c.l.b16 %v3124
        %v3445 = vunpack.c.l.b16 %v3125
        %v3446 = vunpack.c.l.b16 %v3126
        %v3447 = vunpack.c.l.b16 %v3127
        %v3448 = vunpack.c.l.b16 %v3128
        %v3449 = vunpack.c.l.b16 %v3129
        %v3450 = vunpack.c.l.b16 %v3130
        %v3451 = vunpack.c.l.b16 %v3131
        %v3452 = vunpack.c.l.b16 %v3132
        %v3453 = vunpack.c.l.b16 %v3133
        %v3454 = vunpack.c.l.b16 %v3134
        %v3455 = vunpack.c.l.b16 %v3135
        %v3456 = vunpack.c.l.b16 %v3136
        %v3457 = vunpack.c.l.b16 %v3137
        %v3458 = vunpack.c.l.b16 %v3138
        %v3459 = vunpack.c.l.b16 %v3139
        %v3460 = vunpack.c.l.b16 %v3140
        %v3461 = vunpack.c.l.b16 %v3141
        %v3462 = vunpack.c.l.b16 %v3142
        %v3463 = vpack.c.b16 %v3432, %v3431
        %v3464 = vpack.c.b16 %v3434, %v3433
        %v3465 = vpack.c.b16 %v3436, %v3435
        %v3466 = vpack.c.b16 %v3438, %v3437
        %v3467 = vpack.c.b16 %v3440, %v3439
        %v3468 = vpack.c.b16 %v3442, %v3441
        %v3469 = vpack.c.b16 %v3444, %v3443
        %v3470 = vpack.c.b16 %v3446, %v3445
        %v3471 = vpack.c.b16 %v3448, %v3447
        %v3472 = vpack.c.b16 %v3450, %v3449
        %v3473 = vpack.c.b16 %v3452, %v3451
        %v3474 = vpack.c.b16 %v3454, %v3453
        %v3475 = vpack.c.b16 %v3456, %v3455
        %v3476 = vpack.c.b16 %v3458, %v3457
        %v3477 = vpack.c.b16 %v3460, %v3459
        %v3478 = vpack.c.b16 %v3462, %v3461
        %3495 = vmatprep.subr.bf16.mxu0 %v3200
        %3496 = vmatpush1.bf16.msra.mxu0 %v3199
        %3497 = vmatprep.subr.bf16.mxu0 %v3192
        %3498 = vmatpush1.bf16.msra.mxu0 %v3191
        %3499 = vmatprep.subr.bf16.mxu0 %v3184
        %3500 = vmatpush1.bf16.msra.mxu0 %v3183
        %3501 = vmatprep.subr.bf16.mxu0 %v3176
        %3502 = vmatpush1.bf16.msra.mxu0 %v3175
        %3503 = vmatprep.subr.bf16.mxu0 %v3168
        %3504 = vmatpush1.bf16.msra.mxu0 %v3167
        %3505 = vmatprep.subr.bf16.mxu0 %v3160
        %3506 = vmatpush1.bf16.msra.mxu0 %v3159
        %3507 = vmatprep.subr.bf16.mxu0 %v3152
        %3508 = vmatpush1.bf16.msra.mxu0 %v3151
        %3509 = vmatprep.subr.bf16.mxu0 %v3144
        %3510 = vmatpush1.bf16.msra.mxu0 %v3143
        %3511 = vmatprep.subr.bf16.mxu0 0
        %3512 = vmatpush2.bf16.msra.mxu0 0
        %3513 = vmatprep.subr.bf16.mxu0 0
        %3514 = vmatpush2.bf16.msra.mxu0 0
        %3515 = vmatprep.subr.bf16.mxu0 0
        %3516 = vmatpush2.bf16.msra.mxu0 0
        %3517 = vmatprep.subr.bf16.mxu0 0
        %3518 = vmatpush2.bf16.msra.mxu0 0
        %3519 = vmatprep.subr.bf16.mxu0 0
        %3520 = vmatpush2.bf16.msra.mxu0 0
        %3521 = vmatprep.subr.bf16.mxu0 0
        %3522 = vmatpush2.bf16.msra.mxu0 0
        %3523 = vmatprep.subr.bf16.mxu0 0
        %3524 = vmatpush2.bf16.msra.mxu0 0
        %3525 = vmatprep.subr.bf16.mxu0 0
        %3526 = vmatpush2.bf16.msra.mxu0 0
        %3527 = vmatprep.mubr.bf16.mxu0 0
        %3528 = vmatmul.mubr.bf16.gmra.mxu0 %v3463
        %v3529 = vpop.f32.mrf.mxu0
        %v3530 = vadd.f32 %v3242, %v3529
        %v3531 = vpop.f32.mrf.mxu0
        %v3532 = vadd.f32 %v3242, %v3531
        %v3533 = vpop.f32.mrf.mxu0
        %v3534 = vadd.f32 %v3247, %v3533
        %v3535 = vpop.f32.mrf.mxu0
        %v3536 = vadd.f32 %v3247, %v3535
        %3537 = vmatprep.mubr.bf16.mxu0 0
        %3538 = vmatmul.mubr.bf16.gmra.mxu0 %v3464
        %v3539 = vpop.f32.mrf.mxu0
        %v3540 = vadd.f32 %v3252, %v3539
        %v3541 = vpop.f32.mrf.mxu0
        %v3542 = vadd.f32 %v3252, %v3541
        %v3543 = vpop.f32.mrf.mxu0
        %v3544 = vadd.f32 %v3257, %v3543
        %v3545 = vpop.f32.mrf.mxu0
        %v3546 = vadd.f32 %v3257, %v3545
        %3547 = vmatprep.mubr.bf16.mxu0 0
        %3548 = vmatmul.mubr.bf16.gmra.mxu0 %v3465
        %v3549 = vpop.f32.mrf.mxu0
        %v3550 = vadd.f32 %v3262, %v3549
        %v3551 = vpop.f32.mrf.mxu0
        %v3552 = vadd.f32 %v3262, %v3551
        %v3553 = vpop.f32.mrf.mxu0
        %v3554 = vadd.f32 %v3267, %v3553
        %v3555 = vpop.f32.mrf.mxu0
        %v3556 = vadd.f32 %v3267, %v3555
        %3557 = vmatprep.mubr.bf16.mxu0 0
        %3558 = vmatmul.mubr.bf16.gmra.mxu0 %v3466
        %v3559 = vpop.f32.mrf.mxu0
        %v3560 = vadd.f32 %v3272, %v3559
        %v3561 = vpop.f32.mrf.mxu0
        %v3562 = vadd.f32 %v3272, %v3561
        %v3563 = vpop.f32.mrf.mxu0
        %v3564 = vadd.f32 %v3277, %v3563
        %v3565 = vpop.f32.mrf.mxu0
        %v3566 = vadd.f32 %v3277, %v3565
        %3567 = vmatprep.mubr.bf16.mxu0 0
        %3568 = vmatmul.mubr.bf16.gmra.mxu0 %v3467
        %v3569 = vpop.f32.mrf.mxu0
        %v3570 = vadd.f32 %v3282, %v3569
        %v3571 = vpop.f32.mrf.mxu0
        %v3572 = vadd.f32 %v3282, %v3571
        %v3573 = vpop.f32.mrf.mxu0
        %v3574 = vadd.f32 %v3287, %v3573
        %v3575 = vpop.f32.mrf.mxu0
        %v3576 = vadd.f32 %v3287, %v3575
        %3577 = vmatprep.mubr.bf16.mxu0 0
        %3578 = vmatmul.mubr.bf16.gmra.mxu0 %v3468
        %v3579 = vpop.f32.mrf.mxu0
        %v3580 = vadd.f32 %v3292, %v3579
        %v3581 = vpop.f32.mrf.mxu0
        %v3582 = vadd.f32 %v3292, %v3581
        %v3583 = vpop.f32.mrf.mxu0
        %v3584 = vadd.f32 %v3297, %v3583
        %v3585 = vpop.f32.mrf.mxu0
        %v3586 = vadd.f32 %v3297, %v3585
        %3587 = vmatprep.mubr.bf16.mxu0 0
        %3588 = vmatmul.mubr.bf16.gmra.mxu0 %v3469
        %v3589 = vpop.f32.mrf.mxu0
        %v3590 = vadd.f32 %v3302, %v3589
        %v3591 = vpop.f32.mrf.mxu0
        %v3592 = vadd.f32 %v3302, %v3591
        %v3593 = vpop.f32.mrf.mxu0
        %v3594 = vadd.f32 %v3307, %v3593
        %v3595 = vpop.f32.mrf.mxu0
        %v3596 = vadd.f32 %v3307, %v3595
        %3597 = vmatprep.mubr.bf16.mxu0 0
        %3598 = vmatmul.mubr.bf16.gmra.mxu0 %v3470
        %v3599 = vpop.f32.mrf.mxu0
        %v3600 = vadd.f32 %v3312, %v3599
        %v3601 = vpop.f32.mrf.mxu0
        %v3602 = vadd.f32 %v3312, %v3601
        %v3603 = vpop.f32.mrf.mxu0
        %v3604 = vadd.f32 %v3317, %v3603
        %v3605 = vpop.f32.mrf.mxu0
        %v3606 = vadd.f32 %v3317, %v3605
        %3607 = vmatprep.mubr.bf16.mxu0 0
        %3608 = vmatmul.mubr.bf16.gmra.mxu0 %v3471
        %v3609 = vpop.f32.mrf.mxu0
        %v3610 = vadd.f32 %v3322, %v3609
        %v3611 = vpop.f32.mrf.mxu0
        %v3612 = vadd.f32 %v3322, %v3611
        %v3613 = vpop.f32.mrf.mxu0
        %v3614 = vadd.f32 %v3327, %v3613
        %v3615 = vpop.f32.mrf.mxu0
        %v3616 = vadd.f32 %v3327, %v3615
        %3617 = vmatprep.mubr.bf16.mxu0 0
        %3618 = vmatmul.mubr.bf16.gmra.mxu0 %v3472
        %v3619 = vpop.f32.mrf.mxu0
        %v3620 = vadd.f32 %v3332, %v3619
        %v3621 = vpop.f32.mrf.mxu0
        %v3622 = vadd.f32 %v3332, %v3621
        %v3623 = vpop.f32.mrf.mxu0
        %v3624 = vadd.f32 %v3337, %v3623
        %v3625 = vpop.f32.mrf.mxu0
        %v3626 = vadd.f32 %v3337, %v3625
        %3627 = vmatprep.mubr.bf16.mxu0 0
        %3628 = vmatmul.mubr.bf16.gmra.mxu0 %v3473
        %v3629 = vpop.f32.mrf.mxu0
        %v3630 = vadd.f32 %v3342, %v3629
        %v3631 = vpop.f32.mrf.mxu0
        %v3632 = vadd.f32 %v3342, %v3631
        %v3633 = vpop.f32.mrf.mxu0
        %v3634 = vadd.f32 %v3347, %v3633
        %v3635 = vpop.f32.mrf.mxu0
        %v3636 = vadd.f32 %v3347, %v3635
        %3637 = vmatprep.mubr.bf16.mxu0 0
        %3638 = vmatmul.mubr.bf16.gmra.mxu0 %v3474
        %v3639 = vpop.f32.mrf.mxu0
        %v3640 = vadd.f32 %v3352, %v3639
        %v3641 = vpop.f32.mrf.mxu0
        %v3642 = vadd.f32 %v3352, %v3641
        %v3643 = vpop.f32.mrf.mxu0
        %v3644 = vadd.f32 %v3357, %v3643
        %v3645 = vpop.f32.mrf.mxu0
        %v3646 = vadd.f32 %v3357, %v3645
        %3647 = vmatprep.mubr.bf16.mxu0 0
        %3648 = vmatmul.mubr.bf16.gmra.mxu0 %v3475
        %v3649 = vpop.f32.mrf.mxu0
        %v3650 = vadd.f32 %v3362, %v3649
        %v3651 = vpop.f32.mrf.mxu0
        %v3652 = vadd.f32 %v3362, %v3651
        %v3653 = vpop.f32.mrf.mxu0
        %v3654 = vadd.f32 %v3367, %v3653
        %v3655 = vpop.f32.mrf.mxu0
        %v3656 = vadd.f32 %v3367, %v3655
        %3657 = vmatprep.mubr.bf16.mxu0 0
        %3658 = vmatmul.mubr.bf16.gmra.mxu0 %v3476
        %v3659 = vpop.f32.mrf.mxu0
        %v3660 = vadd.f32 %v3372, %v3659
        %v3661 = vpop.f32.mrf.mxu0
        %v3662 = vadd.f32 %v3372, %v3661
        %v3663 = vpop.f32.mrf.mxu0
        %v3664 = vadd.f32 %v3377, %v3663
        %v3665 = vpop.f32.mrf.mxu0
        %v3666 = vadd.f32 %v3377, %v3665
        %3667 = vmatprep.mubr.bf16.mxu0 0
        %3668 = vmatmul.mubr.bf16.gmra.mxu0 %v3477
        %v3669 = vpop.f32.mrf.mxu0
        %v3670 = vadd.f32 %v3382, %v3669
        %v3671 = vpop.f32.mrf.mxu0
        %v3672 = vadd.f32 %v3382, %v3671
        %v3673 = vpop.f32.mrf.mxu0
        %v3674 = vadd.f32 %v3387, %v3673
        %v3675 = vpop.f32.mrf.mxu0
        %v3676 = vadd.f32 %v3387, %v3675
        %3677 = vmatprep.mubr.bf16.mxu0 0
        %3678 = vmatmul.mubr.bf16.gmra.mxu0 %v3478
        %v3679 = vpop.f32.mrf.mxu0
        %v3680 = vadd.f32 %v3392, %v3679
        %v3681 = vpop.f32.mrf.mxu0
        %v3682 = vadd.f32 %v3392, %v3681
        %v3683 = vpop.f32.mrf.mxu0
        %v3684 = vadd.f32 %v3397, %v3683
        %v3685 = vpop.f32.mrf.mxu0
        %v3686 = vadd.f32 %v3397, %v3685
        %3687 = vdwg.mxu0
        %3688 = vmatprep.subr.bf16.mxu0 %v3202
        %3689 = vmatpush1.bf16.msra.mxu0 %v3201
        %3690 = vmatprep.subr.bf16.mxu0 %v3194
        %3691 = vmatpush1.bf16.msra.mxu0 %v3193
        %3692 = vmatprep.subr.bf16.mxu0 %v3186
        %3693 = vmatpush1.bf16.msra.mxu0 %v3185
        %3694 = vmatprep.subr.bf16.mxu0 %v3178
        %3695 = vmatpush1.bf16.msra.mxu0 %v3177
        %3696 = vmatprep.subr.bf16.mxu0 %v3170
        %3697 = vmatpush1.bf16.msra.mxu0 %v3169
        %3698 = vmatprep.subr.bf16.mxu0 %v3162
        %3699 = vmatpush1.bf16.msra.mxu0 %v3161
        %3700 = vmatprep.subr.bf16.mxu0 %v3154
        %3701 = vmatpush1.bf16.msra.mxu0 %v3153
        %3702 = vmatprep.subr.bf16.mxu0 %v3146
        %3703 = vmatpush1.bf16.msra.mxu0 %v3145
        %3704 = vmatprep.subr.bf16.mxu0 0
        %3705 = vmatpush2.bf16.msra.mxu0 0
        %3706 = vmatprep.subr.bf16.mxu0 0
        %3707 = vmatpush2.bf16.msra.mxu0 0
        %3708 = vmatprep.subr.bf16.mxu0 0
        %3709 = vmatpush2.bf16.msra.mxu0 0
        %3710 = vmatprep.subr.bf16.mxu0 0
        %3711 = vmatpush2.bf16.msra.mxu0 0
        %3712 = vmatprep.subr.bf16.mxu0 0
        %3713 = vmatpush2.bf16.msra.mxu0 0
        %3714 = vmatprep.subr.bf16.mxu0 0
        %3715 = vmatpush2.bf16.msra.mxu0 0
        %3716 = vmatprep.subr.bf16.mxu0 0
        %3717 = vmatpush2.bf16.msra.mxu0 0
        %3718 = vmatprep.subr.bf16.mxu0 0
        %3719 = vmatpush2.bf16.msra.mxu0 0
        %3720 = vmatprep.mubr.bf16.mxu0 0
        %3721 = vmatmul.mubr.bf16.gmra.mxu0 %v3463
        %v3722 = vpop.f32.mrf.mxu0
        %v3723 = vadd.f32 %v3242, %v3722
        %v3724 = vpop.f32.mrf.mxu0
        %v3725 = vadd.f32 %v3242, %v3724
        %v3726 = vpop.f32.mrf.mxu0
        %v3727 = vadd.f32 %v3247, %v3726
        %v3728 = vpop.f32.mrf.mxu0
        %v3729 = vadd.f32 %v3247, %v3728
        %3730 = vmatprep.mubr.bf16.mxu0 0
        %3731 = vmatmul.mubr.bf16.gmra.mxu0 %v3464
        %v3732 = vpop.f32.mrf.mxu0
        %v3733 = vadd.f32 %v3252, %v3732
        %v3734 = vpop.f32.mrf.mxu0
        %v3735 = vadd.f32 %v3252, %v3734
        %v3736 = vpop.f32.mrf.mxu0
        %v3737 = vadd.f32 %v3257, %v3736
        %v3738 = vpop.f32.mrf.mxu0
        %v3739 = vadd.f32 %v3257, %v3738
        %3740 = vmatprep.mubr.bf16.mxu0 0
        %3741 = vmatmul.mubr.bf16.gmra.mxu0 %v3465
        %v3742 = vpop.f32.mrf.mxu0
        %v3743 = vadd.f32 %v3262, %v3742
        %v3744 = vpop.f32.mrf.mxu0
        %v3745 = vadd.f32 %v3262, %v3744
        %v3746 = vpop.f32.mrf.mxu0
        %v3747 = vadd.f32 %v3267, %v3746
        %v3748 = vpop.f32.mrf.mxu0
        %v3749 = vadd.f32 %v3267, %v3748
        %3750 = vmatprep.mubr.bf16.mxu0 0
        %3751 = vmatmul.mubr.bf16.gmra.mxu0 %v3466
        %v3752 = vpop.f32.mrf.mxu0
        %v3753 = vadd.f32 %v3272, %v3752
        %v3754 = vpop.f32.mrf.mxu0
        %v3755 = vadd.f32 %v3272, %v3754
        %v3756 = vpop.f32.mrf.mxu0
        %v3757 = vadd.f32 %v3277, %v3756
        %v3758 = vpop.f32.mrf.mxu0
        %v3759 = vadd.f32 %v3277, %v3758
        %3760 = vmatprep.mubr.bf16.mxu0 0
        %3761 = vmatmul.mubr.bf16.gmra.mxu0 %v3467
        %v3762 = vpop.f32.mrf.mxu0
        %v3763 = vadd.f32 %v3282, %v3762
        %v3764 = vpop.f32.mrf.mxu0
        %v3765 = vadd.f32 %v3282, %v3764
        %v3766 = vpop.f32.mrf.mxu0
        %v3767 = vadd.f32 %v3287, %v3766
        %v3768 = vpop.f32.mrf.mxu0
        %v3769 = vadd.f32 %v3287, %v3768
        %3770 = vmatprep.mubr.bf16.mxu0 0
        %3771 = vmatmul.mubr.bf16.gmra.mxu0 %v3468
        %v3772 = vpop.f32.mrf.mxu0
        %v3773 = vadd.f32 %v3292, %v3772
        %v3774 = vpop.f32.mrf.mxu0
        %v3775 = vadd.f32 %v3292, %v3774
        %v3776 = vpop.f32.mrf.mxu0
        %v3777 = vadd.f32 %v3297, %v3776
        %v3778 = vpop.f32.mrf.mxu0
        %v3779 = vadd.f32 %v3297, %v3778
        %3780 = vmatprep.mubr.bf16.mxu0 0
        %3781 = vmatmul.mubr.bf16.gmra.mxu0 %v3469
        %v3782 = vpop.f32.mrf.mxu0
        %v3783 = vadd.f32 %v3302, %v3782
        %v3784 = vpop.f32.mrf.mxu0
        %v3785 = vadd.f32 %v3302, %v3784
        %v3786 = vpop.f32.mrf.mxu0
        %v3787 = vadd.f32 %v3307, %v3786
        %v3788 = vpop.f32.mrf.mxu0
        %v3789 = vadd.f32 %v3307, %v3788
        %3790 = vmatprep.mubr.bf16.mxu0 0
        %3791 = vmatmul.mubr.bf16.gmra.mxu0 %v3470
        %v3792 = vpop.f32.mrf.mxu0
        %v3793 = vadd.f32 %v3312, %v3792
        %v3794 = vpop.f32.mrf.mxu0
        %v3795 = vadd.f32 %v3312, %v3794
        %v3796 = vpop.f32.mrf.mxu0
        %v3797 = vadd.f32 %v3317, %v3796
        %v3798 = vpop.f32.mrf.mxu0
        %v3799 = vadd.f32 %v3317, %v3798
        %3800 = vmatprep.mubr.bf16.mxu0 0
        %3801 = vmatmul.mubr.bf16.gmra.mxu0 %v3471
        %v3802 = vpop.f32.mrf.mxu0
        %v3803 = vadd.f32 %v3322, %v3802
        %v3804 = vpop.f32.mrf.mxu0
        %v3805 = vadd.f32 %v3322, %v3804
        %v3806 = vpop.f32.mrf.mxu0
        %v3807 = vadd.f32 %v3327, %v3806
        %v3808 = vpop.f32.mrf.mxu0
        %v3809 = vadd.f32 %v3327, %v3808
        %3810 = vmatprep.mubr.bf16.mxu0 0
        %3811 = vmatmul.mubr.bf16.gmra.mxu0 %v3472
        %v3812 = vpop.f32.mrf.mxu0
        %v3813 = vadd.f32 %v3332, %v3812
        %v3814 = vpop.f32.mrf.mxu0
        %v3815 = vadd.f32 %v3332, %v3814
        %v3816 = vpop.f32.mrf.mxu0
        %v3817 = vadd.f32 %v3337, %v3816
        %v3818 = vpop.f32.mrf.mxu0
        %v3819 = vadd.f32 %v3337, %v3818
        %3820 = vmatprep.mubr.bf16.mxu0 0
        %3821 = vmatmul.mubr.bf16.gmra.mxu0 %v3473
        %v3822 = vpop.f32.mrf.mxu0
        %v3823 = vadd.f32 %v3342, %v3822
        %v3824 = vpop.f32.mrf.mxu0
        %v3825 = vadd.f32 %v3342, %v3824
        %v3826 = vpop.f32.mrf.mxu0
        %v3827 = vadd.f32 %v3347, %v3826
        %v3828 = vpop.f32.mrf.mxu0
        %v3829 = vadd.f32 %v3347, %v3828
        %3830 = vmatprep.mubr.bf16.mxu0 0
        %3831 = vmatmul.mubr.bf16.gmra.mxu0 %v3474
        %v3832 = vpop.f32.mrf.mxu0
        %v3833 = vadd.f32 %v3352, %v3832
        %v3834 = vpop.f32.mrf.mxu0
        %v3835 = vadd.f32 %v3352, %v3834
        %v3836 = vpop.f32.mrf.mxu0
        %v3837 = vadd.f32 %v3357, %v3836
        %v3838 = vpop.f32.mrf.mxu0
        %v3839 = vadd.f32 %v3357, %v3838
        %3840 = vmatprep.mubr.bf16.mxu0 0
        %3841 = vmatmul.mubr.bf16.gmra.mxu0 %v3475
        %v3842 = vpop.f32.mrf.mxu0
        %v3843 = vadd.f32 %v3362, %v3842
        %v3844 = vpop.f32.mrf.mxu0
        %v3845 = vadd.f32 %v3362, %v3844
        %v3846 = vpop.f32.mrf.mxu0
        %v3847 = vadd.f32 %v3367, %v3846
        %v3848 = vpop.f32.mrf.mxu0
        %v3849 = vadd.f32 %v3367, %v3848
        %3850 = vmatprep.mubr.bf16.mxu0 0
        %3851 = vmatmul.mubr.bf16.gmra.mxu0 %v3476
        %v3852 = vpop.f32.mrf.mxu0
        %v3853 = vadd.f32 %v3372, %v3852
        %v3854 = vpop.f32.mrf.mxu0
        %v3855 = vadd.f32 %v3372, %v3854
        %v3856 = vpop.f32.mrf.mxu0
        %v3857 = vadd.f32 %v3377, %v3856
        %v3858 = vpop.f32.mrf.mxu0
        %v3859 = vadd.f32 %v3377, %v3858
        %3860 = vmatprep.mubr.bf16.mxu0 0
        %3861 = vmatmul.mubr.bf16.gmra.mxu0 %v3477
        %v3862 = vpop.f32.mrf.mxu0
        %v3863 = vadd.f32 %v3382, %v3862
        %v3864 = vpop.f32.mrf.mxu0
        %v3865 = vadd.f32 %v3382, %v3864
        %v3866 = vpop.f32.mrf.mxu0
        %v3867 = vadd.f32 %v3387, %v3866
        %v3868 = vpop.f32.mrf.mxu0
        %v3869 = vadd.f32 %v3387, %v3868
        %3870 = vmatprep.mubr.bf16.mxu0 0
        %3871 = vmatmul.mubr.bf16.gmra.mxu0 %v3478
        %v3872 = vpop.f32.mrf.mxu0
        %v3873 = vadd.f32 %v3392, %v3872
        %v3874 = vpop.f32.mrf.mxu0
        %v3875 = vadd.f32 %v3392, %v3874
        %v3876 = vpop.f32.mrf.mxu0
        %v3877 = vadd.f32 %v3397, %v3876
        %v3878 = vpop.f32.mrf.mxu0
        %v3879 = vadd.f32 %v3397, %v3878
        %3880 = vdwg.mxu0
        %3881 = vmatprep.subr.bf16.mxu0 %v3204
        %3882 = vmatpush1.bf16.msra.mxu0 %v3203
        %3883 = vmatprep.subr.bf16.mxu0 %v3196
        %3884 = vmatpush1.bf16.msra.mxu0 %v3195
        %3885 = vmatprep.subr.bf16.mxu0 %v3188
        %3886 = vmatpush1.bf16.msra.mxu0 %v3187
        %3887 = vmatprep.subr.bf16.mxu0 %v3180
        %3888 = vmatpush1.bf16.msra.mxu0 %v3179
        %3889 = vmatprep.subr.bf16.mxu0 %v3172
        %3890 = vmatpush1.bf16.msra.mxu0 %v3171
        %3891 = vmatprep.subr.bf16.mxu0 %v3164
        %3892 = vmatpush1.bf16.msra.mxu0 %v3163
        %3893 = vmatprep.subr.bf16.mxu0 %v3156
        %3894 = vmatpush1.bf16.msra.mxu0 %v3155
        %3895 = vmatprep.subr.bf16.mxu0 %v3148
        %3896 = vmatpush1.bf16.msra.mxu0 %v3147
        %3897 = vmatprep.subr.bf16.mxu0 0
        %3898 = vmatpush2.bf16.msra.mxu0 0
        %3899 = vmatprep.subr.bf16.mxu0 0
        %3900 = vmatpush2.bf16.msra.mxu0 0
        %3901 = vmatprep.subr.bf16.mxu0 0
        %3902 = vmatpush2.bf16.msra.mxu0 0
        %3903 = vmatprep.subr.bf16.mxu0 0
        %3904 = vmatpush2.bf16.msra.mxu0 0
        %3905 = vmatprep.subr.bf16.mxu0 0
        %3906 = vmatpush2.bf16.msra.mxu0 0
        %3907 = vmatprep.subr.bf16.mxu0 0
        %3908 = vmatpush2.bf16.msra.mxu0 0
        %3909 = vmatprep.subr.bf16.mxu0 0
        %3910 = vmatpush2.bf16.msra.mxu0 0
        %3911 = vmatprep.subr.bf16.mxu0 0
        %3912 = vmatpush2.bf16.msra.mxu0 0
        %3913 = vmatprep.mubr.bf16.mxu0 0
        %3914 = vmatmul.mubr.bf16.gmra.mxu0 %v3463
        %v3915 = vpop.f32.mrf.mxu0
        %v3916 = vadd.f32 %v3242, %v3915
        %v3917 = vpop.f32.mrf.mxu0
        %v3918 = vadd.f32 %v3242, %v3917
        %v3919 = vpop.f32.mrf.mxu0
        %v3920 = vadd.f32 %v3247, %v3919
        %v3921 = vpop.f32.mrf.mxu0
        %v3922 = vadd.f32 %v3247, %v3921
        %3923 = vmatprep.mubr.bf16.mxu0 0
        %3924 = vmatmul.mubr.bf16.gmra.mxu0 %v3464
        %v3925 = vpop.f32.mrf.mxu0
        %v3926 = vadd.f32 %v3252, %v3925
        %v3927 = vpop.f32.mrf.mxu0
        %v3928 = vadd.f32 %v3252, %v3927
        %v3929 = vpop.f32.mrf.mxu0
        %v3930 = vadd.f32 %v3257, %v3929
        %v3931 = vpop.f32.mrf.mxu0
        %v3932 = vadd.f32 %v3257, %v3931
        %3933 = vmatprep.mubr.bf16.mxu0 0
        %3934 = vmatmul.mubr.bf16.gmra.mxu0 %v3465
        %v3935 = vpop.f32.mrf.mxu0
        %v3936 = vadd.f32 %v3262, %v3935
        %v3937 = vpop.f32.mrf.mxu0
        %v3938 = vadd.f32 %v3262, %v3937
        %v3939 = vpop.f32.mrf.mxu0
        %v3940 = vadd.f32 %v3267, %v3939
        %v3941 = vpop.f32.mrf.mxu0
        %v3942 = vadd.f32 %v3267, %v3941
        %3943 = vmatprep.mubr.bf16.mxu0 0
        %3944 = vmatmul.mubr.bf16.gmra.mxu0 %v3466
        %v3945 = vpop.f32.mrf.mxu0
        %v3946 = vadd.f32 %v3272, %v3945
        %v3947 = vpop.f32.mrf.mxu0
        %v3948 = vadd.f32 %v3272, %v3947
        %v3949 = vpop.f32.mrf.mxu0
        %v3950 = vadd.f32 %v3277, %v3949
        %v3951 = vpop.f32.mrf.mxu0
        %v3952 = vadd.f32 %v3277, %v3951
        %3953 = vmatprep.mubr.bf16.mxu0 0
        %3954 = vmatmul.mubr.bf16.gmra.mxu0 %v3467
        %v3955 = vpop.f32.mrf.mxu0
        %v3956 = vadd.f32 %v3282, %v3955
        %v3957 = vpop.f32.mrf.mxu0
        %v3958 = vadd.f32 %v3282, %v3957
        %v3959 = vpop.f32.mrf.mxu0
        %v3960 = vadd.f32 %v3287, %v3959
        %v3961 = vpop.f32.mrf.mxu0
        %v3962 = vadd.f32 %v3287, %v3961
        %3963 = vmatprep.mubr.bf16.mxu0 0
        %3964 = vmatmul.mubr.bf16.gmra.mxu0 %v3468
        %v3965 = vpop.f32.mrf.mxu0
        %v3966 = vadd.f32 %v3292, %v3965
        %v3967 = vpop.f32.mrf.mxu0
        %v3968 = vadd.f32 %v3292, %v3967
        %v3969 = vpop.f32.mrf.mxu0
        %v3970 = vadd.f32 %v3297, %v3969
        %v3971 = vpop.f32.mrf.mxu0
        %v3972 = vadd.f32 %v3297, %v3971
        %3973 = vmatprep.mubr.bf16.mxu0 0
        %3974 = vmatmul.mubr.bf16.gmra.mxu0 %v3469
        %v3975 = vpop.f32.mrf.mxu0
        %v3976 = vadd.f32 %v3302, %v3975
        %v3977 = vpop.f32.mrf.mxu0
        %v3978 = vadd.f32 %v3302, %v3977
        %v3979 = vpop.f32.mrf.mxu0
        %v3980 = vadd.f32 %v3307, %v3979
        %v3981 = vpop.f32.mrf.mxu0
        %v3982 = vadd.f32 %v3307, %v3981
        %3983 = vmatprep.mubr.bf16.mxu0 0
        %3984 = vmatmul.mubr.bf16.gmra.mxu0 %v3470
        %v3985 = vpop.f32.mrf.mxu0
        %v3986 = vadd.f32 %v3312, %v3985
        %v3987 = vpop.f32.mrf.mxu0
        %v3988 = vadd.f32 %v3312, %v3987
        %v3989 = vpop.f32.mrf.mxu0
        %v3990 = vadd.f32 %v3317, %v3989
        %v3991 = vpop.f32.mrf.mxu0
        %v3992 = vadd.f32 %v3317, %v3991
        %3993 = vmatprep.mubr.bf16.mxu0 0
        %3994 = vmatmul.mubr.bf16.gmra.mxu0 %v3471
        %v3995 = vpop.f32.mrf.mxu0
        %v3996 = vadd.f32 %v3322, %v3995
        %v3997 = vpop.f32.mrf.mxu0
        %v3998 = vadd.f32 %v3322, %v3997
        %v3999 = vpop.f32.mrf.mxu0
        %v4000 = vadd.f32 %v3327, %v3999
        %v4001 = vpop.f32.mrf.mxu0
        %v4002 = vadd.f32 %v3327, %v4001
        %4003 = vmatprep.mubr.bf16.mxu0 0
        %4004 = vmatmul.mubr.bf16.gmra.mxu0 %v3472
        %v4005 = vpop.f32.mrf.mxu0
        %v4006 = vadd.f32 %v3332, %v4005
        %v4007 = vpop.f32.mrf.mxu0
        %v4008 = vadd.f32 %v3332, %v4007
        %v4009 = vpop.f32.mrf.mxu0
        %v4010 = vadd.f32 %v3337, %v4009
        %v4011 = vpop.f32.mrf.mxu0
        %v4012 = vadd.f32 %v3337, %v4011
        %4013 = vmatprep.mubr.bf16.mxu0 0
        %4014 = vmatmul.mubr.bf16.gmra.mxu0 %v3473
        %v4015 = vpop.f32.mrf.mxu0
        %v4016 = vadd.f32 %v3342, %v4015
        %v4017 = vpop.f32.mrf.mxu0
        %v4018 = vadd.f32 %v3342, %v4017
        %v4019 = vpop.f32.mrf.mxu0
        %v4020 = vadd.f32 %v3347, %v4019
        %v4021 = vpop.f32.mrf.mxu0
        %v4022 = vadd.f32 %v3347, %v4021
        %4023 = vmatprep.mubr.bf16.mxu0 0
        %4024 = vmatmul.mubr.bf16.gmra.mxu0 %v3474
        %v4025 = vpop.f32.mrf.mxu0
        %v4026 = vadd.f32 %v3352, %v4025
        %v4027 = vpop.f32.mrf.mxu0
        %v4028 = vadd.f32 %v3352, %v4027
        %v4029 = vpop.f32.mrf.mxu0
        %v4030 = vadd.f32 %v3357, %v4029
        %v4031 = vpop.f32.mrf.mxu0
        %v4032 = vadd.f32 %v3357, %v4031
        %4033 = vmatprep.mubr.bf16.mxu0 0
        %4034 = vmatmul.mubr.bf16.gmra.mxu0 %v3475
        %v4035 = vpop.f32.mrf.mxu0
        %v4036 = vadd.f32 %v3362, %v4035
        %v4037 = vpop.f32.mrf.mxu0
        %v4038 = vadd.f32 %v3362, %v4037
        %v4039 = vpop.f32.mrf.mxu0
        %v4040 = vadd.f32 %v3367, %v4039
        %v4041 = vpop.f32.mrf.mxu0
        %v4042 = vadd.f32 %v3367, %v4041
        %4043 = vmatprep.mubr.bf16.mxu0 0
        %4044 = vmatmul.mubr.bf16.gmra.mxu0 %v3476
        %v4045 = vpop.f32.mrf.mxu0
        %v4046 = vadd.f32 %v3372, %v4045
        %v4047 = vpop.f32.mrf.mxu0
        %v4048 = vadd.f32 %v3372, %v4047
        %v4049 = vpop.f32.mrf.mxu0
        %v4050 = vadd.f32 %v3377, %v4049
        %v4051 = vpop.f32.mrf.mxu0
        %v4052 = vadd.f32 %v3377, %v4051
        %4053 = vmatprep.mubr.bf16.mxu0 0
        %4054 = vmatmul.mubr.bf16.gmra.mxu0 %v3477
        %v4055 = vpop.f32.mrf.mxu0
        %v4056 = vadd.f32 %v3382, %v4055
        %v4057 = vpop.f32.mrf.mxu0
        %v4058 = vadd.f32 %v3382, %v4057
        %v4059 = vpop.f32.mrf.mxu0
        %v4060 = vadd.f32 %v3387, %v4059
        %v4061 = vpop.f32.mrf.mxu0
        %v4062 = vadd.f32 %v3387, %v4061
        %4063 = vmatprep.mubr.bf16.mxu0 0
        %4064 = vmatmul.mubr.bf16.gmra.mxu0 %v3478
        %v4065 = vpop.f32.mrf.mxu0
        %v4066 = vadd.f32 %v3392, %v4065
        %v4067 = vpop.f32.mrf.mxu0
        %v4068 = vadd.f32 %v3392, %v4067
        %v4069 = vpop.f32.mrf.mxu0
        %v4070 = vadd.f32 %v3397, %v4069
        %v4071 = vpop.f32.mrf.mxu0
        %v4072 = vadd.f32 %v3397, %v4071
        %4073 = vdwg.mxu0
        %4074 = vmatprep.subr.bf16.mxu0 %v3206
        %4075 = vmatpush1.bf16.msra.mxu0 %v3205
        %4076 = vmatprep.subr.bf16.mxu0 %v3198
        %4077 = vmatpush1.bf16.msra.mxu0 %v3197
        %4078 = vmatprep.subr.bf16.mxu0 %v3190
        %4079 = vmatpush1.bf16.msra.mxu0 %v3189
        %4080 = vmatprep.subr.bf16.mxu0 %v3182
        %4081 = vmatpush1.bf16.msra.mxu0 %v3181
        %4082 = vmatprep.subr.bf16.mxu0 %v3174
        %4083 = vmatpush1.bf16.msra.mxu0 %v3173
        %4084 = vmatprep.subr.bf16.mxu0 %v3166
        %4085 = vmatpush1.bf16.msra.mxu0 %v3165
        %4086 = vmatprep.subr.bf16.mxu0 %v3158
        %4087 = vmatpush1.bf16.msra.mxu0 %v3157
        %4088 = vmatprep.subr.bf16.mxu0 %v3150
        %4089 = vmatpush1.bf16.msra.mxu0 %v3149
        %4090 = vmatprep.subr.bf16.mxu0 0
        %4091 = vmatpush2.bf16.msra.mxu0 0
        %4092 = vmatprep.subr.bf16.mxu0 0
        %4093 = vmatpush2.bf16.msra.mxu0 0
        %4094 = vmatprep.subr.bf16.mxu0 0
        %4095 = vmatpush2.bf16.msra.mxu0 0
        %4096 = vmatprep.subr.bf16.mxu0 0
        %4097 = vmatpush2.bf16.msra.mxu0 0
        %4098 = vmatprep.subr.bf16.mxu0 0
        %4099 = vmatpush2.bf16.msra.mxu0 0
        %4100 = vmatprep.subr.bf16.mxu0 0
        %4101 = vmatpush2.bf16.msra.mxu0 0
        %4102 = vmatprep.subr.bf16.mxu0 0
        %4103 = vmatpush2.bf16.msra.mxu0 0
        %4104 = vmatprep.subr.bf16.mxu0 0
        %4105 = vmatpush2.bf16.msra.mxu0 0
        %4106 = vmatprep.mubr.bf16.mxu0 0
        %4107 = vmatmul.mubr.bf16.gmra.mxu0 %v3463
        %v4108 = vpop.f32.mrf.mxu0
        %v4109 = vadd.f32 %v3242, %v4108
        %v4110 = vpop.f32.mrf.mxu0
        %v4111 = vadd.f32 %v3242, %v4110
        %v4112 = vpop.f32.mrf.mxu0
        %v4113 = vadd.f32 %v3247, %v4112
        %v4114 = vpop.f32.mrf.mxu0
        %v4115 = vadd.f32 %v3247, %v4114
        %4116 = vmatprep.mubr.bf16.mxu0 0
        %4117 = vmatmul.mubr.bf16.gmra.mxu0 %v3464
        %v4118 = vpop.f32.mrf.mxu0
        %v4119 = vadd.f32 %v3252, %v4118
        %v4120 = vpop.f32.mrf.mxu0
        %v4121 = vadd.f32 %v3252, %v4120
        %v4122 = vpop.f32.mrf.mxu0
        %v4123 = vadd.f32 %v3257, %v4122
        %v4124 = vpop.f32.mrf.mxu0
        %v4125 = vadd.f32 %v3257, %v4124
        %4126 = vmatprep.mubr.bf16.mxu0 0
        %4127 = vmatmul.mubr.bf16.gmra.mxu0 %v3465
        %v4128 = vpop.f32.mrf.mxu0
        %v4129 = vadd.f32 %v3262, %v4128
        %v4130 = vpop.f32.mrf.mxu0
        %v4131 = vadd.f32 %v3262, %v4130
        %v4132 = vpop.f32.mrf.mxu0
        %v4133 = vadd.f32 %v3267, %v4132
        %v4134 = vpop.f32.mrf.mxu0
        %v4135 = vadd.f32 %v3267, %v4134
        %4136 = vmatprep.mubr.bf16.mxu0 0
        %4137 = vmatmul.mubr.bf16.gmra.mxu0 %v3466
        %v4138 = vpop.f32.mrf.mxu0
        %v4139 = vadd.f32 %v3272, %v4138
        %v4140 = vpop.f32.mrf.mxu0
        %v4141 = vadd.f32 %v3272, %v4140
        %v4142 = vpop.f32.mrf.mxu0
        %v4143 = vadd.f32 %v3277, %v4142
        %v4144 = vpop.f32.mrf.mxu0
        %v4145 = vadd.f32 %v3277, %v4144
        %4146 = vmatprep.mubr.bf16.mxu0 0
        %4147 = vmatmul.mubr.bf16.gmra.mxu0 %v3467
        %v4148 = vpop.f32.mrf.mxu0
        %v4149 = vadd.f32 %v3282, %v4148
        %v4150 = vpop.f32.mrf.mxu0
        %v4151 = vadd.f32 %v3282, %v4150
        %v4152 = vpop.f32.mrf.mxu0
        %v4153 = vadd.f32 %v3287, %v4152
        %v4154 = vpop.f32.mrf.mxu0
        %v4155 = vadd.f32 %v3287, %v4154
        %4156 = vmatprep.mubr.bf16.mxu0 0
        %4157 = vmatmul.mubr.bf16.gmra.mxu0 %v3468
        %v4158 = vpop.f32.mrf.mxu0
        %v4159 = vadd.f32 %v3292, %v4158
        %v4160 = vpop.f32.mrf.mxu0
        %v4161 = vadd.f32 %v3292, %v4160
        %v4162 = vpop.f32.mrf.mxu0
        %v4163 = vadd.f32 %v3297, %v4162
        %v4164 = vpop.f32.mrf.mxu0
        %v4165 = vadd.f32 %v3297, %v4164
        %4166 = vmatprep.mubr.bf16.mxu0 0
        %4167 = vmatmul.mubr.bf16.gmra.mxu0 %v3469
        %v4168 = vpop.f32.mrf.mxu0
        %v4169 = vadd.f32 %v3302, %v4168
        %v4170 = vpop.f32.mrf.mxu0
        %v4171 = vadd.f32 %v3302, %v4170
        %v4172 = vpop.f32.mrf.mxu0
        %v4173 = vadd.f32 %v3307, %v4172
        %v4174 = vpop.f32.mrf.mxu0
        %v4175 = vadd.f32 %v3307, %v4174
        %4176 = vmatprep.mubr.bf16.mxu0 0
        %4177 = vmatmul.mubr.bf16.gmra.mxu0 %v3470
        %v4178 = vpop.f32.mrf.mxu0
        %v4179 = vadd.f32 %v3312, %v4178
        %v4180 = vpop.f32.mrf.mxu0
        %v4181 = vadd.f32 %v3312, %v4180
        %v4182 = vpop.f32.mrf.mxu0
        %v4183 = vadd.f32 %v3317, %v4182
        %v4184 = vpop.f32.mrf.mxu0
        %v4185 = vadd.f32 %v3317, %v4184
        %4186 = vmatprep.mubr.bf16.mxu0 0
        %4187 = vmatmul.mubr.bf16.gmra.mxu0 %v3471
        %v4188 = vpop.f32.mrf.mxu0
        %v4189 = vadd.f32 %v3322, %v4188
        %v4190 = vpop.f32.mrf.mxu0
        %v4191 = vadd.f32 %v3322, %v4190
        %v4192 = vpop.f32.mrf.mxu0
        %v4193 = vadd.f32 %v3327, %v4192
        %v4194 = vpop.f32.mrf.mxu0
        %v4195 = vadd.f32 %v3327, %v4194
        %4196 = vmatprep.mubr.bf16.mxu0 0
        %4197 = vmatmul.mubr.bf16.gmra.mxu0 %v3472
        %v4198 = vpop.f32.mrf.mxu0
        %v4199 = vadd.f32 %v3332, %v4198
        %v4200 = vpop.f32.mrf.mxu0
        %v4201 = vadd.f32 %v3332, %v4200
        %v4202 = vpop.f32.mrf.mxu0
        %v4203 = vadd.f32 %v3337, %v4202
        %v4204 = vpop.f32.mrf.mxu0
        %v4205 = vadd.f32 %v3337, %v4204
        %4206 = vmatprep.mubr.bf16.mxu0 0
        %4207 = vmatmul.mubr.bf16.gmra.mxu0 %v3473
        %v4208 = vpop.f32.mrf.mxu0
        %v4209 = vadd.f32 %v3342, %v4208
        %v4210 = vpop.f32.mrf.mxu0
        %v4211 = vadd.f32 %v3342, %v4210
        %v4212 = vpop.f32.mrf.mxu0
        %v4213 = vadd.f32 %v3347, %v4212
        %v4214 = vpop.f32.mrf.mxu0
        %v4215 = vadd.f32 %v3347, %v4214
        %4216 = vmatprep.mubr.bf16.mxu0 0
        %4217 = vmatmul.mubr.bf16.gmra.mxu0 %v3474
        %v4218 = vpop.f32.mrf.mxu0
        %v4219 = vadd.f32 %v3352, %v4218
        %v4220 = vpop.f32.mrf.mxu0
        %v4221 = vadd.f32 %v3352, %v4220
        %v4222 = vpop.f32.mrf.mxu0
        %v4223 = vadd.f32 %v3357, %v4222
        %v4224 = vpop.f32.mrf.mxu0
        %v4225 = vadd.f32 %v3357, %v4224
        %4226 = vmatprep.mubr.bf16.mxu0 0
        %4227 = vmatmul.mubr.bf16.gmra.mxu0 %v3475
        %v4228 = vpop.f32.mrf.mxu0
        %v4229 = vadd.f32 %v3362, %v4228
        %v4230 = vpop.f32.mrf.mxu0
        %v4231 = vadd.f32 %v3362, %v4230
        %v4232 = vpop.f32.mrf.mxu0
        %v4233 = vadd.f32 %v3367, %v4232
        %v4234 = vpop.f32.mrf.mxu0
        %v4235 = vadd.f32 %v3367, %v4234
        %4236 = vmatprep.mubr.bf16.mxu0 0
        %4237 = vmatmul.mubr.bf16.gmra.mxu0 %v3476
        %v4238 = vpop.f32.mrf.mxu0
        %v4239 = vadd.f32 %v3372, %v4238
        %v4240 = vpop.f32.mrf.mxu0
        %v4241 = vadd.f32 %v3372, %v4240
        %v4242 = vpop.f32.mrf.mxu0
        %v4243 = vadd.f32 %v3377, %v4242
        %v4244 = vpop.f32.mrf.mxu0
        %v4245 = vadd.f32 %v3377, %v4244
        %4246 = vmatprep.mubr.bf16.mxu0 0
        %4247 = vmatmul.mubr.bf16.gmra.mxu0 %v3477
        %v4248 = vpop.f32.mrf.mxu0
        %v4249 = vadd.f32 %v3382, %v4248
        %v4250 = vpop.f32.mrf.mxu0
        %v4251 = vadd.f32 %v3382, %v4250
        %v4252 = vpop.f32.mrf.mxu0
        %v4253 = vadd.f32 %v3387, %v4252
        %v4254 = vpop.f32.mrf.mxu0
        %v4255 = vadd.f32 %v3387, %v4254
        %4256 = vmatprep.mubr.bf16.mxu0 0
        %4257 = vmatmul.mubr.bf16.gmra.mxu0 %v3478
        %v4258 = vpop.f32.mrf.mxu0
        %v4259 = vadd.f32 %v3392, %v4258
        %v4260 = vpop.f32.mrf.mxu0
        %v4261 = vadd.f32 %v3392, %v4260
        %v4262 = vpop.f32.mrf.mxu0
        %v4263 = vadd.f32 %v3397, %v4262
        %v4264 = vpop.f32.mrf.mxu0
        %v4265 = vadd.f32 %v3397, %v4264
        %4266 = vdwg.mxu0
        %4267 = vst [vmem:[%s610] sm:$0xff] %v3530
        %4268 = vst [vmem:[%s610 + $0x8] sm:$0xff] %v3532
        %4269 = vst [vmem:[%s610 + $0x10] sm:$0xff] %v3723
        %4270 = vst [vmem:[%s610 + $0x18] sm:$0xff] %v3725
        %4271 = vst [vmem:[%s610 + $0x20] sm:$0xff] %v3916
        %4272 = vst [vmem:[%s610 + $0x28] sm:$0xff] %v3918
        %4273 = vst [vmem:[%s610 + $0x30] sm:$0xff] %v4109
        %4274 = vst [vmem:[%s610 + $0x38] sm:$0xff] %v4111
        %4275 = vst [vmem:[%s610 + $0x40] sm:$0xff] %v3534
        %4276 = vst [vmem:[%s610 + $0x48] sm:$0xff] %v3536
        %4277 = vst [vmem:[%s610 + $0x50] sm:$0xff] %v3727
        %4278 = vst [vmem:[%s610 + $0x58] sm:$0xff] %v3729
        %4279 = vst [vmem:[%s610 + $0x60] sm:$0xff] %v3920
        %4280 = vst [vmem:[%s610 + $0x68] sm:$0xff] %v3922
        %4281 = vst [vmem:[%s610 + $0x70] sm:$0xff] %v4113
        %4282 = vst [vmem:[%s610 + $0x78] sm:$0xff] %v4115
        %4283 = vst [vmem:[%s610 + $0x80] sm:$0xff] %v3540
        %4284 = vst [vmem:[%s610 + $0x88] sm:$0xff] %v3542
        %4285 = vst [vmem:[%s610 + $0x90] sm:$0xff] %v3733
        %4286 = vst [vmem:[%s610 + $0x98] sm:$0xff] %v3735
        %4287 = vst [vmem:[%s610 + $0xa0] sm:$0xff] %v3926
        %4288 = vst [vmem:[%s610 + $0xa8] sm:$0xff] %v3928
        %4289 = vst [vmem:[%s610 + $0xb0] sm:$0xff] %v4119
        %4290 = vst [vmem:[%s610 + $0xb8] sm:$0xff] %v4121
        %4291 = vst [vmem:[%s610 + $0xc0] sm:$0xff] %v3544
        %4292 = vst [vmem:[%s610 + $0xc8] sm:$0xff] %v3546
        %4293 = vst [vmem:[%s610 + $0xd0] sm:$0xff] %v3737
        %4294 = vst [vmem:[%s610 + $0xd8] sm:$0xff] %v3739
        %4295 = vst [vmem:[%s610 + $0xe0] sm:$0xff] %v3930
        %4296 = vst [vmem:[%s610 + $0xe8] sm:$0xff] %v3932
        %4297 = vst [vmem:[%s610 + $0xf0] sm:$0xff] %v4123
        %4298 = vst [vmem:[%s610 + $0xf8] sm:$0xff] %v4125
        %4299 = vst [vmem:[%s610 + $0x100] sm:$0xff] %v3550
        %4300 = vst [vmem:[%s610 + $0x108] sm:$0xff] %v3552
        %4301 = vst [vmem:[%s610 + $0x110] sm:$0xff] %v3743
        %4302 = vst [vmem:[%s610 + $0x118] sm:$0xff] %v3745
        %4303 = vst [vmem:[%s610 + $0x120] sm:$0xff] %v3936
        %4304 = vst [vmem:[%s610 + $0x128] sm:$0xff] %v3938
        %4305 = vst [vmem:[%s610 + $0x130] sm:$0xff] %v4129
        %4306 = vst [vmem:[%s610 + $0x138] sm:$0xff] %v4131
        %4307 = vst [vmem:[%s610 + $0x140] sm:$0xff] %v3554
        %4308 = vst [vmem:[%s610 + $0x148] sm:$0xff] %v3556
        %4309 = vst [vmem:[%s610 + $0x150] sm:$0xff] %v3747
        %4310 = vst [vmem:[%s610 + $0x158] sm:$0xff] %v3749
        %4311 = vst [vmem:[%s610 + $0x160] sm:$0xff] %v3940
        %4312 = vst [vmem:[%s610 + $0x168] sm:$0xff] %v3942
        %4313 = vst [vmem:[%s610 + $0x170] sm:$0xff] %v4133
        %4314 = vst [vmem:[%s610 + $0x178] sm:$0xff] %v4135
        %4315 = vst [vmem:[%s610 + $0x180] sm:$0xff] %v3560
        %4316 = vst [vmem:[%s610 + $0x188] sm:$0xff] %v3562
        %4317 = vst [vmem:[%s610 + $0x190] sm:$0xff] %v3753
        %4318 = vst [vmem:[%s610 + $0x198] sm:$0xff] %v3755
        %4319 = vst [vmem:[%s610 + $0x1a0] sm:$0xff] %v3946
        %4320 = vst [vmem:[%s610 + $0x1a8] sm:$0xff] %v3948
        %4321 = vst [vmem:[%s610 + $0x1b0] sm:$0xff] %v4139
        %4322 = vst [vmem:[%s610 + $0x1b8] sm:$0xff] %v4141
        %4323 = vst [vmem:[%s610 + $0x1c0] sm:$0xff] %v3564
        %4324 = vst [vmem:[%s610 + $0x1c8] sm:$0xff] %v3566
        %4325 = vst [vmem:[%s610 + $0x1d0] sm:$0xff] %v3757
        %4326 = vst [vmem:[%s610 + $0x1d8] sm:$0xff] %v3759
        %4327 = vst [vmem:[%s610 + $0x1e0] sm:$0xff] %v3950
        %4328 = vst [vmem:[%s610 + $0x1e8] sm:$0xff] %v3952
        %4329 = vst [vmem:[%s610 + $0x1f0] sm:$0xff] %v4143
        %4330 = vst [vmem:[%s610 + $0x1f8] sm:$0xff] %v4145
        %4331 = vst [vmem:[%s610 + $0x200] sm:$0xff] %v3570
        %4332 = vst [vmem:[%s610 + $0x208] sm:$0xff] %v3572
        %4333 = vst [vmem:[%s610 + $0x210] sm:$0xff] %v3763
        %4334 = vst [vmem:[%s610 + $0x218] sm:$0xff] %v3765
        %4335 = vst [vmem:[%s610 + $0x220] sm:$0xff] %v3956
        %4336 = vst [vmem:[%s610 + $0x228] sm:$0xff] %v3958
        %4337 = vst [vmem:[%s610 + $0x230] sm:$0xff] %v4149
        %4338 = vst [vmem:[%s610 + $0x238] sm:$0xff] %v4151
        %4339 = vst [vmem:[%s610 + $0x240] sm:$0xff] %v3574
        %4340 = vst [vmem:[%s610 + $0x248] sm:$0xff] %v3576
        %4341 = vst [vmem:[%s610 + $0x250] sm:$0xff] %v3767
        %4342 = vst [vmem:[%s610 + $0x258] sm:$0xff] %v3769
        %4343 = vst [vmem:[%s610 + $0x260] sm:$0xff] %v3960
        %4344 = vst [vmem:[%s610 + $0x268] sm:$0xff] %v3962
        %4345 = vst [vmem:[%s610 + $0x270] sm:$0xff] %v4153
        %4346 = vst [vmem:[%s610 + $0x278] sm:$0xff] %v4155
        %4347 = vst [vmem:[%s610 + $0x280] sm:$0xff] %v3580
        %4348 = vst [vmem:[%s610 + $0x288] sm:$0xff] %v3582
        %4349 = vst [vmem:[%s610 + $0x290] sm:$0xff] %v3773
        %4350 = vst [vmem:[%s610 + $0x298] sm:$0xff] %v3775
        %4351 = vst [vmem:[%s610 + $0x2a0] sm:$0xff] %v3966
        %4352 = vst [vmem:[%s610 + $0x2a8] sm:$0xff] %v3968
        %4353 = vst [vmem:[%s610 + $0x2b0] sm:$0xff] %v4159
        %4354 = vst [vmem:[%s610 + $0x2b8] sm:$0xff] %v4161
        %4355 = vst [vmem:[%s610 + $0x2c0] sm:$0xff] %v3584
        %4356 = vst [vmem:[%s610 + $0x2c8] sm:$0xff] %v3586
        %4357 = vst [vmem:[%s610 + $0x2d0] sm:$0xff] %v3777
        %4358 = vst [vmem:[%s610 + $0x2d8] sm:$0xff] %v3779
        %4359 = vst [vmem:[%s610 + $0x2e0] sm:$0xff] %v3970
        %4360 = vst [vmem:[%s610 + $0x2e8] sm:$0xff] %v3972
        %4361 = vst [vmem:[%s610 + $0x2f0] sm:$0xff] %v4163
        %4362 = vst [vmem:[%s610 + $0x2f8] sm:$0xff] %v4165
        %4363 = vst [vmem:[%s610 + $0x300] sm:$0xff] %v3590
        %4364 = vst [vmem:[%s610 + $0x308] sm:$0xff] %v3592
        %4365 = vst [vmem:[%s610 + $0x310] sm:$0xff] %v3783
        %4366 = vst [vmem:[%s610 + $0x318] sm:$0xff] %v3785
        %4367 = vst [vmem:[%s610 + $0x320] sm:$0xff] %v3976
        %4368 = vst [vmem:[%s610 + $0x328] sm:$0xff] %v3978
        %4369 = vst [vmem:[%s610 + $0x330] sm:$0xff] %v4169
        %4370 = vst [vmem:[%s610 + $0x338] sm:$0xff] %v4171
        %4371 = vst [vmem:[%s610 + $0x340] sm:$0xff] %v3594
        %4372 = vst [vmem:[%s610 + $0x348] sm:$0xff] %v3596
        %4373 = vst [vmem:[%s610 + $0x350] sm:$0xff] %v3787
        %4374 = vst [vmem:[%s610 + $0x358] sm:$0xff] %v3789
        %4375 = vst [vmem:[%s610 + $0x360] sm:$0xff] %v3980
        %4376 = vst [vmem:[%s610 + $0x368] sm:$0xff] %v3982
        %4377 = vst [vmem:[%s610 + $0x370] sm:$0xff] %v4173
        %4378 = vst [vmem:[%s610 + $0x378] sm:$0xff] %v4175
        %4379 = vst [vmem:[%s610 + $0x380] sm:$0xff] %v3600
        %4380 = vst [vmem:[%s610 + $0x388] sm:$0xff] %v3602
        %4381 = vst [vmem:[%s610 + $0x390] sm:$0xff] %v3793
        %4382 = vst [vmem:[%s610 + $0x398] sm:$0xff] %v3795
        %4383 = vst [vmem:[%s610 + $0x3a0] sm:$0xff] %v3986
        %4384 = vst [vmem:[%s610 + $0x3a8] sm:$0xff] %v3988
        %4385 = vst [vmem:[%s610 + $0x3b0] sm:$0xff] %v4179
        %4386 = vst [vmem:[%s610 + $0x3b8] sm:$0xff] %v4181
        %4387 = vst [vmem:[%s610 + $0x3c0] sm:$0xff] %v3604
        %4388 = vst [vmem:[%s610 + $0x3c8] sm:$0xff] %v3606
        %4389 = vst [vmem:[%s610 + $0x3d0] sm:$0xff] %v3797
        %4390 = vst [vmem:[%s610 + $0x3d8] sm:$0xff] %v3799
        %4391 = vst [vmem:[%s610 + $0x3e0] sm:$0xff] %v3990
        %4392 = vst [vmem:[%s610 + $0x3e8] sm:$0xff] %v3992
        %4393 = vst [vmem:[%s610 + $0x3f0] sm:$0xff] %v4183
        %4394 = vst [vmem:[%s610 + $0x3f8] sm:$0xff] %v4185
        %4395 = vst [vmem:[%s610 + $0x400] sm:$0xff] %v3610
        %4396 = vst [vmem:[%s610 + $0x408] sm:$0xff] %v3612
        %4397 = vst [vmem:[%s610 + $0x410] sm:$0xff] %v3803
        %4398 = vst [vmem:[%s610 + $0x418] sm:$0xff] %v3805
        %4399 = vst [vmem:[%s610 + $0x420] sm:$0xff] %v3996
        %4400 = vst [vmem:[%s610 + $0x428] sm:$0xff] %v3998
        %4401 = vst [vmem:[%s610 + $0x430] sm:$0xff] %v4189
        %4402 = vst [vmem:[%s610 + $0x438] sm:$0xff] %v4191
        %4403 = vst [vmem:[%s610 + $0x440] sm:$0xff] %v3614
        %4404 = vst [vmem:[%s610 + $0x448] sm:$0xff] %v3616
        %4405 = vst [vmem:[%s610 + $0x450] sm:$0xff] %v3807
        %4406 = vst [vmem:[%s610 + $0x458] sm:$0xff] %v3809
        %4407 = vst [vmem:[%s610 + $0x460] sm:$0xff] %v4000
        %4408 = vst [vmem:[%s610 + $0x468] sm:$0xff] %v4002
        %4409 = vst [vmem:[%s610 + $0x470] sm:$0xff] %v4193
        %4410 = vst [vmem:[%s610 + $0x478] sm:$0xff] %v4195
        %4411 = vst [vmem:[%s610 + $0x480] sm:$0xff] %v3620
        %4412 = vst [vmem:[%s610 + $0x488] sm:$0xff] %v3622
        %4413 = vst [vmem:[%s610 + $0x490] sm:$0xff] %v3813
        %4414 = vst [vmem:[%s610 + $0x498] sm:$0xff] %v3815
        %4415 = vst [vmem:[%s610 + $0x4a0] sm:$0xff] %v4006
        %4416 = vst [vmem:[%s610 + $0x4a8] sm:$0xff] %v4008
        %4417 = vst [vmem:[%s610 + $0x4b0] sm:$0xff] %v4199
        %4418 = vst [vmem:[%s610 + $0x4b8] sm:$0xff] %v4201
        %4419 = vst [vmem:[%s610 + $0x4c0] sm:$0xff] %v3624
        %4420 = vst [vmem:[%s610 + $0x4c8] sm:$0xff] %v3626
        %4421 = vst [vmem:[%s610 + $0x4d0] sm:$0xff] %v3817
        %4422 = vst [vmem:[%s610 + $0x4d8] sm:$0xff] %v3819
        %4423 = vst [vmem:[%s610 + $0x4e0] sm:$0xff] %v4010
        %4424 = vst [vmem:[%s610 + $0x4e8] sm:$0xff] %v4012
        %4425 = vst [vmem:[%s610 + $0x4f0] sm:$0xff] %v4203
        %4426 = vst [vmem:[%s610 + $0x4f8] sm:$0xff] %v4205
        %4427 = vst [vmem:[%s610 + $0x500] sm:$0xff] %v3630
        %4428 = vst [vmem:[%s610 + $0x508] sm:$0xff] %v3632
        %4429 = vst [vmem:[%s610 + $0x510] sm:$0xff] %v3823
        %4430 = vst [vmem:[%s610 + $0x518] sm:$0xff] %v3825
        %4431 = vst [vmem:[%s610 + $0x520] sm:$0xff] %v4016
        %4432 = vst [vmem:[%s610 + $0x528] sm:$0xff] %v4018
        %4433 = vst [vmem:[%s610 + $0x530] sm:$0xff] %v4209
        %4434 = vst [vmem:[%s610 + $0x538] sm:$0xff] %v4211
        %4435 = vst [vmem:[%s610 + $0x540] sm:$0xff] %v3634
        %4436 = vst [vmem:[%s610 + $0x548] sm:$0xff] %v3636
        %4437 = vst [vmem:[%s610 + $0x550] sm:$0xff] %v3827
        %4438 = vst [vmem:[%s610 + $0x558] sm:$0xff] %v3829
        %4439 = vst [vmem:[%s610 + $0x560] sm:$0xff] %v4020
        %4440 = vst [vmem:[%s610 + $0x568] sm:$0xff] %v4022
        %4441 = vst [vmem:[%s610 + $0x570] sm:$0xff] %v4213
        %4442 = vst [vmem:[%s610 + $0x578] sm:$0xff] %v4215
        %4443 = vst [vmem:[%s610 + $0x580] sm:$0xff] %v3640
        %4444 = vst [vmem:[%s610 + $0x588] sm:$0xff] %v3642
        %4445 = vst [vmem:[%s610 + $0x590] sm:$0xff] %v3833
        %4446 = vst [vmem:[%s610 + $0x598] sm:$0xff] %v3835
        %4447 = vst [vmem:[%s610 + $0x5a0] sm:$0xff] %v4026
        %4448 = vst [vmem:[%s610 + $0x5a8] sm:$0xff] %v4028
        %4449 = vst [vmem:[%s610 + $0x5b0] sm:$0xff] %v4219
        %4450 = vst [vmem:[%s610 + $0x5b8] sm:$0xff] %v4221
        %4451 = vst [vmem:[%s610 + $0x5c0] sm:$0xff] %v3644
        %4452 = vst [vmem:[%s610 + $0x5c8] sm:$0xff] %v3646
        %4453 = vst [vmem:[%s610 + $0x5d0] sm:$0xff] %v3837
        %4454 = vst [vmem:[%s610 + $0x5d8] sm:$0xff] %v3839
        %4455 = vst [vmem:[%s610 + $0x5e0] sm:$0xff] %v4030
        %4456 = vst [vmem:[%s610 + $0x5e8] sm:$0xff] %v4032
        %4457 = vst [vmem:[%s610 + $0x5f0] sm:$0xff] %v4223
        %4458 = vst [vmem:[%s610 + $0x5f8] sm:$0xff] %v4225
        %4459 = vst [vmem:[%s610 + $0x600] sm:$0xff] %v3650
        %4460 = vst [vmem:[%s610 + $0x608] sm:$0xff] %v3652
        %4461 = vst [vmem:[%s610 + $0x610] sm:$0xff] %v3843
        %4462 = vst [vmem:[%s610 + $0x618] sm:$0xff] %v3845
        %4463 = vst [vmem:[%s610 + $0x620] sm:$0xff] %v4036
        %4464 = vst [vmem:[%s610 + $0x628] sm:$0xff] %v4038
        %4465 = vst [vmem:[%s610 + $0x630] sm:$0xff] %v4229
        %4466 = vst [vmem:[%s610 + $0x638] sm:$0xff] %v4231
        %4467 = vst [vmem:[%s610 + $0x640] sm:$0xff] %v3654
        %4468 = vst [vmem:[%s610 + $0x648] sm:$0xff] %v3656
        %4469 = vst [vmem:[%s610 + $0x650] sm:$0xff] %v3847
        %4470 = vst [vmem:[%s610 + $0x658] sm:$0xff] %v3849
        %4471 = vst [vmem:[%s610 + $0x660] sm:$0xff] %v4040
        %4472 = vst [vmem:[%s610 + $0x668] sm:$0xff] %v4042
        %4473 = vst [vmem:[%s610 + $0x670] sm:$0xff] %v4233
        %4474 = vst [vmem:[%s610 + $0x678] sm:$0xff] %v4235
        %4475 = vst [vmem:[%s610 + $0x680] sm:$0xff] %v3660
        %4476 = vst [vmem:[%s610 + $0x688] sm:$0xff] %v3662
        %4477 = vst [vmem:[%s610 + $0x690] sm:$0xff] %v3853
        %4478 = vst [vmem:[%s610 + $0x698] sm:$0xff] %v3855
        %4479 = vst [vmem:[%s610 + $0x6a0] sm:$0xff] %v4046
        %4480 = vst [vmem:[%s610 + $0x6a8] sm:$0xff] %v4048
        %4481 = vst [vmem:[%s610 + $0x6b0] sm:$0xff] %v4239
        %4482 = vst [vmem:[%s610 + $0x6b8] sm:$0xff] %v4241
        %4483 = vst [vmem:[%s610 + $0x6c0] sm:$0xff] %v3664
        %4484 = vst [vmem:[%s610 + $0x6c8] sm:$0xff] %v3666
        %4485 = vst [vmem:[%s610 + $0x6d0] sm:$0xff] %v3857
        %4486 = vst [vmem:[%s610 + $0x6d8] sm:$0xff] %v3859
        %4487 = vst [vmem:[%s610 + $0x6e0] sm:$0xff] %v4050
        %4488 = vst [vmem:[%s610 + $0x6e8] sm:$0xff] %v4052
        %4489 = vst [vmem:[%s610 + $0x6f0] sm:$0xff] %v4243
        %4490 = vst [vmem:[%s610 + $0x6f8] sm:$0xff] %v4245
        %4491 = vst [vmem:[%s610 + $0x700] sm:$0xff] %v3670
        %4492 = vst [vmem:[%s610 + $0x708] sm:$0xff] %v3672
        %4493 = vst [vmem:[%s610 + $0x710] sm:$0xff] %v3863
        %4494 = vst [vmem:[%s610 + $0x718] sm:$0xff] %v3865
        %4495 = vst [vmem:[%s610 + $0x720] sm:$0xff] %v4056
        %4496 = vst [vmem:[%s610 + $0x728] sm:$0xff] %v4058
        %4497 = vst [vmem:[%s610 + $0x730] sm:$0xff] %v4249
        %4498 = vst [vmem:[%s610 + $0x738] sm:$0xff] %v4251
        %4499 = vst [vmem:[%s610 + $0x740] sm:$0xff] %v3674
        %4500 = vst [vmem:[%s610 + $0x748] sm:$0xff] %v3676
        %4501 = vst [vmem:[%s610 + $0x750] sm:$0xff] %v3867
        %4502 = vst [vmem:[%s610 + $0x758] sm:$0xff] %v3869
        %4503 = vst [vmem:[%s610 + $0x760] sm:$0xff] %v4060
        %4504 = vst [vmem:[%s610 + $0x768] sm:$0xff] %v4062
        %4505 = vst [vmem:[%s610 + $0x770] sm:$0xff] %v4253
        %4506 = vst [vmem:[%s610 + $0x778] sm:$0xff] %v4255
        %4507 = vst [vmem:[%s610 + $0x780] sm:$0xff] %v3680
        %4508 = vst [vmem:[%s610 + $0x788] sm:$0xff] %v3682
        %4509 = vst [vmem:[%s610 + $0x790] sm:$0xff] %v3873
        %4510 = vst [vmem:[%s610 + $0x798] sm:$0xff] %v3875
        %4511 = vst [vmem:[%s610 + $0x7a0] sm:$0xff] %v4066
        %4512 = vst [vmem:[%s610 + $0x7a8] sm:$0xff] %v4068
        %4513 = vst [vmem:[%s610 + $0x7b0] sm:$0xff] %v4259
        %4514 = vst [vmem:[%s610 + $0x7b8] sm:$0xff] %v4261
        %4515 = vst [vmem:[%s610 + $0x7c0] sm:$0xff] %v3684
        %4516 = vst [vmem:[%s610 + $0x7c8] sm:$0xff] %v3686
        %4517 = vst [vmem:[%s610 + $0x7d0] sm:$0xff] %v3877
        %4518 = vst [vmem:[%s610 + $0x7d8] sm:$0xff] %v3879
        %4519 = vst [vmem:[%s610 + $0x7e0] sm:$0xff] %v4070
        %4520 = vst [vmem:[%s610 + $0x7e8] sm:$0xff] %v4072
        %4521 = vst [vmem:[%s610 + $0x7f0] sm:$0xff] %v4263
        %4522 = vst [vmem:[%s610 + $0x7f8] sm:$0xff] %v4265
        %v4523 = vld [vmem:[#allocation2] sm:$0xff]
        %v4524 = vld [vmem:[#allocation2 + $0x8] sm:$0xff]
        %v4525 = vld [vmem:[#allocation2 + $0x10] sm:$0xff]
        %v4526 = vld [vmem:[#allocation2 + $0x18] sm:$0xff]
        %v4527 = vld [vmem:[#allocation2 + $0x20] sm:$0xff]
        %v4528 = vld [vmem:[#allocation2 + $0x28] sm:$0xff]
        %v4529 = vld [vmem:[#allocation2 + $0x30] sm:$0xff]
        %v4530 = vld [vmem:[#allocation2 + $0x38] sm:$0xff]
        %v4531 = vld [vmem:[#allocation2 + $0x40] sm:$0xff]
        %v4532 = vld [vmem:[#allocation2 + $0x48] sm:$0xff]
        %v4533 = vld [vmem:[#allocation2 + $0x50] sm:$0xff]
        %v4534 = vld [vmem:[#allocation2 + $0x58] sm:$0xff]
        %v4535 = vld [vmem:[#allocation2 + $0x60] sm:$0xff]
        %v4536 = vld [vmem:[#allocation2 + $0x68] sm:$0xff]
        %v4537 = vld [vmem:[#allocation2 + $0x70] sm:$0xff]
        %v4538 = vld [vmem:[#allocation2 + $0x78] sm:$0xff]
        %v4539 = vld [vmem:[#allocation2 + $0x80] sm:$0xff]
        %v4540 = vld [vmem:[#allocation2 + $0x88] sm:$0xff]
        %v4541 = vld [vmem:[#allocation2 + $0x90] sm:$0xff]
        %v4542 = vld [vmem:[#allocation2 + $0x98] sm:$0xff]
        %v4543 = vld [vmem:[#allocation2 + $0xa0] sm:$0xff]
        %v4544 = vld [vmem:[#allocation2 + $0xa8] sm:$0xff]
        %v4545 = vld [vmem:[#allocation2 + $0xb0] sm:$0xff]
        %v4546 = vld [vmem:[#allocation2 + $0xb8] sm:$0xff]
        %v4547 = vld [vmem:[#allocation2 + $0xc0] sm:$0xff]
        %v4548 = vld [vmem:[#allocation2 + $0xc8] sm:$0xff]
        %v4549 = vld [vmem:[#allocation2 + $0xd0] sm:$0xff]
        %v4550 = vld [vmem:[#allocation2 + $0xd8] sm:$0xff]
        %v4551 = vld [vmem:[#allocation2 + $0xe0] sm:$0xff]
        %v4552 = vld [vmem:[#allocation2 + $0xe8] sm:$0xff]
        %v4553 = vld [vmem:[#allocation2 + $0xf0] sm:$0xff]
        %v4554 = vld [vmem:[#allocation2 + $0xf8] sm:$0xff]
        %v4555 = vld [vmem:[%s554] sm:$0xf]
        %v4556 = vld [vmem:[%s554 + $0x4] sm:$0xf]
        %v4557 = vld [vmem:[%s554 + $0x8] sm:$0xf]
        %v4558 = vld [vmem:[%s554 + $0xc] sm:$0xf]
        %v4559 = vld [vmem:[%s554 + $0x10] sm:$0xf]
        %v4560 = vld [vmem:[%s554 + $0x14] sm:$0xf]
        %v4561 = vld [vmem:[%s554 + $0x18] sm:$0xf]
        %v4562 = vld [vmem:[%s554 + $0x1c] sm:$0xf]
        %v4563 = vld [vmem:[%s554 + $0x20] sm:$0xf]
        %v4564 = vld [vmem:[%s554 + $0x24] sm:$0xf]
        %v4565 = vld [vmem:[%s554 + $0x28] sm:$0xf]
        %v4566 = vld [vmem:[%s554 + $0x2c] sm:$0xf]
        %v4567 = vld [vmem:[%s554 + $0x30] sm:$0xf]
        %v4568 = vld [vmem:[%s554 + $0x34] sm:$0xf]
        %v4569 = vld [vmem:[%s554 + $0x38] sm:$0xf]
        %v4570 = vld [vmem:[%s554 + $0x3c] sm:$0xf]
        %v4571 = vld [vmem:[%s554 + $0x40] sm:$0xf]
        %v4572 = vld [vmem:[%s554 + $0x44] sm:$0xf]
        %v4573 = vld [vmem:[%s554 + $0x48] sm:$0xf]
        %v4574 = vld [vmem:[%s554 + $0x4c] sm:$0xf]
        %v4575 = vld [vmem:[%s554 + $0x50] sm:$0xf]
        %v4576 = vld [vmem:[%s554 + $0x54] sm:$0xf]
        %v4577 = vld [vmem:[%s554 + $0x58] sm:$0xf]
        %v4578 = vld [vmem:[%s554 + $0x5c] sm:$0xf]
        %v4579 = vld [vmem:[%s554 + $0x60] sm:$0xf]
        %v4580 = vld [vmem:[%s554 + $0x64] sm:$0xf]
        %v4581 = vld [vmem:[%s554 + $0x68] sm:$0xf]
        %v4582 = vld [vmem:[%s554 + $0x6c] sm:$0xf]
        %v4583 = vld [vmem:[%s554 + $0x70] sm:$0xf]
        %v4584 = vld [vmem:[%s554 + $0x74] sm:$0xf]
        %v4585 = vld [vmem:[%s554 + $0x78] sm:$0xf]
        %v4586 = vld [vmem:[%s554 + $0x7c] sm:$0xf]
        %v4587 = vld [vmem:[%s554 + $0x80] sm:$0xf]
        %v4588 = vld [vmem:[%s554 + $0x84] sm:$0xf]
        %v4589 = vld [vmem:[%s554 + $0x88] sm:$0xf]
        %v4590 = vld [vmem:[%s554 + $0x8c] sm:$0xf]
        %v4591 = vld [vmem:[%s554 + $0x90] sm:$0xf]
        %v4592 = vld [vmem:[%s554 + $0x94] sm:$0xf]
        %v4593 = vld [vmem:[%s554 + $0x98] sm:$0xf]
        %v4594 = vld [vmem:[%s554 + $0x9c] sm:$0xf]
        %v4595 = vld [vmem:[%s554 + $0xa0] sm:$0xf]
        %v4596 = vld [vmem:[%s554 + $0xa4] sm:$0xf]
        %v4597 = vld [vmem:[%s554 + $0xa8] sm:$0xf]
        %v4598 = vld [vmem:[%s554 + $0xac] sm:$0xf]
        %v4599 = vld [vmem:[%s554 + $0xb0] sm:$0xf]
        %v4600 = vld [vmem:[%s554 + $0xb4] sm:$0xf]
        %v4601 = vld [vmem:[%s554 + $0xb8] sm:$0xf]
        %v4602 = vld [vmem:[%s554 + $0xbc] sm:$0xf]
        %v4603 = vld [vmem:[%s554 + $0xc0] sm:$0xf]
        %v4604 = vld [vmem:[%s554 + $0xc4] sm:$0xf]
        %v4605 = vld [vmem:[%s554 + $0xc8] sm:$0xf]
        %v4606 = vld [vmem:[%s554 + $0xcc] sm:$0xf]
        %v4607 = vld [vmem:[%s554 + $0xd0] sm:$0xf]
        %v4608 = vld [vmem:[%s554 + $0xd4] sm:$0xf]
        %v4609 = vld [vmem:[%s554 + $0xd8] sm:$0xf]
        %v4610 = vld [vmem:[%s554 + $0xdc] sm:$0xf]
        %v4611 = vld [vmem:[%s554 + $0xe0] sm:$0xf]
        %v4612 = vld [vmem:[%s554 + $0xe4] sm:$0xf]
        %v4613 = vld [vmem:[%s554 + $0xe8] sm:$0xf]
        %v4614 = vld [vmem:[%s554 + $0xec] sm:$0xf]
        %v4615 = vld [vmem:[%s554 + $0xf0] sm:$0xf]
        %v4616 = vld [vmem:[%s554 + $0xf4] sm:$0xf]
        %v4617 = vld [vmem:[%s554 + $0xf8] sm:$0xf]
        %v4618 = vld [vmem:[%s554 + $0xfc] sm:$0xf]
        %v4619 = vld [vmem:[%s554 + $0x100] sm:$0xf]
        %v4620 = vld [vmem:[%s554 + $0x104] sm:$0xf]
        %v4621 = vld [vmem:[%s554 + $0x108] sm:$0xf]
        %v4622 = vld [vmem:[%s554 + $0x10c] sm:$0xf]
        %v4623 = vld [vmem:[%s554 + $0x110] sm:$0xf]
        %v4624 = vld [vmem:[%s554 + $0x114] sm:$0xf]
        %v4625 = vld [vmem:[%s554 + $0x118] sm:$0xf]
        %v4626 = vld [vmem:[%s554 + $0x11c] sm:$0xf]
        %v4627 = vld [vmem:[%s554 + $0x120] sm:$0xf]
        %v4628 = vld [vmem:[%s554 + $0x124] sm:$0xf]
        %v4629 = vld [vmem:[%s554 + $0x128] sm:$0xf]
        %v4630 = vld [vmem:[%s554 + $0x12c] sm:$0xf]
        %v4631 = vld [vmem:[%s554 + $0x130] sm:$0xf]
        %v4632 = vld [vmem:[%s554 + $0x134] sm:$0xf]
        %v4633 = vld [vmem:[%s554 + $0x138] sm:$0xf]
        %v4634 = vld [vmem:[%s554 + $0x13c] sm:$0xf]
        %v4635 = vld [vmem:[%s554 + $0x140] sm:$0xf]
        %v4636 = vld [vmem:[%s554 + $0x144] sm:$0xf]
        %v4637 = vld [vmem:[%s554 + $0x148] sm:$0xf]
        %v4638 = vld [vmem:[%s554 + $0x14c] sm:$0xf]
        %v4639 = vld [vmem:[%s554 + $0x150] sm:$0xf]
        %v4640 = vld [vmem:[%s554 + $0x154] sm:$0xf]
        %v4641 = vld [vmem:[%s554 + $0x158] sm:$0xf]
        %v4642 = vld [vmem:[%s554 + $0x15c] sm:$0xf]
        %v4643 = vld [vmem:[%s554 + $0x160] sm:$0xf]
        %v4644 = vld [vmem:[%s554 + $0x164] sm:$0xf]
        %v4645 = vld [vmem:[%s554 + $0x168] sm:$0xf]
        %v4646 = vld [vmem:[%s554 + $0x16c] sm:$0xf]
        %v4647 = vld [vmem:[%s554 + $0x170] sm:$0xf]
        %v4648 = vld [vmem:[%s554 + $0x174] sm:$0xf]
        %v4649 = vld [vmem:[%s554 + $0x178] sm:$0xf]
        %v4650 = vld [vmem:[%s554 + $0x17c] sm:$0xf]
        %v4651 = vld [vmem:[%s554 + $0x180] sm:$0xf]
        %v4652 = vld [vmem:[%s554 + $0x184] sm:$0xf]
        %v4653 = vld [vmem:[%s554 + $0x188] sm:$0xf]
        %v4654 = vld [vmem:[%s554 + $0x18c] sm:$0xf]
        %v4655 = vld [vmem:[%s554 + $0x190] sm:$0xf]
        %v4656 = vld [vmem:[%s554 + $0x194] sm:$0xf]
        %v4657 = vld [vmem:[%s554 + $0x198] sm:$0xf]
        %v4658 = vld [vmem:[%s554 + $0x19c] sm:$0xf]
        %v4659 = vld [vmem:[%s554 + $0x1a0] sm:$0xf]
        %v4660 = vld [vmem:[%s554 + $0x1a4] sm:$0xf]
        %v4661 = vld [vmem:[%s554 + $0x1a8] sm:$0xf]
        %v4662 = vld [vmem:[%s554 + $0x1ac] sm:$0xf]
        %v4663 = vld [vmem:[%s554 + $0x1b0] sm:$0xf]
        %v4664 = vld [vmem:[%s554 + $0x1b4] sm:$0xf]
        %v4665 = vld [vmem:[%s554 + $0x1b8] sm:$0xf]
        %v4666 = vld [vmem:[%s554 + $0x1bc] sm:$0xf]
        %v4667 = vld [vmem:[%s554 + $0x1c0] sm:$0xf]
        %v4668 = vld [vmem:[%s554 + $0x1c4] sm:$0xf]
        %v4669 = vld [vmem:[%s554 + $0x1c8] sm:$0xf]
        %v4670 = vld [vmem:[%s554 + $0x1cc] sm:$0xf]
        %v4671 = vld [vmem:[%s554 + $0x1d0] sm:$0xf]
        %v4672 = vld [vmem:[%s554 + $0x1d4] sm:$0xf]
        %v4673 = vld [vmem:[%s554 + $0x1d8] sm:$0xf]
        %v4674 = vld [vmem:[%s554 + $0x1dc] sm:$0xf]
        %v4675 = vld [vmem:[%s554 + $0x1e0] sm:$0xf]
        %v4676 = vld [vmem:[%s554 + $0x1e4] sm:$0xf]
        %v4677 = vld [vmem:[%s554 + $0x1e8] sm:$0xf]
        %v4678 = vld [vmem:[%s554 + $0x1ec] sm:$0xf]
        %v4679 = vld [vmem:[%s554 + $0x1f0] sm:$0xf]
        %v4680 = vld [vmem:[%s554 + $0x1f4] sm:$0xf]
        %v4681 = vld [vmem:[%s554 + $0x1f8] sm:$0xf]
        %v4682 = vld [vmem:[%s554 + $0x1fc] sm:$0xf]
        %v4811 = vunpack.c.l.b16 %v4555
        %v4812 = vunpack.c.l.b16 %v4556
        %v4813 = vunpack.c.l.b16 %v4557
        %v4814 = vunpack.c.l.b16 %v4558
        %v4815 = vunpack.c.l.b16 %v4559
        %v4816 = vunpack.c.l.b16 %v4560
        %v4817 = vunpack.c.l.b16 %v4561
        %v4818 = vunpack.c.l.b16 %v4562
        %v4819 = vunpack.c.l.b16 %v4563
        %v4820 = vunpack.c.l.b16 %v4564
        %v4821 = vunpack.c.l.b16 %v4565
        %v4822 = vunpack.c.l.b16 %v4566
        %v4823 = vunpack.c.l.b16 %v4567
        %v4824 = vunpack.c.l.b16 %v4568
        %v4825 = vunpack.c.l.b16 %v4569
        %v4826 = vunpack.c.l.b16 %v4570
        %v4827 = vunpack.c.l.b16 %v4571
        %v4828 = vunpack.c.l.b16 %v4572
        %v4829 = vunpack.c.l.b16 %v4573
        %v4830 = vunpack.c.l.b16 %v4574
        %v4831 = vunpack.c.l.b16 %v4575
        %v4832 = vunpack.c.l.b16 %v4576
        %v4833 = vunpack.c.l.b16 %v4577
        %v4834 = vunpack.c.l.b16 %v4578
        %v4835 = vunpack.c.l.b16 %v4579
        %v4836 = vunpack.c.l.b16 %v4580
        %v4837 = vunpack.c.l.b16 %v4581
        %v4838 = vunpack.c.l.b16 %v4582
        %v4839 = vunpack.c.l.b16 %v4583
        %v4840 = vunpack.c.l.b16 %v4584
        %v4841 = vunpack.c.l.b16 %v4585
        %v4842 = vunpack.c.l.b16 %v4586
        %v4843 = vunpack.c.l.b16 %v4587
        %v4844 = vunpack.c.l.b16 %v4588
        %v4845 = vunpack.c.l.b16 %v4589
        %v4846 = vunpack.c.l.b16 %v4590
        %v4847 = vunpack.c.l.b16 %v4591
        %v4848 = vunpack.c.l.b16 %v4592
        %v4849 = vunpack.c.l.b16 %v4593
        %v4850 = vunpack.c.l.b16 %v4594
        %v4851 = vunpack.c.l.b16 %v4595
        %v4852 = vunpack.c.l.b16 %v4596
        %v4853 = vunpack.c.l.b16 %v4597
        %v4854 = vunpack.c.l.b16 %v4598
        %v4855 = vunpack.c.l.b16 %v4599
        %v4856 = vunpack.c.l.b16 %v4600
        %v4857 = vunpack.c.l.b16 %v4601
        %v4858 = vunpack.c.l.b16 %v4602
        %v4859 = vunpack.c.l.b16 %v4603
        %v4860 = vunpack.c.l.b16 %v4604
        %v4861 = vunpack.c.l.b16 %v4605
        %v4862 = vunpack.c.l.b16 %v4606
        %v4863 = vunpack.c.l.b16 %v4607
        %v4864 = vunpack.c.l.b16 %v4608
        %v4865 = vunpack.c.l.b16 %v4609
        %v4866 = vunpack.c.l.b16 %v4610
        %v4867 = vunpack.c.l.b16 %v4611
        %v4868 = vunpack.c.l.b16 %v4612
        %v4869 = vunpack.c.l.b16 %v4613
        %v4870 = vunpack.c.l.b16 %v4614
        %v4871 = vunpack.c.l.b16 %v4615
        %v4872 = vunpack.c.l.b16 %v4616
        %v4873 = vunpack.c.l.b16 %v4617
        %v4874 = vunpack.c.l.b16 %v4618
        %v4875 = vunpack.c.l.b16 %v4619
        %v4876 = vunpack.c.l.b16 %v4620
        %v4877 = vunpack.c.l.b16 %v4621
        %v4878 = vunpack.c.l.b16 %v4622
        %v4879 = vunpack.c.l.b16 %v4623
        %v4880 = vunpack.c.l.b16 %v4624
        %v4881 = vunpack.c.l.b16 %v4625
        %v4882 = vunpack.c.l.b16 %v4626
        %v4883 = vunpack.c.l.b16 %v4627
        %v4884 = vunpack.c.l.b16 %v4628
        %v4885 = vunpack.c.l.b16 %v4629
        %v4886 = vunpack.c.l.b16 %v4630
        %v4887 = vunpack.c.l.b16 %v4631
        %v4888 = vunpack.c.l.b16 %v4632
        %v4889 = vunpack.c.l.b16 %v4633
        %v4890 = vunpack.c.l.b16 %v4634
        %v4891 = vunpack.c.l.b16 %v4635
        %v4892 = vunpack.c.l.b16 %v4636
        %v4893 = vunpack.c.l.b16 %v4637
        %v4894 = vunpack.c.l.b16 %v4638
        %v4895 = vunpack.c.l.b16 %v4639
        %v4896 = vunpack.c.l.b16 %v4640
        %v4897 = vunpack.c.l.b16 %v4641
        %v4898 = vunpack.c.l.b16 %v4642
        %v4899 = vunpack.c.l.b16 %v4643
        %v4900 = vunpack.c.l.b16 %v4644
        %v4901 = vunpack.c.l.b16 %v4645
        %v4902 = vunpack.c.l.b16 %v4646
        %v4903 = vunpack.c.l.b16 %v4647
        %v4904 = vunpack.c.l.b16 %v4648
        %v4905 = vunpack.c.l.b16 %v4649
        %v4906 = vunpack.c.l.b16 %v4650
        %v4907 = vunpack.c.l.b16 %v4651
        %v4908 = vunpack.c.l.b16 %v4652
        %v4909 = vunpack.c.l.b16 %v4653
        %v4910 = vunpack.c.l.b16 %v4654
        %v4911 = vunpack.c.l.b16 %v4655
        %v4912 = vunpack.c.l.b16 %v4656
        %v4913 = vunpack.c.l.b16 %v4657
        %v4914 = vunpack.c.l.b16 %v4658
        %v4915 = vunpack.c.l.b16 %v4659
        %v4916 = vunpack.c.l.b16 %v4660
        %v4917 = vunpack.c.l.b16 %v4661
        %v4918 = vunpack.c.l.b16 %v4662
        %v4919 = vunpack.c.l.b16 %v4663
        %v4920 = vunpack.c.l.b16 %v4664
        %v4921 = vunpack.c.l.b16 %v4665
        %v4922 = vunpack.c.l.b16 %v4666
        %v4923 = vunpack.c.l.b16 %v4667
        %v4924 = vunpack.c.l.b16 %v4668
        %v4925 = vunpack.c.l.b16 %v4669
        %v4926 = vunpack.c.l.b16 %v4670
        %v4927 = vunpack.c.l.b16 %v4671
        %v4928 = vunpack.c.l.b16 %v4672
        %v4929 = vunpack.c.l.b16 %v4673
        %v4930 = vunpack.c.l.b16 %v4674
        %v4931 = vunpack.c.l.b16 %v4675
        %v4932 = vunpack.c.l.b16 %v4676
        %v4933 = vunpack.c.l.b16 %v4677
        %v4934 = vunpack.c.l.b16 %v4678
        %v4935 = vunpack.c.l.b16 %v4679
        %v4936 = vunpack.c.l.b16 %v4680
        %v4937 = vunpack.c.l.b16 %v4681
        %v4938 = vunpack.c.l.b16 %v4682
        %v4939 = vpack.c.b16 %v4812, %v4811
        %v4940 = vpack.c.b16 %v4814, %v4813
        %v4941 = vpack.c.b16 %v4816, %v4815
        %v4942 = vpack.c.b16 %v4818, %v4817
        %v4943 = vpack.c.b16 %v4820, %v4819
        %v4944 = vpack.c.b16 %v4822, %v4821
        %v4945 = vpack.c.b16 %v4824, %v4823
        %v4946 = vpack.c.b16 %v4826, %v4825
        %v4947 = vpack.c.b16 %v4828, %v4827
        %v4948 = vpack.c.b16 %v4830, %v4829
        %v4949 = vpack.c.b16 %v4832, %v4831
        %v4950 = vpack.c.b16 %v4834, %v4833
        %v4951 = vpack.c.b16 %v4836, %v4835
        %v4952 = vpack.c.b16 %v4838, %v4837
        %v4953 = vpack.c.b16 %v4840, %v4839
        %v4954 = vpack.c.b16 %v4842, %v4841
        %v4955 = vpack.c.b16 %v4844, %v4843
        %v4956 = vpack.c.b16 %v4846, %v4845
        %v4957 = vpack.c.b16 %v4848, %v4847
        %v4958 = vpack.c.b16 %v4850, %v4849
        %v4959 = vpack.c.b16 %v4852, %v4851
        %v4960 = vpack.c.b16 %v4854, %v4853
        %v4961 = vpack.c.b16 %v4856, %v4855
        %v4962 = vpack.c.b16 %v4858, %v4857
        %v4963 = vpack.c.b16 %v4860, %v4859
        %v4964 = vpack.c.b16 %v4862, %v4861
        %v4965 = vpack.c.b16 %v4864, %v4863
        %v4966 = vpack.c.b16 %v4866, %v4865
        %v4967 = vpack.c.b16 %v4868, %v4867
        %v4968 = vpack.c.b16 %v4870, %v4869
        %v4969 = vpack.c.b16 %v4872, %v4871
        %v4970 = vpack.c.b16 %v4874, %v4873
        %v4971 = vpack.c.b16 %v4876, %v4875
        %v4972 = vpack.c.b16 %v4878, %v4877
        %v4973 = vpack.c.b16 %v4880, %v4879
        %v4974 = vpack.c.b16 %v4882, %v4881
        %v4975 = vpack.c.b16 %v4884, %v4883
        %v4976 = vpack.c.b16 %v4886, %v4885
        %v4977 = vpack.c.b16 %v4888, %v4887
        %v4978 = vpack.c.b16 %v4890, %v4889
        %v4979 = vpack.c.b16 %v4892, %v4891
        %v4980 = vpack.c.b16 %v4894, %v4893
        %v4981 = vpack.c.b16 %v4896, %v4895
        %v4982 = vpack.c.b16 %v4898, %v4897
        %v4983 = vpack.c.b16 %v4900, %v4899
        %v4984 = vpack.c.b16 %v4902, %v4901
        %v4985 = vpack.c.b16 %v4904, %v4903
        %v4986 = vpack.c.b16 %v4906, %v4905
        %v4987 = vpack.c.b16 %v4908, %v4907
        %v4988 = vpack.c.b16 %v4910, %v4909
        %v4989 = vpack.c.b16 %v4912, %v4911
        %v4990 = vpack.c.b16 %v4914, %v4913
        %v4991 = vpack.c.b16 %v4916, %v4915
        %v4992 = vpack.c.b16 %v4918, %v4917
        %v4993 = vpack.c.b16 %v4920, %v4919
        %v4994 = vpack.c.b16 %v4922, %v4921
        %v4995 = vpack.c.b16 %v4924, %v4923
        %v4996 = vpack.c.b16 %v4926, %v4925
        %v4997 = vpack.c.b16 %v4928, %v4927
        %v4998 = vpack.c.b16 %v4930, %v4929
        %v4999 = vpack.c.b16 %v4932, %v4931
        %v5000 = vpack.c.b16 %v4934, %v4933
        %v5001 = vpack.c.b16 %v4936, %v4935
        %v5002 = vpack.c.b16 %v4938, %v4937
        %5067 = vmatprep.subr.bf16.mxu0 0
        %5068 = vmatpush1.bf16.msra.mxu0 %v4946
        %5069 = vmatprep.subr.bf16.mxu0 0
        %5070 = vmatpush1.bf16.msra.mxu0 %v4945
        %5071 = vmatprep.subr.bf16.mxu0 0
        %5072 = vmatpush1.bf16.msra.mxu0 %v4944
        %5073 = vmatprep.subr.bf16.mxu0 0
        %5074 = vmatpush1.bf16.msra.mxu0 %v4943
        %5075 = vmatprep.subr.bf16.mxu0 0
        %5076 = vmatpush1.bf16.msra.mxu0 %v4942
        %5077 = vmatprep.subr.bf16.mxu0 0
        %5078 = vmatpush1.bf16.msra.mxu0 %v4941
        %5079 = vmatprep.subr.bf16.mxu0 0
        %5080 = vmatpush1.bf16.msra.mxu0 %v4940
        %5081 = vmatprep.subr.bf16.mxu0 0
        %5082 = vmatpush1.bf16.msra.mxu0 %v4939
        %5083 = vmatprep.subr.bf16.mxu0 0
        %5084 = vmatpush2.bf16.msra.mxu0 %v4954
        %5085 = vmatprep.subr.bf16.mxu0 0
        %5086 = vmatpush2.bf16.msra.mxu0 %v4953
        %5087 = vmatprep.subr.bf16.mxu0 0
        %5088 = vmatpush2.bf16.msra.mxu0 %v4952
        %5089 = vmatprep.subr.bf16.mxu0 0
        %5090 = vmatpush2.bf16.msra.mxu0 %v4951
        %5091 = vmatprep.subr.bf16.mxu0 0
        %5092 = vmatpush2.bf16.msra.mxu0 %v4950
        %5093 = vmatprep.subr.bf16.mxu0 0
        %5094 = vmatpush2.bf16.msra.mxu0 %v4949
        %5095 = vmatprep.subr.bf16.mxu0 0
        %5096 = vmatpush2.bf16.msra.mxu0 %v4948
        %5097 = vmatprep.subr.bf16.mxu0 0
        %5098 = vmatpush2.bf16.msra.mxu0 %v4947
        %5099 = vmatprep.mubr.bf16.mxu0 %v2212
        %5100 = vmatmul.mubr.bf16.gmra.mxu0 %v2211
        %v5101 = vpop.f32.mrf.mxu0
        %v5102 = vadd.f32 0.0, %v5101
        %v5103 = vpop.f32.mrf.mxu0
        %v5104 = vpop.f32.mrf.mxu0
        %v5105 = vadd.f32 0.0, %v5104
        %v5106 = vpop.f32.mrf.mxu0
        %5107 = vmatprep.mubr.bf16.mxu0 %v2220
        %5108 = vmatmul.mubr.bf16.gmra.mxu0 %v2219
        %v5109 = vpop.f32.mrf.mxu0
        %v5110 = vadd.f32 0.0, %v5109
        %v5111 = vpop.f32.mrf.mxu0
        %v5112 = vpop.f32.mrf.mxu0
        %v5113 = vadd.f32 0.0, %v5112
        %v5114 = vpop.f32.mrf.mxu0
        %5115 = vmatprep.mubr.bf16.mxu0 %v2228
        %5116 = vmatmul.mubr.bf16.gmra.mxu0 %v2227
        %v5117 = vpop.f32.mrf.mxu0
        %v5118 = vadd.f32 0.0, %v5117
        %v5119 = vpop.f32.mrf.mxu0
        %v5120 = vpop.f32.mrf.mxu0
        %v5121 = vadd.f32 0.0, %v5120
        %v5122 = vpop.f32.mrf.mxu0
        %5123 = vmatprep.mubr.bf16.mxu0 %v2236
        %5124 = vmatmul.mubr.bf16.gmra.mxu0 %v2235
        %v5125 = vpop.f32.mrf.mxu0
        %v5126 = vadd.f32 0.0, %v5125
        %v5127 = vpop.f32.mrf.mxu0
        %v5128 = vpop.f32.mrf.mxu0
        %v5129 = vadd.f32 0.0, %v5128
        %v5130 = vpop.f32.mrf.mxu0
        %5131 = vmatprep.mubr.bf16.mxu0 %v2244
        %5132 = vmatmul.mubr.bf16.gmra.mxu0 %v2243
        %v5133 = vpop.f32.mrf.mxu0
        %v5134 = vadd.f32 0.0, %v5133
        %v5135 = vpop.f32.mrf.mxu0
        %v5136 = vpop.f32.mrf.mxu0
        %v5137 = vadd.f32 0.0, %v5136
        %v5138 = vpop.f32.mrf.mxu0
        %5139 = vmatprep.mubr.bf16.mxu0 %v2252
        %5140 = vmatmul.mubr.bf16.gmra.mxu0 %v2251
        %v5141 = vpop.f32.mrf.mxu0
        %v5142 = vadd.f32 0.0, %v5141
        %v5143 = vpop.f32.mrf.mxu0
        %v5144 = vpop.f32.mrf.mxu0
        %v5145 = vadd.f32 0.0, %v5144
        %v5146 = vpop.f32.mrf.mxu0
        %5147 = vmatprep.mubr.bf16.mxu0 %v2260
        %5148 = vmatmul.mubr.bf16.gmra.mxu0 %v2259
        %v5149 = vpop.f32.mrf.mxu0
        %v5150 = vadd.f32 0.0, %v5149
        %v5151 = vpop.f32.mrf.mxu0
        %v5152 = vpop.f32.mrf.mxu0
        %v5153 = vadd.f32 0.0, %v5152
        %v5154 = vpop.f32.mrf.mxu0
        %5155 = vmatprep.mubr.bf16.mxu0 %v2268
        %5156 = vmatmul.mubr.bf16.gmra.mxu0 %v2267
        %v5157 = vpop.f32.mrf.mxu0
        %v5158 = vadd.f32 0.0, %v5157
        %v5159 = vpop.f32.mrf.mxu0
        %v5160 = vpop.f32.mrf.mxu0
        %v5161 = vadd.f32 0.0, %v5160
        %v5162 = vpop.f32.mrf.mxu0
        %5163 = vmatprep.mubr.bf16.mxu0 %v2276
        %5164 = vmatmul.mubr.bf16.gmra.mxu0 %v2275
        %v5165 = vpop.f32.mrf.mxu0
        %v5166 = vadd.f32 0.0, %v5165
        %v5167 = vpop.f32.mrf.mxu0
        %v5168 = vpop.f32.mrf.mxu0
        %v5169 = vadd.f32 0.0, %v5168
        %v5170 = vpop.f32.mrf.mxu0
        %5171 = vmatprep.mubr.bf16.mxu0 %v2284
        %5172 = vmatmul.mubr.bf16.gmra.mxu0 %v2283
        %v5173 = vpop.f32.mrf.mxu0
        %v5174 = vadd.f32 0.0, %v5173
        %v5175 = vpop.f32.mrf.mxu0
        %v5176 = vpop.f32.mrf.mxu0
        %v5177 = vadd.f32 0.0, %v5176
        %v5178 = vpop.f32.mrf.mxu0
        %5179 = vmatprep.mubr.bf16.mxu0 %v2292
        %5180 = vmatmul.mubr.bf16.gmra.mxu0 %v2291
        %v5181 = vpop.f32.mrf.mxu0
        %v5182 = vadd.f32 0.0, %v5181
        %v5183 = vpop.f32.mrf.mxu0
        %v5184 = vpop.f32.mrf.mxu0
        %v5185 = vadd.f32 0.0, %v5184
        %v5186 = vpop.f32.mrf.mxu0
        %5187 = vmatprep.mubr.bf16.mxu0 %v2300
        %5188 = vmatmul.mubr.bf16.gmra.mxu0 %v2299
        %v5189 = vpop.f32.mrf.mxu0
        %v5190 = vadd.f32 0.0, %v5189
        %v5191 = vpop.f32.mrf.mxu0
        %v5192 = vpop.f32.mrf.mxu0
        %v5193 = vadd.f32 0.0, %v5192
        %v5194 = vpop.f32.mrf.mxu0
        %5195 = vmatprep.mubr.bf16.mxu0 %v2308
        %5196 = vmatmul.mubr.bf16.gmra.mxu0 %v2307
        %v5197 = vpop.f32.mrf.mxu0
        %v5198 = vadd.f32 0.0, %v5197
        %v5199 = vpop.f32.mrf.mxu0
        %v5200 = vpop.f32.mrf.mxu0
        %v5201 = vadd.f32 0.0, %v5200
        %v5202 = vpop.f32.mrf.mxu0
        %5203 = vmatprep.mubr.bf16.mxu0 %v2316
        %5204 = vmatmul.mubr.bf16.gmra.mxu0 %v2315
        %v5205 = vpop.f32.mrf.mxu0
        %v5206 = vadd.f32 0.0, %v5205
        %v5207 = vpop.f32.mrf.mxu0
        %v5208 = vpop.f32.mrf.mxu0
        %v5209 = vadd.f32 0.0, %v5208
        %v5210 = vpop.f32.mrf.mxu0
        %5211 = vmatprep.mubr.bf16.mxu0 %v2324
        %5212 = vmatmul.mubr.bf16.gmra.mxu0 %v2323
        %v5213 = vpop.f32.mrf.mxu0
        %v5214 = vadd.f32 0.0, %v5213
        %v5215 = vpop.f32.mrf.mxu0
        %v5216 = vpop.f32.mrf.mxu0
        %v5217 = vadd.f32 0.0, %v5216
        %v5218 = vpop.f32.mrf.mxu0
        %5219 = vmatprep.mubr.bf16.mxu0 %v2332
        %5220 = vmatmul.mubr.bf16.gmra.mxu0 %v2331
        %v5221 = vpop.f32.mrf.mxu0
        %v5222 = vadd.f32 0.0, %v5221
        %v5223 = vpop.f32.mrf.mxu0
        %v5224 = vpop.f32.mrf.mxu0
        %v5225 = vadd.f32 0.0, %v5224
        %v5226 = vpop.f32.mrf.mxu0
        %5227 = vdwg.mxu0
        %5228 = vmatprep.subr.bf16.mxu0 0
        %5229 = vmatpush1.bf16.msra.mxu0 %v4962
        %5230 = vmatprep.subr.bf16.mxu0 0
        %5231 = vmatpush1.bf16.msra.mxu0 %v4961
        %5232 = vmatprep.subr.bf16.mxu0 0
        %5233 = vmatpush1.bf16.msra.mxu0 %v4960
        %5234 = vmatprep.subr.bf16.mxu0 0
        %5235 = vmatpush1.bf16.msra.mxu0 %v4959
        %5236 = vmatprep.subr.bf16.mxu0 0
        %5237 = vmatpush1.bf16.msra.mxu0 %v4958
        %5238 = vmatprep.subr.bf16.mxu0 0
        %5239 = vmatpush1.bf16.msra.mxu0 %v4957
        %5240 = vmatprep.subr.bf16.mxu0 0
        %5241 = vmatpush1.bf16.msra.mxu0 %v4956
        %5242 = vmatprep.subr.bf16.mxu0 0
        %5243 = vmatpush1.bf16.msra.mxu0 %v4955
        %5244 = vmatprep.subr.bf16.mxu0 0
        %5245 = vmatpush2.bf16.msra.mxu0 %v4970
        %5246 = vmatprep.subr.bf16.mxu0 0
        %5247 = vmatpush2.bf16.msra.mxu0 %v4969
        %5248 = vmatprep.subr.bf16.mxu0 0
        %5249 = vmatpush2.bf16.msra.mxu0 %v4968
        %5250 = vmatprep.subr.bf16.mxu0 0
        %5251 = vmatpush2.bf16.msra.mxu0 %v4967
        %5252 = vmatprep.subr.bf16.mxu0 0
        %5253 = vmatpush2.bf16.msra.mxu0 %v4966
        %5254 = vmatprep.subr.bf16.mxu0 0
        %5255 = vmatpush2.bf16.msra.mxu0 %v4965
        %5256 = vmatprep.subr.bf16.mxu0 0
        %5257 = vmatpush2.bf16.msra.mxu0 %v4964
        %5258 = vmatprep.subr.bf16.mxu0 0
        %5259 = vmatpush2.bf16.msra.mxu0 %v4963
        %5260 = vmatprep.mubr.bf16.mxu0 %v2214
        %5261 = vmatmul.mubr.bf16.gmra.mxu0 %v2213
        %v5262 = vpop.f32.mrf.mxu0
        %v5263 = vadd.f32 %v5102, %v5262
        %v5264 = vpop.f32.mrf.mxu0
        %v5265 = vpop.f32.mrf.mxu0
        %v5266 = vadd.f32 %v5105, %v5265
        %v5267 = vpop.f32.mrf.mxu0
        %5268 = vmatprep.mubr.bf16.mxu0 %v2222
        %5269 = vmatmul.mubr.bf16.gmra.mxu0 %v2221
        %v5270 = vpop.f32.mrf.mxu0
        %v5271 = vadd.f32 %v5110, %v5270
        %v5272 = vpop.f32.mrf.mxu0
        %v5273 = vpop.f32.mrf.mxu0
        %v5274 = vadd.f32 %v5113, %v5273
        %v5275 = vpop.f32.mrf.mxu0
        %5276 = vmatprep.mubr.bf16.mxu0 %v2230
        %5277 = vmatmul.mubr.bf16.gmra.mxu0 %v2229
        %v5278 = vpop.f32.mrf.mxu0
        %v5279 = vadd.f32 %v5118, %v5278
        %v5280 = vpop.f32.mrf.mxu0
        %v5281 = vpop.f32.mrf.mxu0
        %v5282 = vadd.f32 %v5121, %v5281
        %v5283 = vpop.f32.mrf.mxu0
        %5284 = vmatprep.mubr.bf16.mxu0 %v2238
        %5285 = vmatmul.mubr.bf16.gmra.mxu0 %v2237
        %v5286 = vpop.f32.mrf.mxu0
        %v5287 = vadd.f32 %v5126, %v5286
        %v5288 = vpop.f32.mrf.mxu0
        %v5289 = vpop.f32.mrf.mxu0
        %v5290 = vadd.f32 %v5129, %v5289
        %v5291 = vpop.f32.mrf.mxu0
        %5292 = vmatprep.mubr.bf16.mxu0 %v2246
        %5293 = vmatmul.mubr.bf16.gmra.mxu0 %v2245
        %v5294 = vpop.f32.mrf.mxu0
        %v5295 = vadd.f32 %v5134, %v5294
        %v5296 = vpop.f32.mrf.mxu0
        %v5297 = vpop.f32.mrf.mxu0
        %v5298 = vadd.f32 %v5137, %v5297
        %v5299 = vpop.f32.mrf.mxu0
        %5300 = vmatprep.mubr.bf16.mxu0 %v2254
        %5301 = vmatmul.mubr.bf16.gmra.mxu0 %v2253
        %v5302 = vpop.f32.mrf.mxu0
        %v5303 = vadd.f32 %v5142, %v5302
        %v5304 = vpop.f32.mrf.mxu0
        %v5305 = vpop.f32.mrf.mxu0
        %v5306 = vadd.f32 %v5145, %v5305
        %v5307 = vpop.f32.mrf.mxu0
        %5308 = vmatprep.mubr.bf16.mxu0 %v2262
        %5309 = vmatmul.mubr.bf16.gmra.mxu0 %v2261
        %v5310 = vpop.f32.mrf.mxu0
        %v5311 = vadd.f32 %v5150, %v5310
        %v5312 = vpop.f32.mrf.mxu0
        %v5313 = vpop.f32.mrf.mxu0
        %v5314 = vadd.f32 %v5153, %v5313
        %v5315 = vpop.f32.mrf.mxu0
        %5316 = vmatprep.mubr.bf16.mxu0 %v2270
        %5317 = vmatmul.mubr.bf16.gmra.mxu0 %v2269
        %v5318 = vpop.f32.mrf.mxu0
        %v5319 = vadd.f32 %v5158, %v5318
        %v5320 = vpop.f32.mrf.mxu0
        %v5321 = vpop.f32.mrf.mxu0
        %v5322 = vadd.f32 %v5161, %v5321
        %v5323 = vpop.f32.mrf.mxu0
        %5324 = vmatprep.mubr.bf16.mxu0 %v2278
        %5325 = vmatmul.mubr.bf16.gmra.mxu0 %v2277
        %v5326 = vpop.f32.mrf.mxu0
        %v5327 = vadd.f32 %v5166, %v5326
        %v5328 = vpop.f32.mrf.mxu0
        %v5329 = vpop.f32.mrf.mxu0
        %v5330 = vadd.f32 %v5169, %v5329
        %v5331 = vpop.f32.mrf.mxu0
        %5332 = vmatprep.mubr.bf16.mxu0 %v2286
        %5333 = vmatmul.mubr.bf16.gmra.mxu0 %v2285
        %v5334 = vpop.f32.mrf.mxu0
        %v5335 = vadd.f32 %v5174, %v5334
        %v5336 = vpop.f32.mrf.mxu0
        %v5337 = vpop.f32.mrf.mxu0
        %v5338 = vadd.f32 %v5177, %v5337
        %v5339 = vpop.f32.mrf.mxu0
        %5340 = vmatprep.mubr.bf16.mxu0 %v2294
        %5341 = vmatmul.mubr.bf16.gmra.mxu0 %v2293
        %v5342 = vpop.f32.mrf.mxu0
        %v5343 = vadd.f32 %v5182, %v5342
        %v5344 = vpop.f32.mrf.mxu0
        %v5345 = vpop.f32.mrf.mxu0
        %v5346 = vadd.f32 %v5185, %v5345
        %v5347 = vpop.f32.mrf.mxu0
        %5348 = vmatprep.mubr.bf16.mxu0 %v2302
        %5349 = vmatmul.mubr.bf16.gmra.mxu0 %v2301
        %v5350 = vpop.f32.mrf.mxu0
        %v5351 = vadd.f32 %v5190, %v5350
        %v5352 = vpop.f32.mrf.mxu0
        %v5353 = vpop.f32.mrf.mxu0
        %v5354 = vadd.f32 %v5193, %v5353
        %v5355 = vpop.f32.mrf.mxu0
        %5356 = vmatprep.mubr.bf16.mxu0 %v2310
        %5357 = vmatmul.mubr.bf16.gmra.mxu0 %v2309
        %v5358 = vpop.f32.mrf.mxu0
        %v5359 = vadd.f32 %v5198, %v5358
        %v5360 = vpop.f32.mrf.mxu0
        %v5361 = vpop.f32.mrf.mxu0
        %v5362 = vadd.f32 %v5201, %v5361
        %v5363 = vpop.f32.mrf.mxu0
        %5364 = vmatprep.mubr.bf16.mxu0 %v2318
        %5365 = vmatmul.mubr.bf16.gmra.mxu0 %v2317
        %v5366 = vpop.f32.mrf.mxu0
        %v5367 = vadd.f32 %v5206, %v5366
        %v5368 = vpop.f32.mrf.mxu0
        %v5369 = vpop.f32.mrf.mxu0
        %v5370 = vadd.f32 %v5209, %v5369
        %v5371 = vpop.f32.mrf.mxu0
        %5372 = vmatprep.mubr.bf16.mxu0 %v2326
        %5373 = vmatmul.mubr.bf16.gmra.mxu0 %v2325
        %v5374 = vpop.f32.mrf.mxu0
        %v5375 = vadd.f32 %v5214, %v5374
        %v5376 = vpop.f32.mrf.mxu0
        %v5377 = vpop.f32.mrf.mxu0
        %v5378 = vadd.f32 %v5217, %v5377
        %v5379 = vpop.f32.mrf.mxu0
        %5380 = vmatprep.mubr.bf16.mxu0 %v2334
        %5381 = vmatmul.mubr.bf16.gmra.mxu0 %v2333
        %v5382 = vpop.f32.mrf.mxu0
        %v5383 = vadd.f32 %v5222, %v5382
        %v5384 = vpop.f32.mrf.mxu0
        %v5385 = vpop.f32.mrf.mxu0
        %v5386 = vadd.f32 %v5225, %v5385
        %v5387 = vpop.f32.mrf.mxu0
        %5388 = vdwg.mxu0
        %5389 = vmatprep.subr.bf16.mxu0 0
        %5390 = vmatpush1.bf16.msra.mxu0 %v4978
        %5391 = vmatprep.subr.bf16.mxu0 0
        %5392 = vmatpush1.bf16.msra.mxu0 %v4977
        %5393 = vmatprep.subr.bf16.mxu0 0
        %5394 = vmatpush1.bf16.msra.mxu0 %v4976
        %5395 = vmatprep.subr.bf16.mxu0 0
        %5396 = vmatpush1.bf16.msra.mxu0 %v4975
        %5397 = vmatprep.subr.bf16.mxu0 0
        %5398 = vmatpush1.bf16.msra.mxu0 %v4974
        %5399 = vmatprep.subr.bf16.mxu0 0
        %5400 = vmatpush1.bf16.msra.mxu0 %v4973
        %5401 = vmatprep.subr.bf16.mxu0 0
        %5402 = vmatpush1.bf16.msra.mxu0 %v4972
        %5403 = vmatprep.subr.bf16.mxu0 0
        %5404 = vmatpush1.bf16.msra.mxu0 %v4971
        %5405 = vmatprep.subr.bf16.mxu0 0
        %5406 = vmatpush2.bf16.msra.mxu0 %v4986
        %5407 = vmatprep.subr.bf16.mxu0 0
        %5408 = vmatpush2.bf16.msra.mxu0 %v4985
        %5409 = vmatprep.subr.bf16.mxu0 0
        %5410 = vmatpush2.bf16.msra.mxu0 %v4984
        %5411 = vmatprep.subr.bf16.mxu0 0
        %5412 = vmatpush2.bf16.msra.mxu0 %v4983
        %5413 = vmatprep.subr.bf16.mxu0 0
        %5414 = vmatpush2.bf16.msra.mxu0 %v4982
        %5415 = vmatprep.subr.bf16.mxu0 0
        %5416 = vmatpush2.bf16.msra.mxu0 %v4981
        %5417 = vmatprep.subr.bf16.mxu0 0
        %5418 = vmatpush2.bf16.msra.mxu0 %v4980
        %5419 = vmatprep.subr.bf16.mxu0 0
        %5420 = vmatpush2.bf16.msra.mxu0 %v4979
        %5421 = vmatprep.mubr.bf16.mxu0 %v2216
        %5422 = vmatmul.mubr.bf16.gmra.mxu0 %v2215
        %v5423 = vpop.f32.mrf.mxu0
        %v5424 = vadd.f32 %v5263, %v5423
        %v5425 = vpop.f32.mrf.mxu0
        %v5426 = vpop.f32.mrf.mxu0
        %v5427 = vadd.f32 %v5266, %v5426
        %v5428 = vpop.f32.mrf.mxu0
        %5429 = vmatprep.mubr.bf16.mxu0 %v2224
        %5430 = vmatmul.mubr.bf16.gmra.mxu0 %v2223
        %v5431 = vpop.f32.mrf.mxu0
        %v5432 = vadd.f32 %v5271, %v5431
        %v5433 = vpop.f32.mrf.mxu0
        %v5434 = vpop.f32.mrf.mxu0
        %v5435 = vadd.f32 %v5274, %v5434
        %v5436 = vpop.f32.mrf.mxu0
        %5437 = vmatprep.mubr.bf16.mxu0 %v2232
        %5438 = vmatmul.mubr.bf16.gmra.mxu0 %v2231
        %v5439 = vpop.f32.mrf.mxu0
        %v5440 = vadd.f32 %v5279, %v5439
        %v5441 = vpop.f32.mrf.mxu0
        %v5442 = vpop.f32.mrf.mxu0
        %v5443 = vadd.f32 %v5282, %v5442
        %v5444 = vpop.f32.mrf.mxu0
        %5445 = vmatprep.mubr.bf16.mxu0 %v2240
        %5446 = vmatmul.mubr.bf16.gmra.mxu0 %v2239
        %v5447 = vpop.f32.mrf.mxu0
        %v5448 = vadd.f32 %v5287, %v5447
        %v5449 = vpop.f32.mrf.mxu0
        %v5450 = vpop.f32.mrf.mxu0
        %v5451 = vadd.f32 %v5290, %v5450
        %v5452 = vpop.f32.mrf.mxu0
        %5453 = vmatprep.mubr.bf16.mxu0 %v2248
        %5454 = vmatmul.mubr.bf16.gmra.mxu0 %v2247
        %v5455 = vpop.f32.mrf.mxu0
        %v5456 = vadd.f32 %v5295, %v5455
        %v5457 = vpop.f32.mrf.mxu0
        %v5458 = vpop.f32.mrf.mxu0
        %v5459 = vadd.f32 %v5298, %v5458
        %v5460 = vpop.f32.mrf.mxu0
        %5461 = vmatprep.mubr.bf16.mxu0 %v2256
        %5462 = vmatmul.mubr.bf16.gmra.mxu0 %v2255
        %v5463 = vpop.f32.mrf.mxu0
        %v5464 = vadd.f32 %v5303, %v5463
        %v5465 = vpop.f32.mrf.mxu0
        %v5466 = vpop.f32.mrf.mxu0
        %v5467 = vadd.f32 %v5306, %v5466
        %v5468 = vpop.f32.mrf.mxu0
        %5469 = vmatprep.mubr.bf16.mxu0 %v2264
        %5470 = vmatmul.mubr.bf16.gmra.mxu0 %v2263
        %v5471 = vpop.f32.mrf.mxu0
        %v5472 = vadd.f32 %v5311, %v5471
        %v5473 = vpop.f32.mrf.mxu0
        %v5474 = vpop.f32.mrf.mxu0
        %v5475 = vadd.f32 %v5314, %v5474
        %v5476 = vpop.f32.mrf.mxu0
        %5477 = vmatprep.mubr.bf16.mxu0 %v2272
        %5478 = vmatmul.mubr.bf16.gmra.mxu0 %v2271
        %v5479 = vpop.f32.mrf.mxu0
        %v5480 = vadd.f32 %v5319, %v5479
        %v5481 = vpop.f32.mrf.mxu0
        %v5482 = vpop.f32.mrf.mxu0
        %v5483 = vadd.f32 %v5322, %v5482
        %v5484 = vpop.f32.mrf.mxu0
        %5485 = vmatprep.mubr.bf16.mxu0 %v2280
        %5486 = vmatmul.mubr.bf16.gmra.mxu0 %v2279
        %v5487 = vpop.f32.mrf.mxu0
        %v5488 = vadd.f32 %v5327, %v5487
        %v5489 = vpop.f32.mrf.mxu0
        %v5490 = vpop.f32.mrf.mxu0
        %v5491 = vadd.f32 %v5330, %v5490
        %v5492 = vpop.f32.mrf.mxu0
        %5493 = vmatprep.mubr.bf16.mxu0 %v2288
        %5494 = vmatmul.mubr.bf16.gmra.mxu0 %v2287
        %v5495 = vpop.f32.mrf.mxu0
        %v5496 = vadd.f32 %v5335, %v5495
        %v5497 = vpop.f32.mrf.mxu0
        %v5498 = vpop.f32.mrf.mxu0
        %v5499 = vadd.f32 %v5338, %v5498
        %v5500 = vpop.f32.mrf.mxu0
        %5501 = vmatprep.mubr.bf16.mxu0 %v2296
        %5502 = vmatmul.mubr.bf16.gmra.mxu0 %v2295
        %v5503 = vpop.f32.mrf.mxu0
        %v5504 = vadd.f32 %v5343, %v5503
        %v5505 = vpop.f32.mrf.mxu0
        %v5506 = vpop.f32.mrf.mxu0
        %v5507 = vadd.f32 %v5346, %v5506
        %v5508 = vpop.f32.mrf.mxu0
        %5509 = vmatprep.mubr.bf16.mxu0 %v2304
        %5510 = vmatmul.mubr.bf16.gmra.mxu0 %v2303
        %v5511 = vpop.f32.mrf.mxu0
        %v5512 = vadd.f32 %v5351, %v5511
        %v5513 = vpop.f32.mrf.mxu0
        %v5514 = vpop.f32.mrf.mxu0
        %v5515 = vadd.f32 %v5354, %v5514
        %v5516 = vpop.f32.mrf.mxu0
        %5517 = vmatprep.mubr.bf16.mxu0 %v2312
        %5518 = vmatmul.mubr.bf16.gmra.mxu0 %v2311
        %v5519 = vpop.f32.mrf.mxu0
        %v5520 = vadd.f32 %v5359, %v5519
        %v5521 = vpop.f32.mrf.mxu0
        %v5522 = vpop.f32.mrf.mxu0
        %v5523 = vadd.f32 %v5362, %v5522
        %v5524 = vpop.f32.mrf.mxu0
        %5525 = vmatprep.mubr.bf16.mxu0 %v2320
        %5526 = vmatmul.mubr.bf16.gmra.mxu0 %v2319
        %v5527 = vpop.f32.mrf.mxu0
        %v5528 = vadd.f32 %v5367, %v5527
        %v5529 = vpop.f32.mrf.mxu0
        %v5530 = vpop.f32.mrf.mxu0
        %v5531 = vadd.f32 %v5370, %v5530
        %v5532 = vpop.f32.mrf.mxu0
        %5533 = vmatprep.mubr.bf16.mxu0 %v2328
        %5534 = vmatmul.mubr.bf16.gmra.mxu0 %v2327
        %v5535 = vpop.f32.mrf.mxu0
        %v5536 = vadd.f32 %v5375, %v5535
        %v5537 = vpop.f32.mrf.mxu0
        %v5538 = vpop.f32.mrf.mxu0
        %v5539 = vadd.f32 %v5378, %v5538
        %v5540 = vpop.f32.mrf.mxu0
        %5541 = vmatprep.mubr.bf16.mxu0 %v2336
        %5542 = vmatmul.mubr.bf16.gmra.mxu0 %v2335
        %v5543 = vpop.f32.mrf.mxu0
        %v5544 = vadd.f32 %v5383, %v5543
        %v5545 = vpop.f32.mrf.mxu0
        %v5546 = vpop.f32.mrf.mxu0
        %v5547 = vadd.f32 %v5386, %v5546
        %v5548 = vpop.f32.mrf.mxu0
        %5549 = vdwg.mxu0
        %5550 = vmatprep.subr.bf16.mxu0 0
        %5551 = vmatpush1.bf16.msra.mxu0 %v4994
        %5552 = vmatprep.subr.bf16.mxu0 0
        %5553 = vmatpush1.bf16.msra.mxu0 %v4993
        %5554 = vmatprep.subr.bf16.mxu0 0
        %5555 = vmatpush1.bf16.msra.mxu0 %v4992
        %5556 = vmatprep.subr.bf16.mxu0 0
        %5557 = vmatpush1.bf16.msra.mxu0 %v4991
        %5558 = vmatprep.subr.bf16.mxu0 0
        %5559 = vmatpush1.bf16.msra.mxu0 %v4990
        %5560 = vmatprep.subr.bf16.mxu0 0
        %5561 = vmatpush1.bf16.msra.mxu0 %v4989
        %5562 = vmatprep.subr.bf16.mxu0 0
        %5563 = vmatpush1.bf16.msra.mxu0 %v4988
        %5564 = vmatprep.subr.bf16.mxu0 0
        %5565 = vmatpush1.bf16.msra.mxu0 %v4987
        %5566 = vmatprep.subr.bf16.mxu0 0
        %5567 = vmatpush2.bf16.msra.mxu0 %v5002
        %5568 = vmatprep.subr.bf16.mxu0 0
        %5569 = vmatpush2.bf16.msra.mxu0 %v5001
        %5570 = vmatprep.subr.bf16.mxu0 0
        %5571 = vmatpush2.bf16.msra.mxu0 %v5000
        %5572 = vmatprep.subr.bf16.mxu0 0
        %5573 = vmatpush2.bf16.msra.mxu0 %v4999
        %5574 = vmatprep.subr.bf16.mxu0 0
        %5575 = vmatpush2.bf16.msra.mxu0 %v4998
        %5576 = vmatprep.subr.bf16.mxu0 0
        %5577 = vmatpush2.bf16.msra.mxu0 %v4997
        %5578 = vmatprep.subr.bf16.mxu0 0
        %5579 = vmatpush2.bf16.msra.mxu0 %v4996
        %5580 = vmatprep.subr.bf16.mxu0 0
        %5581 = vmatpush2.bf16.msra.mxu0 %v4995
        %5582 = vmatprep.mubr.bf16.mxu0 %v2218
        %5583 = vmatmul.mubr.bf16.gmra.mxu0 %v2217
        %v5584 = vpop.f32.mrf.mxu0
        %v5585 = vadd.f32 %v5424, %v5584
        %v5586 = vpop.f32.mrf.mxu0
        %v5587 = vpop.f32.mrf.mxu0
        %v5588 = vadd.f32 %v5427, %v5587
        %v5589 = vpop.f32.mrf.mxu0
        %5590 = vmatprep.mubr.bf16.mxu0 %v2226
        %5591 = vmatmul.mubr.bf16.gmra.mxu0 %v2225
        %v5592 = vpop.f32.mrf.mxu0
        %v5593 = vadd.f32 %v5432, %v5592
        %v5594 = vpop.f32.mrf.mxu0
        %v5595 = vpop.f32.mrf.mxu0
        %v5596 = vadd.f32 %v5435, %v5595
        %v5597 = vpop.f32.mrf.mxu0
        %5598 = vmatprep.mubr.bf16.mxu0 %v2234
        %5599 = vmatmul.mubr.bf16.gmra.mxu0 %v2233
        %v5600 = vpop.f32.mrf.mxu0
        %v5601 = vadd.f32 %v5440, %v5600
        %v5602 = vpop.f32.mrf.mxu0
        %v5603 = vpop.f32.mrf.mxu0
        %v5604 = vadd.f32 %v5443, %v5603
        %v5605 = vpop.f32.mrf.mxu0
        %5606 = vmatprep.mubr.bf16.mxu0 %v2242
        %5607 = vmatmul.mubr.bf16.gmra.mxu0 %v2241
        %v5608 = vpop.f32.mrf.mxu0
        %v5609 = vadd.f32 %v5448, %v5608
        %v5610 = vpop.f32.mrf.mxu0
        %v5611 = vpop.f32.mrf.mxu0
        %v5612 = vadd.f32 %v5451, %v5611
        %v5613 = vpop.f32.mrf.mxu0
        %5614 = vmatprep.mubr.bf16.mxu0 %v2250
        %5615 = vmatmul.mubr.bf16.gmra.mxu0 %v2249
        %v5616 = vpop.f32.mrf.mxu0
        %v5617 = vadd.f32 %v5456, %v5616
        %v5618 = vpop.f32.mrf.mxu0
        %v5619 = vpop.f32.mrf.mxu0
        %v5620 = vadd.f32 %v5459, %v5619
        %v5621 = vpop.f32.mrf.mxu0
        %5622 = vmatprep.mubr.bf16.mxu0 %v2258
        %5623 = vmatmul.mubr.bf16.gmra.mxu0 %v2257
        %v5624 = vpop.f32.mrf.mxu0
        %v5625 = vadd.f32 %v5464, %v5624
        %v5626 = vpop.f32.mrf.mxu0
        %v5627 = vpop.f32.mrf.mxu0
        %v5628 = vadd.f32 %v5467, %v5627
        %v5629 = vpop.f32.mrf.mxu0
        %5630 = vmatprep.mubr.bf16.mxu0 %v2266
        %5631 = vmatmul.mubr.bf16.gmra.mxu0 %v2265
        %v5632 = vpop.f32.mrf.mxu0
        %v5633 = vadd.f32 %v5472, %v5632
        %v5634 = vpop.f32.mrf.mxu0
        %v5635 = vpop.f32.mrf.mxu0
        %v5636 = vadd.f32 %v5475, %v5635
        %v5637 = vpop.f32.mrf.mxu0
        %5638 = vmatprep.mubr.bf16.mxu0 %v2274
        %5639 = vmatmul.mubr.bf16.gmra.mxu0 %v2273
        %v5640 = vpop.f32.mrf.mxu0
        %v5641 = vadd.f32 %v5480, %v5640
        %v5642 = vpop.f32.mrf.mxu0
        %v5643 = vpop.f32.mrf.mxu0
        %v5644 = vadd.f32 %v5483, %v5643
        %v5645 = vpop.f32.mrf.mxu0
        %5646 = vmatprep.mubr.bf16.mxu0 %v2282
        %5647 = vmatmul.mubr.bf16.gmra.mxu0 %v2281
        %v5648 = vpop.f32.mrf.mxu0
        %v5649 = vadd.f32 %v5488, %v5648
        %v5650 = vpop.f32.mrf.mxu0
        %v5651 = vpop.f32.mrf.mxu0
        %v5652 = vadd.f32 %v5491, %v5651
        %v5653 = vpop.f32.mrf.mxu0
        %5654 = vmatprep.mubr.bf16.mxu0 %v2290
        %5655 = vmatmul.mubr.bf16.gmra.mxu0 %v2289
        %v5656 = vpop.f32.mrf.mxu0
        %v5657 = vadd.f32 %v5496, %v5656
        %v5658 = vpop.f32.mrf.mxu0
        %v5659 = vpop.f32.mrf.mxu0
        %v5660 = vadd.f32 %v5499, %v5659
        %v5661 = vpop.f32.mrf.mxu0
        %5662 = vmatprep.mubr.bf16.mxu0 %v2298
        %5663 = vmatmul.mubr.bf16.gmra.mxu0 %v2297
        %v5664 = vpop.f32.mrf.mxu0
        %v5665 = vadd.f32 %v5504, %v5664
        %v5666 = vpop.f32.mrf.mxu0
        %v5667 = vpop.f32.mrf.mxu0
        %v5668 = vadd.f32 %v5507, %v5667
        %v5669 = vpop.f32.mrf.mxu0
        %5670 = vmatprep.mubr.bf16.mxu0 %v2306
        %5671 = vmatmul.mubr.bf16.gmra.mxu0 %v2305
        %v5672 = vpop.f32.mrf.mxu0
        %v5673 = vadd.f32 %v5512, %v5672
        %v5674 = vpop.f32.mrf.mxu0
        %v5675 = vpop.f32.mrf.mxu0
        %v5676 = vadd.f32 %v5515, %v5675
        %v5677 = vpop.f32.mrf.mxu0
        %5678 = vmatprep.mubr.bf16.mxu0 %v2314
        %5679 = vmatmul.mubr.bf16.gmra.mxu0 %v2313
        %v5680 = vpop.f32.mrf.mxu0
        %v5681 = vadd.f32 %v5520, %v5680
        %v5682 = vpop.f32.mrf.mxu0
        %v5683 = vpop.f32.mrf.mxu0
        %v5684 = vadd.f32 %v5523, %v5683
        %v5685 = vpop.f32.mrf.mxu0
        %5686 = vmatprep.mubr.bf16.mxu0 %v2322
        %5687 = vmatmul.mubr.bf16.gmra.mxu0 %v2321
        %v5688 = vpop.f32.mrf.mxu0
        %v5689 = vadd.f32 %v5528, %v5688
        %v5690 = vpop.f32.mrf.mxu0
        %v5691 = vpop.f32.mrf.mxu0
        %v5692 = vadd.f32 %v5531, %v5691
        %v5693 = vpop.f32.mrf.mxu0
        %5694 = vmatprep.mubr.bf16.mxu0 %v2330
        %5695 = vmatmul.mubr.bf16.gmra.mxu0 %v2329
        %v5696 = vpop.f32.mrf.mxu0
        %v5697 = vadd.f32 %v5536, %v5696
        %v5698 = vpop.f32.mrf.mxu0
        %v5699 = vpop.f32.mrf.mxu0
        %v5700 = vadd.f32 %v5539, %v5699
        %v5701 = vpop.f32.mrf.mxu0
        %5702 = vmatprep.mubr.bf16.mxu0 %v2338
        %5703 = vmatmul.mubr.bf16.gmra.mxu0 %v2337
        %v5704 = vpop.f32.mrf.mxu0
        %v5705 = vadd.f32 %v5544, %v5704
        %v5706 = vpop.f32.mrf.mxu0
        %v5707 = vpop.f32.mrf.mxu0
        %v5708 = vadd.f32 %v5547, %v5707
        %v5709 = vpop.f32.mrf.mxu0
        %5710 = vdwg.mxu0
        %v5711 = vadd.f32 %v4523, %v5585
        %v5712 = vadd.f32 %v4524, %v5588
        %v5713 = vadd.f32 %v4525, %v5593
        %v5714 = vadd.f32 %v4526, %v5596
        %v5715 = vadd.f32 %v4527, %v5601
        %v5716 = vadd.f32 %v4528, %v5604
        %v5717 = vadd.f32 %v4529, %v5609
        %v5718 = vadd.f32 %v4530, %v5612
        %v5719 = vadd.f32 %v4531, %v5617
        %v5720 = vadd.f32 %v4532, %v5620
        %v5721 = vadd.f32 %v4533, %v5625
        %v5722 = vadd.f32 %v4534, %v5628
        %v5723 = vadd.f32 %v4535, %v5633
        %v5724 = vadd.f32 %v4536, %v5636
        %v5725 = vadd.f32 %v4537, %v5641
        %v5726 = vadd.f32 %v4538, %v5644
        %v5727 = vadd.f32 %v4539, %v5649
        %v5728 = vadd.f32 %v4540, %v5652
        %v5729 = vadd.f32 %v4541, %v5657
        %v5730 = vadd.f32 %v4542, %v5660
        %v5731 = vadd.f32 %v4543, %v5665
        %v5732 = vadd.f32 %v4544, %v5668
        %v5733 = vadd.f32 %v4545, %v5673
        %v5734 = vadd.f32 %v4546, %v5676
        %v5735 = vadd.f32 %v4547, %v5681
        %v5736 = vadd.f32 %v4548, %v5684
        %v5737 = vadd.f32 %v4549, %v5689
        %v5738 = vadd.f32 %v4550, %v5692
        %v5739 = vadd.f32 %v4551, %v5697
        %v5740 = vadd.f32 %v4552, %v5700
        %v5741 = vadd.f32 %v4553, %v5705
        %v5742 = vadd.f32 %v4554, %v5708
        %5743 = vst [vmem:[#allocation2] sm:$0xff] %v5711
        %5744 = vst [vmem:[#allocation2 + $0x8] sm:$0xff] %v5712
        %5745 = vst [vmem:[#allocation2 + $0x10] sm:$0xff] %v5713
        %5746 = vst [vmem:[#allocation2 + $0x18] sm:$0xff] %v5714
        %5747 = vst [vmem:[#allocation2 + $0x20] sm:$0xff] %v5715
        %5748 = vst [vmem:[#allocation2 + $0x28] sm:$0xff] %v5716
        %5749 = vst [vmem:[#allocation2 + $0x30] sm:$0xff] %v5717
        %5750 = vst [vmem:[#allocation2 + $0x38] sm:$0xff] %v5718
        %5751 = vst [vmem:[#allocation2 + $0x40] sm:$0xff] %v5719
        %5752 = vst [vmem:[#allocation2 + $0x48] sm:$0xff] %v5720
        %5753 = vst [vmem:[#allocation2 + $0x50] sm:$0xff] %v5721
        %5754 = vst [vmem:[#allocation2 + $0x58] sm:$0xff] %v5722
        %5755 = vst [vmem:[#allocation2 + $0x60] sm:$0xff] %v5723
        %5756 = vst [vmem:[#allocation2 + $0x68] sm:$0xff] %v5724
        %5757 = vst [vmem:[#allocation2 + $0x70] sm:$0xff] %v5725
        %5758 = vst [vmem:[#allocation2 + $0x78] sm:$0xff] %v5726
        %5759 = vst [vmem:[#allocation2 + $0x80] sm:$0xff] %v5727
        %5760 = vst [vmem:[#allocation2 + $0x88] sm:$0xff] %v5728
        %5761 = vst [vmem:[#allocation2 + $0x90] sm:$0xff] %v5729
        %5762 = vst [vmem:[#allocation2 + $0x98] sm:$0xff] %v5730
        %5763 = vst [vmem:[#allocation2 + $0xa0] sm:$0xff] %v5731
        %5764 = vst [vmem:[#allocation2 + $0xa8] sm:$0xff] %v5732
        %5765 = vst [vmem:[#allocation2 + $0xb0] sm:$0xff] %v5733
        %5766 = vst [vmem:[#allocation2 + $0xb8] sm:$0xff] %v5734
        %5767 = vst [vmem:[#allocation2 + $0xc0] sm:$0xff] %v5735
        %5768 = vst [vmem:[#allocation2 + $0xc8] sm:$0xff] %v5736
        %5769 = vst [vmem:[#allocation2 + $0xd0] sm:$0xff] %v5737
        %5770 = vst [vmem:[#allocation2 + $0xd8] sm:$0xff] %v5738
        %5771 = vst [vmem:[#allocation2 + $0xe0] sm:$0xff] %v5739
        %5772 = vst [vmem:[#allocation2 + $0xe8] sm:$0xff] %v5740
        %5773 = vst [vmem:[#allocation2 + $0xf0] sm:$0xff] %v5741
        %5774 = vst [vmem:[#allocation2 + $0xf8] sm:$0xff] %v5742
        %p5775 = scmp.eq.s32.totalorder %s43, 3
        // Predicated region
        $region105: #{endosam_forward.1} parent=75 // pred_check
          %p5776 = pneg %p5775
        $region106: #{endosam_forward.1} parent=75 // pred_check_branch
          %5778 = sbr.rel (%p5776) target = $region108
        $region107: #{endosam_forward.1} parent=75 // pred_region
          %v5779 = vld [vmem:[#allocation2] sm:$0xff]
          %v5780 = vld [vmem:[#allocation2 + $0x8] sm:$0xff]
          %v5781 = vld [vmem:[#allocation2 + $0x10] sm:$0xff]
          %v5782 = vld [vmem:[#allocation2 + $0x18] sm:$0xff]
          %v5783 = vld [vmem:[#allocation2 + $0x20] sm:$0xff]
          %v5784 = vld [vmem:[#allocation2 + $0x28] sm:$0xff]
          %v5785 = vld [vmem:[#allocation2 + $0x30] sm:$0xff]
          %v5786 = vld [vmem:[#allocation2 + $0x38] sm:$0xff]
          %v5787 = vld [vmem:[#allocation2 + $0x40] sm:$0xff]
          %v5788 = vld [vmem:[#allocation2 + $0x48] sm:$0xff]
          %v5789 = vld [vmem:[#allocation2 + $0x50] sm:$0xff]
          %v5790 = vld [vmem:[#allocation2 + $0x58] sm:$0xff]
          %v5791 = vld [vmem:[#allocation2 + $0x60] sm:$0xff]
          %v5792 = vld [vmem:[#allocation2 + $0x68] sm:$0xff]
          %v5793 = vld [vmem:[#allocation2 + $0x70] sm:$0xff]
          %v5794 = vld [vmem:[#allocation2 + $0x78] sm:$0xff]
          %v5795 = vld [vmem:[#allocation2 + $0x80] sm:$0xff]
          %v5796 = vld [vmem:[#allocation2 + $0x88] sm:$0xff]
          %v5797 = vld [vmem:[#allocation2 + $0x90] sm:$0xff]
          %v5798 = vld [vmem:[#allocation2 + $0x98] sm:$0xff]
          %v5799 = vld [vmem:[#allocation2 + $0xa0] sm:$0xff]
          %v5800 = vld [vmem:[#allocation2 + $0xa8] sm:$0xff]
          %v5801 = vld [vmem:[#allocation2 + $0xb0] sm:$0xff]
          %v5802 = vld [vmem:[#allocation2 + $0xb8] sm:$0xff]
          %v5803 = vld [vmem:[#allocation2 + $0xc0] sm:$0xff]
          %v5804 = vld [vmem:[#allocation2 + $0xc8] sm:$0xff]
          %v5805 = vld [vmem:[#allocation2 + $0xd0] sm:$0xff]
          %v5806 = vld [vmem:[#allocation2 + $0xd8] sm:$0xff]
          %v5807 = vld [vmem:[#allocation2 + $0xe0] sm:$0xff]
          %v5808 = vld [vmem:[#allocation2 + $0xe8] sm:$0xff]
          %v5809 = vld [vmem:[#allocation2 + $0xf0] sm:$0xff]
          %v5810 = vld [vmem:[#allocation2 + $0xf8] sm:$0xff]
          %5811 = vxpose.xlu0.b32.start [1/16] %v5779, 128
          %5812 = vxpose.xlu0.b32.cont [2/16] %v5780, 128
          %5813 = vxpose.xlu0.b32.cont [3/16] %v5781, 128
          %5814 = vxpose.xlu0.b32.cont [4/16] %v5782, 128
          %5815 = vxpose.xlu0.b32.cont [5/16] %v5783, 128
          %5816 = vxpose.xlu0.b32.cont [6/16] %v5784, 128
          %5817 = vxpose.xlu0.b32.cont [7/16] %v5785, 128
          %5818 = vxpose.xlu0.b32.cont [8/16] %v5786, 128
          %5819 = vxpose.xlu0.b32.cont [9/16] %v5787, 128
          %5820 = vxpose.xlu0.b32.cont [10/16] %v5788, 128
          %5821 = vxpose.xlu0.b32.cont [11/16] %v5789, 128
          %5822 = vxpose.xlu0.b32.cont [12/16] %v5790, 128
          %5823 = vxpose.xlu0.b32.cont [13/16] %v5791, 128
          %5824 = vxpose.xlu0.b32.cont [14/16] %v5792, 128
          %5825 = vxpose.xlu0.b32.cont [15/16] %v5793, 128
          %5826 = vxpose.xlu0.b32.end [16/16] %v5794, 128
          %v5827 = vpop.trf.xlu0
          %v5828 = vpop.trf.xlu0
          %v5829 = vpop.trf.xlu0
          %v5830 = vpop.trf.xlu0
          %v5831 = vpop.trf.xlu0
          %v5832 = vpop.trf.xlu0
          %v5833 = vpop.trf.xlu0
          %v5834 = vpop.trf.xlu0
          %v5835 = vpop.trf.xlu0
          %v5836 = vpop.trf.xlu0
          %v5837 = vpop.trf.xlu0
          %v5838 = vpop.trf.xlu0
          %v5839 = vpop.trf.xlu0
          %v5840 = vpop.trf.xlu0
          %v5841 = vpop.trf.xlu0
          %v5842 = vpop.trf.xlu0
          %5843 = vxpose.xlu0.b32.start [1/16] %v5795, 128
          %5844 = vxpose.xlu0.b32.cont [2/16] %v5796, 128
          %5845 = vxpose.xlu0.b32.cont [3/16] %v5797, 128
          %5846 = vxpose.xlu0.b32.cont [4/16] %v5798, 128
          %5847 = vxpose.xlu0.b32.cont [5/16] %v5799, 128
          %5848 = vxpose.xlu0.b32.cont [6/16] %v5800, 128
          %5849 = vxpose.xlu0.b32.cont [7/16] %v5801, 128
          %5850 = vxpose.xlu0.b32.cont [8/16] %v5802, 128
          %5851 = vxpose.xlu0.b32.cont [9/16] %v5803, 128
          %5852 = vxpose.xlu0.b32.cont [10/16] %v5804, 128
          %5853 = vxpose.xlu0.b32.cont [11/16] %v5805, 128
          %5854 = vxpose.xlu0.b32.cont [12/16] %v5806, 128
          %5855 = vxpose.xlu0.b32.cont [13/16] %v5807, 128
          %5856 = vxpose.xlu0.b32.cont [14/16] %v5808, 128
          %5857 = vxpose.xlu0.b32.cont [15/16] %v5809, 128
          %5858 = vxpose.xlu0.b32.end [16/16] %v5810, 128
          %v5859 = vpop.trf.xlu0
          %v5860 = vpop.trf.xlu0
          %v5861 = vpop.trf.xlu0
          %v5862 = vpop.trf.xlu0
          %v5863 = vpop.trf.xlu0
          %v5864 = vpop.trf.xlu0
          %v5865 = vpop.trf.xlu0
          %v5866 = vpop.trf.xlu0
          %v5867 = vpop.trf.xlu0
          %v5868 = vpop.trf.xlu0
          %v5869 = vpop.trf.xlu0
          %v5870 = vpop.trf.xlu0
          %v5871 = vpop.trf.xlu0
          %v5872 = vpop.trf.xlu0
          %v5873 = vpop.trf.xlu0
          %v5874 = vpop.trf.xlu0
          %v5875 = vld [vmem:[%s10] sm:$0xff]
          %v5876 = vld [vmem:[%s10 + $0x8] sm:$0xff]
          %v5877 = vld [vmem:[%s10 + $0x10] sm:$0xff]
          %v5878 = vld [vmem:[%s10 + $0x18] sm:$0xff]
          %v5879 = vld [vmem:[%s10 + $0x20] sm:$0xff]
          %v5880 = vld [vmem:[%s10 + $0x28] sm:$0xff]
          %v5881 = vld [vmem:[%s10 + $0x30] sm:$0xff]
          %v5882 = vld [vmem:[%s10 + $0x38] sm:$0xff]
          %v5883 = vld [vmem:[%s10 + $0x40] sm:$0xff]
          %v5884 = vld [vmem:[%s10 + $0x48] sm:$0xff]
          %v5885 = vld [vmem:[%s10 + $0x50] sm:$0xff]
          %v5886 = vld [vmem:[%s10 + $0x58] sm:$0xff]
          %v5887 = vld [vmem:[%s10 + $0x60] sm:$0xff]
          %v5888 = vld [vmem:[%s10 + $0x68] sm:$0xff]
          %v5889 = vld [vmem:[%s10 + $0x70] sm:$0xff]
          %v5890 = vld [vmem:[%s10 + $0x78] sm:$0xff]
          %5892 = vset.pattern.permute.xlu0 0
          %5893 = vperm.xlu0 %5892, %v5875
          %v5894 = vpop.permute.xlu0 %5893
          %5897 = vset.pattern.permute.xlu0 0
          %5898 = vperm.xlu0 %5897, %v5876
          %v5899 = vpop.permute.xlu0 %5898
          %5902 = vset.pattern.permute.xlu0 0
          %5903 = vperm.xlu0 %5902, %v5877
          %v5904 = vpop.permute.xlu0 %5903
          %5907 = vset.pattern.permute.xlu0 0
          %5908 = vperm.xlu0 %5907, %v5878
          %v5909 = vpop.permute.xlu0 %5908
          %5912 = vset.pattern.permute.xlu0 0
          %5913 = vperm.xlu0 %5912, %v5879
          %v5914 = vpop.permute.xlu0 %5913
          %5917 = vset.pattern.permute.xlu0 0
          %5918 = vperm.xlu0 %5917, %v5880
          %v5919 = vpop.permute.xlu0 %5918
          %5922 = vset.pattern.permute.xlu0 0
          %5923 = vperm.xlu0 %5922, %v5881
          %v5924 = vpop.permute.xlu0 %5923
          %5927 = vset.pattern.permute.xlu0 0
          %5928 = vperm.xlu0 %5927, %v5882
          %v5929 = vpop.permute.xlu0 %5928
          %5932 = vset.pattern.permute.xlu0 0
          %5933 = vperm.xlu0 %5932, %v5883
          %v5934 = vpop.permute.xlu0 %5933
          %5937 = vset.pattern.permute.xlu0 0
          %5938 = vperm.xlu0 %5937, %v5884
          %v5939 = vpop.permute.xlu0 %5938
          %5942 = vset.pattern.permute.xlu0 0
          %5943 = vperm.xlu0 %5942, %v5885
          %v5944 = vpop.permute.xlu0 %5943
          %5947 = vset.pattern.permute.xlu0 0
          %5948 = vperm.xlu0 %5947, %v5886
          %v5949 = vpop.permute.xlu0 %5948
          %5952 = vset.pattern.permute.xlu0 0
          %5953 = vperm.xlu0 %5952, %v5887
          %v5954 = vpop.permute.xlu0 %5953
          %5957 = vset.pattern.permute.xlu0 0
          %5958 = vperm.xlu0 %5957, %v5888
          %v5959 = vpop.permute.xlu0 %5958
          %5962 = vset.pattern.permute.xlu0 0
          %5963 = vperm.xlu0 %5962, %v5889
          %v5964 = vpop.permute.xlu0 %5963
          %5967 = vset.pattern.permute.xlu0 0
          %5968 = vperm.xlu0 %5967, %v5890
          %v5969 = vpop.permute.xlu0 %5968
          %v5971 = vadd.f32 %v5827, %v5894
          %v5972 = vadd.f32 %v5859, %v5894
          %v5973 = vadd.f32 %v5828, %v5899
          %v5974 = vadd.f32 %v5860, %v5899
          %v5975 = vadd.f32 %v5829, %v5904
          %v5976 = vadd.f32 %v5861, %v5904
          %v5977 = vadd.f32 %v5830, %v5909
          %v5978 = vadd.f32 %v5862, %v5909
          %v5979 = vadd.f32 %v5831, %v5914
          %v5980 = vadd.f32 %v5863, %v5914
          %v5981 = vadd.f32 %v5832, %v5919
          %v5982 = vadd.f32 %v5864, %v5919
          %v5983 = vadd.f32 %v5833, %v5924
          %v5984 = vadd.f32 %v5865, %v5924
          %v5985 = vadd.f32 %v5834, %v5929
          %v5986 = vadd.f32 %v5866, %v5929
          %v5987 = vadd.f32 %v5835, %v5934
          %v5988 = vadd.f32 %v5867, %v5934
          %v5989 = vadd.f32 %v5836, %v5939
          %v5990 = vadd.f32 %v5868, %v5939
          %v5991 = vadd.f32 %v5837, %v5944
          %v5992 = vadd.f32 %v5869, %v5944
          %v5993 = vadd.f32 %v5838, %v5949
          %v5994 = vadd.f32 %v5870, %v5949
          %v5995 = vadd.f32 %v5839, %v5954
          %v5996 = vadd.f32 %v5871, %v5954
          %v5997 = vadd.f32 %v5840, %v5959
          %v5998 = vadd.f32 %v5872, %v5959
          %v5999 = vadd.f32 %v5841, %v5964
          %v6000 = vadd.f32 %v5873, %v5964
          %v6001 = vadd.f32 %v5842, %v5969
          %v6002 = vadd.f32 %v5874, %v5969
          %v6003 = vmax.f32 %v5971, 0.0
          %v6004 = vmax.f32 %v5972, 0.0
          %v6005 = vmax.f32 %v5973, 0.0
          %v6006 = vmax.f32 %v5974, 0.0
          %v6007 = vmax.f32 %v5975, 0.0
          %v6008 = vmax.f32 %v5976, 0.0
          %v6009 = vmax.f32 %v5977, 0.0
          %v6010 = vmax.f32 %v5978, 0.0
          %v6011 = vmax.f32 %v5979, 0.0
          %v6012 = vmax.f32 %v5980, 0.0
          %v6013 = vmax.f32 %v5981, 0.0
          %v6014 = vmax.f32 %v5982, 0.0
          %v6015 = vmax.f32 %v5983, 0.0
          %v6016 = vmax.f32 %v5984, 0.0
          %v6017 = vmax.f32 %v5985, 0.0
          %v6018 = vmax.f32 %v5986, 0.0
          %v6019 = vmax.f32 %v5987, 0.0
          %v6020 = vmax.f32 %v5988, 0.0
          %v6021 = vmax.f32 %v5989, 0.0
          %v6022 = vmax.f32 %v5990, 0.0
          %v6023 = vmax.f32 %v5991, 0.0
          %v6024 = vmax.f32 %v5992, 0.0
          %v6025 = vmax.f32 %v5993, 0.0
          %v6026 = vmax.f32 %v5994, 0.0
          %v6027 = vmax.f32 %v5995, 0.0
          %v6028 = vmax.f32 %v5996, 0.0
          %v6029 = vmax.f32 %v5997, 0.0
          %v6030 = vmax.f32 %v5998, 0.0
          %v6031 = vmax.f32 %v5999, 0.0
          %v6032 = vmax.f32 %v6000, 0.0
          %v6033 = vmax.f32 %v6001, 0.0
          %v6034 = vmax.f32 %v6002, 0.0
          %v6035 = vld [vmem:[#allocation12] sm:$0xff]
          %v6036 = vld [vmem:[%s12] sm:$0xff]
          %6038 = vset.pattern.permute.xlu0 0
          %6039 = vperm.xlu0 %6038, %v6036
          %v6040 = vpop.permute.xlu0 %6039
          %6042 = vmatprep.subr.mxu0 %v6034
          %6043 = vmatpush1.msra.mxu0 %v6033
          %6044 = vmatprep.subr.mxu0 %v6032
          %6045 = vmatpush1.msra.mxu0 %v6031
          %6046 = vmatprep.subr.mxu0 %v6030
          %6047 = vmatpush1.msra.mxu0 %v6029
          %6048 = vmatprep.subr.mxu0 %v6028
          %6049 = vmatpush1.msra.mxu0 %v6027
          %6050 = vmatprep.subr.mxu0 %v6026
          %6051 = vmatpush1.msra.mxu0 %v6025
          %6052 = vmatprep.subr.mxu0 %v6024
          %6053 = vmatpush1.msra.mxu0 %v6023
          %6054 = vmatprep.subr.mxu0 %v6022
          %6055 = vmatpush1.msra.mxu0 %v6021
          %6056 = vmatprep.subr.mxu0 %v6020
          %6057 = vmatpush1.msra.mxu0 %v6019
          %6058 = vmatprep.subr.mxu0 %v6018
          %6059 = vmatpush1.msra.mxu0 %v6017
          %6060 = vmatprep.subr.mxu0 %v6016
          %6061 = vmatpush1.msra.mxu0 %v6015
          %6062 = vmatprep.subr.mxu0 %v6014
          %6063 = vmatpush1.msra.mxu0 %v6013
          %6064 = vmatprep.subr.mxu0 %v6012
          %6065 = vmatpush1.msra.mxu0 %v6011
          %6066 = vmatprep.subr.mxu0 %v6010
          %6067 = vmatpush1.msra.mxu0 %v6009
          %6068 = vmatprep.subr.mxu0 %v6008
          %6069 = vmatpush1.msra.mxu0 %v6007
          %6070 = vmatprep.subr.mxu0 %v6006
          %6071 = vmatpush1.msra.mxu0 %v6005
          %6072 = vmatprep.subr.mxu0 %v6004
          %6073 = vmatpush1.msra.mxu0 %v6003
          %6074 = vmatprep.subr.mxu0 0.0
          %6075 = vmatpush2.msra.mxu0 0.0
          %6076 = vmatprep.subr.mxu0 0.0
          %6077 = vmatpush2.msra.mxu0 0.0
          %6078 = vmatprep.subr.mxu0 0.0
          %6079 = vmatpush2.msra.mxu0 0.0
          %6080 = vmatprep.subr.mxu0 0.0
          %6081 = vmatpush2.msra.mxu0 0.0
          %6082 = vmatprep.subr.mxu0 0.0
          %6083 = vmatpush2.msra.mxu0 0.0
          %6084 = vmatprep.subr.mxu0 0.0
          %6085 = vmatpush2.msra.mxu0 0.0
          %6086 = vmatprep.subr.mxu0 0.0
          %6087 = vmatpush2.msra.mxu0 0.0
          %6088 = vmatprep.subr.mxu0 0.0
          %6089 = vmatpush2.msra.mxu0 0.0
          %6090 = vmatprep.subr.mxu0 0.0
          %6091 = vmatpush2.msra.mxu0 0.0
          %6092 = vmatprep.subr.mxu0 0.0
          %6093 = vmatpush2.msra.mxu0 0.0
          %6094 = vmatprep.subr.mxu0 0.0
          %6095 = vmatpush2.msra.mxu0 0.0
          %6096 = vmatprep.subr.mxu0 0.0
          %6097 = vmatpush2.msra.mxu0 0.0
          %6098 = vmatprep.subr.mxu0 0.0
          %6099 = vmatpush2.msra.mxu0 0.0
          %6100 = vmatprep.subr.mxu0 0.0
          %6101 = vmatpush2.msra.mxu0 0.0
          %6102 = vmatprep.subr.mxu0 0.0
          %6103 = vmatpush2.msra.mxu0 0.0
          %6104 = vmatprep.subr.mxu0 0.0
          %6105 = vmatpush2.msra.mxu0 0.0
          %6106 = vmatprep.mubr.f32.mxu0 0.0
          %6107 = vmatmul.mubr.f32.gmra.mxu0 %v6035
          %v6108 = vpop.f32.mrf.mxu0
          %v6109 = vadd.f32 %v6040, %v6108
          %v6110 = vpop.f32.mrf.mxu0
          %v6111 = vadd.f32 %v6040, %v6110
          %6112 = vdwg.mxu0
          %v6113 = vld [vmem:[#allocation13] sm:$0xff]
          %v6114 = vld [vmem:[#allocation13 + $0x8] sm:$0xff]
          %v6115 = vadd.f32 %v6109, %v6113
          %v6116 = vadd.f32 %v6111, %v6114
          %6117 = vst [vmem:[%s617] sm:$0xff] %v6115
          %6118 = vst [vmem:[%s617 + $0x8] sm:$0xff] %v6116
        $region108: #{endosam_forward.1} parent=75 // pred_fallthru
          _
        %s6119 = sand.u32 %s364, 1
        %s6120 = sand.u32 %s364, 1
        %s6121 = smul.addr %s6120, 2048
        %s6122 = scalar_lea.vmem [#allocation15], %s6121
        %s6123 = sand.u32 %s390, 1
        %s6124 = scalar_lea.sflag [#allocation6], %s6123
        %s6125 = sand.u32 %s390, 1
        %s6126 = smul.addr %s6125, 16
        %s6127 = scalar_lea.vmem [#allocation16], %s6126
        // Predicated region
        $region109: #{endosam_forward.1} parent=75 // pred_check
          %p6128 = pneg %p374
        $region110: #{endosam_forward.1} parent=75 // pred_check_branch
          %6130 = sbr.rel (%p6128) target = $region112
        $region111: #{endosam_forward.1} parent=75 // pred_region
          %s6131 = smul.u32 8, %s43
          %s6132 = smul.addr %s42, 1024
          %s6133 = sadd.s32 %s6131, %s6132
          %s6134 = smul.addr %s6133, 8
          %s6135 = scalar_lea.vmem %s14, %s6134
          // Predicated region
          $region113: #{endosam_forward.1} parent=111 // pred_check
            _
          $region114: #{endosam_forward.1} parent=111 // pred_check_branch
            %6137 = sbr.rel (0) target = $region116
          $region115: #{endosam_forward.1} parent=111 // pred_region
            // Predicated region
            $region117: #{endosam_forward.1} parent=115 // pred_check
              _
            $region118: #{endosam_forward.1} parent=115 // pred_check_branch
              %6139 = sbr.rel (0) target = $region120
            $region119: #{endosam_forward.1} parent=115 // pred_region
              loop: start=0, step=1, limit=1
              $region121: #{endosam_forward.1} parent=119 // loop_pre_header
                _
              $region122: #{endosam_forward.1} parent=119 // loop_header
                %s6141 = sphi 0, %s6145
                %p6142 = scmp.ge.s32.totalorder %s6141, 1
                %s6146 = sphi %s6122, %s6122
                %s6147 = sphi %s6135, %s6135
              $region123: #{endosam_forward.1} parent=119 // loop_header_branch
                %6144 = sbr.rel (%p6142) target = $region127
              $region124: #{endosam_forward.1} parent=119 // loop_body
                %v6148 = vld [vmem:[%s6146] sm:$0xff]
                %6149 = vst [vmem:[%s6147] sm:$0xff] %v6148
                %v6150 = vld [vmem:[%s6146 + $0x8] sm:$0xff]
                %6151 = vst [vmem:[%s6147 + $0x8] sm:$0xff] %v6150
                %v6152 = vld [vmem:[%s6146 + $0x10] sm:$0xff]
                %6153 = vst [vmem:[%s6147 + $0x10] sm:$0xff] %v6152
                %v6154 = vld [vmem:[%s6146 + $0x18] sm:$0xff]
                %6155 = vst [vmem:[%s6147 + $0x18] sm:$0xff] %v6154
                %v6156 = vld [vmem:[%s6146 + $0x20] sm:$0xff]
                %6157 = vst [vmem:[%s6147 + $0x20] sm:$0xff] %v6156
                %v6158 = vld [vmem:[%s6146 + $0x28] sm:$0xff]
                %6159 = vst [vmem:[%s6147 + $0x28] sm:$0xff] %v6158
                %v6160 = vld [vmem:[%s6146 + $0x30] sm:$0xff]
                %6161 = vst [vmem:[%s6147 + $0x30] sm:$0xff] %v6160
                %v6162 = vld [vmem:[%s6146 + $0x38] sm:$0xff]
                %6163 = vst [vmem:[%s6147 + $0x38] sm:$0xff] %v6162
                %v6164 = vld [vmem:[%s6146 + $0x40] sm:$0xff]
                %6165 = vst [vmem:[%s6147 + $0x100] sm:$0xff] %v6164
                %v6166 = vld [vmem:[%s6146 + $0x48] sm:$0xff]
                %6167 = vst [vmem:[%s6147 + $0x108] sm:$0xff] %v6166
                %v6168 = vld [vmem:[%s6146 + $0x50] sm:$0xff]
                %6169 = vst [vmem:[%s6147 + $0x110] sm:$0xff] %v6168
                %v6170 = vld [vmem:[%s6146 + $0x58] sm:$0xff]
                %6171 = vst [vmem:[%s6147 + $0x118] sm:$0xff] %v6170
                %v6172 = vld [vmem:[%s6146 + $0x60] sm:$0xff]
                %6173 = vst [vmem:[%s6147 + $0x120] sm:$0xff] %v6172
                %v6174 = vld [vmem:[%s6146 + $0x68] sm:$0xff]
                %6175 = vst [vmem:[%s6147 + $0x128] sm:$0xff] %v6174
                %v6176 = vld [vmem:[%s6146 + $0x70] sm:$0xff]
                %6177 = vst [vmem:[%s6147 + $0x130] sm:$0xff] %v6176
                %v6178 = vld [vmem:[%s6146 + $0x78] sm:$0xff]
                %6179 = vst [vmem:[%s6147 + $0x138] sm:$0xff] %v6178
                %v6180 = vld [vmem:[%s6146 + $0x80] sm:$0xff]
                %6181 = vst [vmem:[%s6147 + $0x200] sm:$0xff] %v6180
                %v6182 = vld [vmem:[%s6146 + $0x88] sm:$0xff]
                %6183 = vst [vmem:[%s6147 + $0x208] sm:$0xff] %v6182
                %v6184 = vld [vmem:[%s6146 + $0x90] sm:$0xff]
                %6185 = vst [vmem:[%s6147 + $0x210] sm:$0xff] %v6184
                %v6186 = vld [vmem:[%s6146 + $0x98] sm:$0xff]
                %6187 = vst [vmem:[%s6147 + $0x218] sm:$0xff] %v6186
                %v6188 = vld [vmem:[%s6146 + $0xa0] sm:$0xff]
                %6189 = vst [vmem:[%s6147 + $0x220] sm:$0xff] %v6188
                %v6190 = vld [vmem:[%s6146 + $0xa8] sm:$0xff]
                %6191 = vst [vmem:[%s6147 + $0x228] sm:$0xff] %v6190
                %v6192 = vld [vmem:[%s6146 + $0xb0] sm:$0xff]
                %6193 = vst [vmem:[%s6147 + $0x230] sm:$0xff] %v6192
                %v6194 = vld [vmem:[%s6146 + $0xb8] sm:$0xff]
                %6195 = vst [vmem:[%s6147 + $0x238] sm:$0xff] %v6194
                %v6196 = vld [vmem:[%s6146 + $0xc0] sm:$0xff]
                %6197 = vst [vmem:[%s6147 + $0x300] sm:$0xff] %v6196
                %v6198 = vld [vmem:[%s6146 + $0xc8] sm:$0xff]
                %6199 = vst [vmem:[%s6147 + $0x308] sm:$0xff] %v6198
                %v6200 = vld [vmem:[%s6146 + $0xd0] sm:$0xff]
                %6201 = vst [vmem:[%s6147 + $0x310] sm:$0xff] %v6200
                %v6202 = vld [vmem:[%s6146 + $0xd8] sm:$0xff]
                %6203 = vst [vmem:[%s6147 + $0x318] sm:$0xff] %v6202
                %v6204 = vld [vmem:[%s6146 + $0xe0] sm:$0xff]
                %6205 = vst [vmem:[%s6147 + $0x320] sm:$0xff] %v6204
                %v6206 = vld [vmem:[%s6146 + $0xe8] sm:$0xff]
                %6207 = vst [vmem:[%s6147 + $0x328] sm:$0xff] %v6206
                %v6208 = vld [vmem:[%s6146 + $0xf0] sm:$0xff]
                %6209 = vst [vmem:[%s6147 + $0x330] sm:$0xff] %v6208
                %v6210 = vld [vmem:[%s6146 + $0xf8] sm:$0xff]
                %6211 = vst [vmem:[%s6147 + $0x338] sm:$0xff] %v6210
                %v6212 = vld [vmem:[%s6146 + $0x100] sm:$0xff]
                %6213 = vst [vmem:[%s6147 + $0x400] sm:$0xff] %v6212
                %v6214 = vld [vmem:[%s6146 + $0x108] sm:$0xff]
                %6215 = vst [vmem:[%s6147 + $0x408] sm:$0xff] %v6214
                %v6216 = vld [vmem:[%s6146 + $0x110] sm:$0xff]
                %6217 = vst [vmem:[%s6147 + $0x410] sm:$0xff] %v6216
                %v6218 = vld [vmem:[%s6146 + $0x118] sm:$0xff]
                %6219 = vst [vmem:[%s6147 + $0x418] sm:$0xff] %v6218
                %v6220 = vld [vmem:[%s6146 + $0x120] sm:$0xff]
                %6221 = vst [vmem:[%s6147 + $0x420] sm:$0xff] %v6220
                %v6222 = vld [vmem:[%s6146 + $0x128] sm:$0xff]
                %6223 = vst [vmem:[%s6147 + $0x428] sm:$0xff] %v6222
                %v6224 = vld [vmem:[%s6146 + $0x130] sm:$0xff]
                %6225 = vst [vmem:[%s6147 + $0x430] sm:$0xff] %v6224
                %v6226 = vld [vmem:[%s6146 + $0x138] sm:$0xff]
                %6227 = vst [vmem:[%s6147 + $0x438] sm:$0xff] %v6226
                %v6228 = vld [vmem:[%s6146 + $0x140] sm:$0xff]
                %6229 = vst [vmem:[%s6147 + $0x500] sm:$0xff] %v6228
                %v6230 = vld [vmem:[%s6146 + $0x148] sm:$0xff]
                %6231 = vst [vmem:[%s6147 + $0x508] sm:$0xff] %v6230
                %v6232 = vld [vmem:[%s6146 + $0x150] sm:$0xff]
                %6233 = vst [vmem:[%s6147 + $0x510] sm:$0xff] %v6232
                %v6234 = vld [vmem:[%s6146 + $0x158] sm:$0xff]
                %6235 = vst [vmem:[%s6147 + $0x518] sm:$0xff] %v6234
                %v6236 = vld [vmem:[%s6146 + $0x160] sm:$0xff]
                %6237 = vst [vmem:[%s6147 + $0x520] sm:$0xff] %v6236
                %v6238 = vld [vmem:[%s6146 + $0x168] sm:$0xff]
                %6239 = vst [vmem:[%s6147 + $0x528] sm:$0xff] %v6238
                %v6240 = vld [vmem:[%s6146 + $0x170] sm:$0xff]
                %6241 = vst [vmem:[%s6147 + $0x530] sm:$0xff] %v6240
                %v6242 = vld [vmem:[%s6146 + $0x178] sm:$0xff]
                %6243 = vst [vmem:[%s6147 + $0x538] sm:$0xff] %v6242
                %v6244 = vld [vmem:[%s6146 + $0x180] sm:$0xff]
                %6245 = vst [vmem:[%s6147 + $0x600] sm:$0xff] %v6244
                %v6246 = vld [vmem:[%s6146 + $0x188] sm:$0xff]
                %6247 = vst [vmem:[%s6147 + $0x608] sm:$0xff] %v6246
                %v6248 = vld [vmem:[%s6146 + $0x190] sm:$0xff]
                %6249 = vst [vmem:[%s6147 + $0x610] sm:$0xff] %v6248
                %v6250 = vld [vmem:[%s6146 + $0x198] sm:$0xff]
                %6251 = vst [vmem:[%s6147 + $0x618] sm:$0xff] %v6250
                %v6252 = vld [vmem:[%s6146 + $0x1a0] sm:$0xff]
                %6253 = vst [vmem:[%s6147 + $0x620] sm:$0xff] %v6252
                %v6254 = vld [vmem:[%s6146 + $0x1a8] sm:$0xff]
                %6255 = vst [vmem:[%s6147 + $0x628] sm:$0xff] %v6254
                %v6256 = vld [vmem:[%s6146 + $0x1b0] sm:$0xff]
                %6257 = vst [vmem:[%s6147 + $0x630] sm:$0xff] %v6256
                %v6258 = vld [vmem:[%s6146 + $0x1b8] sm:$0xff]
                %6259 = vst [vmem:[%s6147 + $0x638] sm:$0xff] %v6258
                %v6260 = vld [vmem:[%s6146 + $0x1c0] sm:$0xff]
                %6261 = vst [vmem:[%s6147 + $0x700] sm:$0xff] %v6260
                %v6262 = vld [vmem:[%s6146 + $0x1c8] sm:$0xff]
                %6263 = vst [vmem:[%s6147 + $0x708] sm:$0xff] %v6262
                %v6264 = vld [vmem:[%s6146 + $0x1d0] sm:$0xff]
                %6265 = vst [vmem:[%s6147 + $0x710] sm:$0xff] %v6264
                %v6266 = vld [vmem:[%s6146 + $0x1d8] sm:$0xff]
                %6267 = vst [vmem:[%s6147 + $0x718] sm:$0xff] %v6266
                %v6268 = vld [vmem:[%s6146 + $0x1e0] sm:$0xff]
                %6269 = vst [vmem:[%s6147 + $0x720] sm:$0xff] %v6268
                %v6270 = vld [vmem:[%s6146 + $0x1e8] sm:$0xff]
                %6271 = vst [vmem:[%s6147 + $0x728] sm:$0xff] %v6270
                %v6272 = vld [vmem:[%s6146 + $0x1f0] sm:$0xff]
                %6273 = vst [vmem:[%s6147 + $0x730] sm:$0xff] %v6272
                %v6274 = vld [vmem:[%s6146 + $0x1f8] sm:$0xff]
                %6275 = vst [vmem:[%s6147 + $0x738] sm:$0xff] %v6274
                %v6276 = vld [vmem:[%s6146 + $0x200] sm:$0xff]
                %6277 = vst [vmem:[%s6147 + $0x800] sm:$0xff] %v6276
                %v6278 = vld [vmem:[%s6146 + $0x208] sm:$0xff]
                %6279 = vst [vmem:[%s6147 + $0x808] sm:$0xff] %v6278
                %v6280 = vld [vmem:[%s6146 + $0x210] sm:$0xff]
                %6281 = vst [vmem:[%s6147 + $0x810] sm:$0xff] %v6280
                %v6282 = vld [vmem:[%s6146 + $0x218] sm:$0xff]
                %6283 = vst [vmem:[%s6147 + $0x818] sm:$0xff] %v6282
                %v6284 = vld [vmem:[%s6146 + $0x220] sm:$0xff]
                %6285 = vst [vmem:[%s6147 + $0x820] sm:$0xff] %v6284
                %v6286 = vld [vmem:[%s6146 + $0x228] sm:$0xff]
                %6287 = vst [vmem:[%s6147 + $0x828] sm:$0xff] %v6286
                %v6288 = vld [vmem:[%s6146 + $0x230] sm:$0xff]
                %6289 = vst [vmem:[%s6147 + $0x830] sm:$0xff] %v6288
                %v6290 = vld [vmem:[%s6146 + $0x238] sm:$0xff]
                %6291 = vst [vmem:[%s6147 + $0x838] sm:$0xff] %v6290
                %v6292 = vld [vmem:[%s6146 + $0x240] sm:$0xff]
                %6293 = vst [vmem:[%s6147 + $0x900] sm:$0xff] %v6292
                %v6294 = vld [vmem:[%s6146 + $0x248] sm:$0xff]
                %6295 = vst [vmem:[%s6147 + $0x908] sm:$0xff] %v6294
                %v6296 = vld [vmem:[%s6146 + $0x250] sm:$0xff]
                %6297 = vst [vmem:[%s6147 + $0x910] sm:$0xff] %v6296
                %v6298 = vld [vmem:[%s6146 + $0x258] sm:$0xff]
                %6299 = vst [vmem:[%s6147 + $0x918] sm:$0xff] %v6298
                %v6300 = vld [vmem:[%s6146 + $0x260] sm:$0xff]
                %6301 = vst [vmem:[%s6147 + $0x920] sm:$0xff] %v6300
                %v6302 = vld [vmem:[%s6146 + $0x268] sm:$0xff]
                %6303 = vst [vmem:[%s6147 + $0x928] sm:$0xff] %v6302
                %v6304 = vld [vmem:[%s6146 + $0x270] sm:$0xff]
                %6305 = vst [vmem:[%s6147 + $0x930] sm:$0xff] %v6304
                %v6306 = vld [vmem:[%s6146 + $0x278] sm:$0xff]
                %6307 = vst [vmem:[%s6147 + $0x938] sm:$0xff] %v6306
                %v6308 = vld [vmem:[%s6146 + $0x280] sm:$0xff]
                %6309 = vst [vmem:[%s6147 + $0xa00] sm:$0xff] %v6308
                %v6310 = vld [vmem:[%s6146 + $0x288] sm:$0xff]
                %6311 = vst [vmem:[%s6147 + $0xa08] sm:$0xff] %v6310
                %v6312 = vld [vmem:[%s6146 + $0x290] sm:$0xff]
                %6313 = vst [vmem:[%s6147 + $0xa10] sm:$0xff] %v6312
                %v6314 = vld [vmem:[%s6146 + $0x298] sm:$0xff]
                %6315 = vst [vmem:[%s6147 + $0xa18] sm:$0xff] %v6314
                %v6316 = vld [vmem:[%s6146 + $0x2a0] sm:$0xff]
                %6317 = vst [vmem:[%s6147 + $0xa20] sm:$0xff] %v6316
                %v6318 = vld [vmem:[%s6146 + $0x2a8] sm:$0xff]
                %6319 = vst [vmem:[%s6147 + $0xa28] sm:$0xff] %v6318
                %v6320 = vld [vmem:[%s6146 + $0x2b0] sm:$0xff]
                %6321 = vst [vmem:[%s6147 + $0xa30] sm:$0xff] %v6320
                %v6322 = vld [vmem:[%s6146 + $0x2b8] sm:$0xff]
                %6323 = vst [vmem:[%s6147 + $0xa38] sm:$0xff] %v6322
                %v6324 = vld [vmem:[%s6146 + $0x2c0] sm:$0xff]
                %6325 = vst [vmem:[%s6147 + $0xb00] sm:$0xff] %v6324
                %v6326 = vld [vmem:[%s6146 + $0x2c8] sm:$0xff]
                %6327 = vst [vmem:[%s6147 + $0xb08] sm:$0xff] %v6326
                %v6328 = vld [vmem:[%s6146 + $0x2d0] sm:$0xff]
                %6329 = vst [vmem:[%s6147 + $0xb10] sm:$0xff] %v6328
                %v6330 = vld [vmem:[%s6146 + $0x2d8] sm:$0xff]
                %6331 = vst [vmem:[%s6147 + $0xb18] sm:$0xff] %v6330
                %v6332 = vld [vmem:[%s6146 + $0x2e0] sm:$0xff]
                %6333 = vst [vmem:[%s6147 + $0xb20] sm:$0xff] %v6332
                %v6334 = vld [vmem:[%s6146 + $0x2e8] sm:$0xff]
                %6335 = vst [vmem:[%s6147 + $0xb28] sm:$0xff] %v6334
                %v6336 = vld [vmem:[%s6146 + $0x2f0] sm:$0xff]
                %6337 = vst [vmem:[%s6147 + $0xb30] sm:$0xff] %v6336
                %v6338 = vld [vmem:[%s6146 + $0x2f8] sm:$0xff]
                %6339 = vst [vmem:[%s6147 + $0xb38] sm:$0xff] %v6338
                %v6340 = vld [vmem:[%s6146 + $0x300] sm:$0xff]
                %6341 = vst [vmem:[%s6147 + $0xc00] sm:$0xff] %v6340
                %v6342 = vld [vmem:[%s6146 + $0x308] sm:$0xff]
                %6343 = vst [vmem:[%s6147 + $0xc08] sm:$0xff] %v6342
                %v6344 = vld [vmem:[%s6146 + $0x310] sm:$0xff]
                %6345 = vst [vmem:[%s6147 + $0xc10] sm:$0xff] %v6344
                %v6346 = vld [vmem:[%s6146 + $0x318] sm:$0xff]
                %6347 = vst [vmem:[%s6147 + $0xc18] sm:$0xff] %v6346
                %v6348 = vld [vmem:[%s6146 + $0x320] sm:$0xff]
                %6349 = vst [vmem:[%s6147 + $0xc20] sm:$0xff] %v6348
                %v6350 = vld [vmem:[%s6146 + $0x328] sm:$0xff]
                %6351 = vst [vmem:[%s6147 + $0xc28] sm:$0xff] %v6350
                %v6352 = vld [vmem:[%s6146 + $0x330] sm:$0xff]
                %6353 = vst [vmem:[%s6147 + $0xc30] sm:$0xff] %v6352
                %v6354 = vld [vmem:[%s6146 + $0x338] sm:$0xff]
                %6355 = vst [vmem:[%s6147 + $0xc38] sm:$0xff] %v6354
                %v6356 = vld [vmem:[%s6146 + $0x340] sm:$0xff]
                %6357 = vst [vmem:[%s6147 + $0xd00] sm:$0xff] %v6356
                %v6358 = vld [vmem:[%s6146 + $0x348] sm:$0xff]
                %6359 = vst [vmem:[%s6147 + $0xd08] sm:$0xff] %v6358
                %v6360 = vld [vmem:[%s6146 + $0x350] sm:$0xff]
                %6361 = vst [vmem:[%s6147 + $0xd10] sm:$0xff] %v6360
                %v6362 = vld [vmem:[%s6146 + $0x358] sm:$0xff]
                %6363 = vst [vmem:[%s6147 + $0xd18] sm:$0xff] %v6362
                %v6364 = vld [vmem:[%s6146 + $0x360] sm:$0xff]
                %6365 = vst [vmem:[%s6147 + $0xd20] sm:$0xff] %v6364
                %v6366 = vld [vmem:[%s6146 + $0x368] sm:$0xff]
                %6367 = vst [vmem:[%s6147 + $0xd28] sm:$0xff] %v6366
                %v6368 = vld [vmem:[%s6146 + $0x370] sm:$0xff]
                %6369 = vst [vmem:[%s6147 + $0xd30] sm:$0xff] %v6368
                %v6370 = vld [vmem:[%s6146 + $0x378] sm:$0xff]
                %6371 = vst [vmem:[%s6147 + $0xd38] sm:$0xff] %v6370
                %v6372 = vld [vmem:[%s6146 + $0x380] sm:$0xff]
                %6373 = vst [vmem:[%s6147 + $0xe00] sm:$0xff] %v6372
                %v6374 = vld [vmem:[%s6146 + $0x388] sm:$0xff]
                %6375 = vst [vmem:[%s6147 + $0xe08] sm:$0xff] %v6374
                %v6376 = vld [vmem:[%s6146 + $0x390] sm:$0xff]
                %6377 = vst [vmem:[%s6147 + $0xe10] sm:$0xff] %v6376
                %v6378 = vld [vmem:[%s6146 + $0x398] sm:$0xff]
                %6379 = vst [vmem:[%s6147 + $0xe18] sm:$0xff] %v6378
                %v6380 = vld [vmem:[%s6146 + $0x3a0] sm:$0xff]
                %6381 = vst [vmem:[%s6147 + $0xe20] sm:$0xff] %v6380
                %v6382 = vld [vmem:[%s6146 + $0x3a8] sm:$0xff]
                %6383 = vst [vmem:[%s6147 + $0xe28] sm:$0xff] %v6382
                %v6384 = vld [vmem:[%s6146 + $0x3b0] sm:$0xff]
                %6385 = vst [vmem:[%s6147 + $0xe30] sm:$0xff] %v6384
                %v6386 = vld [vmem:[%s6146 + $0x3b8] sm:$0xff]
                %6387 = vst [vmem:[%s6147 + $0xe38] sm:$0xff] %v6386
                %v6388 = vld [vmem:[%s6146 + $0x3c0] sm:$0xff]
                %6389 = vst [vmem:[%s6147 + $0xf00] sm:$0xff] %v6388
                %v6390 = vld [vmem:[%s6146 + $0x3c8] sm:$0xff]
                %6391 = vst [vmem:[%s6147 + $0xf08] sm:$0xff] %v6390
                %v6392 = vld [vmem:[%s6146 + $0x3d0] sm:$0xff]
                %6393 = vst [vmem:[%s6147 + $0xf10] sm:$0xff] %v6392
                %v6394 = vld [vmem:[%s6146 + $0x3d8] sm:$0xff]
                %6395 = vst [vmem:[%s6147 + $0xf18] sm:$0xff] %v6394
                %v6396 = vld [vmem:[%s6146 + $0x3e0] sm:$0xff]
                %6397 = vst [vmem:[%s6147 + $0xf20] sm:$0xff] %v6396
                %v6398 = vld [vmem:[%s6146 + $0x3e8] sm:$0xff]
                %6399 = vst [vmem:[%s6147 + $0xf28] sm:$0xff] %v6398
                %v6400 = vld [vmem:[%s6146 + $0x3f0] sm:$0xff]
                %6401 = vst [vmem:[%s6147 + $0xf30] sm:$0xff] %v6400
                %v6402 = vld [vmem:[%s6146 + $0x3f8] sm:$0xff]
                %6403 = vst [vmem:[%s6147 + $0xf38] sm:$0xff] %v6402
                %v6404 = vld [vmem:[%s6146 + $0x400] sm:$0xff]
                %6405 = vst [vmem:[%s6147 + $0x1000] sm:$0xff] %v6404
                %v6406 = vld [vmem:[%s6146 + $0x408] sm:$0xff]
                %6407 = vst [vmem:[%s6147 + $0x1008] sm:$0xff] %v6406
                %v6408 = vld [vmem:[%s6146 + $0x410] sm:$0xff]
                %6409 = vst [vmem:[%s6147 + $0x1010] sm:$0xff] %v6408
                %v6410 = vld [vmem:[%s6146 + $0x418] sm:$0xff]
                %6411 = vst [vmem:[%s6147 + $0x1018] sm:$0xff] %v6410
                %v6412 = vld [vmem:[%s6146 + $0x420] sm:$0xff]
                %6413 = vst [vmem:[%s6147 + $0x1020] sm:$0xff] %v6412
                %v6414 = vld [vmem:[%s6146 + $0x428] sm:$0xff]
                %6415 = vst [vmem:[%s6147 + $0x1028] sm:$0xff] %v6414
                %v6416 = vld [vmem:[%s6146 + $0x430] sm:$0xff]
                %6417 = vst [vmem:[%s6147 + $0x1030] sm:$0xff] %v6416
                %v6418 = vld [vmem:[%s6146 + $0x438] sm:$0xff]
                %6419 = vst [vmem:[%s6147 + $0x1038] sm:$0xff] %v6418
                %v6420 = vld [vmem:[%s6146 + $0x440] sm:$0xff]
                %6421 = vst [vmem:[%s6147 + $0x1100] sm:$0xff] %v6420
                %v6422 = vld [vmem:[%s6146 + $0x448] sm:$0xff]
                %6423 = vst [vmem:[%s6147 + $0x1108] sm:$0xff] %v6422
                %v6424 = vld [vmem:[%s6146 + $0x450] sm:$0xff]
                %6425 = vst [vmem:[%s6147 + $0x1110] sm:$0xff] %v6424
                %v6426 = vld [vmem:[%s6146 + $0x458] sm:$0xff]
                %6427 = vst [vmem:[%s6147 + $0x1118] sm:$0xff] %v6426
                %v6428 = vld [vmem:[%s6146 + $0x460] sm:$0xff]
                %6429 = vst [vmem:[%s6147 + $0x1120] sm:$0xff] %v6428
                %v6430 = vld [vmem:[%s6146 + $0x468] sm:$0xff]
                %6431 = vst [vmem:[%s6147 + $0x1128] sm:$0xff] %v6430
                %v6432 = vld [vmem:[%s6146 + $0x470] sm:$0xff]
                %6433 = vst [vmem:[%s6147 + $0x1130] sm:$0xff] %v6432
                %v6434 = vld [vmem:[%s6146 + $0x478] sm:$0xff]
                %6435 = vst [vmem:[%s6147 + $0x1138] sm:$0xff] %v6434
                %v6436 = vld [vmem:[%s6146 + $0x480] sm:$0xff]
                %6437 = vst [vmem:[%s6147 + $0x1200] sm:$0xff] %v6436
                %v6438 = vld [vmem:[%s6146 + $0x488] sm:$0xff]
                %6439 = vst [vmem:[%s6147 + $0x1208] sm:$0xff] %v6438
                %v6440 = vld [vmem:[%s6146 + $0x490] sm:$0xff]
                %6441 = vst [vmem:[%s6147 + $0x1210] sm:$0xff] %v6440
                %v6442 = vld [vmem:[%s6146 + $0x498] sm:$0xff]
                %6443 = vst [vmem:[%s6147 + $0x1218] sm:$0xff] %v6442
                %v6444 = vld [vmem:[%s6146 + $0x4a0] sm:$0xff]
                %6445 = vst [vmem:[%s6147 + $0x1220] sm:$0xff] %v6444
                %v6446 = vld [vmem:[%s6146 + $0x4a8] sm:$0xff]
                %6447 = vst [vmem:[%s6147 + $0x1228] sm:$0xff] %v6446
                %v6448 = vld [vmem:[%s6146 + $0x4b0] sm:$0xff]
                %6449 = vst [vmem:[%s6147 + $0x1230] sm:$0xff] %v6448
                %v6450 = vld [vmem:[%s6146 + $0x4b8] sm:$0xff]
                %6451 = vst [vmem:[%s6147 + $0x1238] sm:$0xff] %v6450
                %v6452 = vld [vmem:[%s6146 + $0x4c0] sm:$0xff]
                %6453 = vst [vmem:[%s6147 + $0x1300] sm:$0xff] %v6452
                %v6454 = vld [vmem:[%s6146 + $0x4c8] sm:$0xff]
                %6455 = vst [vmem:[%s6147 + $0x1308] sm:$0xff] %v6454
                %v6456 = vld [vmem:[%s6146 + $0x4d0] sm:$0xff]
                %6457 = vst [vmem:[%s6147 + $0x1310] sm:$0xff] %v6456
                %v6458 = vld [vmem:[%s6146 + $0x4d8] sm:$0xff]
                %6459 = vst [vmem:[%s6147 + $0x1318] sm:$0xff] %v6458
                %v6460 = vld [vmem:[%s6146 + $0x4e0] sm:$0xff]
                %6461 = vst [vmem:[%s6147 + $0x1320] sm:$0xff] %v6460
                %v6462 = vld [vmem:[%s6146 + $0x4e8] sm:$0xff]
                %6463 = vst [vmem:[%s6147 + $0x1328] sm:$0xff] %v6462
                %v6464 = vld [vmem:[%s6146 + $0x4f0] sm:$0xff]
                %6465 = vst [vmem:[%s6147 + $0x1330] sm:$0xff] %v6464
                %v6466 = vld [vmem:[%s6146 + $0x4f8] sm:$0xff]
                %6467 = vst [vmem:[%s6147 + $0x1338] sm:$0xff] %v6466
                %v6468 = vld [vmem:[%s6146 + $0x500] sm:$0xff]
                %6469 = vst [vmem:[%s6147 + $0x1400] sm:$0xff] %v6468
                %v6470 = vld [vmem:[%s6146 + $0x508] sm:$0xff]
                %6471 = vst [vmem:[%s6147 + $0x1408] sm:$0xff] %v6470
                %v6472 = vld [vmem:[%s6146 + $0x510] sm:$0xff]
                %6473 = vst [vmem:[%s6147 + $0x1410] sm:$0xff] %v6472
                %v6474 = vld [vmem:[%s6146 + $0x518] sm:$0xff]
                %6475 = vst [vmem:[%s6147 + $0x1418] sm:$0xff] %v6474
                %v6476 = vld [vmem:[%s6146 + $0x520] sm:$0xff]
                %6477 = vst [vmem:[%s6147 + $0x1420] sm:$0xff] %v6476
                %v6478 = vld [vmem:[%s6146 + $0x528] sm:$0xff]
                %6479 = vst [vmem:[%s6147 + $0x1428] sm:$0xff] %v6478
                %v6480 = vld [vmem:[%s6146 + $0x530] sm:$0xff]
                %6481 = vst [vmem:[%s6147 + $0x1430] sm:$0xff] %v6480
                %v6482 = vld [vmem:[%s6146 + $0x538] sm:$0xff]
                %6483 = vst [vmem:[%s6147 + $0x1438] sm:$0xff] %v6482
                %v6484 = vld [vmem:[%s6146 + $0x540] sm:$0xff]
                %6485 = vst [vmem:[%s6147 + $0x1500] sm:$0xff] %v6484
                %v6486 = vld [vmem:[%s6146 + $0x548] sm:$0xff]
                %6487 = vst [vmem:[%s6147 + $0x1508] sm:$0xff] %v6486
                %v6488 = vld [vmem:[%s6146 + $0x550] sm:$0xff]
                %6489 = vst [vmem:[%s6147 + $0x1510] sm:$0xff] %v6488
                %v6490 = vld [vmem:[%s6146 + $0x558] sm:$0xff]
                %6491 = vst [vmem:[%s6147 + $0x1518] sm:$0xff] %v6490
                %v6492 = vld [vmem:[%s6146 + $0x560] sm:$0xff]
                %6493 = vst [vmem:[%s6147 + $0x1520] sm:$0xff] %v6492
                %v6494 = vld [vmem:[%s6146 + $0x568] sm:$0xff]
                %6495 = vst [vmem:[%s6147 + $0x1528] sm:$0xff] %v6494
                %v6496 = vld [vmem:[%s6146 + $0x570] sm:$0xff]
                %6497 = vst [vmem:[%s6147 + $0x1530] sm:$0xff] %v6496
                %v6498 = vld [vmem:[%s6146 + $0x578] sm:$0xff]
                %6499 = vst [vmem:[%s6147 + $0x1538] sm:$0xff] %v6498
                %v6500 = vld [vmem:[%s6146 + $0x580] sm:$0xff]
                %6501 = vst [vmem:[%s6147 + $0x1600] sm:$0xff] %v6500
                %v6502 = vld [vmem:[%s6146 + $0x588] sm:$0xff]
                %6503 = vst [vmem:[%s6147 + $0x1608] sm:$0xff] %v6502
                %v6504 = vld [vmem:[%s6146 + $0x590] sm:$0xff]
                %6505 = vst [vmem:[%s6147 + $0x1610] sm:$0xff] %v6504
                %v6506 = vld [vmem:[%s6146 + $0x598] sm:$0xff]
                %6507 = vst [vmem:[%s6147 + $0x1618] sm:$0xff] %v6506
                %v6508 = vld [vmem:[%s6146 + $0x5a0] sm:$0xff]
                %6509 = vst [vmem:[%s6147 + $0x1620] sm:$0xff] %v6508
                %v6510 = vld [vmem:[%s6146 + $0x5a8] sm:$0xff]
                %6511 = vst [vmem:[%s6147 + $0x1628] sm:$0xff] %v6510
                %v6512 = vld [vmem:[%s6146 + $0x5b0] sm:$0xff]
                %6513 = vst [vmem:[%s6147 + $0x1630] sm:$0xff] %v6512
                %v6514 = vld [vmem:[%s6146 + $0x5b8] sm:$0xff]
                %6515 = vst [vmem:[%s6147 + $0x1638] sm:$0xff] %v6514
                %v6516 = vld [vmem:[%s6146 + $0x5c0] sm:$0xff]
                %6517 = vst [vmem:[%s6147 + $0x1700] sm:$0xff] %v6516
                %v6518 = vld [vmem:[%s6146 + $0x5c8] sm:$0xff]
                %6519 = vst [vmem:[%s6147 + $0x1708] sm:$0xff] %v6518
                %v6520 = vld [vmem:[%s6146 + $0x5d0] sm:$0xff]
                %6521 = vst [vmem:[%s6147 + $0x1710] sm:$0xff] %v6520
                %v6522 = vld [vmem:[%s6146 + $0x5d8] sm:$0xff]
                %6523 = vst [vmem:[%s6147 + $0x1718] sm:$0xff] %v6522
                %v6524 = vld [vmem:[%s6146 + $0x5e0] sm:$0xff]
                %6525 = vst [vmem:[%s6147 + $0x1720] sm:$0xff] %v6524
                %v6526 = vld [vmem:[%s6146 + $0x5e8] sm:$0xff]
                %6527 = vst [vmem:[%s6147 + $0x1728] sm:$0xff] %v6526
                %v6528 = vld [vmem:[%s6146 + $0x5f0] sm:$0xff]
                %6529 = vst [vmem:[%s6147 + $0x1730] sm:$0xff] %v6528
                %v6530 = vld [vmem:[%s6146 + $0x5f8] sm:$0xff]
                %6531 = vst [vmem:[%s6147 + $0x1738] sm:$0xff] %v6530
                %v6532 = vld [vmem:[%s6146 + $0x600] sm:$0xff]
                %6533 = vst [vmem:[%s6147 + $0x1800] sm:$0xff] %v6532
                %v6534 = vld [vmem:[%s6146 + $0x608] sm:$0xff]
                %6535 = vst [vmem:[%s6147 + $0x1808] sm:$0xff] %v6534
                %v6536 = vld [vmem:[%s6146 + $0x610] sm:$0xff]
                %6537 = vst [vmem:[%s6147 + $0x1810] sm:$0xff] %v6536
                %v6538 = vld [vmem:[%s6146 + $0x618] sm:$0xff]
                %6539 = vst [vmem:[%s6147 + $0x1818] sm:$0xff] %v6538
                %v6540 = vld [vmem:[%s6146 + $0x620] sm:$0xff]
                %6541 = vst [vmem:[%s6147 + $0x1820] sm:$0xff] %v6540
                %v6542 = vld [vmem:[%s6146 + $0x628] sm:$0xff]
                %6543 = vst [vmem:[%s6147 + $0x1828] sm:$0xff] %v6542
                %v6544 = vld [vmem:[%s6146 + $0x630] sm:$0xff]
                %6545 = vst [vmem:[%s6147 + $0x1830] sm:$0xff] %v6544
                %v6546 = vld [vmem:[%s6146 + $0x638] sm:$0xff]
                %6547 = vst [vmem:[%s6147 + $0x1838] sm:$0xff] %v6546
                %v6548 = vld [vmem:[%s6146 + $0x640] sm:$0xff]
                %6549 = vst [vmem:[%s6147 + $0x1900] sm:$0xff] %v6548
                %v6550 = vld [vmem:[%s6146 + $0x648] sm:$0xff]
                %6551 = vst [vmem:[%s6147 + $0x1908] sm:$0xff] %v6550
                %v6552 = vld [vmem:[%s6146 + $0x650] sm:$0xff]
                %6553 = vst [vmem:[%s6147 + $0x1910] sm:$0xff] %v6552
                %v6554 = vld [vmem:[%s6146 + $0x658] sm:$0xff]
                %6555 = vst [vmem:[%s6147 + $0x1918] sm:$0xff] %v6554
                %v6556 = vld [vmem:[%s6146 + $0x660] sm:$0xff]
                %6557 = vst [vmem:[%s6147 + $0x1920] sm:$0xff] %v6556
                %v6558 = vld [vmem:[%s6146 + $0x668] sm:$0xff]
                %6559 = vst [vmem:[%s6147 + $0x1928] sm:$0xff] %v6558
                %v6560 = vld [vmem:[%s6146 + $0x670] sm:$0xff]
                %6561 = vst [vmem:[%s6147 + $0x1930] sm:$0xff] %v6560
                %v6562 = vld [vmem:[%s6146 + $0x678] sm:$0xff]
                %6563 = vst [vmem:[%s6147 + $0x1938] sm:$0xff] %v6562
                %v6564 = vld [vmem:[%s6146 + $0x680] sm:$0xff]
                %6565 = vst [vmem:[%s6147 + $0x1a00] sm:$0xff] %v6564
                %v6566 = vld [vmem:[%s6146 + $0x688] sm:$0xff]
                %6567 = vst [vmem:[%s6147 + $0x1a08] sm:$0xff] %v6566
                %v6568 = vld [vmem:[%s6146 + $0x690] sm:$0xff]
                %6569 = vst [vmem:[%s6147 + $0x1a10] sm:$0xff] %v6568
                %v6570 = vld [vmem:[%s6146 + $0x698] sm:$0xff]
                %6571 = vst [vmem:[%s6147 + $0x1a18] sm:$0xff] %v6570
                %v6572 = vld [vmem:[%s6146 + $0x6a0] sm:$0xff]
                %6573 = vst [vmem:[%s6147 + $0x1a20] sm:$0xff] %v6572
                %v6574 = vld [vmem:[%s6146 + $0x6a8] sm:$0xff]
                %6575 = vst [vmem:[%s6147 + $0x1a28] sm:$0xff] %v6574
                %v6576 = vld [vmem:[%s6146 + $0x6b0] sm:$0xff]
                %6577 = vst [vmem:[%s6147 + $0x1a30] sm:$0xff] %v6576
                %v6578 = vld [vmem:[%s6146 + $0x6b8] sm:$0xff]
                %6579 = vst [vmem:[%s6147 + $0x1a38] sm:$0xff] %v6578
                %v6580 = vld [vmem:[%s6146 + $0x6c0] sm:$0xff]
                %6581 = vst [vmem:[%s6147 + $0x1b00] sm:$0xff] %v6580
                %v6582 = vld [vmem:[%s6146 + $0x6c8] sm:$0xff]
                %6583 = vst [vmem:[%s6147 + $0x1b08] sm:$0xff] %v6582
                %v6584 = vld [vmem:[%s6146 + $0x6d0] sm:$0xff]
                %6585 = vst [vmem:[%s6147 + $0x1b10] sm:$0xff] %v6584
                %v6586 = vld [vmem:[%s6146 + $0x6d8] sm:$0xff]
                %6587 = vst [vmem:[%s6147 + $0x1b18] sm:$0xff] %v6586
                %v6588 = vld [vmem:[%s6146 + $0x6e0] sm:$0xff]
                %6589 = vst [vmem:[%s6147 + $0x1b20] sm:$0xff] %v6588
                %v6590 = vld [vmem:[%s6146 + $0x6e8] sm:$0xff]
                %6591 = vst [vmem:[%s6147 + $0x1b28] sm:$0xff] %v6590
                %v6592 = vld [vmem:[%s6146 + $0x6f0] sm:$0xff]
                %6593 = vst [vmem:[%s6147 + $0x1b30] sm:$0xff] %v6592
                %v6594 = vld [vmem:[%s6146 + $0x6f8] sm:$0xff]
                %6595 = vst [vmem:[%s6147 + $0x1b38] sm:$0xff] %v6594
                %v6596 = vld [vmem:[%s6146 + $0x700] sm:$0xff]
                %6597 = vst [vmem:[%s6147 + $0x1c00] sm:$0xff] %v6596
                %v6598 = vld [vmem:[%s6146 + $0x708] sm:$0xff]
                %6599 = vst [vmem:[%s6147 + $0x1c08] sm:$0xff] %v6598
                %v6600 = vld [vmem:[%s6146 + $0x710] sm:$0xff]
                %6601 = vst [vmem:[%s6147 + $0x1c10] sm:$0xff] %v6600
                %v6602 = vld [vmem:[%s6146 + $0x718] sm:$0xff]
                %6603 = vst [vmem:[%s6147 + $0x1c18] sm:$0xff] %v6602
                %v6604 = vld [vmem:[%s6146 + $0x720] sm:$0xff]
                %6605 = vst [vmem:[%s6147 + $0x1c20] sm:$0xff] %v6604
                %v6606 = vld [vmem:[%s6146 + $0x728] sm:$0xff]
                %6607 = vst [vmem:[%s6147 + $0x1c28] sm:$0xff] %v6606
                %v6608 = vld [vmem:[%s6146 + $0x730] sm:$0xff]
                %6609 = vst [vmem:[%s6147 + $0x1c30] sm:$0xff] %v6608
                %v6610 = vld [vmem:[%s6146 + $0x738] sm:$0xff]
                %6611 = vst [vmem:[%s6147 + $0x1c38] sm:$0xff] %v6610
                %v6612 = vld [vmem:[%s6146 + $0x740] sm:$0xff]
                %6613 = vst [vmem:[%s6147 + $0x1d00] sm:$0xff] %v6612
                %v6614 = vld [vmem:[%s6146 + $0x748] sm:$0xff]
                %6615 = vst [vmem:[%s6147 + $0x1d08] sm:$0xff] %v6614
                %v6616 = vld [vmem:[%s6146 + $0x750] sm:$0xff]
                %6617 = vst [vmem:[%s6147 + $0x1d10] sm:$0xff] %v6616
                %v6618 = vld [vmem:[%s6146 + $0x758] sm:$0xff]
                %6619 = vst [vmem:[%s6147 + $0x1d18] sm:$0xff] %v6618
                %v6620 = vld [vmem:[%s6146 + $0x760] sm:$0xff]
                %6621 = vst [vmem:[%s6147 + $0x1d20] sm:$0xff] %v6620
                %v6622 = vld [vmem:[%s6146 + $0x768] sm:$0xff]
                %6623 = vst [vmem:[%s6147 + $0x1d28] sm:$0xff] %v6622
                %v6624 = vld [vmem:[%s6146 + $0x770] sm:$0xff]
                %6625 = vst [vmem:[%s6147 + $0x1d30] sm:$0xff] %v6624
                %v6626 = vld [vmem:[%s6146 + $0x778] sm:$0xff]
                %6627 = vst [vmem:[%s6147 + $0x1d38] sm:$0xff] %v6626
                %v6628 = vld [vmem:[%s6146 + $0x780] sm:$0xff]
                %6629 = vst [vmem:[%s6147 + $0x1e00] sm:$0xff] %v6628
                %v6630 = vld [vmem:[%s6146 + $0x788] sm:$0xff]
                %6631 = vst [vmem:[%s6147 + $0x1e08] sm:$0xff] %v6630
                %v6632 = vld [vmem:[%s6146 + $0x790] sm:$0xff]
                %6633 = vst [vmem:[%s6147 + $0x1e10] sm:$0xff] %v6632
                %v6634 = vld [vmem:[%s6146 + $0x798] sm:$0xff]
                %6635 = vst [vmem:[%s6147 + $0x1e18] sm:$0xff] %v6634
                %v6636 = vld [vmem:[%s6146 + $0x7a0] sm:$0xff]
                %6637 = vst [vmem:[%s6147 + $0x1e20] sm:$0xff] %v6636
                %v6638 = vld [vmem:[%s6146 + $0x7a8] sm:$0xff]
                %6639 = vst [vmem:[%s6147 + $0x1e28] sm:$0xff] %v6638
                %v6640 = vld [vmem:[%s6146 + $0x7b0] sm:$0xff]
                %6641 = vst [vmem:[%s6147 + $0x1e30] sm:$0xff] %v6640
                %v6642 = vld [vmem:[%s6146 + $0x7b8] sm:$0xff]
                %6643 = vst [vmem:[%s6147 + $0x1e38] sm:$0xff] %v6642
                %v6644 = vld [vmem:[%s6146 + $0x7c0] sm:$0xff]
                %6645 = vst [vmem:[%s6147 + $0x1f00] sm:$0xff] %v6644
                %v6646 = vld [vmem:[%s6146 + $0x7c8] sm:$0xff]
                %6647 = vst [vmem:[%s6147 + $0x1f08] sm:$0xff] %v6646
                %v6648 = vld [vmem:[%s6146 + $0x7d0] sm:$0xff]
                %6649 = vst [vmem:[%s6147 + $0x1f10] sm:$0xff] %v6648
                %v6650 = vld [vmem:[%s6146 + $0x7d8] sm:$0xff]
                %6651 = vst [vmem:[%s6147 + $0x1f18] sm:$0xff] %v6650
                %v6652 = vld [vmem:[%s6146 + $0x7e0] sm:$0xff]
                %6653 = vst [vmem:[%s6147 + $0x1f20] sm:$0xff] %v6652
                %v6654 = vld [vmem:[%s6146 + $0x7e8] sm:$0xff]
                %6655 = vst [vmem:[%s6147 + $0x1f28] sm:$0xff] %v6654
                %v6656 = vld [vmem:[%s6146 + $0x7f0] sm:$0xff]
                %6657 = vst [vmem:[%s6147 + $0x1f30] sm:$0xff] %v6656
                %v6658 = vld [vmem:[%s6146 + $0x7f8] sm:$0xff]
                %6659 = vst [vmem:[%s6147 + $0x1f38] sm:$0xff] %v6658
              $region125: #{endosam_forward.1} parent=119 // loop_footer
                %s6145 = sadd.s32 1, %s6141
              $region126: #{endosam_forward.1} parent=119 // loop_footer_branch
                %6140 = sbr.rel target = $region122
              $region127: #{endosam_forward.1} parent=119 // loop_exit
                _
            $region120: #{endosam_forward.1} parent=115 // pred_fallthru
              _
            // Predicated region
            $region128: #{endosam_forward.1} parent=115 // pred_check
              _
            $region129: #{endosam_forward.1} parent=115 // pred_check_branch
              %6661 = sbr.rel target = $region131
            $region130: #{endosam_forward.1} parent=115 // pred_region
              _
            $region131: #{endosam_forward.1} parent=115 // pred_fallthru
              _
          $region116: #{endosam_forward.1} parent=111 // pred_fallthru
            _
          %6662 = vnop
        $region112: #{endosam_forward.1} parent=75 // pred_fallthru
          _
        // Predicated region
        $region132: #{endosam_forward.1} parent=75 // pred_check
          %p6663 = pneg %p400
        $region133: #{endosam_forward.1} parent=75 // pred_check_branch
          %6665 = sbr.rel (%p6663) target = $region135
        $region134: #{endosam_forward.1} parent=75 // pred_region
          %s6667 = ssub.s32 256, 256
          %6668 = vsyncadd %s6124, %s6667
          %s6669 = smul.addr %s42, 2
          %s6670 = smul.addr %s6669, 128
          %s6671 = scalar_lea.hbm %s15, %s6670
          %s6673 = sshll.u32 %s6127, 4
          %s6674 = int_to_ptr.vmem [resolvable:$true] %s6673
          %6676 = dma.vmem_to_hbm [thread:$0]  %s6674, 256, %s6671, %s6124
        $region135: #{endosam_forward.1} parent=75 // pred_fallthru
          _
      $region76: #{endosam_forward.1} parent=5 // pred_fallthru
        _
      %p6677 = scmp.le.s32.totalorder 2, %s33
      // Predicated region
      $region136: #{endosam_forward.1} parent=5 // pred_check
        %p6678 = pneg %p6677
      $region137: #{endosam_forward.1} parent=5 // pred_check_branch
        %6680 = sbr.rel (%p6678) target = $region139
      $region138: #{endosam_forward.1} parent=5 // pred_region
        %s6681 = ssub.s32 %s33, 2
        // Predicated region
        $region140: #{endosam_forward.1} parent=138 // pred_check
          %p6682 = pneg %p380
        $region141: #{endosam_forward.1} parent=138 // pred_check_branch
          %6684 = sbr.rel (%p6682) target = $region143
        $region142: #{endosam_forward.1} parent=138 // pred_region
          %s6685 = sand.u32 %s365, 1
          %s6686 = sand.u32 %s365, 1
          %s6687 = smul.addr %s6686, 2048
          %s6688 = scalar_lea.vmem [#allocation15], %s6687
        $region143: #{endosam_forward.1} parent=138 // pred_fallthru
          _
        // Predicated region
        $region144: #{endosam_forward.1} parent=138 // pred_check
          %p6689 = pneg %p406
        $region145: #{endosam_forward.1} parent=138 // pred_check_branch
          %6691 = sbr.rel (%p6689) target = $region147
        $region146: #{endosam_forward.1} parent=138 // pred_region
          %s6692 = sand.u32 %s391, 1
          %s6693 = scalar_lea.sflag [#allocation6], %s6692
          %s6694 = sand.u32 %s391, 1
          %s6695 = smul.addr %s6694, 16
          %s6696 = scalar_lea.vmem [#allocation16], %s6695
          %6697 = dma.done %s6693, 256
        $region147: #{endosam_forward.1} parent=138 // pred_fallthru
          _
      $region139: #{endosam_forward.1} parent=5 // pred_fallthru
        _
    $region6: #{endosam_forward.1} parent=1 // loop_footer
      %s37 = sadd.s32 1, %s33
    $region7: #{endosam_forward.1} parent=1 // loop_footer_branch
      %32 = sbr.rel target = $region3
    $region8: #{endosam_forward.1} parent=1 // loop_exit
      _
    %6698 = vsyncpa [#allocation5], 1
    %s6699 = scalar_lea.sflag [#allocation5], 1
    %6700 = vsyncpa %s6699, 1
    %6701 = vsyncpa [#allocation8], 1
    %6702 = vsyncpa [#allocation11], 1
    %s6703 = scalar_lea.sflag [#allocation11], 1
    %6704 = vsyncpa %s6703, 1
    %6705 = vsyncpa [#allocation14], 1
    %6706 = vsyncpa [#allocation6], 1
    %s6707 = scalar_lea.sflag [#allocation6], 1
    %6708 = vsyncpa %s6707, 1

</llo_original>
